<compile_context>
chip_gen: v6e
topology: v6e:2x2x1
jax: 0.10.0
libtpu: 0.0.40
codegen_flags: <defaults>
</compile_context>

<pallas_src>
import functools

import jax
import jax.numpy as jnp
from jax.experimental import pallas as pl
from jax.experimental.pallas import tpu as pltpu


def _round_up(x, m):
    return ((x + m - 1) // m) * m


# ----------------------------- Pallas kernel -------------------------------

def _heads_kernel(x_ref, w_ref, b_ref, o_ref):
    """Fused 1x1-conv heads for one (N-tile, batch-block) grid cell.

    x_ref: (bt, C, HW)  f32  -- NCHW feature-map block (bf16 cast done in-kernel)
    w_ref: (tn, C)      bf16 -- concatenated conv weights, out-channel major
    b_ref: (tn, 1)      f32  -- concatenated conv biases
    o_ref: (bt, tn, HW) f32  -- NCHW output block (heads concatenated on channels)
    """
    w = w_ref[...]                                   # (tn, C) bf16
    bias = b_ref[...]                                # (tn, 1) f32
    bt = x_ref.shape[0]                              # static block size
    for b in range(bt):                              # small static unroll
        xb = x_ref[b].astype(jnp.bfloat16)           # (C, HW)
        acc = jnp.dot(w, xb, preferred_element_type=jnp.float32)   # (tn, HW) f32
        o_ref[b] = (acc + bias).astype(o_ref.dtype)


def _fused_heads(feat3, w, bias, *, tn, bt):
    """feat3: (B, C, HW) f32 (NCHW), w: (N_pad, C) bf16, bias: (N_pad, 1) f32
    -> (B, N_pad, HW) f32 : NCHW output with all heads concatenated on channels."""
    B, C, HW = feat3.shape
    N, Kw = w.shape
    assert Kw == C and N % tn == 0 and B % bt == 0

    # Batch is the inner grid axis: the weight tile index only depends on j, so
    # each weight tile is DMA'd exactly once (no re-streaming for large batches).
    grid = (N // tn, B // bt)
    return pl.pallas_call(
        _heads_kernel,
        out_shape=jax.ShapeDtypeStruct((B, N, HW), jnp.float32),
        grid_spec=pltpu.PrefetchScalarGridSpec(
            num_scalar_prefetch=0,
            grid=grid,
            in_specs=[
                # x: NCHW batch-block slab; constant across j when B//bt == 1,
                # so it is DMA'd once and stays resident while weights stream.
                pl.BlockSpec((bt, C, HW), lambda j, b: (b, 0, 0)),
                # w: two 896-wide tiles streamed over j (dominant HBM traffic).
                pl.BlockSpec((tn, C), lambda j, b: (j, 0)),
                # bias: tiny per-N-tile column.
                pl.BlockSpec((tn, 1), lambda j, b: (j, 0)),
            ],
            out_specs=pl.BlockSpec((bt, tn, HW), lambda j, b: (b, j, 0)),
        ),
        compiler_params=pltpu.CompilerParams(
            dimension_semantics=("parallel", "parallel"),
            vmem_limit_bytes=32 * 1024 * 1024,
        ),
    )(feat3, w, bias)


# ------------------------------ Model wrapper -------------------------------

class PipMbnetV2Heads:
    """Pallas implementation of the Pip_mbnetv2 forward-pass heads.

    Consumes the 1280-channel MobileNetV2 feature map (NCHW) and returns the five
    head outputs (NCHW), matching the PyTorch module's (x1..x5) tuple.
    """

    IN_CH = 1280
    N_ALIGN = 256                 # -> exactly two 128-aligned N tiles (v7x balance)
    X_BLOCK_BUDGET = 2_621_440    # ~2.5 MiB per x block (lane-padded f32 bytes)

    def __init__(self, num_nb, num_lms=68, input_size=256, net_stride=32, seed=0):
        self.num_nb = num_nb
        self.num_lms = num_lms
        self.input_size = input_size
        self.net_stride = net_stride

        out_chs = [num_lms, num_lms, num_lms,
                   num_nb * num_lms, num_nb * num_lms]
        self.out_chs = out_chs
        n_total = sum(out_chs)
        self.n_total = n_total

        # Minimal padding with two lane-aligned tiles: 1564 -> 1792, tn = 896.
        n_pad = _round_up(n_total, self.N_ALIGN)
        self.n_pad = n_pad
        self.tn = n_pad // 2

        key = jax.random.PRNGKey(seed)
        keys = jax.random.split(key, len(out_chs))
        # PyTorch: nn.init.normal_(w, std=0.001); bias = 0.  Conv2d weight
        # (out, in, 1, 1) is kept in its native (out, in) layout, heads concatenated.
        ws = [0.001 * jax.random.normal(k, (oc, self.IN_CH), dtype=jnp.float32)
              for k, oc in zip(keys, out_chs)]
        w_all = jnp.concatenate(ws, axis=0)                       # (n_total, 1280)
        w_all = jnp.pad(w_all, ((0, n_pad - n_total), (0, 0)))
        # bf16 weights halve the dominant HBM stream; f32 accumulation in-kernel.
        self.w_all = w_all.astype(jnp.bfloat16)                   # (n_pad, 1280)
        self.b_all = jnp.zeros((n_pad, 1), dtype=jnp.float32)

    def _batch_block(self, B, HW):
        # Keep each resident x block (f32, lanes padded to 128) within budget so
        # double-buffered x + weight tiles stay under v5e's 16 MiB scoped VMEM.
        per_image = self.IN_CH * _round_up(HW, 128) * 4
        bt = max(1, min(B, self.X_BLOCK_BUDGET // per_image))
        while B % bt:
            bt -= 1
        return bt

    @functools.partial(jax.jit, static_argnums=0)
    def __call__(self, feat_nchw):
        B, C, Hf, Wf = feat_nchw.shape
        assert C == self.IN_CH
        HW = Hf * Wf

        feat3 = feat_nchw.reshape(B, C, HW)          # free view of NCHW layout
        bt = self._batch_block(B, HW)

        y = _fused_heads(feat3, self.w_all, self.b_all, tn=self.tn, bt=bt)

        # y is already NCHW with all heads concatenated along channels: the tail
        # is contiguous slices + free reshapes only (no transposes).
        outs = []
        off = 0
        for oc in self.out_chs:
            outs.append(y[:, off: off + oc, :].reshape(B, oc, Hf, Wf))
            off += oc
        return tuple(outs)


# --------------------------------- Main --------------------------------------

if __name__ == "__main__":
    num_nb = 10
    num_lms = 68
    input_size = 256
    net_stride = 32
    B = 2
    Hf = Wf = input_size // net_stride   # 8 x 8 stride-32 feature map

    model = PipMbnetV2Heads(num_nb=num_nb, num_lms=num_lms,
                            input_size=input_size, net_stride=net_stride, seed=0)

    key = jax.random.PRNGKey(0)
    # Stand-in for mbnet.features(x): the 1280-channel NCHW feature map.
    feat = jax.random.normal(key, (B, 1280, Hf, Wf), dtype=jnp.float32)

    outs = model(feat)
    outs = jax.block_until_ready(outs)
    x1, x2, x3, x4, x5 = outs

    # Shape checks against the PyTorch module's outputs.
    assert x1.shape == (B, num_lms, Hf, Wf)
    assert x2.shape == (B, num_lms, Hf, Wf)
    assert x3.shape == (B, num_lms, Hf, Wf)
    assert x4.shape == (B, num_nb * num_lms, Hf, Wf)
    assert x5.shape == (B, num_nb * num_lms, Hf, Wf)

    # Numeric check: plain-JAX 1x1 convs on the same bf16-rounded operands
    # (the kernel casts x to bf16 in-kernel, stores w in bf16, accumulates f32).
    x_bf = feat.astype(jnp.bfloat16).astype(jnp.float32)
    w_f32 = model.w_all[: model.n_total, :].astype(jnp.float32)       # (n_total, C)
    ref = jnp.einsum("nc,bchw->bnhw", w_f32, x_bf)                    # bias is zero
    off = 0
    for out, oc in zip(outs, model.out_chs):
        ref_head = ref[:, off: off + oc, :, :]
        assert jnp.allclose(out, ref_head, atol=1e-3, rtol=1e-2), \
            f"mismatch at channel offset {off}"
        off += oc

    print("KERNEL_OK")
</pallas_src>

<mosaic_0001>
module attributes {stable_mosaic.version = 11 : i64} {
  func.func @_heads_kernel(%arg0: i32, %arg1: i32, %arg2: memref<2x1280x64xf32, #tpu.memory_space<vmem>>, %arg3: memref<896x1280xbf16, #tpu.memory_space<vmem>>, %arg4: memref<896x1xf32, #tpu.memory_space<vmem>>, %arg5: memref<2x896x64xf32, #tpu.memory_space<vmem>>) attributes {dimension_semantics = [#tpu.dimension_semantics<parallel>, #tpu.dimension_semantics<parallel>], iteration_bounds = array<i64: 2, 1>, scalar_prefetch = 0 : i64, scratch_operands = 0 : i64, tpu.core_type = #tpu.core_type<tc>, window_params = [{transform_indices = @transform_0, window_bounds = array<i64: 2, 1280, 64>}, {transform_indices = @transform_1, window_bounds = array<i64: 896, 1280>}, {transform_indices = @transform_2, window_bounds = array<i64: 896, 1>}, {transform_indices = @transform_3, window_bounds = array<i64: 2, 896, 64>}]} {
    %c0 = arith.constant 0 : index
    %c0_0 = arith.constant 0 : index
    %0 = vector.load %arg3[%c0, %c0_0] : memref<896x1280xbf16, #tpu.memory_space<vmem>>, vector<896x1280xbf16>
    %c0_1 = arith.constant 0 : index
    %c0_2 = arith.constant 0 : index
    %1 = vector.load %arg4[%c0_1, %c0_2] : memref<896x1xf32, #tpu.memory_space<vmem>>, vector<896x1xf32>
    %c0_3 = arith.constant 0 : index
    %c0_4 = arith.constant 0 : index
    %c0_5 = arith.constant 0 : index
    %2 = vector.load %arg2[%c0_3, %c0_4, %c0_5] : memref<2x1280x64xf32, #tpu.memory_space<vmem>>, vector<1x1280x64xf32>
    %3 = vector.shape_cast %2 : vector<1x1280x64xf32> to vector<1280x64xf32>
    %4 = arith.truncf %3 : vector<1280x64xf32> to vector<1280x64xbf16>
    %cst = arith.constant dense<0.000000e+00> : vector<896x64xf32>
    %5 = tpu.matmul %0, %4, %cst {dimension_numbers = #tpu.dot_dimension_numbers<[1], [0], [0], [1], [0, 0, 1, 1], [], []>} : vector<896x1280xbf16>, vector<1280x64xbf16>, vector<896x64xf32> -> vector<896x64xf32>
    %6 = vector.broadcast %1 : vector<896x1xf32> to vector<896x64xf32>
    %7 = arith.addf %5, %6 : vector<896x64xf32>
    %c0_6 = arith.constant 0 : index
    %c0_7 = arith.constant 0 : index
    %c0_8 = arith.constant 0 : index
    %8 = vector.load %arg5[%c0_6, %c0_7, %c0_8] : memref<2x896x64xf32, #tpu.memory_space<vmem>>, vector<1x896x64xf32>
    %9 = vector.shape_cast %8 : vector<1x896x64xf32> to vector<896x64xf32>
    %10 = vector.shape_cast %7 : vector<896x64xf32> to vector<1x896x64xf32>
    tpu.vector_store %arg5[%c0_6, %c0_7, %c0_8], %10 {strides = array<i32>} : memref<2x896x64xf32, #tpu.memory_space<vmem>>, vector<1x896x64xf32>,
    %c1 = arith.constant 1 : index
    %c0_9 = arith.constant 0 : index
    %c0_10 = arith.constant 0 : index
    %11 = vector.load %arg2[%c1, %c0_9, %c0_10] : memref<2x1280x64xf32, #tpu.memory_space<vmem>>, vector<1x1280x64xf32>
    %12 = vector.shape_cast %11 : vector<1x1280x64xf32> to vector<1280x64xf32>
    %13 = arith.truncf %12 : vector<1280x64xf32> to vector<1280x64xbf16>
    %cst_11 = arith.constant dense<0.000000e+00> : vector<896x64xf32>
    %14 = tpu.matmul %0, %13, %cst_11 {dimension_numbers = #tpu.dot_dimension_numbers<[1], [0], [0], [1], [0, 0, 1, 1], [], []>} : vector<896x1280xbf16>, vector<1280x64xbf16>, vector<896x64xf32> -> vector<896x64xf32>
    %15 = vector.broadcast %1 : vector<896x1xf32> to vector<896x64xf32>
    %16 = arith.addf %14, %15 : vector<896x64xf32>
    %c1_12 = arith.constant 1 : index
    %c0_13 = arith.constant 0 : index
    %c0_14 = arith.constant 0 : index
    %17 = vector.load %arg5[%c1_12, %c0_13, %c0_14] : memref<2x896x64xf32, #tpu.memory_space<vmem>>, vector<1x896x64xf32>
    %18 = vector.shape_cast %17 : vector<1x896x64xf32> to vector<896x64xf32>
    %19 = vector.shape_cast %16 : vector<896x64xf32> to vector<1x896x64xf32>
    tpu.vector_store %arg5[%c1_12, %c0_13, %c0_14], %19 {strides = array<i32>} : memref<2x896x64xf32, #tpu.memory_space<vmem>>, vector<1x896x64xf32>,
    return
  }
  func.func @transform_0(%arg0: i32, %arg1: i32) -> (i32, i32, i32) {
    %c0_i32 = arith.constant 0 : i32
    %c0_i32_0 = arith.constant 0 : i32
    %c0_i32_1 = arith.constant 0 : i32
    return %arg1, %c0_i32, %c0_i32_0 : i32, i32, i32
  }
  func.func @transform_1(%arg0: i32, %arg1: i32) -> (i32, i32) {
    %c0_i32 = arith.constant 0 : i32
    %c0_i32_0 = arith.constant 0 : i32
    return %arg0, %c0_i32 : i32, i32
  }
  func.func @transform_2(%arg0: i32, %arg1: i32) -> (i32, i32) {
    %c0_i32 = arith.constant 0 : i32
    %c0_i32_0 = arith.constant 0 : i32
    return %arg0, %c0_i32 : i32, i32
  }
  func.func @transform_3(%arg0: i32, %arg1: i32) -> (i32, i32, i32) {
    %c0_i32 = arith.constant 0 : i32
    %c0_i32_0 = arith.constant 0 : i32
    return %arg1, %arg0, %c0_i32 : i32, i32, i32
  }
}

</mosaic_0001>

<llo_original>
// kernel: a_call__.1
$region0: #{a_call__.1}
  #allocation0 [shape = 'u32[]', space=smem, size = 0x4, offset = 0x4, fixed_abs, tag = 'smem constant byte address 0x4 - core index']
  #allocation1 [shape = 'u32[144,128]{1,0:T(1,128)}', space=vmem, size = 0x12000, scoped, tag = 'internal scratch']
  %s0 = inlined_call_operand.vmem [shape: f32[2,1280,64], index: 0, kind: input, shape index: {}]
  %s1 = inlined_call_operand.hbm [shape: bf16[1792,1280], index: 1, kind: input, shape index: {}]
  %s2 = inlined_call_operand.vmem [shape: f32[1792,1], index: 2, kind: input, shape index: {}]
  %s3 = inlined_call_operand.vmem [shape: f32[2,1792,64], index: 3, kind: output, shape index: {}]
  %s4 = sld [smem:[#allocation0]]
  $region83: #{a_call__.1} parent=0
    _
  %s6 = ssub.s32 1, %s4
  %s7 = scalar_select 0, %s6, %s4
  $region1: #{a_call__.1} parent=0
    #allocation2 [shape = 'u8[4587520]{0}', space=vmem, size = 0x460000, scoped, tag = 'input window, operand 1']
    #allocation3 [shape = 's32[2]{0}', space=sflag, size = 0x8, scoped, tag = 'scoped memory for a_call__.1']
    #allocation4 [shape = 'u8[1835008]{0}', space=vmem, size = 0x1c0000, scoped, tag = 'output window, operand 0']
    %8 = vsyncpa [#allocation3], 0
    %s9 = scalar_lea.sflag [#allocation3], 1
    %10 = vsyncpa %s9, 0
    loop: start=0, step=1, limit=4
    $region2: #{a_call__.1} parent=1 // loop_pre_header
      _
    $region3: #{a_call__.1} parent=1 // loop_header
      %s12 = sphi 0, %s16
      %p13 = scmp.ge.s32.totalorder %s12, 4
      %s19 = sphi 0, %s31
      %s20 = sphi 0, %s27
      %s21 = sphi 0, %s19
      %s22 = sphi 0, %s20
      %s23 = sphi 0, %s21
      %s24 = sphi 0, %s22
      %s34 = sphi 0, %s36
      %s37 = sphi 0, %s34
      %s38 = sphi 0, %s37
      %s54 = sphi 0, %s38
      %s60 = sphi 0, %s62
      %s63 = sphi 0, %s60
      %s64 = sphi 0, %s63
      %s80 = sphi 0, %s64
      %s86 = sphi 0, %s88
      %s89 = sphi 0, %s86
      %s90 = sphi 0, %s89
      %s106 = sphi 0, %s90
      %s114 = sphi 0, %s116
      %s117 = sphi 0, %s114
      %s118 = sphi 0, %s117
      %s134 = sphi 0, %s118
    $region4: #{a_call__.1} parent=1 // loop_header_branch
      %15 = sbr.rel (%p13) target = $region8
    $region5: #{a_call__.1} parent=1 // loop_body
      %s17 = ssub.s32 %s12, 1
      %s18 = ssub.s32 %s12, 2
      %s25 = sadd.s32 1, %s20
      %p26 = scmp.ge.s32.totalorder %s25, 1
      %s27 = scalar_select %p26, 0, %s25
      %s28 = sadd.s32 1, %s19
      %s29 = scalar_select %p26, %s28, %s19
      %p30 = scmp.ge.s32.totalorder %s29, 2
      %s31 = scalar_select %p30, 0, %s29
      %s32 = ssub.s32 %s20, %s27
      %p33 = scmp.eq.s32.totalorder %s32, 0
      %s35 = sadd.s32 %s34, 1
      %s36 = scalar_select %p33, %s34, %s35
      %p39 = pneg %p33
      %p40 = scmp.eq.s32.totalorder %s12, 1
      %p41 = por %p39, %p40
      %p42 = scmp.ne.s32.totalorder %s34, %s37
      %p43 = scmp.eq.s32.totalorder %s12, 0
      %p44 = por %p42, %p43
      %p45 = scmp.ne.s32.totalorder %s34, %s37
      %p46 = scmp.eq.s32.totalorder %s17, 1
      %p47 = por %p45, %p46
      %p48 = scmp.ne.s32.totalorder %s37, %s38
      %p49 = scmp.eq.s32.totalorder %s17, 0
      %p50 = por %p48, %p49
      %p51 = scmp.ne.s32.totalorder %s37, %s38
      %p52 = scmp.eq.s32.totalorder %s18, 1
      %p53 = por %p51, %p52
      %p55 = scmp.ne.s32.totalorder %s38, %s54
      %p56 = scmp.eq.s32.totalorder %s18, 0
      %p57 = por %p55, %p56
      %s58 = ssub.s32 %s19, %s31
      %p59 = scmp.eq.s32.totalorder %s58, 0
      %s61 = sadd.s32 %s60, 1
      %s62 = scalar_select %p59, %s60, %s61
      %p65 = pneg %p59
      %p66 = scmp.eq.s32.totalorder %s12, 1
      %p67 = por %p65, %p66
      %p68 = scmp.ne.s32.totalorder %s60, %s63
      %p69 = scmp.eq.s32.totalorder %s12, 0
      %p70 = por %p68, %p69
      %p71 = scmp.ne.s32.totalorder %s60, %s63
      %p72 = scmp.eq.s32.totalorder %s17, 1
      %p73 = por %p71, %p72
      %p74 = scmp.ne.s32.totalorder %s63, %s64
      %p75 = scmp.eq.s32.totalorder %s17, 0
      %p76 = por %p74, %p75
      %p77 = scmp.ne.s32.totalorder %s63, %s64
      %p78 = scmp.eq.s32.totalorder %s18, 1
      %p79 = por %p77, %p78
      %p81 = scmp.ne.s32.totalorder %s64, %s80
      %p82 = scmp.eq.s32.totalorder %s18, 0
      %p83 = por %p81, %p82
      %s84 = ssub.s32 %s19, %s31
      %p85 = scmp.eq.s32.totalorder %s84, 0
      %s87 = sadd.s32 %s86, 1
      %s88 = scalar_select %p85, %s86, %s87
      %p91 = pneg %p85
      %p92 = scmp.eq.s32.totalorder %s12, 1
      %p93 = por %p91, %p92
      %p94 = scmp.ne.s32.totalorder %s86, %s89
      %p95 = scmp.eq.s32.totalorder %s12, 0
      %p96 = por %p94, %p95
      %p97 = scmp.ne.s32.totalorder %s86, %s89
      %p98 = scmp.eq.s32.totalorder %s17, 1
      %p99 = por %p97, %p98
      %p100 = scmp.ne.s32.totalorder %s89, %s90
      %p101 = scmp.eq.s32.totalorder %s17, 0
      %p102 = por %p100, %p101
      %p103 = scmp.ne.s32.totalorder %s89, %s90
      %p104 = scmp.eq.s32.totalorder %s18, 1
      %p105 = por %p103, %p104
      %p107 = scmp.ne.s32.totalorder %s90, %s106
      %p108 = scmp.eq.s32.totalorder %s18, 0
      %p109 = por %p107, %p108
      %s110 = ssub.s32 %s20, %s27
      %s111 = ssub.s32 %s19, %s31
      %s112 = sor.u32 %s110, %s111
      %p113 = scmp.eq.s32.totalorder %s112, 0
      %s115 = sadd.s32 %s114, 1
      %s116 = scalar_select %p113, %s114, %s115
      %p119 = pneg %p113
      %p120 = scmp.eq.s32.totalorder %s12, 1
      %p121 = por %p119, %p120
      %p122 = scmp.ne.s32.totalorder %s114, %s117
      %p123 = scmp.eq.s32.totalorder %s12, 0
      %p124 = por %p122, %p123
      %p125 = scmp.ne.s32.totalorder %s114, %s117
      %p126 = scmp.eq.s32.totalorder %s17, 1
      %p127 = por %p125, %p126
      %p128 = scmp.ne.s32.totalorder %s117, %s118
      %p129 = scmp.eq.s32.totalorder %s17, 0
      %p130 = por %p128, %p129
      %p131 = scmp.ne.s32.totalorder %s117, %s118
      %p132 = scmp.eq.s32.totalorder %s18, 1
      %p133 = por %p131, %p132
      %p135 = scmp.ne.s32.totalorder %s118, %s134
      %p136 = scmp.eq.s32.totalorder %s18, 0
      %p137 = por %p135, %p136
      %p138 = scmp.le.s32.totalorder 1, %s12
      %p139 = scmp.lt.s32.totalorder %s12, 3
      %p140 = pnand %p138, %p139
      %p141 = pneg %p140
      // Predicated region
      $region9: #{a_call__.1} parent=5 // pred_check
        _
      $region10: #{a_call__.1} parent=5 // pred_check_branch
        %143 = sbr.rel (%p140) target = $region12
      $region11: #{a_call__.1} parent=5 // pred_region
        %s144 = ssub.s32 %s12, 1
        // Predicated region
        $region13: #{a_call__.1} parent=11 // pred_check
          %p145 = pneg %p50
        $region14: #{a_call__.1} parent=11 // pred_check_branch
          %147 = sbr.rel (%p145) target = $region16
        $region15: #{a_call__.1} parent=11 // pred_region
          %s148 = smul.u32 2, %s22
          %p149 = scmp.lt.s32.totalorder %s148, 1
          %s150 = scalar_select %p149, %s148, 1
          %s151 = smul.addr %s150, 160
          %s152 = smul.addr %s151, 8
          %s153 = scalar_lea.vmem %s0, %s152
          %s154 = smul.u32 2, %s22
        $region16: #{a_call__.1} parent=11 // pred_fallthru
          _
      $region12: #{a_call__.1} parent=5 // pred_fallthru
        _
      %p155 = scmp.lt.s32.totalorder %s12, 2
      // Predicated region
      $region17: #{a_call__.1} parent=5 // pred_check
        %p156 = pneg %p155
      $region18: #{a_call__.1} parent=5 // pred_check_branch
        %158 = sbr.rel (%p156) target = $region20
      $region19: #{a_call__.1} parent=5 // pred_region
        // Predicated region
        $region21: #{a_call__.1} parent=19 // pred_check
          %p159 = pneg %p70
        $region22: #{a_call__.1} parent=19 // pred_check_branch
          %161 = sbr.rel (%p159) target = $region24
        $region23: #{a_call__.1} parent=19 // pred_region
          %s162 = sand.u32 %s60, 1
          %s163 = scalar_lea.sflag [#allocation3], %s162
          %s164 = sand.u32 %s60, 1
          %s165 = smul.addr %s164, 4480
          %s166 = scalar_lea.vmem [#allocation2], %s165
          %s167 = smul.u32 112, %s19
          %s169 = ssub.s32 71680, 71680
          %170 = vsyncadd %s163, %s169
          %s171 = smul.addr %s167, 10
          %s172 = smul.addr %s171, 64
          %s173 = scalar_lea.hbm %s1, %s172
          %s174 = sshll.u32 %s166, 4
          %s175 = int_to_ptr.vmem [resolvable:$true] %s174
          %180 = dma.hbm_to_vmem [thread:$0]  %s173, 71680, %s175, %s163, 640, 640, 40
        $region24: #{a_call__.1} parent=19 // pred_fallthru
          _
        // Predicated region
        $region25: #{a_call__.1} parent=19 // pred_check
          %p181 = pneg %p96
        $region26: #{a_call__.1} parent=19 // pred_check_branch
          %183 = sbr.rel (%p181) target = $region28
        $region27: #{a_call__.1} parent=19 // pred_region
          %s184 = smul.u32 112, %s19
          %p185 = scmp.lt.s32.totalorder %s184, 223
          %s186 = scalar_select %p185, %s184, 223
          %s187 = smul.addr %s186, 8
          %s188 = scalar_lea.vmem %s2, %s187
          %s189 = smul.u32 112, %s19
        $region28: #{a_call__.1} parent=19 // pred_fallthru
          _
      $region20: #{a_call__.1} parent=5 // pred_fallthru
        _
      %p190 = scmp.le.s32.totalorder 1, %s12
      %p191 = scmp.lt.s32.totalorder %s12, 3
      %p192 = pnand %p190, %p191
      %p193 = pneg %p192
      // Predicated region
      $region29: #{a_call__.1} parent=5 // pred_check
        _
      $region30: #{a_call__.1} parent=5 // pred_check_branch
        %195 = sbr.rel (%p192) target = $region32
      $region31: #{a_call__.1} parent=5 // pred_region
        %s196 = ssub.s32 %s12, 1
        %s197 = sand.u32 %s63, 1
        %s198 = scalar_lea.sflag [#allocation3], %s197
        %s199 = sand.u32 %s63, 1
        %s200 = smul.addr %s199, 4480
        %s201 = scalar_lea.vmem [#allocation2], %s200
        // Predicated region
        $region33: #{a_call__.1} parent=31 // pred_check
          %p202 = pneg %p76
        $region34: #{a_call__.1} parent=31 // pred_check_branch
          %204 = sbr.rel (%p202) target = $region36
        $region35: #{a_call__.1} parent=31 // pred_region
          %205 = dma.done %s198, 71680
        $region36: #{a_call__.1} parent=31 // pred_fallthru
          _
        %s206 = smul.u32 2, %s22
        %p207 = scmp.lt.s32.totalorder %s206, 1
        %s208 = scalar_select %p207, %s206, 1
        %s209 = smul.addr %s208, 160
        %s210 = smul.addr %s209, 8
        %s211 = scalar_lea.vmem %s0, %s210
        %p212 = pneg %p50
        %p213 = pneg %p47
        %s214 = sand.u32 %s63, 1
        %s215 = scalar_lea.sflag [#allocation3], %s214
        %s216 = sand.u32 %s63, 1
        %s217 = smul.addr %s216, 4480
        %s218 = scalar_lea.vmem [#allocation2], %s217
        %p219 = pneg %p76
        %p220 = pneg %p73
        %s221 = smul.u32 112, %s21
        %p222 = scmp.lt.s32.totalorder %s221, 223
        %s223 = scalar_select %p222, %s221, 223
        %s224 = smul.addr %s223, 8
        %s225 = scalar_lea.vmem %s2, %s224
        %p226 = pneg %p102
        %p227 = pneg %p99
        %p228 = pneg %p130
        %p229 = pneg %p127
        %s230 = sand.u32 %s117, 1
        %s231 = sand.u32 %s117, 1
        %s232 = smul.addr %s231, 1792
        %s233 = scalar_lea.vmem [#allocation4], %s232
        %s234 = smul.u32 2, %s22
        %p235 = scmp.lt.s32.totalorder %s234, 1
        %s236 = scalar_select %p235, %s234, 1
        %s237 = smul.addr %s236, 160
        %s238 = smul.addr %s237, 8
        %s239 = scalar_lea.vmem %s0, %s238
        %s240 = smul.u32 2, %s22
        %s241 = smul.u32 112, %s21
        %s242 = smul.u32 112, %s21
        %p243 = scmp.lt.s32.totalorder %s242, 223
        %s244 = scalar_select %p243, %s242, 223
        %s245 = smul.addr %s244, 8
        %s246 = scalar_lea.vmem %s2, %s245
        %s247 = smul.u32 112, %s21
        %s248 = smul.u32 2, %s22
        %s249 = smul.u32 112, %s21
        %v251 = vld [vmem:[%s201] sm:$0xff]
        %v252 = vld [vmem:[%s201 + $0x8] sm:$0xff]
        %v253 = vld [vmem:[%s201 + $0x10] sm:$0xff]
        %v254 = vld [vmem:[%s201 + $0x18] sm:$0xff]
        %v255 = vld [vmem:[%s201 + $0x20] sm:$0xff]
        %v256 = vld [vmem:[%s201 + $0x28] sm:$0xff]
        %v257 = vld [vmem:[%s201 + $0x30] sm:$0xff]
        %v258 = vld [vmem:[%s201 + $0x38] sm:$0xff]
        %v259 = vld [vmem:[%s201 + $0x40] sm:$0xff]
        %v260 = vld [vmem:[%s201 + $0x48] sm:$0xff]
        %v261 = vld [vmem:[%s201 + $0x50] sm:$0xff]
        %v262 = vld [vmem:[%s201 + $0x58] sm:$0xff]
        %v263 = vld [vmem:[%s201 + $0x60] sm:$0xff]
        %v264 = vld [vmem:[%s201 + $0x68] sm:$0xff]
        %v265 = vld [vmem:[%s201 + $0x70] sm:$0xff]
        %v266 = vld [vmem:[%s201 + $0x78] sm:$0xff]
        %v267 = vld [vmem:[%s201 + $0x80] sm:$0xff]
        %v268 = vld [vmem:[%s201 + $0x88] sm:$0xff]
        %v269 = vld [vmem:[%s201 + $0x90] sm:$0xff]
        %v270 = vld [vmem:[%s201 + $0x98] sm:$0xff]
        %v271 = vld [vmem:[%s201 + $0xa0] sm:$0xff]
        %v272 = vld [vmem:[%s201 + $0xa8] sm:$0xff]
        %v273 = vld [vmem:[%s201 + $0xb0] sm:$0xff]
        %v274 = vld [vmem:[%s201 + $0xb8] sm:$0xff]
        %v275 = vld [vmem:[%s201 + $0xc0] sm:$0xff]
        %v276 = vld [vmem:[%s201 + $0xc8] sm:$0xff]
        %v277 = vld [vmem:[%s201 + $0xd0] sm:$0xff]
        %v278 = vld [vmem:[%s201 + $0xd8] sm:$0xff]
        %v279 = vld [vmem:[%s201 + $0xe0] sm:$0xff]
        %v280 = vld [vmem:[%s201 + $0xe8] sm:$0xff]
        %v281 = vld [vmem:[%s201 + $0xf0] sm:$0xff]
        %v282 = vld [vmem:[%s201 + $0xf8] sm:$0xff]
        %v283 = vld [vmem:[%s201 + $0x100] sm:$0xff]
        %v284 = vld [vmem:[%s201 + $0x108] sm:$0xff]
        %v285 = vld [vmem:[%s201 + $0x110] sm:$0xff]
        %v286 = vld [vmem:[%s201 + $0x118] sm:$0xff]
        %v287 = vld [vmem:[%s201 + $0x120] sm:$0xff]
        %v288 = vld [vmem:[%s201 + $0x128] sm:$0xff]
        %v289 = vld [vmem:[%s201 + $0x130] sm:$0xff]
        %v290 = vld [vmem:[%s201 + $0x138] sm:$0xff]
        %v291 = vld [vmem:[%s201 + $0x140] sm:$0xff]
        %v292 = vld [vmem:[%s201 + $0x148] sm:$0xff]
        %v293 = vld [vmem:[%s201 + $0x150] sm:$0xff]
        %v294 = vld [vmem:[%s201 + $0x158] sm:$0xff]
        %v295 = vld [vmem:[%s201 + $0x160] sm:$0xff]
        %v296 = vld [vmem:[%s201 + $0x168] sm:$0xff]
        %v297 = vld [vmem:[%s201 + $0x170] sm:$0xff]
        %v298 = vld [vmem:[%s201 + $0x178] sm:$0xff]
        %v299 = vld [vmem:[%s201 + $0x180] sm:$0xff]
        %v300 = vld [vmem:[%s201 + $0x188] sm:$0xff]
        %v301 = vld [vmem:[%s201 + $0x190] sm:$0xff]
        %v302 = vld [vmem:[%s201 + $0x198] sm:$0xff]
        %v303 = vld [vmem:[%s201 + $0x1a0] sm:$0xff]
        %v304 = vld [vmem:[%s201 + $0x1a8] sm:$0xff]
        %v305 = vld [vmem:[%s201 + $0x1b0] sm:$0xff]
        %v306 = vld [vmem:[%s201 + $0x1b8] sm:$0xff]
        %v307 = vld [vmem:[%s201 + $0x1c0] sm:$0xff]
        %v308 = vld [vmem:[%s201 + $0x1c8] sm:$0xff]
        %v309 = vld [vmem:[%s201 + $0x1d0] sm:$0xff]
        %v310 = vld [vmem:[%s201 + $0x1d8] sm:$0xff]
        %v311 = vld [vmem:[%s201 + $0x1e0] sm:$0xff]
        %v312 = vld [vmem:[%s201 + $0x1e8] sm:$0xff]
        %v313 = vld [vmem:[%s201 + $0x1f0] sm:$0xff]
        %v314 = vld [vmem:[%s201 + $0x1f8] sm:$0xff]
        %v315 = vld [vmem:[%s201 + $0x200] sm:$0xff]
        %v316 = vld [vmem:[%s201 + $0x208] sm:$0xff]
        %v317 = vld [vmem:[%s201 + $0x210] sm:$0xff]
        %v318 = vld [vmem:[%s201 + $0x218] sm:$0xff]
        %v319 = vld [vmem:[%s201 + $0x220] sm:$0xff]
        %v320 = vld [vmem:[%s201 + $0x228] sm:$0xff]
        %v321 = vld [vmem:[%s201 + $0x230] sm:$0xff]
        %v322 = vld [vmem:[%s201 + $0x238] sm:$0xff]
        %v323 = vld [vmem:[%s201 + $0x240] sm:$0xff]
        %v324 = vld [vmem:[%s201 + $0x248] sm:$0xff]
        %v325 = vld [vmem:[%s201 + $0x250] sm:$0xff]
        %v326 = vld [vmem:[%s201 + $0x258] sm:$0xff]
        %v327 = vld [vmem:[%s201 + $0x260] sm:$0xff]
        %v328 = vld [vmem:[%s201 + $0x268] sm:$0xff]
        %v329 = vld [vmem:[%s201 + $0x270] sm:$0xff]
        %v330 = vld [vmem:[%s201 + $0x278] sm:$0xff]
        %v331 = vld [vmem:[%s201 + $0x280] sm:$0xff]
        %v332 = vld [vmem:[%s201 + $0x288] sm:$0xff]
        %v333 = vld [vmem:[%s201 + $0x290] sm:$0xff]
        %v334 = vld [vmem:[%s201 + $0x298] sm:$0xff]
        %v335 = vld [vmem:[%s201 + $0x2a0] sm:$0xff]
        %v336 = vld [vmem:[%s201 + $0x2a8] sm:$0xff]
        %v337 = vld [vmem:[%s201 + $0x2b0] sm:$0xff]
        %v338 = vld [vmem:[%s201 + $0x2b8] sm:$0xff]
        %v339 = vld [vmem:[%s201 + $0x2c0] sm:$0xff]
        %v340 = vld [vmem:[%s201 + $0x2c8] sm:$0xff]
        %v341 = vld [vmem:[%s201 + $0x2d0] sm:$0xff]
        %v342 = vld [vmem:[%s201 + $0x2d8] sm:$0xff]
        %v343 = vld [vmem:[%s201 + $0x2e0] sm:$0xff]
        %v344 = vld [vmem:[%s201 + $0x2e8] sm:$0xff]
        %v345 = vld [vmem:[%s201 + $0x2f0] sm:$0xff]
        %v346 = vld [vmem:[%s201 + $0x2f8] sm:$0xff]
        %v347 = vld [vmem:[%s201 + $0x300] sm:$0xff]
        %v348 = vld [vmem:[%s201 + $0x308] sm:$0xff]
        %v349 = vld [vmem:[%s201 + $0x310] sm:$0xff]
        %v350 = vld [vmem:[%s201 + $0x318] sm:$0xff]
        %v351 = vld [vmem:[%s201 + $0x320] sm:$0xff]
        %v352 = vld [vmem:[%s201 + $0x328] sm:$0xff]
        %v353 = vld [vmem:[%s201 + $0x330] sm:$0xff]
        %v354 = vld [vmem:[%s201 + $0x338] sm:$0xff]
        %v355 = vld [vmem:[%s201 + $0x340] sm:$0xff]
        %v356 = vld [vmem:[%s201 + $0x348] sm:$0xff]
        %v357 = vld [vmem:[%s201 + $0x350] sm:$0xff]
        %v358 = vld [vmem:[%s201 + $0x358] sm:$0xff]
        %v359 = vld [vmem:[%s201 + $0x360] sm:$0xff]
        %v360 = vld [vmem:[%s201 + $0x368] sm:$0xff]
        %v361 = vld [vmem:[%s201 + $0x370] sm:$0xff]
        %v362 = vld [vmem:[%s201 + $0x378] sm:$0xff]
        %v363 = vld [vmem:[%s201 + $0x380] sm:$0xff]
        %v364 = vld [vmem:[%s201 + $0x388] sm:$0xff]
        %v365 = vld [vmem:[%s201 + $0x390] sm:$0xff]
        %v366 = vld [vmem:[%s201 + $0x398] sm:$0xff]
        %v367 = vld [vmem:[%s201 + $0x3a0] sm:$0xff]
        %v368 = vld [vmem:[%s201 + $0x3a8] sm:$0xff]
        %v369 = vld [vmem:[%s201 + $0x3b0] sm:$0xff]
        %v370 = vld [vmem:[%s201 + $0x3b8] sm:$0xff]
        %v371 = vld [vmem:[%s201 + $0x3c0] sm:$0xff]
        %v372 = vld [vmem:[%s201 + $0x3c8] sm:$0xff]
        %v373 = vld [vmem:[%s201 + $0x3d0] sm:$0xff]
        %v374 = vld [vmem:[%s201 + $0x3d8] sm:$0xff]
        %v375 = vld [vmem:[%s201 + $0x3e0] sm:$0xff]
        %v376 = vld [vmem:[%s201 + $0x3e8] sm:$0xff]
        %v377 = vld [vmem:[%s201 + $0x3f0] sm:$0xff]
        %v378 = vld [vmem:[%s201 + $0x3f8] sm:$0xff]
        %v379 = vld [vmem:[%s201 + $0x400] sm:$0xff]
        %v380 = vld [vmem:[%s201 + $0x408] sm:$0xff]
        %v381 = vld [vmem:[%s201 + $0x410] sm:$0xff]
        %v382 = vld [vmem:[%s201 + $0x418] sm:$0xff]
        %v383 = vld [vmem:[%s201 + $0x420] sm:$0xff]
        %v384 = vld [vmem:[%s201 + $0x428] sm:$0xff]
        %v385 = vld [vmem:[%s201 + $0x430] sm:$0xff]
        %v386 = vld [vmem:[%s201 + $0x438] sm:$0xff]
        %v387 = vld [vmem:[%s201 + $0x440] sm:$0xff]
        %v388 = vld [vmem:[%s201 + $0x448] sm:$0xff]
        %v389 = vld [vmem:[%s201 + $0x450] sm:$0xff]
        %v390 = vld [vmem:[%s201 + $0x458] sm:$0xff]
        %v391 = vld [vmem:[%s201 + $0x460] sm:$0xff]
        %v392 = vld [vmem:[%s201 + $0x468] sm:$0xff]
        %v393 = vld [vmem:[%s201 + $0x470] sm:$0xff]
        %v394 = vld [vmem:[%s201 + $0x478] sm:$0xff]
        %v395 = vld [vmem:[%s201 + $0x480] sm:$0xff]
        %v396 = vld [vmem:[%s201 + $0x488] sm:$0xff]
        %v397 = vld [vmem:[%s201 + $0x490] sm:$0xff]
        %v398 = vld [vmem:[%s201 + $0x498] sm:$0xff]
        %v399 = vld [vmem:[%s201 + $0x4a0] sm:$0xff]
        %v400 = vld [vmem:[%s201 + $0x4a8] sm:$0xff]
        %v401 = vld [vmem:[%s201 + $0x4b0] sm:$0xff]
        %v402 = vld [vmem:[%s201 + $0x4b8] sm:$0xff]
        %v403 = vld [vmem:[%s201 + $0x4c0] sm:$0xff]
        %v404 = vld [vmem:[%s201 + $0x4c8] sm:$0xff]
        %v405 = vld [vmem:[%s201 + $0x4d0] sm:$0xff]
        %v406 = vld [vmem:[%s201 + $0x4d8] sm:$0xff]
        %v407 = vld [vmem:[%s201 + $0x4e0] sm:$0xff]
        %v408 = vld [vmem:[%s201 + $0x4e8] sm:$0xff]
        %v409 = vld [vmem:[%s201 + $0x4f0] sm:$0xff]
        %v410 = vld [vmem:[%s201 + $0x4f8] sm:$0xff]
        %v411 = vld [vmem:[%s201 + $0x500] sm:$0xff]
        %v412 = vld [vmem:[%s201 + $0x508] sm:$0xff]
        %v413 = vld [vmem:[%s201 + $0x510] sm:$0xff]
        %v414 = vld [vmem:[%s201 + $0x518] sm:$0xff]
        %v415 = vld [vmem:[%s201 + $0x520] sm:$0xff]
        %v416 = vld [vmem:[%s201 + $0x528] sm:$0xff]
        %v417 = vld [vmem:[%s201 + $0x530] sm:$0xff]
        %v418 = vld [vmem:[%s201 + $0x538] sm:$0xff]
        %v419 = vld [vmem:[%s201 + $0x540] sm:$0xff]
        %v420 = vld [vmem:[%s201 + $0x548] sm:$0xff]
        %v421 = vld [vmem:[%s201 + $0x550] sm:$0xff]
        %v422 = vld [vmem:[%s201 + $0x558] sm:$0xff]
        %v423 = vld [vmem:[%s201 + $0x560] sm:$0xff]
        %v424 = vld [vmem:[%s201 + $0x568] sm:$0xff]
        %v425 = vld [vmem:[%s201 + $0x570] sm:$0xff]
        %v426 = vld [vmem:[%s201 + $0x578] sm:$0xff]
        %v427 = vld [vmem:[%s201 + $0x580] sm:$0xff]
        %v428 = vld [vmem:[%s201 + $0x588] sm:$0xff]
        %v429 = vld [vmem:[%s201 + $0x590] sm:$0xff]
        %v430 = vld [vmem:[%s201 + $0x598] sm:$0xff]
        %v431 = vld [vmem:[%s201 + $0x5a0] sm:$0xff]
        %v432 = vld [vmem:[%s201 + $0x5a8] sm:$0xff]
        %v433 = vld [vmem:[%s201 + $0x5b0] sm:$0xff]
        %v434 = vld [vmem:[%s201 + $0x5b8] sm:$0xff]
        %v435 = vld [vmem:[%s201 + $0x5c0] sm:$0xff]
        %v436 = vld [vmem:[%s201 + $0x5c8] sm:$0xff]
        %v437 = vld [vmem:[%s201 + $0x5d0] sm:$0xff]
        %v438 = vld [vmem:[%s201 + $0x5d8] sm:$0xff]
        %v439 = vld [vmem:[%s201 + $0x5e0] sm:$0xff]
        %v440 = vld [vmem:[%s201 + $0x5e8] sm:$0xff]
        %v441 = vld [vmem:[%s201 + $0x5f0] sm:$0xff]
        %v442 = vld [vmem:[%s201 + $0x5f8] sm:$0xff]
        %v443 = vld [vmem:[%s201 + $0x600] sm:$0xff]
        %v444 = vld [vmem:[%s201 + $0x608] sm:$0xff]
        %v445 = vld [vmem:[%s201 + $0x610] sm:$0xff]
        %v446 = vld [vmem:[%s201 + $0x618] sm:$0xff]
        %v447 = vld [vmem:[%s201 + $0x620] sm:$0xff]
        %v448 = vld [vmem:[%s201 + $0x628] sm:$0xff]
        %v449 = vld [vmem:[%s201 + $0x630] sm:$0xff]
        %v450 = vld [vmem:[%s201 + $0x638] sm:$0xff]
        %v451 = vld [vmem:[%s201 + $0x640] sm:$0xff]
        %v452 = vld [vmem:[%s201 + $0x648] sm:$0xff]
        %v453 = vld [vmem:[%s201 + $0x650] sm:$0xff]
        %v454 = vld [vmem:[%s201 + $0x658] sm:$0xff]
        %v455 = vld [vmem:[%s201 + $0x660] sm:$0xff]
        %v456 = vld [vmem:[%s201 + $0x668] sm:$0xff]
        %v457 = vld [vmem:[%s201 + $0x670] sm:$0xff]
        %v458 = vld [vmem:[%s201 + $0x678] sm:$0xff]
        %v459 = vld [vmem:[%s201 + $0x680] sm:$0xff]
        %v460 = vld [vmem:[%s201 + $0x688] sm:$0xff]
        %v461 = vld [vmem:[%s201 + $0x690] sm:$0xff]
        %v462 = vld [vmem:[%s201 + $0x698] sm:$0xff]
        %v463 = vld [vmem:[%s201 + $0x6a0] sm:$0xff]
        %v464 = vld [vmem:[%s201 + $0x6a8] sm:$0xff]
        %v465 = vld [vmem:[%s201 + $0x6b0] sm:$0xff]
        %v466 = vld [vmem:[%s201 + $0x6b8] sm:$0xff]
        %v467 = vld [vmem:[%s201 + $0x6c0] sm:$0xff]
        %v468 = vld [vmem:[%s201 + $0x6c8] sm:$0xff]
        %v469 = vld [vmem:[%s201 + $0x6d0] sm:$0xff]
        %v470 = vld [vmem:[%s201 + $0x6d8] sm:$0xff]
        %v471 = vld [vmem:[%s201 + $0x6e0] sm:$0xff]
        %v472 = vld [vmem:[%s201 + $0x6e8] sm:$0xff]
        %v473 = vld [vmem:[%s201 + $0x6f0] sm:$0xff]
        %v474 = vld [vmem:[%s201 + $0x6f8] sm:$0xff]
        %v475 = vld [vmem:[%s201 + $0x700] sm:$0xff]
        %v476 = vld [vmem:[%s201 + $0x708] sm:$0xff]
        %v477 = vld [vmem:[%s201 + $0x710] sm:$0xff]
        %v478 = vld [vmem:[%s201 + $0x718] sm:$0xff]
        %v479 = vld [vmem:[%s201 + $0x720] sm:$0xff]
        %v480 = vld [vmem:[%s201 + $0x728] sm:$0xff]
        %v481 = vld [vmem:[%s201 + $0x730] sm:$0xff]
        %v482 = vld [vmem:[%s201 + $0x738] sm:$0xff]
        %v483 = vld [vmem:[%s201 + $0x740] sm:$0xff]
        %v484 = vld [vmem:[%s201 + $0x748] sm:$0xff]
        %v485 = vld [vmem:[%s201 + $0x750] sm:$0xff]
        %v486 = vld [vmem:[%s201 + $0x758] sm:$0xff]
        %v487 = vld [vmem:[%s201 + $0x760] sm:$0xff]
        %v488 = vld [vmem:[%s201 + $0x768] sm:$0xff]
        %v489 = vld [vmem:[%s201 + $0x770] sm:$0xff]
        %v490 = vld [vmem:[%s201 + $0x778] sm:$0xff]
        %v491 = vld [vmem:[%s201 + $0x780] sm:$0xff]
        %v492 = vld [vmem:[%s201 + $0x788] sm:$0xff]
        %v493 = vld [vmem:[%s201 + $0x790] sm:$0xff]
        %v494 = vld [vmem:[%s201 + $0x798] sm:$0xff]
        %v495 = vld [vmem:[%s201 + $0x7a0] sm:$0xff]
        %v496 = vld [vmem:[%s201 + $0x7a8] sm:$0xff]
        %v497 = vld [vmem:[%s201 + $0x7b0] sm:$0xff]
        %v498 = vld [vmem:[%s201 + $0x7b8] sm:$0xff]
        %v499 = vld [vmem:[%s201 + $0x7c0] sm:$0xff]
        %v500 = vld [vmem:[%s201 + $0x7c8] sm:$0xff]
        %v501 = vld [vmem:[%s201 + $0x7d0] sm:$0xff]
        %v502 = vld [vmem:[%s201 + $0x7d8] sm:$0xff]
        %v503 = vld [vmem:[%s201 + $0x7e0] sm:$0xff]
        %v504 = vld [vmem:[%s201 + $0x7e8] sm:$0xff]
        %v505 = vld [vmem:[%s201 + $0x7f0] sm:$0xff]
        %v506 = vld [vmem:[%s201 + $0x7f8] sm:$0xff]
        %v507 = vld [vmem:[%s201 + $0x800] sm:$0xff]
        %v508 = vld [vmem:[%s201 + $0x808] sm:$0xff]
        %v509 = vld [vmem:[%s201 + $0x810] sm:$0xff]
        %v510 = vld [vmem:[%s201 + $0x818] sm:$0xff]
        %v511 = vld [vmem:[%s201 + $0x820] sm:$0xff]
        %v512 = vld [vmem:[%s201 + $0x828] sm:$0xff]
        %v513 = vld [vmem:[%s201 + $0x830] sm:$0xff]
        %v514 = vld [vmem:[%s201 + $0x838] sm:$0xff]
        %v515 = vld [vmem:[%s201 + $0x840] sm:$0xff]
        %v516 = vld [vmem:[%s201 + $0x848] sm:$0xff]
        %v517 = vld [vmem:[%s201 + $0x850] sm:$0xff]
        %v518 = vld [vmem:[%s201 + $0x858] sm:$0xff]
        %v519 = vld [vmem:[%s201 + $0x860] sm:$0xff]
        %v520 = vld [vmem:[%s201 + $0x868] sm:$0xff]
        %v521 = vld [vmem:[%s201 + $0x870] sm:$0xff]
        %v522 = vld [vmem:[%s201 + $0x878] sm:$0xff]
        %v523 = vld [vmem:[%s201 + $0x880] sm:$0xff]
        %v524 = vld [vmem:[%s201 + $0x888] sm:$0xff]
        %v525 = vld [vmem:[%s201 + $0x890] sm:$0xff]
        %v526 = vld [vmem:[%s201 + $0x898] sm:$0xff]
        %v527 = vld [vmem:[%s201 + $0x8a0] sm:$0xff]
        %v528 = vld [vmem:[%s201 + $0x8a8] sm:$0xff]
        %v529 = vld [vmem:[%s201 + $0x8b0] sm:$0xff]
        %v530 = vld [vmem:[%s201 + $0x8b8] sm:$0xff]
        %v531 = vld [vmem:[%s201 + $0x8c0] sm:$0xff]
        %v532 = vld [vmem:[%s201 + $0x8c8] sm:$0xff]
        %v533 = vld [vmem:[%s201 + $0x8d0] sm:$0xff]
        %v534 = vld [vmem:[%s201 + $0x8d8] sm:$0xff]
        %v535 = vld [vmem:[%s201 + $0x8e0] sm:$0xff]
        %v536 = vld [vmem:[%s201 + $0x8e8] sm:$0xff]
        %v537 = vld [vmem:[%s201 + $0x8f0] sm:$0xff]
        %v538 = vld [vmem:[%s201 + $0x8f8] sm:$0xff]
        %v539 = vld [vmem:[%s201 + $0x900] sm:$0xff]
        %v540 = vld [vmem:[%s201 + $0x908] sm:$0xff]
        %v541 = vld [vmem:[%s201 + $0x910] sm:$0xff]
        %v542 = vld [vmem:[%s201 + $0x918] sm:$0xff]
        %v543 = vld [vmem:[%s201 + $0x920] sm:$0xff]
        %v544 = vld [vmem:[%s201 + $0x928] sm:$0xff]
        %v545 = vld [vmem:[%s201 + $0x930] sm:$0xff]
        %v546 = vld [vmem:[%s201 + $0x938] sm:$0xff]
        %v547 = vld [vmem:[%s201 + $0x940] sm:$0xff]
        %v548 = vld [vmem:[%s201 + $0x948] sm:$0xff]
        %v549 = vld [vmem:[%s201 + $0x950] sm:$0xff]
        %v550 = vld [vmem:[%s201 + $0x958] sm:$0xff]
        %v551 = vld [vmem:[%s201 + $0x960] sm:$0xff]
        %v552 = vld [vmem:[%s201 + $0x968] sm:$0xff]
        %v553 = vld [vmem:[%s201 + $0x970] sm:$0xff]
        %v554 = vld [vmem:[%s201 + $0x978] sm:$0xff]
        %v555 = vld [vmem:[%s201 + $0x980] sm:$0xff]
        %v556 = vld [vmem:[%s201 + $0x988] sm:$0xff]
        %v557 = vld [vmem:[%s201 + $0x990] sm:$0xff]
        %v558 = vld [vmem:[%s201 + $0x998] sm:$0xff]
        %v559 = vld [vmem:[%s201 + $0x9a0] sm:$0xff]
        %v560 = vld [vmem:[%s201 + $0x9a8] sm:$0xff]
        %v561 = vld [vmem:[%s201 + $0x9b0] sm:$0xff]
        %v562 = vld [vmem:[%s201 + $0x9b8] sm:$0xff]
        %v563 = vld [vmem:[%s201 + $0x9c0] sm:$0xff]
        %v564 = vld [vmem:[%s201 + $0x9c8] sm:$0xff]
        %v565 = vld [vmem:[%s201 + $0x9d0] sm:$0xff]
        %v566 = vld [vmem:[%s201 + $0x9d8] sm:$0xff]
        %v567 = vld [vmem:[%s201 + $0x9e0] sm:$0xff]
        %v568 = vld [vmem:[%s201 + $0x9e8] sm:$0xff]
        %v569 = vld [vmem:[%s201 + $0x9f0] sm:$0xff]
        %v570 = vld [vmem:[%s201 + $0x9f8] sm:$0xff]
        %v571 = vld [vmem:[%s201 + $0xa00] sm:$0xff]
        %v572 = vld [vmem:[%s201 + $0xa08] sm:$0xff]
        %v573 = vld [vmem:[%s201 + $0xa10] sm:$0xff]
        %v574 = vld [vmem:[%s201 + $0xa18] sm:$0xff]
        %v575 = vld [vmem:[%s201 + $0xa20] sm:$0xff]
        %v576 = vld [vmem:[%s201 + $0xa28] sm:$0xff]
        %v577 = vld [vmem:[%s201 + $0xa30] sm:$0xff]
        %v578 = vld [vmem:[%s201 + $0xa38] sm:$0xff]
        %v579 = vld [vmem:[%s201 + $0xa40] sm:$0xff]
        %v580 = vld [vmem:[%s201 + $0xa48] sm:$0xff]
        %v581 = vld [vmem:[%s201 + $0xa50] sm:$0xff]
        %v582 = vld [vmem:[%s201 + $0xa58] sm:$0xff]
        %v583 = vld [vmem:[%s201 + $0xa60] sm:$0xff]
        %v584 = vld [vmem:[%s201 + $0xa68] sm:$0xff]
        %v585 = vld [vmem:[%s201 + $0xa70] sm:$0xff]
        %v586 = vld [vmem:[%s201 + $0xa78] sm:$0xff]
        %v587 = vld [vmem:[%s201 + $0xa80] sm:$0xff]
        %v588 = vld [vmem:[%s201 + $0xa88] sm:$0xff]
        %v589 = vld [vmem:[%s201 + $0xa90] sm:$0xff]
        %v590 = vld [vmem:[%s201 + $0xa98] sm:$0xff]
        %v591 = vld [vmem:[%s201 + $0xaa0] sm:$0xff]
        %v592 = vld [vmem:[%s201 + $0xaa8] sm:$0xff]
        %v593 = vld [vmem:[%s201 + $0xab0] sm:$0xff]
        %v594 = vld [vmem:[%s201 + $0xab8] sm:$0xff]
        %v595 = vld [vmem:[%s201 + $0xac0] sm:$0xff]
        %v596 = vld [vmem:[%s201 + $0xac8] sm:$0xff]
        %v597 = vld [vmem:[%s201 + $0xad0] sm:$0xff]
        %v598 = vld [vmem:[%s201 + $0xad8] sm:$0xff]
        %v599 = vld [vmem:[%s201 + $0xae0] sm:$0xff]
        %v600 = vld [vmem:[%s201 + $0xae8] sm:$0xff]
        %v601 = vld [vmem:[%s201 + $0xaf0] sm:$0xff]
        %v602 = vld [vmem:[%s201 + $0xaf8] sm:$0xff]
        %v603 = vld [vmem:[%s201 + $0xb00] sm:$0xff]
        %v604 = vld [vmem:[%s201 + $0xb08] sm:$0xff]
        %v605 = vld [vmem:[%s201 + $0xb10] sm:$0xff]
        %v606 = vld [vmem:[%s201 + $0xb18] sm:$0xff]
        %v607 = vld [vmem:[%s201 + $0xb20] sm:$0xff]
        %v608 = vld [vmem:[%s201 + $0xb28] sm:$0xff]
        %v609 = vld [vmem:[%s201 + $0xb30] sm:$0xff]
        %v610 = vld [vmem:[%s201 + $0xb38] sm:$0xff]
        %v611 = vld [vmem:[%s201 + $0xb40] sm:$0xff]
        %v612 = vld [vmem:[%s201 + $0xb48] sm:$0xff]
        %v613 = vld [vmem:[%s201 + $0xb50] sm:$0xff]
        %v614 = vld [vmem:[%s201 + $0xb58] sm:$0xff]
        %v615 = vld [vmem:[%s201 + $0xb60] sm:$0xff]
        %v616 = vld [vmem:[%s201 + $0xb68] sm:$0xff]
        %v617 = vld [vmem:[%s201 + $0xb70] sm:$0xff]
        %v618 = vld [vmem:[%s201 + $0xb78] sm:$0xff]
        %v619 = vld [vmem:[%s201 + $0xb80] sm:$0xff]
        %v620 = vld [vmem:[%s201 + $0xb88] sm:$0xff]
        %v621 = vld [vmem:[%s201 + $0xb90] sm:$0xff]
        %v622 = vld [vmem:[%s201 + $0xb98] sm:$0xff]
        %v623 = vld [vmem:[%s201 + $0xba0] sm:$0xff]
        %v624 = vld [vmem:[%s201 + $0xba8] sm:$0xff]
        %v625 = vld [vmem:[%s201 + $0xbb0] sm:$0xff]
        %v626 = vld [vmem:[%s201 + $0xbb8] sm:$0xff]
        %v627 = vld [vmem:[%s201 + $0xbc0] sm:$0xff]
        %v628 = vld [vmem:[%s201 + $0xbc8] sm:$0xff]
        %v629 = vld [vmem:[%s201 + $0xbd0] sm:$0xff]
        %v630 = vld [vmem:[%s201 + $0xbd8] sm:$0xff]
        %v631 = vld [vmem:[%s201 + $0xbe0] sm:$0xff]
        %v632 = vld [vmem:[%s201 + $0xbe8] sm:$0xff]
        %v633 = vld [vmem:[%s201 + $0xbf0] sm:$0xff]
        %v634 = vld [vmem:[%s201 + $0xbf8] sm:$0xff]
        %v635 = vld [vmem:[%s201 + $0xc00] sm:$0xff]
        %v636 = vld [vmem:[%s201 + $0xc08] sm:$0xff]
        %v637 = vld [vmem:[%s201 + $0xc10] sm:$0xff]
        %v638 = vld [vmem:[%s201 + $0xc18] sm:$0xff]
        %v639 = vld [vmem:[%s201 + $0xc20] sm:$0xff]
        %v640 = vld [vmem:[%s201 + $0xc28] sm:$0xff]
        %v641 = vld [vmem:[%s201 + $0xc30] sm:$0xff]
        %v642 = vld [vmem:[%s201 + $0xc38] sm:$0xff]
        %v643 = vld [vmem:[%s201 + $0xc40] sm:$0xff]
        %v644 = vld [vmem:[%s201 + $0xc48] sm:$0xff]
        %v645 = vld [vmem:[%s201 + $0xc50] sm:$0xff]
        %v646 = vld [vmem:[%s201 + $0xc58] sm:$0xff]
        %v647 = vld [vmem:[%s201 + $0xc60] sm:$0xff]
        %v648 = vld [vmem:[%s201 + $0xc68] sm:$0xff]
        %v649 = vld [vmem:[%s201 + $0xc70] sm:$0xff]
        %v650 = vld [vmem:[%s201 + $0xc78] sm:$0xff]
        %v651 = vld [vmem:[%s201 + $0xc80] sm:$0xff]
        %v652 = vld [vmem:[%s201 + $0xc88] sm:$0xff]
        %v653 = vld [vmem:[%s201 + $0xc90] sm:$0xff]
        %v654 = vld [vmem:[%s201 + $0xc98] sm:$0xff]
        %v655 = vld [vmem:[%s201 + $0xca0] sm:$0xff]
        %v656 = vld [vmem:[%s201 + $0xca8] sm:$0xff]
        %v657 = vld [vmem:[%s201 + $0xcb0] sm:$0xff]
        %v658 = vld [vmem:[%s201 + $0xcb8] sm:$0xff]
        %v659 = vld [vmem:[%s201 + $0xcc0] sm:$0xff]
        %v660 = vld [vmem:[%s201 + $0xcc8] sm:$0xff]
        %v661 = vld [vmem:[%s201 + $0xcd0] sm:$0xff]
        %v662 = vld [vmem:[%s201 + $0xcd8] sm:$0xff]
        %v663 = vld [vmem:[%s201 + $0xce0] sm:$0xff]
        %v664 = vld [vmem:[%s201 + $0xce8] sm:$0xff]
        %v665 = vld [vmem:[%s201 + $0xcf0] sm:$0xff]
        %v666 = vld [vmem:[%s201 + $0xcf8] sm:$0xff]
        %v667 = vld [vmem:[%s201 + $0xd00] sm:$0xff]
        %v668 = vld [vmem:[%s201 + $0xd08] sm:$0xff]
        %v669 = vld [vmem:[%s201 + $0xd10] sm:$0xff]
        %v670 = vld [vmem:[%s201 + $0xd18] sm:$0xff]
        %v671 = vld [vmem:[%s201 + $0xd20] sm:$0xff]
        %v672 = vld [vmem:[%s201 + $0xd28] sm:$0xff]
        %v673 = vld [vmem:[%s201 + $0xd30] sm:$0xff]
        %v674 = vld [vmem:[%s201 + $0xd38] sm:$0xff]
        %v675 = vld [vmem:[%s201 + $0xd40] sm:$0xff]
        %v676 = vld [vmem:[%s201 + $0xd48] sm:$0xff]
        %v677 = vld [vmem:[%s201 + $0xd50] sm:$0xff]
        %v678 = vld [vmem:[%s201 + $0xd58] sm:$0xff]
        %v679 = vld [vmem:[%s201 + $0xd60] sm:$0xff]
        %v680 = vld [vmem:[%s201 + $0xd68] sm:$0xff]
        %v681 = vld [vmem:[%s201 + $0xd70] sm:$0xff]
        %v682 = vld [vmem:[%s201 + $0xd78] sm:$0xff]
        %v683 = vld [vmem:[%s201 + $0xd80] sm:$0xff]
        %v684 = vld [vmem:[%s201 + $0xd88] sm:$0xff]
        %v685 = vld [vmem:[%s201 + $0xd90] sm:$0xff]
        %v686 = vld [vmem:[%s201 + $0xd98] sm:$0xff]
        %v687 = vld [vmem:[%s201 + $0xda0] sm:$0xff]
        %v688 = vld [vmem:[%s201 + $0xda8] sm:$0xff]
        %v689 = vld [vmem:[%s201 + $0xdb0] sm:$0xff]
        %v690 = vld [vmem:[%s201 + $0xdb8] sm:$0xff]
        %v691 = vld [vmem:[%s201 + $0xdc0] sm:$0xff]
        %v692 = vld [vmem:[%s201 + $0xdc8] sm:$0xff]
        %v693 = vld [vmem:[%s201 + $0xdd0] sm:$0xff]
        %v694 = vld [vmem:[%s201 + $0xdd8] sm:$0xff]
        %v695 = vld [vmem:[%s201 + $0xde0] sm:$0xff]
        %v696 = vld [vmem:[%s201 + $0xde8] sm:$0xff]
        %v697 = vld [vmem:[%s201 + $0xdf0] sm:$0xff]
        %v698 = vld [vmem:[%s201 + $0xdf8] sm:$0xff]
        %v699 = vld [vmem:[%s201 + $0xe00] sm:$0xff]
        %v700 = vld [vmem:[%s201 + $0xe08] sm:$0xff]
        %v701 = vld [vmem:[%s201 + $0xe10] sm:$0xff]
        %v702 = vld [vmem:[%s201 + $0xe18] sm:$0xff]
        %v703 = vld [vmem:[%s201 + $0xe20] sm:$0xff]
        %v704 = vld [vmem:[%s201 + $0xe28] sm:$0xff]
        %v705 = vld [vmem:[%s201 + $0xe30] sm:$0xff]
        %v706 = vld [vmem:[%s201 + $0xe38] sm:$0xff]
        %v707 = vld [vmem:[%s201 + $0xe40] sm:$0xff]
        %v708 = vld [vmem:[%s201 + $0xe48] sm:$0xff]
        %v709 = vld [vmem:[%s201 + $0xe50] sm:$0xff]
        %v710 = vld [vmem:[%s201 + $0xe58] sm:$0xff]
        %v711 = vld [vmem:[%s201 + $0xe60] sm:$0xff]
        %v712 = vld [vmem:[%s201 + $0xe68] sm:$0xff]
        %v713 = vld [vmem:[%s201 + $0xe70] sm:$0xff]
        %v714 = vld [vmem:[%s201 + $0xe78] sm:$0xff]
        %v715 = vld [vmem:[%s201 + $0xe80] sm:$0xff]
        %v716 = vld [vmem:[%s201 + $0xe88] sm:$0xff]
        %v717 = vld [vmem:[%s201 + $0xe90] sm:$0xff]
        %v718 = vld [vmem:[%s201 + $0xe98] sm:$0xff]
        %v719 = vld [vmem:[%s201 + $0xea0] sm:$0xff]
        %v720 = vld [vmem:[%s201 + $0xea8] sm:$0xff]
        %v721 = vld [vmem:[%s201 + $0xeb0] sm:$0xff]
        %v722 = vld [vmem:[%s201 + $0xeb8] sm:$0xff]
        %v723 = vld [vmem:[%s201 + $0xec0] sm:$0xff]
        %v724 = vld [vmem:[%s201 + $0xec8] sm:$0xff]
        %v725 = vld [vmem:[%s201 + $0xed0] sm:$0xff]
        %v726 = vld [vmem:[%s201 + $0xed8] sm:$0xff]
        %v727 = vld [vmem:[%s201 + $0xee0] sm:$0xff]
        %v728 = vld [vmem:[%s201 + $0xee8] sm:$0xff]
        %v729 = vld [vmem:[%s201 + $0xef0] sm:$0xff]
        %v730 = vld [vmem:[%s201 + $0xef8] sm:$0xff]
        %v731 = vld [vmem:[%s201 + $0xf00] sm:$0xff]
        %v732 = vld [vmem:[%s201 + $0xf08] sm:$0xff]
        %v733 = vld [vmem:[%s201 + $0xf10] sm:$0xff]
        %v734 = vld [vmem:[%s201 + $0xf18] sm:$0xff]
        %v735 = vld [vmem:[%s201 + $0xf20] sm:$0xff]
        %v736 = vld [vmem:[%s201 + $0xf28] sm:$0xff]
        %v737 = vld [vmem:[%s201 + $0xf30] sm:$0xff]
        %v738 = vld [vmem:[%s201 + $0xf38] sm:$0xff]
        %v739 = vld [vmem:[%s201 + $0xf40] sm:$0xff]
        %v740 = vld [vmem:[%s201 + $0xf48] sm:$0xff]
        %v741 = vld [vmem:[%s201 + $0xf50] sm:$0xff]
        %v742 = vld [vmem:[%s201 + $0xf58] sm:$0xff]
        %v743 = vld [vmem:[%s201 + $0xf60] sm:$0xff]
        %v744 = vld [vmem:[%s201 + $0xf68] sm:$0xff]
        %v745 = vld [vmem:[%s201 + $0xf70] sm:$0xff]
        %v746 = vld [vmem:[%s201 + $0xf78] sm:$0xff]
        %v747 = vld [vmem:[%s201 + $0xf80] sm:$0xff]
        %v748 = vld [vmem:[%s201 + $0xf88] sm:$0xff]
        %v749 = vld [vmem:[%s201 + $0xf90] sm:$0xff]
        %v750 = vld [vmem:[%s201 + $0xf98] sm:$0xff]
        %v751 = vld [vmem:[%s201 + $0xfa0] sm:$0xff]
        %v752 = vld [vmem:[%s201 + $0xfa8] sm:$0xff]
        %v753 = vld [vmem:[%s201 + $0xfb0] sm:$0xff]
        %v754 = vld [vmem:[%s201 + $0xfb8] sm:$0xff]
        %v755 = vld [vmem:[%s201 + $0xfc0] sm:$0xff]
        %v756 = vld [vmem:[%s201 + $0xfc8] sm:$0xff]
        %v757 = vld [vmem:[%s201 + $0xfd0] sm:$0xff]
        %v758 = vld [vmem:[%s201 + $0xfd8] sm:$0xff]
        %v759 = vld [vmem:[%s201 + $0xfe0] sm:$0xff]
        %v760 = vld [vmem:[%s201 + $0xfe8] sm:$0xff]
        %v761 = vld [vmem:[%s201 + $0xff0] sm:$0xff]
        %v762 = vld [vmem:[%s201 + $0xff8] sm:$0xff]
        %v763 = vld [vmem:[%s201 + $0x1000] sm:$0xff]
        %v764 = vld [vmem:[%s201 + $0x1008] sm:$0xff]
        %v765 = vld [vmem:[%s201 + $0x1010] sm:$0xff]
        %v766 = vld [vmem:[%s201 + $0x1018] sm:$0xff]
        %v767 = vld [vmem:[%s201 + $0x1020] sm:$0xff]
        %v768 = vld [vmem:[%s201 + $0x1028] sm:$0xff]
        %v769 = vld [vmem:[%s201 + $0x1030] sm:$0xff]
        %v770 = vld [vmem:[%s201 + $0x1038] sm:$0xff]
        %v771 = vld [vmem:[%s201 + $0x1040] sm:$0xff]
        %v772 = vld [vmem:[%s201 + $0x1048] sm:$0xff]
        %v773 = vld [vmem:[%s201 + $0x1050] sm:$0xff]
        %v774 = vld [vmem:[%s201 + $0x1058] sm:$0xff]
        %v775 = vld [vmem:[%s201 + $0x1060] sm:$0xff]
        %v776 = vld [vmem:[%s201 + $0x1068] sm:$0xff]
        %v777 = vld [vmem:[%s201 + $0x1070] sm:$0xff]
        %v778 = vld [vmem:[%s201 + $0x1078] sm:$0xff]
        %v779 = vld [vmem:[%s201 + $0x1080] sm:$0xff]
        %v780 = vld [vmem:[%s201 + $0x1088] sm:$0xff]
        %v781 = vld [vmem:[%s201 + $0x1090] sm:$0xff]
        %v782 = vld [vmem:[%s201 + $0x1098] sm:$0xff]
        %v783 = vld [vmem:[%s201 + $0x10a0] sm:$0xff]
        %v784 = vld [vmem:[%s201 + $0x10a8] sm:$0xff]
        %v785 = vld [vmem:[%s201 + $0x10b0] sm:$0xff]
        %v786 = vld [vmem:[%s201 + $0x10b8] sm:$0xff]
        %v787 = vld [vmem:[%s201 + $0x10c0] sm:$0xff]
        %v788 = vld [vmem:[%s201 + $0x10c8] sm:$0xff]
        %v789 = vld [vmem:[%s201 + $0x10d0] sm:$0xff]
        %v790 = vld [vmem:[%s201 + $0x10d8] sm:$0xff]
        %v791 = vld [vmem:[%s201 + $0x10e0] sm:$0xff]
        %v792 = vld [vmem:[%s201 + $0x10e8] sm:$0xff]
        %v793 = vld [vmem:[%s201 + $0x10f0] sm:$0xff]
        %v794 = vld [vmem:[%s201 + $0x10f8] sm:$0xff]
        %v795 = vld [vmem:[%s201 + $0x1100] sm:$0xff]
        %v796 = vld [vmem:[%s201 + $0x1108] sm:$0xff]
        %v797 = vld [vmem:[%s201 + $0x1110] sm:$0xff]
        %v798 = vld [vmem:[%s201 + $0x1118] sm:$0xff]
        %v799 = vld [vmem:[%s201 + $0x1120] sm:$0xff]
        %v800 = vld [vmem:[%s201 + $0x1128] sm:$0xff]
        %v801 = vld [vmem:[%s201 + $0x1130] sm:$0xff]
        %v802 = vld [vmem:[%s201 + $0x1138] sm:$0xff]
        %v803 = vld [vmem:[%s201 + $0x1140] sm:$0xff]
        %v804 = vld [vmem:[%s201 + $0x1148] sm:$0xff]
        %v805 = vld [vmem:[%s201 + $0x1150] sm:$0xff]
        %v806 = vld [vmem:[%s201 + $0x1158] sm:$0xff]
        %v807 = vld [vmem:[%s201 + $0x1160] sm:$0xff]
        %v808 = vld [vmem:[%s201 + $0x1168] sm:$0xff]
        %v809 = vld [vmem:[%s201 + $0x1170] sm:$0xff]
        %v810 = vld [vmem:[%s201 + $0x1178] sm:$0xff]
        %v811 = vld [vmem:[%s246] sm:$0xff]
        %v812 = vld [vmem:[%s246 + $0x8] sm:$0xff]
        %v813 = vld [vmem:[%s246 + $0x10] sm:$0xff]
        %v814 = vld [vmem:[%s246 + $0x18] sm:$0xff]
        %v815 = vld [vmem:[%s246 + $0x20] sm:$0xff]
        %v816 = vld [vmem:[%s246 + $0x28] sm:$0xff]
        %v817 = vld [vmem:[%s246 + $0x30] sm:$0xff]
        %v818 = vld [vmem:[%s246 + $0x38] sm:$0xff]
        %v819 = vld [vmem:[%s246 + $0x40] sm:$0xff]
        %v820 = vld [vmem:[%s246 + $0x48] sm:$0xff]
        %v821 = vld [vmem:[%s246 + $0x50] sm:$0xff]
        %v822 = vld [vmem:[%s246 + $0x58] sm:$0xff]
        %v823 = vld [vmem:[%s246 + $0x60] sm:$0xff]
        %v824 = vld [vmem:[%s246 + $0x68] sm:$0xff]
        %v825 = vld [vmem:[%s246 + $0x70] sm:$0xff]
        %v826 = vld [vmem:[%s246 + $0x78] sm:$0xff]
        %v827 = vld [vmem:[%s246 + $0x80] sm:$0xff]
        %v828 = vld [vmem:[%s246 + $0x88] sm:$0xff]
        %v829 = vld [vmem:[%s246 + $0x90] sm:$0xff]
        %v830 = vld [vmem:[%s246 + $0x98] sm:$0xff]
        %v831 = vld [vmem:[%s246 + $0xa0] sm:$0xff]
        %v832 = vld [vmem:[%s246 + $0xa8] sm:$0xff]
        %v833 = vld [vmem:[%s246 + $0xb0] sm:$0xff]
        %v834 = vld [vmem:[%s246 + $0xb8] sm:$0xff]
        %v835 = vld [vmem:[%s246 + $0xc0] sm:$0xff]
        %v836 = vld [vmem:[%s246 + $0xc8] sm:$0xff]
        %v837 = vld [vmem:[%s246 + $0xd0] sm:$0xff]
        %v838 = vld [vmem:[%s246 + $0xd8] sm:$0xff]
        %v839 = vld [vmem:[%s246 + $0xe0] sm:$0xff]
        %v840 = vld [vmem:[%s246 + $0xe8] sm:$0xff]
        %v841 = vld [vmem:[%s246 + $0xf0] sm:$0xff]
        %v842 = vld [vmem:[%s246 + $0xf8] sm:$0xff]
        %v843 = vld [vmem:[%s246 + $0x100] sm:$0xff]
        %v844 = vld [vmem:[%s246 + $0x108] sm:$0xff]
        %v845 = vld [vmem:[%s246 + $0x110] sm:$0xff]
        %v846 = vld [vmem:[%s246 + $0x118] sm:$0xff]
        %v847 = vld [vmem:[%s246 + $0x120] sm:$0xff]
        %v848 = vld [vmem:[%s246 + $0x128] sm:$0xff]
        %v849 = vld [vmem:[%s246 + $0x130] sm:$0xff]
        %v850 = vld [vmem:[%s246 + $0x138] sm:$0xff]
        %v851 = vld [vmem:[%s246 + $0x140] sm:$0xff]
        %v852 = vld [vmem:[%s246 + $0x148] sm:$0xff]
        %v853 = vld [vmem:[%s246 + $0x150] sm:$0xff]
        %v854 = vld [vmem:[%s246 + $0x158] sm:$0xff]
        %v855 = vld [vmem:[%s246 + $0x160] sm:$0xff]
        %v856 = vld [vmem:[%s246 + $0x168] sm:$0xff]
        %v857 = vld [vmem:[%s246 + $0x170] sm:$0xff]
        %v858 = vld [vmem:[%s246 + $0x178] sm:$0xff]
        %v859 = vld [vmem:[%s246 + $0x180] sm:$0xff]
        %v860 = vld [vmem:[%s246 + $0x188] sm:$0xff]
        %v861 = vld [vmem:[%s246 + $0x190] sm:$0xff]
        %v862 = vld [vmem:[%s246 + $0x198] sm:$0xff]
        %v863 = vld [vmem:[%s246 + $0x1a0] sm:$0xff]
        %v864 = vld [vmem:[%s246 + $0x1a8] sm:$0xff]
        %v865 = vld [vmem:[%s246 + $0x1b0] sm:$0xff]
        %v866 = vld [vmem:[%s246 + $0x1b8] sm:$0xff]
        %v867 = vld [vmem:[%s246 + $0x1c0] sm:$0xff]
        %v868 = vld [vmem:[%s246 + $0x1c8] sm:$0xff]
        %v869 = vld [vmem:[%s246 + $0x1d0] sm:$0xff]
        %v870 = vld [vmem:[%s246 + $0x1d8] sm:$0xff]
        %v871 = vld [vmem:[%s246 + $0x1e0] sm:$0xff]
        %v872 = vld [vmem:[%s246 + $0x1e8] sm:$0xff]
        %v873 = vld [vmem:[%s246 + $0x1f0] sm:$0xff]
        %v874 = vld [vmem:[%s246 + $0x1f8] sm:$0xff]
        %v875 = vld [vmem:[%s246 + $0x200] sm:$0xff]
        %v876 = vld [vmem:[%s246 + $0x208] sm:$0xff]
        %v877 = vld [vmem:[%s246 + $0x210] sm:$0xff]
        %v878 = vld [vmem:[%s246 + $0x218] sm:$0xff]
        %v879 = vld [vmem:[%s246 + $0x220] sm:$0xff]
        %v880 = vld [vmem:[%s246 + $0x228] sm:$0xff]
        %v881 = vld [vmem:[%s246 + $0x230] sm:$0xff]
        %v882 = vld [vmem:[%s246 + $0x238] sm:$0xff]
        %v883 = vld [vmem:[%s246 + $0x240] sm:$0xff]
        %v884 = vld [vmem:[%s246 + $0x248] sm:$0xff]
        %v885 = vld [vmem:[%s246 + $0x250] sm:$0xff]
        %v886 = vld [vmem:[%s246 + $0x258] sm:$0xff]
        %v887 = vld [vmem:[%s246 + $0x260] sm:$0xff]
        %v888 = vld [vmem:[%s246 + $0x268] sm:$0xff]
        %v889 = vld [vmem:[%s246 + $0x270] sm:$0xff]
        %v890 = vld [vmem:[%s246 + $0x278] sm:$0xff]
        %v891 = vld [vmem:[%s246 + $0x280] sm:$0xff]
        %v892 = vld [vmem:[%s246 + $0x288] sm:$0xff]
        %v893 = vld [vmem:[%s246 + $0x290] sm:$0xff]
        %v894 = vld [vmem:[%s246 + $0x298] sm:$0xff]
        %v895 = vld [vmem:[%s246 + $0x2a0] sm:$0xff]
        %v896 = vld [vmem:[%s246 + $0x2a8] sm:$0xff]
        %v897 = vld [vmem:[%s246 + $0x2b0] sm:$0xff]
        %v898 = vld [vmem:[%s246 + $0x2b8] sm:$0xff]
        %v899 = vld [vmem:[%s246 + $0x2c0] sm:$0xff]
        %v900 = vld [vmem:[%s246 + $0x2c8] sm:$0xff]
        %v901 = vld [vmem:[%s246 + $0x2d0] sm:$0xff]
        %v902 = vld [vmem:[%s246 + $0x2d8] sm:$0xff]
        %v903 = vld [vmem:[%s246 + $0x2e0] sm:$0xff]
        %v904 = vld [vmem:[%s246 + $0x2e8] sm:$0xff]
        %v905 = vld [vmem:[%s246 + $0x2f0] sm:$0xff]
        %v906 = vld [vmem:[%s246 + $0x2f8] sm:$0xff]
        %v907 = vld [vmem:[%s246 + $0x300] sm:$0xff]
        %v908 = vld [vmem:[%s246 + $0x308] sm:$0xff]
        %v909 = vld [vmem:[%s246 + $0x310] sm:$0xff]
        %v910 = vld [vmem:[%s246 + $0x318] sm:$0xff]
        %v911 = vld [vmem:[%s246 + $0x320] sm:$0xff]
        %v912 = vld [vmem:[%s246 + $0x328] sm:$0xff]
        %v913 = vld [vmem:[%s246 + $0x330] sm:$0xff]
        %v914 = vld [vmem:[%s246 + $0x338] sm:$0xff]
        %v915 = vld [vmem:[%s246 + $0x340] sm:$0xff]
        %v916 = vld [vmem:[%s246 + $0x348] sm:$0xff]
        %v917 = vld [vmem:[%s246 + $0x350] sm:$0xff]
        %v918 = vld [vmem:[%s246 + $0x358] sm:$0xff]
        %v919 = vld [vmem:[%s246 + $0x360] sm:$0xff]
        %v920 = vld [vmem:[%s246 + $0x368] sm:$0xff]
        %v921 = vld [vmem:[%s246 + $0x370] sm:$0xff]
        %v922 = vld [vmem:[%s246 + $0x378] sm:$0xff]
        %v923 = vld [vmem:[%s239] sm:$0xff]
        %v924 = vld [vmem:[%s239 + $0x8] sm:$0xff]
        %v925 = vld [vmem:[%s239 + $0x10] sm:$0xff]
        %v926 = vld [vmem:[%s239 + $0x18] sm:$0xff]
        %v927 = vld [vmem:[%s239 + $0x20] sm:$0xff]
        %v928 = vld [vmem:[%s239 + $0x28] sm:$0xff]
        %v929 = vld [vmem:[%s239 + $0x30] sm:$0xff]
        %v930 = vld [vmem:[%s239 + $0x38] sm:$0xff]
        %v931 = vld [vmem:[%s239 + $0x40] sm:$0xff]
        %v932 = vld [vmem:[%s239 + $0x48] sm:$0xff]
        %v933 = vld [vmem:[%s239 + $0x50] sm:$0xff]
        %v934 = vld [vmem:[%s239 + $0x58] sm:$0xff]
        %v935 = vld [vmem:[%s239 + $0x60] sm:$0xff]
        %v936 = vld [vmem:[%s239 + $0x68] sm:$0xff]
        %v937 = vld [vmem:[%s239 + $0x70] sm:$0xff]
        %v938 = vld [vmem:[%s239 + $0x78] sm:$0xff]
        %v939 = vld [vmem:[%s239 + $0x80] sm:$0xff]
        %v940 = vld [vmem:[%s239 + $0x88] sm:$0xff]
        %v941 = vld [vmem:[%s239 + $0x90] sm:$0xff]
        %v942 = vld [vmem:[%s239 + $0x98] sm:$0xff]
        %v943 = vld [vmem:[%s239 + $0xa0] sm:$0xff]
        %v944 = vld [vmem:[%s239 + $0xa8] sm:$0xff]
        %v945 = vld [vmem:[%s239 + $0xb0] sm:$0xff]
        %v946 = vld [vmem:[%s239 + $0xb8] sm:$0xff]
        %v947 = vld [vmem:[%s239 + $0xc0] sm:$0xff]
        %v948 = vld [vmem:[%s239 + $0xc8] sm:$0xff]
        %v949 = vld [vmem:[%s239 + $0xd0] sm:$0xff]
        %v950 = vld [vmem:[%s239 + $0xd8] sm:$0xff]
        %v951 = vld [vmem:[%s239 + $0xe0] sm:$0xff]
        %v952 = vld [vmem:[%s239 + $0xe8] sm:$0xff]
        %v953 = vld [vmem:[%s239 + $0xf0] sm:$0xff]
        %v954 = vld [vmem:[%s239 + $0xf8] sm:$0xff]
        %v955 = vld [vmem:[%s239 + $0x100] sm:$0xff]
        %v956 = vld [vmem:[%s239 + $0x108] sm:$0xff]
        %v957 = vld [vmem:[%s239 + $0x110] sm:$0xff]
        %v958 = vld [vmem:[%s239 + $0x118] sm:$0xff]
        %v959 = vld [vmem:[%s239 + $0x120] sm:$0xff]
        %v960 = vld [vmem:[%s239 + $0x128] sm:$0xff]
        %v961 = vld [vmem:[%s239 + $0x130] sm:$0xff]
        %v962 = vld [vmem:[%s239 + $0x138] sm:$0xff]
        %v963 = vld [vmem:[%s239 + $0x140] sm:$0xff]
        %v964 = vld [vmem:[%s239 + $0x148] sm:$0xff]
        %v965 = vld [vmem:[%s239 + $0x150] sm:$0xff]
        %v966 = vld [vmem:[%s239 + $0x158] sm:$0xff]
        %v967 = vld [vmem:[%s239 + $0x160] sm:$0xff]
        %v968 = vld [vmem:[%s239 + $0x168] sm:$0xff]
        %v969 = vld [vmem:[%s239 + $0x170] sm:$0xff]
        %v970 = vld [vmem:[%s239 + $0x178] sm:$0xff]
        %v971 = vld [vmem:[%s239 + $0x180] sm:$0xff]
        %v972 = vld [vmem:[%s239 + $0x188] sm:$0xff]
        %v973 = vld [vmem:[%s239 + $0x190] sm:$0xff]
        %v974 = vld [vmem:[%s239 + $0x198] sm:$0xff]
        %v975 = vld [vmem:[%s239 + $0x1a0] sm:$0xff]
        %v976 = vld [vmem:[%s239 + $0x1a8] sm:$0xff]
        %v977 = vld [vmem:[%s239 + $0x1b0] sm:$0xff]
        %v978 = vld [vmem:[%s239 + $0x1b8] sm:$0xff]
        %v979 = vld [vmem:[%s239 + $0x1c0] sm:$0xff]
        %v980 = vld [vmem:[%s239 + $0x1c8] sm:$0xff]
        %v981 = vld [vmem:[%s239 + $0x1d0] sm:$0xff]
        %v982 = vld [vmem:[%s239 + $0x1d8] sm:$0xff]
        %v983 = vld [vmem:[%s239 + $0x1e0] sm:$0xff]
        %v984 = vld [vmem:[%s239 + $0x1e8] sm:$0xff]
        %v985 = vld [vmem:[%s239 + $0x1f0] sm:$0xff]
        %v986 = vld [vmem:[%s239 + $0x1f8] sm:$0xff]
        %v987 = vld [vmem:[%s239 + $0x200] sm:$0xff]
        %v988 = vld [vmem:[%s239 + $0x208] sm:$0xff]
        %v989 = vld [vmem:[%s239 + $0x210] sm:$0xff]
        %v990 = vld [vmem:[%s239 + $0x218] sm:$0xff]
        %v991 = vld [vmem:[%s239 + $0x220] sm:$0xff]
        %v992 = vld [vmem:[%s239 + $0x228] sm:$0xff]
        %v993 = vld [vmem:[%s239 + $0x230] sm:$0xff]
        %v994 = vld [vmem:[%s239 + $0x238] sm:$0xff]
        %v995 = vld [vmem:[%s239 + $0x240] sm:$0xff]
        %v996 = vld [vmem:[%s239 + $0x248] sm:$0xff]
        %v997 = vld [vmem:[%s239 + $0x250] sm:$0xff]
        %v998 = vld [vmem:[%s239 + $0x258] sm:$0xff]
        %v999 = vld [vmem:[%s239 + $0x260] sm:$0xff]
        %v1000 = vld [vmem:[%s239 + $0x268] sm:$0xff]
        %v1001 = vld [vmem:[%s239 + $0x270] sm:$0xff]
        %v1002 = vld [vmem:[%s239 + $0x278] sm:$0xff]
        %v1003 = vld [vmem:[%s239 + $0x280] sm:$0xff]
        %v1004 = vld [vmem:[%s239 + $0x288] sm:$0xff]
        %v1005 = vld [vmem:[%s239 + $0x290] sm:$0xff]
        %v1006 = vld [vmem:[%s239 + $0x298] sm:$0xff]
        %v1007 = vld [vmem:[%s239 + $0x2a0] sm:$0xff]
        %v1008 = vld [vmem:[%s239 + $0x2a8] sm:$0xff]
        %v1009 = vld [vmem:[%s239 + $0x2b0] sm:$0xff]
        %v1010 = vld [vmem:[%s239 + $0x2b8] sm:$0xff]
        %v1011 = vld [vmem:[%s239 + $0x2c0] sm:$0xff]
        %v1012 = vld [vmem:[%s239 + $0x2c8] sm:$0xff]
        %v1013 = vld [vmem:[%s239 + $0x2d0] sm:$0xff]
        %v1014 = vld [vmem:[%s239 + $0x2d8] sm:$0xff]
        %v1015 = vld [vmem:[%s239 + $0x2e0] sm:$0xff]
        %v1016 = vld [vmem:[%s239 + $0x2e8] sm:$0xff]
        %v1017 = vld [vmem:[%s239 + $0x2f0] sm:$0xff]
        %v1018 = vld [vmem:[%s239 + $0x2f8] sm:$0xff]
        %v1019 = vld [vmem:[%s239 + $0x300] sm:$0xff]
        %v1020 = vld [vmem:[%s239 + $0x308] sm:$0xff]
        %v1021 = vld [vmem:[%s239 + $0x310] sm:$0xff]
        %v1022 = vld [vmem:[%s239 + $0x318] sm:$0xff]
        %v1023 = vld [vmem:[%s239 + $0x320] sm:$0xff]
        %v1024 = vld [vmem:[%s239 + $0x328] sm:$0xff]
        %v1025 = vld [vmem:[%s239 + $0x330] sm:$0xff]
        %v1026 = vld [vmem:[%s239 + $0x338] sm:$0xff]
        %v1027 = vld [vmem:[%s239 + $0x340] sm:$0xff]
        %v1028 = vld [vmem:[%s239 + $0x348] sm:$0xff]
        %v1029 = vld [vmem:[%s239 + $0x350] sm:$0xff]
        %v1030 = vld [vmem:[%s239 + $0x358] sm:$0xff]
        %v1031 = vld [vmem:[%s239 + $0x360] sm:$0xff]
        %v1032 = vld [vmem:[%s239 + $0x368] sm:$0xff]
        %v1033 = vld [vmem:[%s239 + $0x370] sm:$0xff]
        %v1034 = vld [vmem:[%s239 + $0x378] sm:$0xff]
        %v1035 = vld [vmem:[%s239 + $0x380] sm:$0xff]
        %v1036 = vld [vmem:[%s239 + $0x388] sm:$0xff]
        %v1037 = vld [vmem:[%s239 + $0x390] sm:$0xff]
        %v1038 = vld [vmem:[%s239 + $0x398] sm:$0xff]
        %v1039 = vld [vmem:[%s239 + $0x3a0] sm:$0xff]
        %v1040 = vld [vmem:[%s239 + $0x3a8] sm:$0xff]
        %v1041 = vld [vmem:[%s239 + $0x3b0] sm:$0xff]
        %v1042 = vld [vmem:[%s239 + $0x3b8] sm:$0xff]
        %v1043 = vld [vmem:[%s239 + $0x3c0] sm:$0xff]
        %v1044 = vld [vmem:[%s239 + $0x3c8] sm:$0xff]
        %v1045 = vld [vmem:[%s239 + $0x3d0] sm:$0xff]
        %v1046 = vld [vmem:[%s239 + $0x3d8] sm:$0xff]
        %v1047 = vld [vmem:[%s239 + $0x3e0] sm:$0xff]
        %v1048 = vld [vmem:[%s239 + $0x3e8] sm:$0xff]
        %v1049 = vld [vmem:[%s239 + $0x3f0] sm:$0xff]
        %v1050 = vld [vmem:[%s239 + $0x3f8] sm:$0xff]
        %v1051 = vld [vmem:[%s239 + $0x400] sm:$0xff]
        %v1052 = vld [vmem:[%s239 + $0x408] sm:$0xff]
        %v1053 = vld [vmem:[%s239 + $0x410] sm:$0xff]
        %v1054 = vld [vmem:[%s239 + $0x418] sm:$0xff]
        %v1055 = vld [vmem:[%s239 + $0x420] sm:$0xff]
        %v1056 = vld [vmem:[%s239 + $0x428] sm:$0xff]
        %v1057 = vld [vmem:[%s239 + $0x430] sm:$0xff]
        %v1058 = vld [vmem:[%s239 + $0x438] sm:$0xff]
        %v1059 = vld [vmem:[%s239 + $0x440] sm:$0xff]
        %v1060 = vld [vmem:[%s239 + $0x448] sm:$0xff]
        %v1061 = vld [vmem:[%s239 + $0x450] sm:$0xff]
        %v1062 = vld [vmem:[%s239 + $0x458] sm:$0xff]
        %v1063 = vld [vmem:[%s239 + $0x460] sm:$0xff]
        %v1064 = vld [vmem:[%s239 + $0x468] sm:$0xff]
        %v1065 = vld [vmem:[%s239 + $0x470] sm:$0xff]
        %v1066 = vld [vmem:[%s239 + $0x478] sm:$0xff]
        %v1067 = vld [vmem:[%s239 + $0x480] sm:$0xff]
        %v1068 = vld [vmem:[%s239 + $0x488] sm:$0xff]
        %v1069 = vld [vmem:[%s239 + $0x490] sm:$0xff]
        %v1070 = vld [vmem:[%s239 + $0x498] sm:$0xff]
        %v1071 = vld [vmem:[%s239 + $0x4a0] sm:$0xff]
        %v1072 = vld [vmem:[%s239 + $0x4a8] sm:$0xff]
        %v1073 = vld [vmem:[%s239 + $0x4b0] sm:$0xff]
        %v1074 = vld [vmem:[%s239 + $0x4b8] sm:$0xff]
        %v1075 = vld [vmem:[%s239 + $0x4c0] sm:$0xff]
        %v1076 = vld [vmem:[%s239 + $0x4c8] sm:$0xff]
        %v1077 = vld [vmem:[%s239 + $0x4d0] sm:$0xff]
        %v1078 = vld [vmem:[%s239 + $0x4d8] sm:$0xff]
        %v1079 = vld [vmem:[%s239 + $0x4e0] sm:$0xff]
        %v1080 = vld [vmem:[%s239 + $0x4e8] sm:$0xff]
        %v1081 = vld [vmem:[%s239 + $0x4f0] sm:$0xff]
        %v1082 = vld [vmem:[%s239 + $0x4f8] sm:$0xff]
        %v1083 = vpack.c.bf16 %v924, %v923
        %v1084 = vpack.c.bf16 %v926, %v925
        %v1085 = vpack.c.bf16 %v928, %v927
        %v1086 = vpack.c.bf16 %v930, %v929
        %v1087 = vpack.c.bf16 %v932, %v931
        %v1088 = vpack.c.bf16 %v934, %v933
        %v1089 = vpack.c.bf16 %v936, %v935
        %v1090 = vpack.c.bf16 %v938, %v937
        %v1091 = vpack.c.bf16 %v940, %v939
        %v1092 = vpack.c.bf16 %v942, %v941
        %v1093 = vpack.c.bf16 %v944, %v943
        %v1094 = vpack.c.bf16 %v946, %v945
        %v1095 = vpack.c.bf16 %v948, %v947
        %v1096 = vpack.c.bf16 %v950, %v949
        %v1097 = vpack.c.bf16 %v952, %v951
        %v1098 = vpack.c.bf16 %v954, %v953
        %v1099 = vpack.c.bf16 %v956, %v955
        %v1100 = vpack.c.bf16 %v958, %v957
        %v1101 = vpack.c.bf16 %v960, %v959
        %v1102 = vpack.c.bf16 %v962, %v961
        %v1103 = vpack.c.bf16 %v964, %v963
        %v1104 = vpack.c.bf16 %v966, %v965
        %v1105 = vpack.c.bf16 %v968, %v967
        %v1106 = vpack.c.bf16 %v970, %v969
        %v1107 = vpack.c.bf16 %v972, %v971
        %v1108 = vpack.c.bf16 %v974, %v973
        %v1109 = vpack.c.bf16 %v976, %v975
        %v1110 = vpack.c.bf16 %v978, %v977
        %v1111 = vpack.c.bf16 %v980, %v979
        %v1112 = vpack.c.bf16 %v982, %v981
        %v1113 = vpack.c.bf16 %v984, %v983
        %v1114 = vpack.c.bf16 %v986, %v985
        %v1115 = vpack.c.bf16 %v988, %v987
        %v1116 = vpack.c.bf16 %v990, %v989
        %v1117 = vpack.c.bf16 %v992, %v991
        %v1118 = vpack.c.bf16 %v994, %v993
        %v1119 = vpack.c.bf16 %v996, %v995
        %v1120 = vpack.c.bf16 %v998, %v997
        %v1121 = vpack.c.bf16 %v1000, %v999
        %v1122 = vpack.c.bf16 %v1002, %v1001
        %v1123 = vpack.c.bf16 %v1004, %v1003
        %v1124 = vpack.c.bf16 %v1006, %v1005
        %v1125 = vpack.c.bf16 %v1008, %v1007
        %v1126 = vpack.c.bf16 %v1010, %v1009
        %v1127 = vpack.c.bf16 %v1012, %v1011
        %v1128 = vpack.c.bf16 %v1014, %v1013
        %v1129 = vpack.c.bf16 %v1016, %v1015
        %v1130 = vpack.c.bf16 %v1018, %v1017
        %v1131 = vpack.c.bf16 %v1020, %v1019
        %v1132 = vpack.c.bf16 %v1022, %v1021
        %v1133 = vpack.c.bf16 %v1024, %v1023
        %v1134 = vpack.c.bf16 %v1026, %v1025
        %v1135 = vpack.c.bf16 %v1028, %v1027
        %v1136 = vpack.c.bf16 %v1030, %v1029
        %v1137 = vpack.c.bf16 %v1032, %v1031
        %v1138 = vpack.c.bf16 %v1034, %v1033
        %v1139 = vpack.c.bf16 %v1036, %v1035
        %v1140 = vpack.c.bf16 %v1038, %v1037
        %v1141 = vpack.c.bf16 %v1040, %v1039
        %v1142 = vpack.c.bf16 %v1042, %v1041
        %v1143 = vpack.c.bf16 %v1044, %v1043
        %v1144 = vpack.c.bf16 %v1046, %v1045
        %v1145 = vpack.c.bf16 %v1048, %v1047
        %v1146 = vpack.c.bf16 %v1050, %v1049
        %v1147 = vpack.c.bf16 %v1052, %v1051
        %v1148 = vpack.c.bf16 %v1054, %v1053
        %v1149 = vpack.c.bf16 %v1056, %v1055
        %v1150 = vpack.c.bf16 %v1058, %v1057
        %v1151 = vpack.c.bf16 %v1060, %v1059
        %v1152 = vpack.c.bf16 %v1062, %v1061
        %v1153 = vpack.c.bf16 %v1064, %v1063
        %v1154 = vpack.c.bf16 %v1066, %v1065
        %v1155 = vpack.c.bf16 %v1068, %v1067
        %v1156 = vpack.c.bf16 %v1070, %v1069
        %v1157 = vpack.c.bf16 %v1072, %v1071
        %v1158 = vpack.c.bf16 %v1074, %v1073
        %v1159 = vpack.c.bf16 %v1076, %v1075
        %v1160 = vpack.c.bf16 %v1078, %v1077
        %v1161 = vpack.c.bf16 %v1080, %v1079
        %v1162 = vpack.c.bf16 %v1082, %v1081
        %1164 = vset.pattern.permute.xlu0 0
        %1165 = vperm.xlu0 %1164, %v811
        %v1166 = vpop.permute.xlu0 %1165
        %1169 = vset.pattern.permute.xlu0 0
        %1170 = vperm.xlu0 %1169, %v812
        %v1171 = vpop.permute.xlu0 %1170
        %1174 = vset.pattern.permute.xlu0 0
        %1175 = vperm.xlu0 %1174, %v813
        %v1176 = vpop.permute.xlu0 %1175
        %1179 = vset.pattern.permute.xlu0 0
        %1180 = vperm.xlu0 %1179, %v814
        %v1181 = vpop.permute.xlu0 %1180
        %1184 = vset.pattern.permute.xlu0 0
        %1185 = vperm.xlu0 %1184, %v815
        %v1186 = vpop.permute.xlu0 %1185
        %1189 = vset.pattern.permute.xlu0 0
        %1190 = vperm.xlu0 %1189, %v816
        %v1191 = vpop.permute.xlu0 %1190
        %1194 = vset.pattern.permute.xlu0 0
        %1195 = vperm.xlu0 %1194, %v817
        %v1196 = vpop.permute.xlu0 %1195
        %1199 = vset.pattern.permute.xlu0 0
        %1200 = vperm.xlu0 %1199, %v818
        %v1201 = vpop.permute.xlu0 %1200
        %1204 = vset.pattern.permute.xlu0 0
        %1205 = vperm.xlu0 %1204, %v819
        %v1206 = vpop.permute.xlu0 %1205
        %1209 = vset.pattern.permute.xlu0 0
        %1210 = vperm.xlu0 %1209, %v820
        %v1211 = vpop.permute.xlu0 %1210
        %1214 = vset.pattern.permute.xlu0 0
        %1215 = vperm.xlu0 %1214, %v821
        %v1216 = vpop.permute.xlu0 %1215
        %1219 = vset.pattern.permute.xlu0 0
        %1220 = vperm.xlu0 %1219, %v822
        %v1221 = vpop.permute.xlu0 %1220
        %1224 = vset.pattern.permute.xlu0 0
        %1225 = vperm.xlu0 %1224, %v823
        %v1226 = vpop.permute.xlu0 %1225
        %1229 = vset.pattern.permute.xlu0 0
        %1230 = vperm.xlu0 %1229, %v824
        %v1231 = vpop.permute.xlu0 %1230
        %1234 = vset.pattern.permute.xlu0 0
        %1235 = vperm.xlu0 %1234, %v825
        %v1236 = vpop.permute.xlu0 %1235
        %1239 = vset.pattern.permute.xlu0 0
        %1240 = vperm.xlu0 %1239, %v826
        %v1241 = vpop.permute.xlu0 %1240
        %1244 = vset.pattern.permute.xlu0 0
        %1245 = vperm.xlu0 %1244, %v827
        %v1246 = vpop.permute.xlu0 %1245
        %1249 = vset.pattern.permute.xlu0 0
        %1250 = vperm.xlu0 %1249, %v828
        %v1251 = vpop.permute.xlu0 %1250
        %1254 = vset.pattern.permute.xlu0 0
        %1255 = vperm.xlu0 %1254, %v829
        %v1256 = vpop.permute.xlu0 %1255
        %1259 = vset.pattern.permute.xlu0 0
        %1260 = vperm.xlu0 %1259, %v830
        %v1261 = vpop.permute.xlu0 %1260
        %1264 = vset.pattern.permute.xlu0 0
        %1265 = vperm.xlu0 %1264, %v831
        %v1266 = vpop.permute.xlu0 %1265
        %1269 = vset.pattern.permute.xlu0 0
        %1270 = vperm.xlu0 %1269, %v832
        %v1271 = vpop.permute.xlu0 %1270
        %1274 = vset.pattern.permute.xlu0 0
        %1275 = vperm.xlu0 %1274, %v833
        %v1276 = vpop.permute.xlu0 %1275
        %1279 = vset.pattern.permute.xlu0 0
        %1280 = vperm.xlu0 %1279, %v834
        %v1281 = vpop.permute.xlu0 %1280
        %1284 = vset.pattern.permute.xlu0 0
        %1285 = vperm.xlu0 %1284, %v835
        %v1286 = vpop.permute.xlu0 %1285
        %1289 = vset.pattern.permute.xlu0 0
        %1290 = vperm.xlu0 %1289, %v836
        %v1291 = vpop.permute.xlu0 %1290
        %1294 = vset.pattern.permute.xlu0 0
        %1295 = vperm.xlu0 %1294, %v837
        %v1296 = vpop.permute.xlu0 %1295
        %1299 = vset.pattern.permute.xlu0 0
        %1300 = vperm.xlu0 %1299, %v838
        %v1301 = vpop.permute.xlu0 %1300
        %1304 = vset.pattern.permute.xlu0 0
        %1305 = vperm.xlu0 %1304, %v839
        %v1306 = vpop.permute.xlu0 %1305
        %1309 = vset.pattern.permute.xlu0 0
        %1310 = vperm.xlu0 %1309, %v840
        %v1311 = vpop.permute.xlu0 %1310
        %1314 = vset.pattern.permute.xlu0 0
        %1315 = vperm.xlu0 %1314, %v841
        %v1316 = vpop.permute.xlu0 %1315
        %1319 = vset.pattern.permute.xlu0 0
        %1320 = vperm.xlu0 %1319, %v842
        %v1321 = vpop.permute.xlu0 %1320
        %1324 = vset.pattern.permute.xlu0 0
        %1325 = vperm.xlu0 %1324, %v843
        %v1326 = vpop.permute.xlu0 %1325
        %1329 = vset.pattern.permute.xlu0 0
        %1330 = vperm.xlu0 %1329, %v844
        %v1331 = vpop.permute.xlu0 %1330
        %1334 = vset.pattern.permute.xlu0 0
        %1335 = vperm.xlu0 %1334, %v845
        %v1336 = vpop.permute.xlu0 %1335
        %1339 = vset.pattern.permute.xlu0 0
        %1340 = vperm.xlu0 %1339, %v846
        %v1341 = vpop.permute.xlu0 %1340
        %1344 = vset.pattern.permute.xlu0 0
        %1345 = vperm.xlu0 %1344, %v847
        %v1346 = vpop.permute.xlu0 %1345
        %1349 = vset.pattern.permute.xlu0 0
        %1350 = vperm.xlu0 %1349, %v848
        %v1351 = vpop.permute.xlu0 %1350
        %1354 = vset.pattern.permute.xlu0 0
        %1355 = vperm.xlu0 %1354, %v849
        %v1356 = vpop.permute.xlu0 %1355
        %1359 = vset.pattern.permute.xlu0 0
        %1360 = vperm.xlu0 %1359, %v850
        %v1361 = vpop.permute.xlu0 %1360
        %1364 = vset.pattern.permute.xlu0 0
        %1365 = vperm.xlu0 %1364, %v851
        %v1366 = vpop.permute.xlu0 %1365
        %1369 = vset.pattern.permute.xlu0 0
        %1370 = vperm.xlu0 %1369, %v852
        %v1371 = vpop.permute.xlu0 %1370
        %1374 = vset.pattern.permute.xlu0 0
        %1375 = vperm.xlu0 %1374, %v853
        %v1376 = vpop.permute.xlu0 %1375
        %1379 = vset.pattern.permute.xlu0 0
        %1380 = vperm.xlu0 %1379, %v854
        %v1381 = vpop.permute.xlu0 %1380
        %1384 = vset.pattern.permute.xlu0 0
        %1385 = vperm.xlu0 %1384, %v855
        %v1386 = vpop.permute.xlu0 %1385
        %1389 = vset.pattern.permute.xlu0 0
        %1390 = vperm.xlu0 %1389, %v856
        %v1391 = vpop.permute.xlu0 %1390
        %1394 = vset.pattern.permute.xlu0 0
        %1395 = vperm.xlu0 %1394, %v857
        %v1396 = vpop.permute.xlu0 %1395
        %1399 = vset.pattern.permute.xlu0 0
        %1400 = vperm.xlu0 %1399, %v858
        %v1401 = vpop.permute.xlu0 %1400
        %1404 = vset.pattern.permute.xlu0 0
        %1405 = vperm.xlu0 %1404, %v859
        %v1406 = vpop.permute.xlu0 %1405
        %1409 = vset.pattern.permute.xlu0 0
        %1410 = vperm.xlu0 %1409, %v860
        %v1411 = vpop.permute.xlu0 %1410
        %1414 = vset.pattern.permute.xlu0 0
        %1415 = vperm.xlu0 %1414, %v861
        %v1416 = vpop.permute.xlu0 %1415
        %1419 = vset.pattern.permute.xlu0 0
        %1420 = vperm.xlu0 %1419, %v862
        %v1421 = vpop.permute.xlu0 %1420
        %1424 = vset.pattern.permute.xlu0 0
        %1425 = vperm.xlu0 %1424, %v863
        %v1426 = vpop.permute.xlu0 %1425
        %1429 = vset.pattern.permute.xlu0 0
        %1430 = vperm.xlu0 %1429, %v864
        %v1431 = vpop.permute.xlu0 %1430
        %1434 = vset.pattern.permute.xlu0 0
        %1435 = vperm.xlu0 %1434, %v865
        %v1436 = vpop.permute.xlu0 %1435
        %1439 = vset.pattern.permute.xlu0 0
        %1440 = vperm.xlu0 %1439, %v866
        %v1441 = vpop.permute.xlu0 %1440
        %1444 = vset.pattern.permute.xlu0 0
        %1445 = vperm.xlu0 %1444, %v867
        %v1446 = vpop.permute.xlu0 %1445
        %1449 = vset.pattern.permute.xlu0 0
        %1450 = vperm.xlu0 %1449, %v868
        %v1451 = vpop.permute.xlu0 %1450
        %1454 = vset.pattern.permute.xlu0 0
        %1455 = vperm.xlu0 %1454, %v869
        %v1456 = vpop.permute.xlu0 %1455
        %1459 = vset.pattern.permute.xlu0 0
        %1460 = vperm.xlu0 %1459, %v870
        %v1461 = vpop.permute.xlu0 %1460
        %1464 = vset.pattern.permute.xlu0 0
        %1465 = vperm.xlu0 %1464, %v871
        %v1466 = vpop.permute.xlu0 %1465
        %1469 = vset.pattern.permute.xlu0 0
        %1470 = vperm.xlu0 %1469, %v872
        %v1471 = vpop.permute.xlu0 %1470
        %1474 = vset.pattern.permute.xlu0 0
        %1475 = vperm.xlu0 %1474, %v873
        %v1476 = vpop.permute.xlu0 %1475
        %1479 = vset.pattern.permute.xlu0 0
        %1480 = vperm.xlu0 %1479, %v874
        %v1481 = vpop.permute.xlu0 %1480
        %1484 = vset.pattern.permute.xlu0 0
        %1485 = vperm.xlu0 %1484, %v875
        %v1486 = vpop.permute.xlu0 %1485
        %1489 = vset.pattern.permute.xlu0 0
        %1490 = vperm.xlu0 %1489, %v876
        %v1491 = vpop.permute.xlu0 %1490
        %1494 = vset.pattern.permute.xlu0 0
        %1495 = vperm.xlu0 %1494, %v877
        %v1496 = vpop.permute.xlu0 %1495
        %1499 = vset.pattern.permute.xlu0 0
        %1500 = vperm.xlu0 %1499, %v878
        %v1501 = vpop.permute.xlu0 %1500
        %1504 = vset.pattern.permute.xlu0 0
        %1505 = vperm.xlu0 %1504, %v879
        %v1506 = vpop.permute.xlu0 %1505
        %1509 = vset.pattern.permute.xlu0 0
        %1510 = vperm.xlu0 %1509, %v880
        %v1511 = vpop.permute.xlu0 %1510
        %1514 = vset.pattern.permute.xlu0 0
        %1515 = vperm.xlu0 %1514, %v881
        %v1516 = vpop.permute.xlu0 %1515
        %1519 = vset.pattern.permute.xlu0 0
        %1520 = vperm.xlu0 %1519, %v882
        %v1521 = vpop.permute.xlu0 %1520
        %1524 = vset.pattern.permute.xlu0 0
        %1525 = vperm.xlu0 %1524, %v883
        %v1526 = vpop.permute.xlu0 %1525
        %1529 = vset.pattern.permute.xlu0 0
        %1530 = vperm.xlu0 %1529, %v884
        %v1531 = vpop.permute.xlu0 %1530
        %1534 = vset.pattern.permute.xlu0 0
        %1535 = vperm.xlu0 %1534, %v885
        %v1536 = vpop.permute.xlu0 %1535
        %1539 = vset.pattern.permute.xlu0 0
        %1540 = vperm.xlu0 %1539, %v886
        %v1541 = vpop.permute.xlu0 %1540
        %1544 = vset.pattern.permute.xlu0 0
        %1545 = vperm.xlu0 %1544, %v887
        %v1546 = vpop.permute.xlu0 %1545
        %1549 = vset.pattern.permute.xlu0 0
        %1550 = vperm.xlu0 %1549, %v888
        %v1551 = vpop.permute.xlu0 %1550
        %1554 = vset.pattern.permute.xlu0 0
        %1555 = vperm.xlu0 %1554, %v889
        %v1556 = vpop.permute.xlu0 %1555
        %1559 = vset.pattern.permute.xlu0 0
        %1560 = vperm.xlu0 %1559, %v890
        %v1561 = vpop.permute.xlu0 %1560
        %1564 = vset.pattern.permute.xlu0 0
        %1565 = vperm.xlu0 %1564, %v891
        %v1566 = vpop.permute.xlu0 %1565
        %1569 = vset.pattern.permute.xlu0 0
        %1570 = vperm.xlu0 %1569, %v892
        %v1571 = vpop.permute.xlu0 %1570
        %1574 = vset.pattern.permute.xlu0 0
        %1575 = vperm.xlu0 %1574, %v893
        %v1576 = vpop.permute.xlu0 %1575
        %1579 = vset.pattern.permute.xlu0 0
        %1580 = vperm.xlu0 %1579, %v894
        %v1581 = vpop.permute.xlu0 %1580
        %1584 = vset.pattern.permute.xlu0 0
        %1585 = vperm.xlu0 %1584, %v895
        %v1586 = vpop.permute.xlu0 %1585
        %1589 = vset.pattern.permute.xlu0 0
        %1590 = vperm.xlu0 %1589, %v896
        %v1591 = vpop.permute.xlu0 %1590
        %1594 = vset.pattern.permute.xlu0 0
        %1595 = vperm.xlu0 %1594, %v897
        %v1596 = vpop.permute.xlu0 %1595
        %1599 = vset.pattern.permute.xlu0 0
        %1600 = vperm.xlu0 %1599, %v898
        %v1601 = vpop.permute.xlu0 %1600
        %1604 = vset.pattern.permute.xlu0 0
        %1605 = vperm.xlu0 %1604, %v899
        %v1606 = vpop.permute.xlu0 %1605
        %1609 = vset.pattern.permute.xlu0 0
        %1610 = vperm.xlu0 %1609, %v900
        %v1611 = vpop.permute.xlu0 %1610
        %1614 = vset.pattern.permute.xlu0 0
        %1615 = vperm.xlu0 %1614, %v901
        %v1616 = vpop.permute.xlu0 %1615
        %1619 = vset.pattern.permute.xlu0 0
        %1620 = vperm.xlu0 %1619, %v902
        %v1621 = vpop.permute.xlu0 %1620
        %1624 = vset.pattern.permute.xlu0 0
        %1625 = vperm.xlu0 %1624, %v903
        %v1626 = vpop.permute.xlu0 %1625
        %1629 = vset.pattern.permute.xlu0 0
        %1630 = vperm.xlu0 %1629, %v904
        %v1631 = vpop.permute.xlu0 %1630
        %1634 = vset.pattern.permute.xlu0 0
        %1635 = vperm.xlu0 %1634, %v905
        %v1636 = vpop.permute.xlu0 %1635
        %1639 = vset.pattern.permute.xlu0 0
        %1640 = vperm.xlu0 %1639, %v906
        %v1641 = vpop.permute.xlu0 %1640
        %1644 = vset.pattern.permute.xlu0 0
        %1645 = vperm.xlu0 %1644, %v907
        %v1646 = vpop.permute.xlu0 %1645
        %1649 = vset.pattern.permute.xlu0 0
        %1650 = vperm.xlu0 %1649, %v908
        %v1651 = vpop.permute.xlu0 %1650
        %1654 = vset.pattern.permute.xlu0 0
        %1655 = vperm.xlu0 %1654, %v909
        %v1656 = vpop.permute.xlu0 %1655
        %1659 = vset.pattern.permute.xlu0 0
        %1660 = vperm.xlu0 %1659, %v910
        %v1661 = vpop.permute.xlu0 %1660
        %1664 = vset.pattern.permute.xlu0 0
        %1665 = vperm.xlu0 %1664, %v911
        %v1666 = vpop.permute.xlu0 %1665
        %1669 = vset.pattern.permute.xlu0 0
        %1670 = vperm.xlu0 %1669, %v912
        %v1671 = vpop.permute.xlu0 %1670
        %1674 = vset.pattern.permute.xlu0 0
        %1675 = vperm.xlu0 %1674, %v913
        %v1676 = vpop.permute.xlu0 %1675
        %1679 = vset.pattern.permute.xlu0 0
        %1680 = vperm.xlu0 %1679, %v914
        %v1681 = vpop.permute.xlu0 %1680
        %1684 = vset.pattern.permute.xlu0 0
        %1685 = vperm.xlu0 %1684, %v915
        %v1686 = vpop.permute.xlu0 %1685
        %1689 = vset.pattern.permute.xlu0 0
        %1690 = vperm.xlu0 %1689, %v916
        %v1691 = vpop.permute.xlu0 %1690
        %1694 = vset.pattern.permute.xlu0 0
        %1695 = vperm.xlu0 %1694, %v917
        %v1696 = vpop.permute.xlu0 %1695
        %1699 = vset.pattern.permute.xlu0 0
        %1700 = vperm.xlu0 %1699, %v918
        %v1701 = vpop.permute.xlu0 %1700
        %1704 = vset.pattern.permute.xlu0 0
        %1705 = vperm.xlu0 %1704, %v919
        %v1706 = vpop.permute.xlu0 %1705
        %1709 = vset.pattern.permute.xlu0 0
        %1710 = vperm.xlu0 %1709, %v920
        %v1711 = vpop.permute.xlu0 %1710
        %1714 = vset.pattern.permute.xlu0 0
        %1715 = vperm.xlu0 %1714, %v921
        %v1716 = vpop.permute.xlu0 %1715
        %1719 = vset.pattern.permute.xlu0 0
        %1720 = vperm.xlu0 %1719, %v922
        %v1721 = vpop.permute.xlu0 %1720
        %v2283 = vunpack.c.l.b16 %v251
        %v2284 = vunpack.c.h.b16 %v251
        %v2285 = vunpack.c.l.b16 %v252
        %v2286 = vunpack.c.h.b16 %v252
        %v2287 = vunpack.c.l.b16 %v253
        %v2288 = vunpack.c.h.b16 %v253
        %v2289 = vunpack.c.l.b16 %v254
        %v2290 = vunpack.c.h.b16 %v254
        %v2291 = vunpack.c.l.b16 %v255
        %v2292 = vunpack.c.h.b16 %v255
        %v2293 = vunpack.c.l.b16 %v256
        %v2294 = vunpack.c.h.b16 %v256
        %v2295 = vunpack.c.l.b16 %v257
        %v2296 = vunpack.c.h.b16 %v257
        %v2297 = vunpack.c.l.b16 %v258
        %v2298 = vunpack.c.h.b16 %v258
        %v2299 = vunpack.c.l.b16 %v259
        %v2300 = vunpack.c.h.b16 %v259
        %v2301 = vunpack.c.l.b16 %v260
        %v2302 = vunpack.c.h.b16 %v260
        %v2303 = vunpack.c.l.b16 %v261
        %v2304 = vunpack.c.h.b16 %v261
        %v2305 = vunpack.c.l.b16 %v262
        %v2306 = vunpack.c.h.b16 %v262
        %v2307 = vunpack.c.l.b16 %v263
        %v2308 = vunpack.c.h.b16 %v263
        %v2309 = vunpack.c.l.b16 %v264
        %v2310 = vunpack.c.h.b16 %v264
        %v2311 = vunpack.c.l.b16 %v265
        %v2312 = vunpack.c.h.b16 %v265
        %v2313 = vunpack.c.l.b16 %v266
        %v2314 = vunpack.c.h.b16 %v266
        %v2315 = vunpack.c.l.b16 %v267
        %v2316 = vunpack.c.h.b16 %v267
        %v2317 = vunpack.c.l.b16 %v268
        %v2318 = vunpack.c.h.b16 %v268
        %v2319 = vunpack.c.l.b16 %v269
        %v2320 = vunpack.c.h.b16 %v269
        %v2321 = vunpack.c.l.b16 %v270
        %v2322 = vunpack.c.h.b16 %v270
        %v2323 = vunpack.c.l.b16 %v271
        %v2324 = vunpack.c.h.b16 %v271
        %v2325 = vunpack.c.l.b16 %v272
        %v2326 = vunpack.c.h.b16 %v272
        %v2327 = vunpack.c.l.b16 %v273
        %v2328 = vunpack.c.h.b16 %v273
        %v2329 = vunpack.c.l.b16 %v274
        %v2330 = vunpack.c.h.b16 %v274
        %v2331 = vunpack.c.l.b16 %v275
        %v2332 = vunpack.c.h.b16 %v275
        %v2333 = vunpack.c.l.b16 %v276
        %v2334 = vunpack.c.h.b16 %v276
        %v2335 = vunpack.c.l.b16 %v277
        %v2336 = vunpack.c.h.b16 %v277
        %v2337 = vunpack.c.l.b16 %v278
        %v2338 = vunpack.c.h.b16 %v278
        %v2339 = vunpack.c.l.b16 %v279
        %v2340 = vunpack.c.h.b16 %v279
        %v2341 = vunpack.c.l.b16 %v280
        %v2342 = vunpack.c.h.b16 %v280
        %v2343 = vunpack.c.l.b16 %v281
        %v2344 = vunpack.c.h.b16 %v281
        %v2345 = vunpack.c.l.b16 %v282
        %v2346 = vunpack.c.h.b16 %v282
        %v2347 = vunpack.c.l.b16 %v283
        %v2348 = vunpack.c.h.b16 %v283
        %v2349 = vunpack.c.l.b16 %v284
        %v2350 = vunpack.c.h.b16 %v284
        %v2351 = vunpack.c.l.b16 %v285
        %v2352 = vunpack.c.h.b16 %v285
        %v2353 = vunpack.c.l.b16 %v286
        %v2354 = vunpack.c.h.b16 %v286
        %v2355 = vunpack.c.l.b16 %v287
        %v2356 = vunpack.c.h.b16 %v287
        %v2357 = vunpack.c.l.b16 %v288
        %v2358 = vunpack.c.h.b16 %v288
        %v2359 = vunpack.c.l.b16 %v289
        %v2360 = vunpack.c.h.b16 %v289
        %v2361 = vunpack.c.l.b16 %v290
        %v2362 = vunpack.c.h.b16 %v290
        %v2363 = vunpack.c.l.b16 %v291
        %v2364 = vunpack.c.h.b16 %v291
        %v2365 = vunpack.c.l.b16 %v292
        %v2366 = vunpack.c.h.b16 %v292
        %v2367 = vunpack.c.l.b16 %v293
        %v2368 = vunpack.c.h.b16 %v293
        %v2369 = vunpack.c.l.b16 %v294
        %v2370 = vunpack.c.h.b16 %v294
        %v2371 = vunpack.c.l.b16 %v295
        %v2372 = vunpack.c.h.b16 %v295
        %v2373 = vunpack.c.l.b16 %v296
        %v2374 = vunpack.c.h.b16 %v296
        %v2375 = vunpack.c.l.b16 %v297
        %v2376 = vunpack.c.h.b16 %v297
        %v2377 = vunpack.c.l.b16 %v298
        %v2378 = vunpack.c.h.b16 %v298
        %v2379 = vunpack.c.l.b16 %v299
        %v2380 = vunpack.c.h.b16 %v299
        %v2381 = vunpack.c.l.b16 %v300
        %v2382 = vunpack.c.h.b16 %v300
        %v2383 = vunpack.c.l.b16 %v301
        %v2384 = vunpack.c.h.b16 %v301
        %v2385 = vunpack.c.l.b16 %v302
        %v2386 = vunpack.c.h.b16 %v302
        %v2387 = vunpack.c.l.b16 %v303
        %v2388 = vunpack.c.h.b16 %v303
        %v2389 = vunpack.c.l.b16 %v304
        %v2390 = vunpack.c.h.b16 %v304
        %v2391 = vunpack.c.l.b16 %v305
        %v2392 = vunpack.c.h.b16 %v305
        %v2393 = vunpack.c.l.b16 %v306
        %v2394 = vunpack.c.h.b16 %v306
        %v2395 = vunpack.c.l.b16 %v307
        %v2396 = vunpack.c.h.b16 %v307
        %v2397 = vunpack.c.l.b16 %v308
        %v2398 = vunpack.c.h.b16 %v308
        %v2399 = vunpack.c.l.b16 %v309
        %v2400 = vunpack.c.h.b16 %v309
        %v2401 = vunpack.c.l.b16 %v310
        %v2402 = vunpack.c.h.b16 %v310
        %v2403 = vunpack.c.l.b16 %v311
        %v2404 = vunpack.c.h.b16 %v311
        %v2405 = vunpack.c.l.b16 %v312
        %v2406 = vunpack.c.h.b16 %v312
        %v2407 = vunpack.c.l.b16 %v313
        %v2408 = vunpack.c.h.b16 %v313
        %v2409 = vunpack.c.l.b16 %v314
        %v2410 = vunpack.c.h.b16 %v314
        %v2411 = vunpack.c.l.b16 %v315
        %v2412 = vunpack.c.h.b16 %v315
        %v2413 = vunpack.c.l.b16 %v316
        %v2414 = vunpack.c.h.b16 %v316
        %v2415 = vunpack.c.l.b16 %v317
        %v2416 = vunpack.c.h.b16 %v317
        %v2417 = vunpack.c.l.b16 %v318
        %v2418 = vunpack.c.h.b16 %v318
        %v2419 = vunpack.c.l.b16 %v319
        %v2420 = vunpack.c.h.b16 %v319
        %v2421 = vunpack.c.l.b16 %v320
        %v2422 = vunpack.c.h.b16 %v320
        %v2423 = vunpack.c.l.b16 %v321
        %v2424 = vunpack.c.h.b16 %v321
        %v2425 = vunpack.c.l.b16 %v322
        %v2426 = vunpack.c.h.b16 %v322
        %v2427 = vunpack.c.l.b16 %v323
        %v2428 = vunpack.c.h.b16 %v323
        %v2429 = vunpack.c.l.b16 %v324
        %v2430 = vunpack.c.h.b16 %v324
        %v2431 = vunpack.c.l.b16 %v325
        %v2432 = vunpack.c.h.b16 %v325
        %v2433 = vunpack.c.l.b16 %v326
        %v2434 = vunpack.c.h.b16 %v326
        %v2435 = vunpack.c.l.b16 %v327
        %v2436 = vunpack.c.h.b16 %v327
        %v2437 = vunpack.c.l.b16 %v328
        %v2438 = vunpack.c.h.b16 %v328
        %v2439 = vunpack.c.l.b16 %v329
        %v2440 = vunpack.c.h.b16 %v329
        %v2441 = vunpack.c.l.b16 %v330
        %v2442 = vunpack.c.h.b16 %v330
        %v2443 = vunpack.c.l.b16 %v331
        %v2444 = vunpack.c.h.b16 %v331
        %v2445 = vunpack.c.l.b16 %v332
        %v2446 = vunpack.c.h.b16 %v332
        %v2447 = vunpack.c.l.b16 %v333
        %v2448 = vunpack.c.h.b16 %v333
        %v2449 = vunpack.c.l.b16 %v334
        %v2450 = vunpack.c.h.b16 %v334
        %v2451 = vunpack.c.l.b16 %v335
        %v2452 = vunpack.c.h.b16 %v335
        %v2453 = vunpack.c.l.b16 %v336
        %v2454 = vunpack.c.h.b16 %v336
        %v2455 = vunpack.c.l.b16 %v337
        %v2456 = vunpack.c.h.b16 %v337
        %v2457 = vunpack.c.l.b16 %v338
        %v2458 = vunpack.c.h.b16 %v338
        %v2459 = vunpack.c.l.b16 %v339
        %v2460 = vunpack.c.h.b16 %v339
        %v2461 = vunpack.c.l.b16 %v340
        %v2462 = vunpack.c.h.b16 %v340
        %v2463 = vunpack.c.l.b16 %v341
        %v2464 = vunpack.c.h.b16 %v341
        %v2465 = vunpack.c.l.b16 %v342
        %v2466 = vunpack.c.h.b16 %v342
        %v2467 = vunpack.c.l.b16 %v343
        %v2468 = vunpack.c.h.b16 %v343
        %v2469 = vunpack.c.l.b16 %v344
        %v2470 = vunpack.c.h.b16 %v344
        %v2471 = vunpack.c.l.b16 %v345
        %v2472 = vunpack.c.h.b16 %v345
        %v2473 = vunpack.c.l.b16 %v346
        %v2474 = vunpack.c.h.b16 %v346
        %v2475 = vunpack.c.l.b16 %v347
        %v2476 = vunpack.c.h.b16 %v347
        %v2477 = vunpack.c.l.b16 %v348
        %v2478 = vunpack.c.h.b16 %v348
        %v2479 = vunpack.c.l.b16 %v349
        %v2480 = vunpack.c.h.b16 %v349
        %v2481 = vunpack.c.l.b16 %v350
        %v2482 = vunpack.c.h.b16 %v350
        %v2483 = vunpack.c.l.b16 %v351
        %v2484 = vunpack.c.h.b16 %v351
        %v2485 = vunpack.c.l.b16 %v352
        %v2486 = vunpack.c.h.b16 %v352
        %v2487 = vunpack.c.l.b16 %v353
        %v2488 = vunpack.c.h.b16 %v353
        %v2489 = vunpack.c.l.b16 %v354
        %v2490 = vunpack.c.h.b16 %v354
        %v2491 = vunpack.c.l.b16 %v355
        %v2492 = vunpack.c.h.b16 %v355
        %v2493 = vunpack.c.l.b16 %v356
        %v2494 = vunpack.c.h.b16 %v356
        %v2495 = vunpack.c.l.b16 %v357
        %v2496 = vunpack.c.h.b16 %v357
        %v2497 = vunpack.c.l.b16 %v358
        %v2498 = vunpack.c.h.b16 %v358
        %v2499 = vunpack.c.l.b16 %v359
        %v2500 = vunpack.c.h.b16 %v359
        %v2501 = vunpack.c.l.b16 %v360
        %v2502 = vunpack.c.h.b16 %v360
        %v2503 = vunpack.c.l.b16 %v361
        %v2504 = vunpack.c.h.b16 %v361
        %v2505 = vunpack.c.l.b16 %v362
        %v2506 = vunpack.c.h.b16 %v362
        %v2507 = vunpack.c.l.b16 %v363
        %v2508 = vunpack.c.h.b16 %v363
        %v2509 = vunpack.c.l.b16 %v364
        %v2510 = vunpack.c.h.b16 %v364
        %v2511 = vunpack.c.l.b16 %v365
        %v2512 = vunpack.c.h.b16 %v365
        %v2513 = vunpack.c.l.b16 %v366
        %v2514 = vunpack.c.h.b16 %v366
        %v2515 = vunpack.c.l.b16 %v367
        %v2516 = vunpack.c.h.b16 %v367
        %v2517 = vunpack.c.l.b16 %v368
        %v2518 = vunpack.c.h.b16 %v368
        %v2519 = vunpack.c.l.b16 %v369
        %v2520 = vunpack.c.h.b16 %v369
        %v2521 = vunpack.c.l.b16 %v370
        %v2522 = vunpack.c.h.b16 %v370
        %v2523 = vunpack.c.l.b16 %v371
        %v2524 = vunpack.c.h.b16 %v371
        %v2525 = vunpack.c.l.b16 %v372
        %v2526 = vunpack.c.h.b16 %v372
        %v2527 = vunpack.c.l.b16 %v373
        %v2528 = vunpack.c.h.b16 %v373
        %v2529 = vunpack.c.l.b16 %v374
        %v2530 = vunpack.c.h.b16 %v374
        %v2531 = vunpack.c.l.b16 %v375
        %v2532 = vunpack.c.h.b16 %v375
        %v2533 = vunpack.c.l.b16 %v376
        %v2534 = vunpack.c.h.b16 %v376
        %v2535 = vunpack.c.l.b16 %v377
        %v2536 = vunpack.c.h.b16 %v377
        %v2537 = vunpack.c.l.b16 %v378
        %v2538 = vunpack.c.h.b16 %v378
        %v2539 = vunpack.c.l.b16 %v379
        %v2540 = vunpack.c.h.b16 %v379
        %v2541 = vunpack.c.l.b16 %v380
        %v2542 = vunpack.c.h.b16 %v380
        %v2543 = vunpack.c.l.b16 %v381
        %v2544 = vunpack.c.h.b16 %v381
        %v2545 = vunpack.c.l.b16 %v382
        %v2546 = vunpack.c.h.b16 %v382
        %v2547 = vunpack.c.l.b16 %v383
        %v2548 = vunpack.c.h.b16 %v383
        %v2549 = vunpack.c.l.b16 %v384
        %v2550 = vunpack.c.h.b16 %v384
        %v2551 = vunpack.c.l.b16 %v385
        %v2552 = vunpack.c.h.b16 %v385
        %v2553 = vunpack.c.l.b16 %v386
        %v2554 = vunpack.c.h.b16 %v386
        %v2555 = vunpack.c.l.b16 %v387
        %v2556 = vunpack.c.h.b16 %v387
        %v2557 = vunpack.c.l.b16 %v388
        %v2558 = vunpack.c.h.b16 %v388
        %v2559 = vunpack.c.l.b16 %v389
        %v2560 = vunpack.c.h.b16 %v389
        %v2561 = vunpack.c.l.b16 %v390
        %v2562 = vunpack.c.h.b16 %v390
        %v2563 = vunpack.c.l.b16 %v391
        %v2564 = vunpack.c.h.b16 %v391
        %v2565 = vunpack.c.l.b16 %v392
        %v2566 = vunpack.c.h.b16 %v392
        %v2567 = vunpack.c.l.b16 %v393
        %v2568 = vunpack.c.h.b16 %v393
        %v2569 = vunpack.c.l.b16 %v394
        %v2570 = vunpack.c.h.b16 %v394
        %v2571 = vunpack.c.l.b16 %v395
        %v2572 = vunpack.c.h.b16 %v395
        %v2573 = vunpack.c.l.b16 %v396
        %v2574 = vunpack.c.h.b16 %v396
        %v2575 = vunpack.c.l.b16 %v397
        %v2576 = vunpack.c.h.b16 %v397
        %v2577 = vunpack.c.l.b16 %v398
        %v2578 = vunpack.c.h.b16 %v398
        %v2579 = vunpack.c.l.b16 %v399
        %v2580 = vunpack.c.h.b16 %v399
        %v2581 = vunpack.c.l.b16 %v400
        %v2582 = vunpack.c.h.b16 %v400
        %v2583 = vunpack.c.l.b16 %v401
        %v2584 = vunpack.c.h.b16 %v401
        %v2585 = vunpack.c.l.b16 %v402
        %v2586 = vunpack.c.h.b16 %v402
        %v2587 = vunpack.c.l.b16 %v403
        %v2588 = vunpack.c.h.b16 %v403
        %v2589 = vunpack.c.l.b16 %v404
        %v2590 = vunpack.c.h.b16 %v404
        %v2591 = vunpack.c.l.b16 %v405
        %v2592 = vunpack.c.h.b16 %v405
        %v2593 = vunpack.c.l.b16 %v406
        %v2594 = vunpack.c.h.b16 %v406
        %v2595 = vunpack.c.l.b16 %v407
        %v2596 = vunpack.c.h.b16 %v407
        %v2597 = vunpack.c.l.b16 %v408
        %v2598 = vunpack.c.h.b16 %v408
        %v2599 = vunpack.c.l.b16 %v409
        %v2600 = vunpack.c.h.b16 %v409
        %v2601 = vunpack.c.l.b16 %v410
        %v2602 = vunpack.c.h.b16 %v410
        %v2603 = vunpack.c.l.b16 %v411
        %v2604 = vunpack.c.h.b16 %v411
        %v2605 = vunpack.c.l.b16 %v412
        %v2606 = vunpack.c.h.b16 %v412
        %v2607 = vunpack.c.l.b16 %v413
        %v2608 = vunpack.c.h.b16 %v413
        %v2609 = vunpack.c.l.b16 %v414
        %v2610 = vunpack.c.h.b16 %v414
        %v2611 = vunpack.c.l.b16 %v415
        %v2612 = vunpack.c.h.b16 %v415
        %v2613 = vunpack.c.l.b16 %v416
        %v2614 = vunpack.c.h.b16 %v416
        %v2615 = vunpack.c.l.b16 %v417
        %v2616 = vunpack.c.h.b16 %v417
        %v2617 = vunpack.c.l.b16 %v418
        %v2618 = vunpack.c.h.b16 %v418
        %v2619 = vunpack.c.l.b16 %v419
        %v2620 = vunpack.c.h.b16 %v419
        %v2621 = vunpack.c.l.b16 %v420
        %v2622 = vunpack.c.h.b16 %v420
        %v2623 = vunpack.c.l.b16 %v421
        %v2624 = vunpack.c.h.b16 %v421
        %v2625 = vunpack.c.l.b16 %v422
        %v2626 = vunpack.c.h.b16 %v422
        %v2627 = vunpack.c.l.b16 %v423
        %v2628 = vunpack.c.h.b16 %v423
        %v2629 = vunpack.c.l.b16 %v424
        %v2630 = vunpack.c.h.b16 %v424
        %v2631 = vunpack.c.l.b16 %v425
        %v2632 = vunpack.c.h.b16 %v425
        %v2633 = vunpack.c.l.b16 %v426
        %v2634 = vunpack.c.h.b16 %v426
        %v2635 = vunpack.c.l.b16 %v427
        %v2636 = vunpack.c.h.b16 %v427
        %v2637 = vunpack.c.l.b16 %v428
        %v2638 = vunpack.c.h.b16 %v428
        %v2639 = vunpack.c.l.b16 %v429
        %v2640 = vunpack.c.h.b16 %v429
        %v2641 = vunpack.c.l.b16 %v430
        %v2642 = vunpack.c.h.b16 %v430
        %v2643 = vunpack.c.l.b16 %v431
        %v2644 = vunpack.c.h.b16 %v431
        %v2645 = vunpack.c.l.b16 %v432
        %v2646 = vunpack.c.h.b16 %v432
        %v2647 = vunpack.c.l.b16 %v433
        %v2648 = vunpack.c.h.b16 %v433
        %v2649 = vunpack.c.l.b16 %v434
        %v2650 = vunpack.c.h.b16 %v434
        %v2651 = vunpack.c.l.b16 %v435
        %v2652 = vunpack.c.h.b16 %v435
        %v2653 = vunpack.c.l.b16 %v436
        %v2654 = vunpack.c.h.b16 %v436
        %v2655 = vunpack.c.l.b16 %v437
        %v2656 = vunpack.c.h.b16 %v437
        %v2657 = vunpack.c.l.b16 %v438
        %v2658 = vunpack.c.h.b16 %v438
        %v2659 = vunpack.c.l.b16 %v439
        %v2660 = vunpack.c.h.b16 %v439
        %v2661 = vunpack.c.l.b16 %v440
        %v2662 = vunpack.c.h.b16 %v440
        %v2663 = vunpack.c.l.b16 %v441
        %v2664 = vunpack.c.h.b16 %v441
        %v2665 = vunpack.c.l.b16 %v442
        %v2666 = vunpack.c.h.b16 %v442
        %v2667 = vunpack.c.l.b16 %v443
        %v2668 = vunpack.c.h.b16 %v443
        %v2669 = vunpack.c.l.b16 %v444
        %v2670 = vunpack.c.h.b16 %v444
        %v2671 = vunpack.c.l.b16 %v445
        %v2672 = vunpack.c.h.b16 %v445
        %v2673 = vunpack.c.l.b16 %v446
        %v2674 = vunpack.c.h.b16 %v446
        %v2675 = vunpack.c.l.b16 %v447
        %v2676 = vunpack.c.h.b16 %v447
        %v2677 = vunpack.c.l.b16 %v448
        %v2678 = vunpack.c.h.b16 %v448
        %v2679 = vunpack.c.l.b16 %v449
        %v2680 = vunpack.c.h.b16 %v449
        %v2681 = vunpack.c.l.b16 %v450
        %v2682 = vunpack.c.h.b16 %v450
        %v2683 = vunpack.c.l.b16 %v451
        %v2684 = vunpack.c.h.b16 %v451
        %v2685 = vunpack.c.l.b16 %v452
        %v2686 = vunpack.c.h.b16 %v452
        %v2687 = vunpack.c.l.b16 %v453
        %v2688 = vunpack.c.h.b16 %v453
        %v2689 = vunpack.c.l.b16 %v454
        %v2690 = vunpack.c.h.b16 %v454
        %v2691 = vunpack.c.l.b16 %v455
        %v2692 = vunpack.c.h.b16 %v455
        %v2693 = vunpack.c.l.b16 %v456
        %v2694 = vunpack.c.h.b16 %v456
        %v2695 = vunpack.c.l.b16 %v457
        %v2696 = vunpack.c.h.b16 %v457
        %v2697 = vunpack.c.l.b16 %v458
        %v2698 = vunpack.c.h.b16 %v458
        %v2699 = vunpack.c.l.b16 %v459
        %v2700 = vunpack.c.h.b16 %v459
        %v2701 = vunpack.c.l.b16 %v460
        %v2702 = vunpack.c.h.b16 %v460
        %v2703 = vunpack.c.l.b16 %v461
        %v2704 = vunpack.c.h.b16 %v461
        %v2705 = vunpack.c.l.b16 %v462
        %v2706 = vunpack.c.h.b16 %v462
        %v2707 = vunpack.c.l.b16 %v463
        %v2708 = vunpack.c.h.b16 %v463
        %v2709 = vunpack.c.l.b16 %v464
        %v2710 = vunpack.c.h.b16 %v464
        %v2711 = vunpack.c.l.b16 %v465
        %v2712 = vunpack.c.h.b16 %v465
        %v2713 = vunpack.c.l.b16 %v466
        %v2714 = vunpack.c.h.b16 %v466
        %v2715 = vunpack.c.l.b16 %v467
        %v2716 = vunpack.c.h.b16 %v467
        %v2717 = vunpack.c.l.b16 %v468
        %v2718 = vunpack.c.h.b16 %v468
        %v2719 = vunpack.c.l.b16 %v469
        %v2720 = vunpack.c.h.b16 %v469
        %v2721 = vunpack.c.l.b16 %v470
        %v2722 = vunpack.c.h.b16 %v470
        %v2723 = vunpack.c.l.b16 %v471
        %v2724 = vunpack.c.h.b16 %v471
        %v2725 = vunpack.c.l.b16 %v472
        %v2726 = vunpack.c.h.b16 %v472
        %v2727 = vunpack.c.l.b16 %v473
        %v2728 = vunpack.c.h.b16 %v473
        %v2729 = vunpack.c.l.b16 %v474
        %v2730 = vunpack.c.h.b16 %v474
        %v2731 = vunpack.c.l.b16 %v475
        %v2732 = vunpack.c.h.b16 %v475
        %v2733 = vunpack.c.l.b16 %v476
        %v2734 = vunpack.c.h.b16 %v476
        %v2735 = vunpack.c.l.b16 %v477
        %v2736 = vunpack.c.h.b16 %v477
        %v2737 = vunpack.c.l.b16 %v478
        %v2738 = vunpack.c.h.b16 %v478
        %v2739 = vunpack.c.l.b16 %v479
        %v2740 = vunpack.c.h.b16 %v479
        %v2741 = vunpack.c.l.b16 %v480
        %v2742 = vunpack.c.h.b16 %v480
        %v2743 = vunpack.c.l.b16 %v481
        %v2744 = vunpack.c.h.b16 %v481
        %v2745 = vunpack.c.l.b16 %v482
        %v2746 = vunpack.c.h.b16 %v482
        %v2747 = vunpack.c.l.b16 %v483
        %v2748 = vunpack.c.h.b16 %v483
        %v2749 = vunpack.c.l.b16 %v484
        %v2750 = vunpack.c.h.b16 %v484
        %v2751 = vunpack.c.l.b16 %v485
        %v2752 = vunpack.c.h.b16 %v485
        %v2753 = vunpack.c.l.b16 %v486
        %v2754 = vunpack.c.h.b16 %v486
        %v2755 = vunpack.c.l.b16 %v487
        %v2756 = vunpack.c.h.b16 %v487
        %v2757 = vunpack.c.l.b16 %v488
        %v2758 = vunpack.c.h.b16 %v488
        %v2759 = vunpack.c.l.b16 %v489
        %v2760 = vunpack.c.h.b16 %v489
        %v2761 = vunpack.c.l.b16 %v490
        %v2762 = vunpack.c.h.b16 %v490
        %v2763 = vunpack.c.l.b16 %v491
        %v2764 = vunpack.c.h.b16 %v491
        %v2765 = vunpack.c.l.b16 %v492
        %v2766 = vunpack.c.h.b16 %v492
        %v2767 = vunpack.c.l.b16 %v493
        %v2768 = vunpack.c.h.b16 %v493
        %v2769 = vunpack.c.l.b16 %v494
        %v2770 = vunpack.c.h.b16 %v494
        %v2771 = vunpack.c.l.b16 %v495
        %v2772 = vunpack.c.h.b16 %v495
        %v2773 = vunpack.c.l.b16 %v496
        %v2774 = vunpack.c.h.b16 %v496
        %v2775 = vunpack.c.l.b16 %v497
        %v2776 = vunpack.c.h.b16 %v497
        %v2777 = vunpack.c.l.b16 %v498
        %v2778 = vunpack.c.h.b16 %v498
        %v2779 = vunpack.c.l.b16 %v499
        %v2780 = vunpack.c.h.b16 %v499
        %v2781 = vunpack.c.l.b16 %v500
        %v2782 = vunpack.c.h.b16 %v500
        %v2783 = vunpack.c.l.b16 %v501
        %v2784 = vunpack.c.h.b16 %v501
        %v2785 = vunpack.c.l.b16 %v502
        %v2786 = vunpack.c.h.b16 %v502
        %v2787 = vunpack.c.l.b16 %v503
        %v2788 = vunpack.c.h.b16 %v503
        %v2789 = vunpack.c.l.b16 %v504
        %v2790 = vunpack.c.h.b16 %v504
        %v2791 = vunpack.c.l.b16 %v505
        %v2792 = vunpack.c.h.b16 %v505
        %v2793 = vunpack.c.l.b16 %v506
        %v2794 = vunpack.c.h.b16 %v506
        %v2795 = vunpack.c.l.b16 %v507
        %v2796 = vunpack.c.h.b16 %v507
        %v2797 = vunpack.c.l.b16 %v508
        %v2798 = vunpack.c.h.b16 %v508
        %v2799 = vunpack.c.l.b16 %v509
        %v2800 = vunpack.c.h.b16 %v509
        %v2801 = vunpack.c.l.b16 %v510
        %v2802 = vunpack.c.h.b16 %v510
        %v2803 = vunpack.c.l.b16 %v511
        %v2804 = vunpack.c.h.b16 %v511
        %v2805 = vunpack.c.l.b16 %v512
        %v2806 = vunpack.c.h.b16 %v512
        %v2807 = vunpack.c.l.b16 %v513
        %v2808 = vunpack.c.h.b16 %v513
        %v2809 = vunpack.c.l.b16 %v514
        %v2810 = vunpack.c.h.b16 %v514
        %v2811 = vunpack.c.l.b16 %v515
        %v2812 = vunpack.c.h.b16 %v515
        %v2813 = vunpack.c.l.b16 %v516
        %v2814 = vunpack.c.h.b16 %v516
        %v2815 = vunpack.c.l.b16 %v517
        %v2816 = vunpack.c.h.b16 %v517
        %v2817 = vunpack.c.l.b16 %v518
        %v2818 = vunpack.c.h.b16 %v518
        %v2819 = vunpack.c.l.b16 %v519
        %v2820 = vunpack.c.h.b16 %v519
        %v2821 = vunpack.c.l.b16 %v520
        %v2822 = vunpack.c.h.b16 %v520
        %v2823 = vunpack.c.l.b16 %v521
        %v2824 = vunpack.c.h.b16 %v521
        %v2825 = vunpack.c.l.b16 %v522
        %v2826 = vunpack.c.h.b16 %v522
        %v2827 = vunpack.c.l.b16 %v523
        %v2828 = vunpack.c.h.b16 %v523
        %v2829 = vunpack.c.l.b16 %v524
        %v2830 = vunpack.c.h.b16 %v524
        %v2831 = vunpack.c.l.b16 %v525
        %v2832 = vunpack.c.h.b16 %v525
        %v2833 = vunpack.c.l.b16 %v526
        %v2834 = vunpack.c.h.b16 %v526
        %v2835 = vunpack.c.l.b16 %v527
        %v2836 = vunpack.c.h.b16 %v527
        %v2837 = vunpack.c.l.b16 %v528
        %v2838 = vunpack.c.h.b16 %v528
        %v2839 = vunpack.c.l.b16 %v529
        %v2840 = vunpack.c.h.b16 %v529
        %v2841 = vunpack.c.l.b16 %v530
        %v2842 = vunpack.c.h.b16 %v530
        %v2843 = vunpack.c.l.b16 %v531
        %v2844 = vunpack.c.h.b16 %v531
        %v2845 = vunpack.c.l.b16 %v532
        %v2846 = vunpack.c.h.b16 %v532
        %v2847 = vunpack.c.l.b16 %v533
        %v2848 = vunpack.c.h.b16 %v533
        %v2849 = vunpack.c.l.b16 %v534
        %v2850 = vunpack.c.h.b16 %v534
        %v2851 = vunpack.c.l.b16 %v535
        %v2852 = vunpack.c.h.b16 %v535
        %v2853 = vunpack.c.l.b16 %v536
        %v2854 = vunpack.c.h.b16 %v536
        %v2855 = vunpack.c.l.b16 %v537
        %v2856 = vunpack.c.h.b16 %v537
        %v2857 = vunpack.c.l.b16 %v538
        %v2858 = vunpack.c.h.b16 %v538
        %v2859 = vunpack.c.l.b16 %v539
        %v2860 = vunpack.c.h.b16 %v539
        %v2861 = vunpack.c.l.b16 %v540
        %v2862 = vunpack.c.h.b16 %v540
        %v2863 = vunpack.c.l.b16 %v541
        %v2864 = vunpack.c.h.b16 %v541
        %v2865 = vunpack.c.l.b16 %v542
        %v2866 = vunpack.c.h.b16 %v542
        %v2867 = vunpack.c.l.b16 %v543
        %v2868 = vunpack.c.h.b16 %v543
        %v2869 = vunpack.c.l.b16 %v544
        %v2870 = vunpack.c.h.b16 %v544
        %v2871 = vunpack.c.l.b16 %v545
        %v2872 = vunpack.c.h.b16 %v545
        %v2873 = vunpack.c.l.b16 %v546
        %v2874 = vunpack.c.h.b16 %v546
        %v2875 = vunpack.c.l.b16 %v547
        %v2876 = vunpack.c.h.b16 %v547
        %v2877 = vunpack.c.l.b16 %v548
        %v2878 = vunpack.c.h.b16 %v548
        %v2879 = vunpack.c.l.b16 %v549
        %v2880 = vunpack.c.h.b16 %v549
        %v2881 = vunpack.c.l.b16 %v550
        %v2882 = vunpack.c.h.b16 %v550
        %v2883 = vunpack.c.l.b16 %v551
        %v2884 = vunpack.c.h.b16 %v551
        %v2885 = vunpack.c.l.b16 %v552
        %v2886 = vunpack.c.h.b16 %v552
        %v2887 = vunpack.c.l.b16 %v553
        %v2888 = vunpack.c.h.b16 %v553
        %v2889 = vunpack.c.l.b16 %v554
        %v2890 = vunpack.c.h.b16 %v554
        %v2891 = vunpack.c.l.b16 %v555
        %v2892 = vunpack.c.h.b16 %v555
        %v2893 = vunpack.c.l.b16 %v556
        %v2894 = vunpack.c.h.b16 %v556
        %v2895 = vunpack.c.l.b16 %v557
        %v2896 = vunpack.c.h.b16 %v557
        %v2897 = vunpack.c.l.b16 %v558
        %v2898 = vunpack.c.h.b16 %v558
        %v2899 = vunpack.c.l.b16 %v559
        %v2900 = vunpack.c.h.b16 %v559
        %v2901 = vunpack.c.l.b16 %v560
        %v2902 = vunpack.c.h.b16 %v560
        %v2903 = vunpack.c.l.b16 %v561
        %v2904 = vunpack.c.h.b16 %v561
        %v2905 = vunpack.c.l.b16 %v562
        %v2906 = vunpack.c.h.b16 %v562
        %v2907 = vunpack.c.l.b16 %v563
        %v2908 = vunpack.c.h.b16 %v563
        %v2909 = vunpack.c.l.b16 %v564
        %v2910 = vunpack.c.h.b16 %v564
        %v2911 = vunpack.c.l.b16 %v565
        %v2912 = vunpack.c.h.b16 %v565
        %v2913 = vunpack.c.l.b16 %v566
        %v2914 = vunpack.c.h.b16 %v566
        %v2915 = vunpack.c.l.b16 %v567
        %v2916 = vunpack.c.h.b16 %v567
        %v2917 = vunpack.c.l.b16 %v568
        %v2918 = vunpack.c.h.b16 %v568
        %v2919 = vunpack.c.l.b16 %v569
        %v2920 = vunpack.c.h.b16 %v569
        %v2921 = vunpack.c.l.b16 %v570
        %v2922 = vunpack.c.h.b16 %v570
        %v2923 = vunpack.c.l.b16 %v571
        %v2924 = vunpack.c.h.b16 %v571
        %v2925 = vunpack.c.l.b16 %v572
        %v2926 = vunpack.c.h.b16 %v572
        %v2927 = vunpack.c.l.b16 %v573
        %v2928 = vunpack.c.h.b16 %v573
        %v2929 = vunpack.c.l.b16 %v574
        %v2930 = vunpack.c.h.b16 %v574
        %v2931 = vunpack.c.l.b16 %v575
        %v2932 = vunpack.c.h.b16 %v575
        %v2933 = vunpack.c.l.b16 %v576
        %v2934 = vunpack.c.h.b16 %v576
        %v2935 = vunpack.c.l.b16 %v577
        %v2936 = vunpack.c.h.b16 %v577
        %v2937 = vunpack.c.l.b16 %v578
        %v2938 = vunpack.c.h.b16 %v578
        %v2939 = vunpack.c.l.b16 %v579
        %v2940 = vunpack.c.h.b16 %v579
        %v2941 = vunpack.c.l.b16 %v580
        %v2942 = vunpack.c.h.b16 %v580
        %v2943 = vunpack.c.l.b16 %v581
        %v2944 = vunpack.c.h.b16 %v581
        %v2945 = vunpack.c.l.b16 %v582
        %v2946 = vunpack.c.h.b16 %v582
        %v2947 = vunpack.c.l.b16 %v583
        %v2948 = vunpack.c.h.b16 %v583
        %v2949 = vunpack.c.l.b16 %v584
        %v2950 = vunpack.c.h.b16 %v584
        %v2951 = vunpack.c.l.b16 %v585
        %v2952 = vunpack.c.h.b16 %v585
        %v2953 = vunpack.c.l.b16 %v586
        %v2954 = vunpack.c.h.b16 %v586
        %v2955 = vunpack.c.l.b16 %v587
        %v2956 = vunpack.c.h.b16 %v587
        %v2957 = vunpack.c.l.b16 %v588
        %v2958 = vunpack.c.h.b16 %v588
        %v2959 = vunpack.c.l.b16 %v589
        %v2960 = vunpack.c.h.b16 %v589
        %v2961 = vunpack.c.l.b16 %v590
        %v2962 = vunpack.c.h.b16 %v590
        %v2963 = vunpack.c.l.b16 %v591
        %v2964 = vunpack.c.h.b16 %v591
        %v2965 = vunpack.c.l.b16 %v592
        %v2966 = vunpack.c.h.b16 %v592
        %v2967 = vunpack.c.l.b16 %v593
        %v2968 = vunpack.c.h.b16 %v593
        %v2969 = vunpack.c.l.b16 %v594
        %v2970 = vunpack.c.h.b16 %v594
        %v2971 = vunpack.c.l.b16 %v595
        %v2972 = vunpack.c.h.b16 %v595
        %v2973 = vunpack.c.l.b16 %v596
        %v2974 = vunpack.c.h.b16 %v596
        %v2975 = vunpack.c.l.b16 %v597
        %v2976 = vunpack.c.h.b16 %v597
        %v2977 = vunpack.c.l.b16 %v598
        %v2978 = vunpack.c.h.b16 %v598
        %v2979 = vunpack.c.l.b16 %v599
        %v2980 = vunpack.c.h.b16 %v599
        %v2981 = vunpack.c.l.b16 %v600
        %v2982 = vunpack.c.h.b16 %v600
        %v2983 = vunpack.c.l.b16 %v601
        %v2984 = vunpack.c.h.b16 %v601
        %v2985 = vunpack.c.l.b16 %v602
        %v2986 = vunpack.c.h.b16 %v602
        %v2987 = vunpack.c.l.b16 %v603
        %v2988 = vunpack.c.h.b16 %v603
        %v2989 = vunpack.c.l.b16 %v604
        %v2990 = vunpack.c.h.b16 %v604
        %v2991 = vunpack.c.l.b16 %v605
        %v2992 = vunpack.c.h.b16 %v605
        %v2993 = vunpack.c.l.b16 %v606
        %v2994 = vunpack.c.h.b16 %v606
        %v2995 = vunpack.c.l.b16 %v607
        %v2996 = vunpack.c.h.b16 %v607
        %v2997 = vunpack.c.l.b16 %v608
        %v2998 = vunpack.c.h.b16 %v608
        %v2999 = vunpack.c.l.b16 %v609
        %v3000 = vunpack.c.h.b16 %v609
        %v3001 = vunpack.c.l.b16 %v610
        %v3002 = vunpack.c.h.b16 %v610
        %v3003 = vunpack.c.l.b16 %v611
        %v3004 = vunpack.c.h.b16 %v611
        %v3005 = vunpack.c.l.b16 %v612
        %v3006 = vunpack.c.h.b16 %v612
        %v3007 = vunpack.c.l.b16 %v613
        %v3008 = vunpack.c.h.b16 %v613
        %v3009 = vunpack.c.l.b16 %v614
        %v3010 = vunpack.c.h.b16 %v614
        %v3011 = vunpack.c.l.b16 %v615
        %v3012 = vunpack.c.h.b16 %v615
        %v3013 = vunpack.c.l.b16 %v616
        %v3014 = vunpack.c.h.b16 %v616
        %v3015 = vunpack.c.l.b16 %v617
        %v3016 = vunpack.c.h.b16 %v617
        %v3017 = vunpack.c.l.b16 %v618
        %v3018 = vunpack.c.h.b16 %v618
        %v3019 = vunpack.c.l.b16 %v619
        %v3020 = vunpack.c.h.b16 %v619
        %v3021 = vunpack.c.l.b16 %v620
        %v3022 = vunpack.c.h.b16 %v620
        %v3023 = vunpack.c.l.b16 %v621
        %v3024 = vunpack.c.h.b16 %v621
        %v3025 = vunpack.c.l.b16 %v622
        %v3026 = vunpack.c.h.b16 %v622
        %v3027 = vunpack.c.l.b16 %v623
        %v3028 = vunpack.c.h.b16 %v623
        %v3029 = vunpack.c.l.b16 %v624
        %v3030 = vunpack.c.h.b16 %v624
        %v3031 = vunpack.c.l.b16 %v625
        %v3032 = vunpack.c.h.b16 %v625
        %v3033 = vunpack.c.l.b16 %v626
        %v3034 = vunpack.c.h.b16 %v626
        %v3035 = vunpack.c.l.b16 %v627
        %v3036 = vunpack.c.h.b16 %v627
        %v3037 = vunpack.c.l.b16 %v628
        %v3038 = vunpack.c.h.b16 %v628
        %v3039 = vunpack.c.l.b16 %v629
        %v3040 = vunpack.c.h.b16 %v629
        %v3041 = vunpack.c.l.b16 %v630
        %v3042 = vunpack.c.h.b16 %v630
        %v3043 = vunpack.c.l.b16 %v631
        %v3044 = vunpack.c.h.b16 %v631
        %v3045 = vunpack.c.l.b16 %v632
        %v3046 = vunpack.c.h.b16 %v632
        %v3047 = vunpack.c.l.b16 %v633
        %v3048 = vunpack.c.h.b16 %v633
        %v3049 = vunpack.c.l.b16 %v634
        %v3050 = vunpack.c.h.b16 %v634
        %v3051 = vunpack.c.l.b16 %v635
        %v3052 = vunpack.c.h.b16 %v635
        %v3053 = vunpack.c.l.b16 %v636
        %v3054 = vunpack.c.h.b16 %v636
        %v3055 = vunpack.c.l.b16 %v637
        %v3056 = vunpack.c.h.b16 %v637
        %v3057 = vunpack.c.l.b16 %v638
        %v3058 = vunpack.c.h.b16 %v638
        %v3059 = vunpack.c.l.b16 %v639
        %v3060 = vunpack.c.h.b16 %v639
        %v3061 = vunpack.c.l.b16 %v640
        %v3062 = vunpack.c.h.b16 %v640
        %v3063 = vunpack.c.l.b16 %v641
        %v3064 = vunpack.c.h.b16 %v641
        %v3065 = vunpack.c.l.b16 %v642
        %v3066 = vunpack.c.h.b16 %v642
        %v3067 = vunpack.c.l.b16 %v643
        %v3068 = vunpack.c.h.b16 %v643
        %v3069 = vunpack.c.l.b16 %v644
        %v3070 = vunpack.c.h.b16 %v644
        %v3071 = vunpack.c.l.b16 %v645
        %v3072 = vunpack.c.h.b16 %v645
        %v3073 = vunpack.c.l.b16 %v646
        %v3074 = vunpack.c.h.b16 %v646
        %v3075 = vunpack.c.l.b16 %v647
        %v3076 = vunpack.c.h.b16 %v647
        %v3077 = vunpack.c.l.b16 %v648
        %v3078 = vunpack.c.h.b16 %v648
        %v3079 = vunpack.c.l.b16 %v649
        %v3080 = vunpack.c.h.b16 %v649
        %v3081 = vunpack.c.l.b16 %v650
        %v3082 = vunpack.c.h.b16 %v650
        %v3083 = vunpack.c.l.b16 %v651
        %v3084 = vunpack.c.h.b16 %v651
        %v3085 = vunpack.c.l.b16 %v652
        %v3086 = vunpack.c.h.b16 %v652
        %v3087 = vunpack.c.l.b16 %v653
        %v3088 = vunpack.c.h.b16 %v653
        %v3089 = vunpack.c.l.b16 %v654
        %v3090 = vunpack.c.h.b16 %v654
        %v3091 = vunpack.c.l.b16 %v655
        %v3092 = vunpack.c.h.b16 %v655
        %v3093 = vunpack.c.l.b16 %v656
        %v3094 = vunpack.c.h.b16 %v656
        %v3095 = vunpack.c.l.b16 %v657
        %v3096 = vunpack.c.h.b16 %v657
        %v3097 = vunpack.c.l.b16 %v658
        %v3098 = vunpack.c.h.b16 %v658
        %v3099 = vunpack.c.l.b16 %v659
        %v3100 = vunpack.c.h.b16 %v659
        %v3101 = vunpack.c.l.b16 %v660
        %v3102 = vunpack.c.h.b16 %v660
        %v3103 = vunpack.c.l.b16 %v661
        %v3104 = vunpack.c.h.b16 %v661
        %v3105 = vunpack.c.l.b16 %v662
        %v3106 = vunpack.c.h.b16 %v662
        %v3107 = vunpack.c.l.b16 %v663
        %v3108 = vunpack.c.h.b16 %v663
        %v3109 = vunpack.c.l.b16 %v664
        %v3110 = vunpack.c.h.b16 %v664
        %v3111 = vunpack.c.l.b16 %v665
        %v3112 = vunpack.c.h.b16 %v665
        %v3113 = vunpack.c.l.b16 %v666
        %v3114 = vunpack.c.h.b16 %v666
        %v3115 = vunpack.c.l.b16 %v667
        %v3116 = vunpack.c.h.b16 %v667
        %v3117 = vunpack.c.l.b16 %v668
        %v3118 = vunpack.c.h.b16 %v668
        %v3119 = vunpack.c.l.b16 %v669
        %v3120 = vunpack.c.h.b16 %v669
        %v3121 = vunpack.c.l.b16 %v670
        %v3122 = vunpack.c.h.b16 %v670
        %v3123 = vunpack.c.l.b16 %v671
        %v3124 = vunpack.c.h.b16 %v671
        %v3125 = vunpack.c.l.b16 %v672
        %v3126 = vunpack.c.h.b16 %v672
        %v3127 = vunpack.c.l.b16 %v673
        %v3128 = vunpack.c.h.b16 %v673
        %v3129 = vunpack.c.l.b16 %v674
        %v3130 = vunpack.c.h.b16 %v674
        %v3131 = vunpack.c.l.b16 %v675
        %v3132 = vunpack.c.h.b16 %v675
        %v3133 = vunpack.c.l.b16 %v676
        %v3134 = vunpack.c.h.b16 %v676
        %v3135 = vunpack.c.l.b16 %v677
        %v3136 = vunpack.c.h.b16 %v677
        %v3137 = vunpack.c.l.b16 %v678
        %v3138 = vunpack.c.h.b16 %v678
        %v3139 = vunpack.c.l.b16 %v679
        %v3140 = vunpack.c.h.b16 %v679
        %v3141 = vunpack.c.l.b16 %v680
        %v3142 = vunpack.c.h.b16 %v680
        %v3143 = vunpack.c.l.b16 %v681
        %v3144 = vunpack.c.h.b16 %v681
        %v3145 = vunpack.c.l.b16 %v682
        %v3146 = vunpack.c.h.b16 %v682
        %v3147 = vunpack.c.l.b16 %v683
        %v3148 = vunpack.c.h.b16 %v683
        %v3149 = vunpack.c.l.b16 %v684
        %v3150 = vunpack.c.h.b16 %v684
        %v3151 = vunpack.c.l.b16 %v685
        %v3152 = vunpack.c.h.b16 %v685
        %v3153 = vunpack.c.l.b16 %v686
        %v3154 = vunpack.c.h.b16 %v686
        %v3155 = vunpack.c.l.b16 %v687
        %v3156 = vunpack.c.h.b16 %v687
        %v3157 = vunpack.c.l.b16 %v688
        %v3158 = vunpack.c.h.b16 %v688
        %v3159 = vunpack.c.l.b16 %v689
        %v3160 = vunpack.c.h.b16 %v689
        %v3161 = vunpack.c.l.b16 %v690
        %v3162 = vunpack.c.h.b16 %v690
        %v3163 = vunpack.c.l.b16 %v691
        %v3164 = vunpack.c.h.b16 %v691
        %v3165 = vunpack.c.l.b16 %v692
        %v3166 = vunpack.c.h.b16 %v692
        %v3167 = vunpack.c.l.b16 %v693
        %v3168 = vunpack.c.h.b16 %v693
        %v3169 = vunpack.c.l.b16 %v694
        %v3170 = vunpack.c.h.b16 %v694
        %v3171 = vunpack.c.l.b16 %v695
        %v3172 = vunpack.c.h.b16 %v695
        %v3173 = vunpack.c.l.b16 %v696
        %v3174 = vunpack.c.h.b16 %v696
        %v3175 = vunpack.c.l.b16 %v697
        %v3176 = vunpack.c.h.b16 %v697
        %v3177 = vunpack.c.l.b16 %v698
        %v3178 = vunpack.c.h.b16 %v698
        %v3179 = vunpack.c.l.b16 %v699
        %v3180 = vunpack.c.h.b16 %v699
        %v3181 = vunpack.c.l.b16 %v700
        %v3182 = vunpack.c.h.b16 %v700
        %v3183 = vunpack.c.l.b16 %v701
        %v3184 = vunpack.c.h.b16 %v701
        %v3185 = vunpack.c.l.b16 %v702
        %v3186 = vunpack.c.h.b16 %v702
        %v3187 = vunpack.c.l.b16 %v703
        %v3188 = vunpack.c.h.b16 %v703
        %v3189 = vunpack.c.l.b16 %v704
        %v3190 = vunpack.c.h.b16 %v704
        %v3191 = vunpack.c.l.b16 %v705
        %v3192 = vunpack.c.h.b16 %v705
        %v3193 = vunpack.c.l.b16 %v706
        %v3194 = vunpack.c.h.b16 %v706
        %v3195 = vunpack.c.l.b16 %v707
        %v3196 = vunpack.c.h.b16 %v707
        %v3197 = vunpack.c.l.b16 %v708
        %v3198 = vunpack.c.h.b16 %v708
        %v3199 = vunpack.c.l.b16 %v709
        %v3200 = vunpack.c.h.b16 %v709
        %v3201 = vunpack.c.l.b16 %v710
        %v3202 = vunpack.c.h.b16 %v710
        %v3203 = vunpack.c.l.b16 %v711
        %v3204 = vunpack.c.h.b16 %v711
        %v3205 = vunpack.c.l.b16 %v712
        %v3206 = vunpack.c.h.b16 %v712
        %v3207 = vunpack.c.l.b16 %v713
        %v3208 = vunpack.c.h.b16 %v713
        %v3209 = vunpack.c.l.b16 %v714
        %v3210 = vunpack.c.h.b16 %v714
        %v3211 = vunpack.c.l.b16 %v715
        %v3212 = vunpack.c.h.b16 %v715
        %v3213 = vunpack.c.l.b16 %v716
        %v3214 = vunpack.c.h.b16 %v716
        %v3215 = vunpack.c.l.b16 %v717
        %v3216 = vunpack.c.h.b16 %v717
        %v3217 = vunpack.c.l.b16 %v718
        %v3218 = vunpack.c.h.b16 %v718
        %v3219 = vunpack.c.l.b16 %v719
        %v3220 = vunpack.c.h.b16 %v719
        %v3221 = vunpack.c.l.b16 %v720
        %v3222 = vunpack.c.h.b16 %v720
        %v3223 = vunpack.c.l.b16 %v721
        %v3224 = vunpack.c.h.b16 %v721
        %v3225 = vunpack.c.l.b16 %v722
        %v3226 = vunpack.c.h.b16 %v722
        %v3227 = vunpack.c.l.b16 %v723
        %v3228 = vunpack.c.h.b16 %v723
        %v3229 = vunpack.c.l.b16 %v724
        %v3230 = vunpack.c.h.b16 %v724
        %v3231 = vunpack.c.l.b16 %v725
        %v3232 = vunpack.c.h.b16 %v725
        %v3233 = vunpack.c.l.b16 %v726
        %v3234 = vunpack.c.h.b16 %v726
        %v3235 = vunpack.c.l.b16 %v727
        %v3236 = vunpack.c.h.b16 %v727
        %v3237 = vunpack.c.l.b16 %v728
        %v3238 = vunpack.c.h.b16 %v728
        %v3239 = vunpack.c.l.b16 %v729
        %v3240 = vunpack.c.h.b16 %v729
        %v3241 = vunpack.c.l.b16 %v730
        %v3242 = vunpack.c.h.b16 %v730
        %v3243 = vunpack.c.l.b16 %v731
        %v3244 = vunpack.c.h.b16 %v731
        %v3245 = vunpack.c.l.b16 %v732
        %v3246 = vunpack.c.h.b16 %v732
        %v3247 = vunpack.c.l.b16 %v733
        %v3248 = vunpack.c.h.b16 %v733
        %v3249 = vunpack.c.l.b16 %v734
        %v3250 = vunpack.c.h.b16 %v734
        %v3251 = vunpack.c.l.b16 %v735
        %v3252 = vunpack.c.h.b16 %v735
        %v3253 = vunpack.c.l.b16 %v736
        %v3254 = vunpack.c.h.b16 %v736
        %v3255 = vunpack.c.l.b16 %v737
        %v3256 = vunpack.c.h.b16 %v737
        %v3257 = vunpack.c.l.b16 %v738
        %v3258 = vunpack.c.h.b16 %v738
        %v3259 = vunpack.c.l.b16 %v739
        %v3260 = vunpack.c.h.b16 %v739
        %v3261 = vunpack.c.l.b16 %v740
        %v3262 = vunpack.c.h.b16 %v740
        %v3263 = vunpack.c.l.b16 %v741
        %v3264 = vunpack.c.h.b16 %v741
        %v3265 = vunpack.c.l.b16 %v742
        %v3266 = vunpack.c.h.b16 %v742
        %v3267 = vunpack.c.l.b16 %v743
        %v3268 = vunpack.c.h.b16 %v743
        %v3269 = vunpack.c.l.b16 %v744
        %v3270 = vunpack.c.h.b16 %v744
        %v3271 = vunpack.c.l.b16 %v745
        %v3272 = vunpack.c.h.b16 %v745
        %v3273 = vunpack.c.l.b16 %v746
        %v3274 = vunpack.c.h.b16 %v746
        %v3275 = vunpack.c.l.b16 %v747
        %v3276 = vunpack.c.h.b16 %v747
        %v3277 = vunpack.c.l.b16 %v748
        %v3278 = vunpack.c.h.b16 %v748
        %v3279 = vunpack.c.l.b16 %v749
        %v3280 = vunpack.c.h.b16 %v749
        %v3281 = vunpack.c.l.b16 %v750
        %v3282 = vunpack.c.h.b16 %v750
        %v3283 = vunpack.c.l.b16 %v751
        %v3284 = vunpack.c.h.b16 %v751
        %v3285 = vunpack.c.l.b16 %v752
        %v3286 = vunpack.c.h.b16 %v752
        %v3287 = vunpack.c.l.b16 %v753
        %v3288 = vunpack.c.h.b16 %v753
        %v3289 = vunpack.c.l.b16 %v754
        %v3290 = vunpack.c.h.b16 %v754
        %v3291 = vunpack.c.l.b16 %v755
        %v3292 = vunpack.c.h.b16 %v755
        %v3293 = vunpack.c.l.b16 %v756
        %v3294 = vunpack.c.h.b16 %v756
        %v3295 = vunpack.c.l.b16 %v757
        %v3296 = vunpack.c.h.b16 %v757
        %v3297 = vunpack.c.l.b16 %v758
        %v3298 = vunpack.c.h.b16 %v758
        %v3299 = vunpack.c.l.b16 %v759
        %v3300 = vunpack.c.h.b16 %v759
        %v3301 = vunpack.c.l.b16 %v760
        %v3302 = vunpack.c.h.b16 %v760
        %v3303 = vunpack.c.l.b16 %v761
        %v3304 = vunpack.c.h.b16 %v761
        %v3305 = vunpack.c.l.b16 %v762
        %v3306 = vunpack.c.h.b16 %v762
        %v3307 = vunpack.c.l.b16 %v763
        %v3308 = vunpack.c.h.b16 %v763
        %v3309 = vunpack.c.l.b16 %v764
        %v3310 = vunpack.c.h.b16 %v764
        %v3311 = vunpack.c.l.b16 %v765
        %v3312 = vunpack.c.h.b16 %v765
        %v3313 = vunpack.c.l.b16 %v766
        %v3314 = vunpack.c.h.b16 %v766
        %v3315 = vunpack.c.l.b16 %v767
        %v3316 = vunpack.c.h.b16 %v767
        %v3317 = vunpack.c.l.b16 %v768
        %v3318 = vunpack.c.h.b16 %v768
        %v3319 = vunpack.c.l.b16 %v769
        %v3320 = vunpack.c.h.b16 %v769
        %v3321 = vunpack.c.l.b16 %v770
        %v3322 = vunpack.c.h.b16 %v770
        %v3323 = vunpack.c.l.b16 %v771
        %v3324 = vunpack.c.h.b16 %v771
        %v3325 = vunpack.c.l.b16 %v772
        %v3326 = vunpack.c.h.b16 %v772
        %v3327 = vunpack.c.l.b16 %v773
        %v3328 = vunpack.c.h.b16 %v773
        %v3329 = vunpack.c.l.b16 %v774
        %v3330 = vunpack.c.h.b16 %v774
        %v3331 = vunpack.c.l.b16 %v775
        %v3332 = vunpack.c.h.b16 %v775
        %v3333 = vunpack.c.l.b16 %v776
        %v3334 = vunpack.c.h.b16 %v776
        %v3335 = vunpack.c.l.b16 %v777
        %v3336 = vunpack.c.h.b16 %v777
        %v3337 = vunpack.c.l.b16 %v778
        %v3338 = vunpack.c.h.b16 %v778
        %v3339 = vunpack.c.l.b16 %v779
        %v3340 = vunpack.c.h.b16 %v779
        %v3341 = vunpack.c.l.b16 %v780
        %v3342 = vunpack.c.h.b16 %v780
        %v3343 = vunpack.c.l.b16 %v781
        %v3344 = vunpack.c.h.b16 %v781
        %v3345 = vunpack.c.l.b16 %v782
        %v3346 = vunpack.c.h.b16 %v782
        %v3347 = vunpack.c.l.b16 %v783
        %v3348 = vunpack.c.h.b16 %v783
        %v3349 = vunpack.c.l.b16 %v784
        %v3350 = vunpack.c.h.b16 %v784
        %v3351 = vunpack.c.l.b16 %v785
        %v3352 = vunpack.c.h.b16 %v785
        %v3353 = vunpack.c.l.b16 %v786
        %v3354 = vunpack.c.h.b16 %v786
        %v3355 = vunpack.c.l.b16 %v787
        %v3356 = vunpack.c.h.b16 %v787
        %v3357 = vunpack.c.l.b16 %v788
        %v3358 = vunpack.c.h.b16 %v788
        %v3359 = vunpack.c.l.b16 %v789
        %v3360 = vunpack.c.h.b16 %v789
        %v3361 = vunpack.c.l.b16 %v790
        %v3362 = vunpack.c.h.b16 %v790
        %v3363 = vunpack.c.l.b16 %v791
        %v3364 = vunpack.c.h.b16 %v791
        %v3365 = vunpack.c.l.b16 %v792
        %v3366 = vunpack.c.h.b16 %v792
        %v3367 = vunpack.c.l.b16 %v793
        %v3368 = vunpack.c.h.b16 %v793
        %v3369 = vunpack.c.l.b16 %v794
        %v3370 = vunpack.c.h.b16 %v794
        %v3371 = vunpack.c.l.b16 %v795
        %v3372 = vunpack.c.h.b16 %v795
        %v3373 = vunpack.c.l.b16 %v796
        %v3374 = vunpack.c.h.b16 %v796
        %v3375 = vunpack.c.l.b16 %v797
        %v3376 = vunpack.c.h.b16 %v797
        %v3377 = vunpack.c.l.b16 %v798
        %v3378 = vunpack.c.h.b16 %v798
        %v3379 = vunpack.c.l.b16 %v799
        %v3380 = vunpack.c.h.b16 %v799
        %v3381 = vunpack.c.l.b16 %v800
        %v3382 = vunpack.c.h.b16 %v800
        %v3383 = vunpack.c.l.b16 %v801
        %v3384 = vunpack.c.h.b16 %v801
        %v3385 = vunpack.c.l.b16 %v802
        %v3386 = vunpack.c.h.b16 %v802
        %v3387 = vunpack.c.l.b16 %v803
        %v3388 = vunpack.c.h.b16 %v803
        %v3389 = vunpack.c.l.b16 %v804
        %v3390 = vunpack.c.h.b16 %v804
        %v3391 = vunpack.c.l.b16 %v805
        %v3392 = vunpack.c.h.b16 %v805
        %v3393 = vunpack.c.l.b16 %v806
        %v3394 = vunpack.c.h.b16 %v806
        %v3395 = vunpack.c.l.b16 %v807
        %v3396 = vunpack.c.h.b16 %v807
        %v3397 = vunpack.c.l.b16 %v808
        %v3398 = vunpack.c.h.b16 %v808
        %v3399 = vunpack.c.l.b16 %v809
        %v3400 = vunpack.c.h.b16 %v809
        %v3401 = vunpack.c.l.b16 %v810
        %v3402 = vunpack.c.h.b16 %v810
        %v3403 = vpack.c.b16 %v2293, %v2283
        %v3404 = vpack.c.b16 %v2294, %v2284
        %v3405 = vpack.c.b16 %v2295, %v2285
        %v3406 = vpack.c.b16 %v2296, %v2286
        %v3407 = vpack.c.b16 %v2297, %v2287
        %v3408 = vpack.c.b16 %v2298, %v2288
        %v3409 = vpack.c.b16 %v2299, %v2289
        %v3410 = vpack.c.b16 %v2300, %v2290
        %v3411 = vpack.c.b16 %v2301, %v2291
        %v3412 = vpack.c.b16 %v2302, %v2292
        %v3413 = vpack.c.b16 %v2313, %v2303
        %v3414 = vpack.c.b16 %v2314, %v2304
        %v3415 = vpack.c.b16 %v2315, %v2305
        %v3416 = vpack.c.b16 %v2316, %v2306
        %v3417 = vpack.c.b16 %v2317, %v2307
        %v3418 = vpack.c.b16 %v2318, %v2308
        %v3419 = vpack.c.b16 %v2319, %v2309
        %v3420 = vpack.c.b16 %v2320, %v2310
        %v3421 = vpack.c.b16 %v2321, %v2311
        %v3422 = vpack.c.b16 %v2322, %v2312
        %v3423 = vpack.c.b16 %v2333, %v2323
        %v3424 = vpack.c.b16 %v2334, %v2324
        %v3425 = vpack.c.b16 %v2335, %v2325
        %v3426 = vpack.c.b16 %v2336, %v2326
        %v3427 = vpack.c.b16 %v2337, %v2327
        %v3428 = vpack.c.b16 %v2338, %v2328
        %v3429 = vpack.c.b16 %v2339, %v2329
        %v3430 = vpack.c.b16 %v2340, %v2330
        %v3431 = vpack.c.b16 %v2341, %v2331
        %v3432 = vpack.c.b16 %v2342, %v2332
        %v3433 = vpack.c.b16 %v2353, %v2343
        %v3434 = vpack.c.b16 %v2354, %v2344
        %v3435 = vpack.c.b16 %v2355, %v2345
        %v3436 = vpack.c.b16 %v2356, %v2346
        %v3437 = vpack.c.b16 %v2357, %v2347
        %v3438 = vpack.c.b16 %v2358, %v2348
        %v3439 = vpack.c.b16 %v2359, %v2349
        %v3440 = vpack.c.b16 %v2360, %v2350
        %v3441 = vpack.c.b16 %v2361, %v2351
        %v3442 = vpack.c.b16 %v2362, %v2352
        %v3443 = vpack.c.b16 %v2373, %v2363
        %v3444 = vpack.c.b16 %v2374, %v2364
        %v3445 = vpack.c.b16 %v2375, %v2365
        %v3446 = vpack.c.b16 %v2376, %v2366
        %v3447 = vpack.c.b16 %v2377, %v2367
        %v3448 = vpack.c.b16 %v2378, %v2368
        %v3449 = vpack.c.b16 %v2379, %v2369
        %v3450 = vpack.c.b16 %v2380, %v2370
        %v3451 = vpack.c.b16 %v2381, %v2371
        %v3452 = vpack.c.b16 %v2382, %v2372
        %v3453 = vpack.c.b16 %v2393, %v2383
        %v3454 = vpack.c.b16 %v2394, %v2384
        %v3455 = vpack.c.b16 %v2395, %v2385
        %v3456 = vpack.c.b16 %v2396, %v2386
        %v3457 = vpack.c.b16 %v2397, %v2387
        %v3458 = vpack.c.b16 %v2398, %v2388
        %v3459 = vpack.c.b16 %v2399, %v2389
        %v3460 = vpack.c.b16 %v2400, %v2390
        %v3461 = vpack.c.b16 %v2401, %v2391
        %v3462 = vpack.c.b16 %v2402, %v2392
        %v3463 = vpack.c.b16 %v2413, %v2403
        %v3464 = vpack.c.b16 %v2414, %v2404
        %v3465 = vpack.c.b16 %v2415, %v2405
        %v3466 = vpack.c.b16 %v2416, %v2406
        %v3467 = vpack.c.b16 %v2417, %v2407
        %v3468 = vpack.c.b16 %v2418, %v2408
        %v3469 = vpack.c.b16 %v2419, %v2409
        %v3470 = vpack.c.b16 %v2420, %v2410
        %v3471 = vpack.c.b16 %v2421, %v2411
        %v3472 = vpack.c.b16 %v2422, %v2412
        %v3473 = vpack.c.b16 %v2433, %v2423
        %v3474 = vpack.c.b16 %v2434, %v2424
        %v3475 = vpack.c.b16 %v2435, %v2425
        %v3476 = vpack.c.b16 %v2436, %v2426
        %v3477 = vpack.c.b16 %v2437, %v2427
        %v3478 = vpack.c.b16 %v2438, %v2428
        %v3479 = vpack.c.b16 %v2439, %v2429
        %v3480 = vpack.c.b16 %v2440, %v2430
        %v3481 = vpack.c.b16 %v2441, %v2431
        %v3482 = vpack.c.b16 %v2442, %v2432
        %v3483 = vpack.c.b16 %v2453, %v2443
        %v3484 = vpack.c.b16 %v2454, %v2444
        %v3485 = vpack.c.b16 %v2455, %v2445
        %v3486 = vpack.c.b16 %v2456, %v2446
        %v3487 = vpack.c.b16 %v2457, %v2447
        %v3488 = vpack.c.b16 %v2458, %v2448
        %v3489 = vpack.c.b16 %v2459, %v2449
        %v3490 = vpack.c.b16 %v2460, %v2450
        %v3491 = vpack.c.b16 %v2461, %v2451
        %v3492 = vpack.c.b16 %v2462, %v2452
        %v3493 = vpack.c.b16 %v2473, %v2463
        %v3494 = vpack.c.b16 %v2474, %v2464
        %v3495 = vpack.c.b16 %v2475, %v2465
        %v3496 = vpack.c.b16 %v2476, %v2466
        %v3497 = vpack.c.b16 %v2477, %v2467
        %v3498 = vpack.c.b16 %v2478, %v2468
        %v3499 = vpack.c.b16 %v2479, %v2469
        %v3500 = vpack.c.b16 %v2480, %v2470
        %v3501 = vpack.c.b16 %v2481, %v2471
        %v3502 = vpack.c.b16 %v2482, %v2472
        %v3503 = vpack.c.b16 %v2493, %v2483
        %v3504 = vpack.c.b16 %v2494, %v2484
        %v3505 = vpack.c.b16 %v2495, %v2485
        %v3506 = vpack.c.b16 %v2496, %v2486
        %v3507 = vpack.c.b16 %v2497, %v2487
        %v3508 = vpack.c.b16 %v2498, %v2488
        %v3509 = vpack.c.b16 %v2499, %v2489
        %v3510 = vpack.c.b16 %v2500, %v2490
        %v3511 = vpack.c.b16 %v2501, %v2491
        %v3512 = vpack.c.b16 %v2502, %v2492
        %v3513 = vpack.c.b16 %v2513, %v2503
        %v3514 = vpack.c.b16 %v2514, %v2504
        %v3515 = vpack.c.b16 %v2515, %v2505
        %v3516 = vpack.c.b16 %v2516, %v2506
        %v3517 = vpack.c.b16 %v2517, %v2507
        %v3518 = vpack.c.b16 %v2518, %v2508
        %v3519 = vpack.c.b16 %v2519, %v2509
        %v3520 = vpack.c.b16 %v2520, %v2510
        %v3521 = vpack.c.b16 %v2521, %v2511
        %v3522 = vpack.c.b16 %v2522, %v2512
        %v3523 = vpack.c.b16 %v2533, %v2523
        %v3524 = vpack.c.b16 %v2534, %v2524
        %v3525 = vpack.c.b16 %v2535, %v2525
        %v3526 = vpack.c.b16 %v2536, %v2526
        %v3527 = vpack.c.b16 %v2537, %v2527
        %v3528 = vpack.c.b16 %v2538, %v2528
        %v3529 = vpack.c.b16 %v2539, %v2529
        %v3530 = vpack.c.b16 %v2540, %v2530
        %v3531 = vpack.c.b16 %v2541, %v2531
        %v3532 = vpack.c.b16 %v2542, %v2532
        %v3533 = vpack.c.b16 %v2553, %v2543
        %v3534 = vpack.c.b16 %v2554, %v2544
        %v3535 = vpack.c.b16 %v2555, %v2545
        %v3536 = vpack.c.b16 %v2556, %v2546
        %v3537 = vpack.c.b16 %v2557, %v2547
        %v3538 = vpack.c.b16 %v2558, %v2548
        %v3539 = vpack.c.b16 %v2559, %v2549
        %v3540 = vpack.c.b16 %v2560, %v2550
        %v3541 = vpack.c.b16 %v2561, %v2551
        %v3542 = vpack.c.b16 %v2562, %v2552
        %v3543 = vpack.c.b16 %v2573, %v2563
        %v3544 = vpack.c.b16 %v2574, %v2564
        %v3545 = vpack.c.b16 %v2575, %v2565
        %v3546 = vpack.c.b16 %v2576, %v2566
        %v3547 = vpack.c.b16 %v2577, %v2567
        %v3548 = vpack.c.b16 %v2578, %v2568
        %v3549 = vpack.c.b16 %v2579, %v2569
        %v3550 = vpack.c.b16 %v2580, %v2570
        %v3551 = vpack.c.b16 %v2581, %v2571
        %v3552 = vpack.c.b16 %v2582, %v2572
        %v3553 = vpack.c.b16 %v2593, %v2583
        %v3554 = vpack.c.b16 %v2594, %v2584
        %v3555 = vpack.c.b16 %v2595, %v2585
        %v3556 = vpack.c.b16 %v2596, %v2586
        %v3557 = vpack.c.b16 %v2597, %v2587
        %v3558 = vpack.c.b16 %v2598, %v2588
        %v3559 = vpack.c.b16 %v2599, %v2589
        %v3560 = vpack.c.b16 %v2600, %v2590
        %v3561 = vpack.c.b16 %v2601, %v2591
        %v3562 = vpack.c.b16 %v2602, %v2592
        %v3563 = vpack.c.b16 %v2613, %v2603
        %v3564 = vpack.c.b16 %v2614, %v2604
        %v3565 = vpack.c.b16 %v2615, %v2605
        %v3566 = vpack.c.b16 %v2616, %v2606
        %v3567 = vpack.c.b16 %v2617, %v2607
        %v3568 = vpack.c.b16 %v2618, %v2608
        %v3569 = vpack.c.b16 %v2619, %v2609
        %v3570 = vpack.c.b16 %v2620, %v2610
        %v3571 = vpack.c.b16 %v2621, %v2611
        %v3572 = vpack.c.b16 %v2622, %v2612
        %v3573 = vpack.c.b16 %v2633, %v2623
        %v3574 = vpack.c.b16 %v2634, %v2624
        %v3575 = vpack.c.b16 %v2635, %v2625
        %v3576 = vpack.c.b16 %v2636, %v2626
        %v3577 = vpack.c.b16 %v2637, %v2627
        %v3578 = vpack.c.b16 %v2638, %v2628
        %v3579 = vpack.c.b16 %v2639, %v2629
        %v3580 = vpack.c.b16 %v2640, %v2630
        %v3581 = vpack.c.b16 %v2641, %v2631
        %v3582 = vpack.c.b16 %v2642, %v2632
        %v3583 = vpack.c.b16 %v2653, %v2643
        %v3584 = vpack.c.b16 %v2654, %v2644
        %v3585 = vpack.c.b16 %v2655, %v2645
        %v3586 = vpack.c.b16 %v2656, %v2646
        %v3587 = vpack.c.b16 %v2657, %v2647
        %v3588 = vpack.c.b16 %v2658, %v2648
        %v3589 = vpack.c.b16 %v2659, %v2649
        %v3590 = vpack.c.b16 %v2660, %v2650
        %v3591 = vpack.c.b16 %v2661, %v2651
        %v3592 = vpack.c.b16 %v2662, %v2652
        %v3593 = vpack.c.b16 %v2673, %v2663
        %v3594 = vpack.c.b16 %v2674, %v2664
        %v3595 = vpack.c.b16 %v2675, %v2665
        %v3596 = vpack.c.b16 %v2676, %v2666
        %v3597 = vpack.c.b16 %v2677, %v2667
        %v3598 = vpack.c.b16 %v2678, %v2668
        %v3599 = vpack.c.b16 %v2679, %v2669
        %v3600 = vpack.c.b16 %v2680, %v2670
        %v3601 = vpack.c.b16 %v2681, %v2671
        %v3602 = vpack.c.b16 %v2682, %v2672
        %v3603 = vpack.c.b16 %v2693, %v2683
        %v3604 = vpack.c.b16 %v2694, %v2684
        %v3605 = vpack.c.b16 %v2695, %v2685
        %v3606 = vpack.c.b16 %v2696, %v2686
        %v3607 = vpack.c.b16 %v2697, %v2687
        %v3608 = vpack.c.b16 %v2698, %v2688
        %v3609 = vpack.c.b16 %v2699, %v2689
        %v3610 = vpack.c.b16 %v2700, %v2690
        %v3611 = vpack.c.b16 %v2701, %v2691
        %v3612 = vpack.c.b16 %v2702, %v2692
        %v3613 = vpack.c.b16 %v2713, %v2703
        %v3614 = vpack.c.b16 %v2714, %v2704
        %v3615 = vpack.c.b16 %v2715, %v2705
        %v3616 = vpack.c.b16 %v2716, %v2706
        %v3617 = vpack.c.b16 %v2717, %v2707
        %v3618 = vpack.c.b16 %v2718, %v2708
        %v3619 = vpack.c.b16 %v2719, %v2709
        %v3620 = vpack.c.b16 %v2720, %v2710
        %v3621 = vpack.c.b16 %v2721, %v2711
        %v3622 = vpack.c.b16 %v2722, %v2712
        %v3623 = vpack.c.b16 %v2733, %v2723
        %v3624 = vpack.c.b16 %v2734, %v2724
        %v3625 = vpack.c.b16 %v2735, %v2725
        %v3626 = vpack.c.b16 %v2736, %v2726
        %v3627 = vpack.c.b16 %v2737, %v2727
        %v3628 = vpack.c.b16 %v2738, %v2728
        %v3629 = vpack.c.b16 %v2739, %v2729
        %v3630 = vpack.c.b16 %v2740, %v2730
        %v3631 = vpack.c.b16 %v2741, %v2731
        %v3632 = vpack.c.b16 %v2742, %v2732
        %v3633 = vpack.c.b16 %v2753, %v2743
        %v3634 = vpack.c.b16 %v2754, %v2744
        %v3635 = vpack.c.b16 %v2755, %v2745
        %v3636 = vpack.c.b16 %v2756, %v2746
        %v3637 = vpack.c.b16 %v2757, %v2747
        %v3638 = vpack.c.b16 %v2758, %v2748
        %v3639 = vpack.c.b16 %v2759, %v2749
        %v3640 = vpack.c.b16 %v2760, %v2750
        %v3641 = vpack.c.b16 %v2761, %v2751
        %v3642 = vpack.c.b16 %v2762, %v2752
        %v3643 = vpack.c.b16 %v2773, %v2763
        %v3644 = vpack.c.b16 %v2774, %v2764
        %v3645 = vpack.c.b16 %v2775, %v2765
        %v3646 = vpack.c.b16 %v2776, %v2766
        %v3647 = vpack.c.b16 %v2777, %v2767
        %v3648 = vpack.c.b16 %v2778, %v2768
        %v3649 = vpack.c.b16 %v2779, %v2769
        %v3650 = vpack.c.b16 %v2780, %v2770
        %v3651 = vpack.c.b16 %v2781, %v2771
        %v3652 = vpack.c.b16 %v2782, %v2772
        %v3653 = vpack.c.b16 %v2793, %v2783
        %v3654 = vpack.c.b16 %v2794, %v2784
        %v3655 = vpack.c.b16 %v2795, %v2785
        %v3656 = vpack.c.b16 %v2796, %v2786
        %v3657 = vpack.c.b16 %v2797, %v2787
        %v3658 = vpack.c.b16 %v2798, %v2788
        %v3659 = vpack.c.b16 %v2799, %v2789
        %v3660 = vpack.c.b16 %v2800, %v2790
        %v3661 = vpack.c.b16 %v2801, %v2791
        %v3662 = vpack.c.b16 %v2802, %v2792
        %v3663 = vpack.c.b16 %v2813, %v2803
        %v3664 = vpack.c.b16 %v2814, %v2804
        %v3665 = vpack.c.b16 %v2815, %v2805
        %v3666 = vpack.c.b16 %v2816, %v2806
        %v3667 = vpack.c.b16 %v2817, %v2807
        %v3668 = vpack.c.b16 %v2818, %v2808
        %v3669 = vpack.c.b16 %v2819, %v2809
        %v3670 = vpack.c.b16 %v2820, %v2810
        %v3671 = vpack.c.b16 %v2821, %v2811
        %v3672 = vpack.c.b16 %v2822, %v2812
        %v3673 = vpack.c.b16 %v2833, %v2823
        %v3674 = vpack.c.b16 %v2834, %v2824
        %v3675 = vpack.c.b16 %v2835, %v2825
        %v3676 = vpack.c.b16 %v2836, %v2826
        %v3677 = vpack.c.b16 %v2837, %v2827
        %v3678 = vpack.c.b16 %v2838, %v2828
        %v3679 = vpack.c.b16 %v2839, %v2829
        %v3680 = vpack.c.b16 %v2840, %v2830
        %v3681 = vpack.c.b16 %v2841, %v2831
        %v3682 = vpack.c.b16 %v2842, %v2832
        %v3683 = vpack.c.b16 %v2853, %v2843
        %v3684 = vpack.c.b16 %v2854, %v2844
        %v3685 = vpack.c.b16 %v2855, %v2845
        %v3686 = vpack.c.b16 %v2856, %v2846
        %v3687 = vpack.c.b16 %v2857, %v2847
        %v3688 = vpack.c.b16 %v2858, %v2848
        %v3689 = vpack.c.b16 %v2859, %v2849
        %v3690 = vpack.c.b16 %v2860, %v2850
        %v3691 = vpack.c.b16 %v2861, %v2851
        %v3692 = vpack.c.b16 %v2862, %v2852
        %v3693 = vpack.c.b16 %v2873, %v2863
        %v3694 = vpack.c.b16 %v2874, %v2864
        %v3695 = vpack.c.b16 %v2875, %v2865
        %v3696 = vpack.c.b16 %v2876, %v2866
        %v3697 = vpack.c.b16 %v2877, %v2867
        %v3698 = vpack.c.b16 %v2878, %v2868
        %v3699 = vpack.c.b16 %v2879, %v2869
        %v3700 = vpack.c.b16 %v2880, %v2870
        %v3701 = vpack.c.b16 %v2881, %v2871
        %v3702 = vpack.c.b16 %v2882, %v2872
        %v3703 = vpack.c.b16 %v2893, %v2883
        %v3704 = vpack.c.b16 %v2894, %v2884
        %v3705 = vpack.c.b16 %v2895, %v2885
        %v3706 = vpack.c.b16 %v2896, %v2886
        %v3707 = vpack.c.b16 %v2897, %v2887
        %v3708 = vpack.c.b16 %v2898, %v2888
        %v3709 = vpack.c.b16 %v2899, %v2889
        %v3710 = vpack.c.b16 %v2900, %v2890
        %v3711 = vpack.c.b16 %v2901, %v2891
        %v3712 = vpack.c.b16 %v2902, %v2892
        %v3713 = vpack.c.b16 %v2913, %v2903
        %v3714 = vpack.c.b16 %v2914, %v2904
        %v3715 = vpack.c.b16 %v2915, %v2905
        %v3716 = vpack.c.b16 %v2916, %v2906
        %v3717 = vpack.c.b16 %v2917, %v2907
        %v3718 = vpack.c.b16 %v2918, %v2908
        %v3719 = vpack.c.b16 %v2919, %v2909
        %v3720 = vpack.c.b16 %v2920, %v2910
        %v3721 = vpack.c.b16 %v2921, %v2911
        %v3722 = vpack.c.b16 %v2922, %v2912
        %v3723 = vpack.c.b16 %v2933, %v2923
        %v3724 = vpack.c.b16 %v2934, %v2924
        %v3725 = vpack.c.b16 %v2935, %v2925
        %v3726 = vpack.c.b16 %v2936, %v2926
        %v3727 = vpack.c.b16 %v2937, %v2927
        %v3728 = vpack.c.b16 %v2938, %v2928
        %v3729 = vpack.c.b16 %v2939, %v2929
        %v3730 = vpack.c.b16 %v2940, %v2930
        %v3731 = vpack.c.b16 %v2941, %v2931
        %v3732 = vpack.c.b16 %v2942, %v2932
        %v3733 = vpack.c.b16 %v2953, %v2943
        %v3734 = vpack.c.b16 %v2954, %v2944
        %v3735 = vpack.c.b16 %v2955, %v2945
        %v3736 = vpack.c.b16 %v2956, %v2946
        %v3737 = vpack.c.b16 %v2957, %v2947
        %v3738 = vpack.c.b16 %v2958, %v2948
        %v3739 = vpack.c.b16 %v2959, %v2949
        %v3740 = vpack.c.b16 %v2960, %v2950
        %v3741 = vpack.c.b16 %v2961, %v2951
        %v3742 = vpack.c.b16 %v2962, %v2952
        %v3743 = vpack.c.b16 %v2973, %v2963
        %v3744 = vpack.c.b16 %v2974, %v2964
        %v3745 = vpack.c.b16 %v2975, %v2965
        %v3746 = vpack.c.b16 %v2976, %v2966
        %v3747 = vpack.c.b16 %v2977, %v2967
        %v3748 = vpack.c.b16 %v2978, %v2968
        %v3749 = vpack.c.b16 %v2979, %v2969
        %v3750 = vpack.c.b16 %v2980, %v2970
        %v3751 = vpack.c.b16 %v2981, %v2971
        %v3752 = vpack.c.b16 %v2982, %v2972
        %v3753 = vpack.c.b16 %v2993, %v2983
        %v3754 = vpack.c.b16 %v2994, %v2984
        %v3755 = vpack.c.b16 %v2995, %v2985
        %v3756 = vpack.c.b16 %v2996, %v2986
        %v3757 = vpack.c.b16 %v2997, %v2987
        %v3758 = vpack.c.b16 %v2998, %v2988
        %v3759 = vpack.c.b16 %v2999, %v2989
        %v3760 = vpack.c.b16 %v3000, %v2990
        %v3761 = vpack.c.b16 %v3001, %v2991
        %v3762 = vpack.c.b16 %v3002, %v2992
        %v3763 = vpack.c.b16 %v3013, %v3003
        %v3764 = vpack.c.b16 %v3014, %v3004
        %v3765 = vpack.c.b16 %v3015, %v3005
        %v3766 = vpack.c.b16 %v3016, %v3006
        %v3767 = vpack.c.b16 %v3017, %v3007
        %v3768 = vpack.c.b16 %v3018, %v3008
        %v3769 = vpack.c.b16 %v3019, %v3009
        %v3770 = vpack.c.b16 %v3020, %v3010
        %v3771 = vpack.c.b16 %v3021, %v3011
        %v3772 = vpack.c.b16 %v3022, %v3012
        %v3773 = vpack.c.b16 %v3033, %v3023
        %v3774 = vpack.c.b16 %v3034, %v3024
        %v3775 = vpack.c.b16 %v3035, %v3025
        %v3776 = vpack.c.b16 %v3036, %v3026
        %v3777 = vpack.c.b16 %v3037, %v3027
        %v3778 = vpack.c.b16 %v3038, %v3028
        %v3779 = vpack.c.b16 %v3039, %v3029
        %v3780 = vpack.c.b16 %v3040, %v3030
        %v3781 = vpack.c.b16 %v3041, %v3031
        %v3782 = vpack.c.b16 %v3042, %v3032
        %v3783 = vpack.c.b16 %v3053, %v3043
        %v3784 = vpack.c.b16 %v3054, %v3044
        %v3785 = vpack.c.b16 %v3055, %v3045
        %v3786 = vpack.c.b16 %v3056, %v3046
        %v3787 = vpack.c.b16 %v3057, %v3047
        %v3788 = vpack.c.b16 %v3058, %v3048
        %v3789 = vpack.c.b16 %v3059, %v3049
        %v3790 = vpack.c.b16 %v3060, %v3050
        %v3791 = vpack.c.b16 %v3061, %v3051
        %v3792 = vpack.c.b16 %v3062, %v3052
        %v3793 = vpack.c.b16 %v3073, %v3063
        %v3794 = vpack.c.b16 %v3074, %v3064
        %v3795 = vpack.c.b16 %v3075, %v3065
        %v3796 = vpack.c.b16 %v3076, %v3066
        %v3797 = vpack.c.b16 %v3077, %v3067
        %v3798 = vpack.c.b16 %v3078, %v3068
        %v3799 = vpack.c.b16 %v3079, %v3069
        %v3800 = vpack.c.b16 %v3080, %v3070
        %v3801 = vpack.c.b16 %v3081, %v3071
        %v3802 = vpack.c.b16 %v3082, %v3072
        %v3803 = vpack.c.b16 %v3093, %v3083
        %v3804 = vpack.c.b16 %v3094, %v3084
        %v3805 = vpack.c.b16 %v3095, %v3085
        %v3806 = vpack.c.b16 %v3096, %v3086
        %v3807 = vpack.c.b16 %v3097, %v3087
        %v3808 = vpack.c.b16 %v3098, %v3088
        %v3809 = vpack.c.b16 %v3099, %v3089
        %v3810 = vpack.c.b16 %v3100, %v3090
        %v3811 = vpack.c.b16 %v3101, %v3091
        %v3812 = vpack.c.b16 %v3102, %v3092
        %v3813 = vpack.c.b16 %v3113, %v3103
        %v3814 = vpack.c.b16 %v3114, %v3104
        %v3815 = vpack.c.b16 %v3115, %v3105
        %v3816 = vpack.c.b16 %v3116, %v3106
        %v3817 = vpack.c.b16 %v3117, %v3107
        %v3818 = vpack.c.b16 %v3118, %v3108
        %v3819 = vpack.c.b16 %v3119, %v3109
        %v3820 = vpack.c.b16 %v3120, %v3110
        %v3821 = vpack.c.b16 %v3121, %v3111
        %v3822 = vpack.c.b16 %v3122, %v3112
        %v3823 = vpack.c.b16 %v3133, %v3123
        %v3824 = vpack.c.b16 %v3134, %v3124
        %v3825 = vpack.c.b16 %v3135, %v3125
        %v3826 = vpack.c.b16 %v3136, %v3126
        %v3827 = vpack.c.b16 %v3137, %v3127
        %v3828 = vpack.c.b16 %v3138, %v3128
        %v3829 = vpack.c.b16 %v3139, %v3129
        %v3830 = vpack.c.b16 %v3140, %v3130
        %v3831 = vpack.c.b16 %v3141, %v3131
        %v3832 = vpack.c.b16 %v3142, %v3132
        %v3833 = vpack.c.b16 %v3153, %v3143
        %v3834 = vpack.c.b16 %v3154, %v3144
        %v3835 = vpack.c.b16 %v3155, %v3145
        %v3836 = vpack.c.b16 %v3156, %v3146
        %v3837 = vpack.c.b16 %v3157, %v3147
        %v3838 = vpack.c.b16 %v3158, %v3148
        %v3839 = vpack.c.b16 %v3159, %v3149
        %v3840 = vpack.c.b16 %v3160, %v3150
        %v3841 = vpack.c.b16 %v3161, %v3151
        %v3842 = vpack.c.b16 %v3162, %v3152
        %v3843 = vpack.c.b16 %v3173, %v3163
        %v3844 = vpack.c.b16 %v3174, %v3164
        %v3845 = vpack.c.b16 %v3175, %v3165
        %v3846 = vpack.c.b16 %v3176, %v3166
        %v3847 = vpack.c.b16 %v3177, %v3167
        %v3848 = vpack.c.b16 %v3178, %v3168
        %v3849 = vpack.c.b16 %v3179, %v3169
        %v3850 = vpack.c.b16 %v3180, %v3170
        %v3851 = vpack.c.b16 %v3181, %v3171
        %v3852 = vpack.c.b16 %v3182, %v3172
        %v3853 = vpack.c.b16 %v3193, %v3183
        %v3854 = vpack.c.b16 %v3194, %v3184
        %v3855 = vpack.c.b16 %v3195, %v3185
        %v3856 = vpack.c.b16 %v3196, %v3186
        %v3857 = vpack.c.b16 %v3197, %v3187
        %v3858 = vpack.c.b16 %v3198, %v3188
        %v3859 = vpack.c.b16 %v3199, %v3189
        %v3860 = vpack.c.b16 %v3200, %v3190
        %v3861 = vpack.c.b16 %v3201, %v3191
        %v3862 = vpack.c.b16 %v3202, %v3192
        %v3863 = vpack.c.b16 %v3213, %v3203
        %v3864 = vpack.c.b16 %v3214, %v3204
        %v3865 = vpack.c.b16 %v3215, %v3205
        %v3866 = vpack.c.b16 %v3216, %v3206
        %v3867 = vpack.c.b16 %v3217, %v3207
        %v3868 = vpack.c.b16 %v3218, %v3208
        %v3869 = vpack.c.b16 %v3219, %v3209
        %v3870 = vpack.c.b16 %v3220, %v3210
        %v3871 = vpack.c.b16 %v3221, %v3211
        %v3872 = vpack.c.b16 %v3222, %v3212
        %v3873 = vpack.c.b16 %v3233, %v3223
        %v3874 = vpack.c.b16 %v3234, %v3224
        %v3875 = vpack.c.b16 %v3235, %v3225
        %v3876 = vpack.c.b16 %v3236, %v3226
        %v3877 = vpack.c.b16 %v3237, %v3227
        %v3878 = vpack.c.b16 %v3238, %v3228
        %v3879 = vpack.c.b16 %v3239, %v3229
        %v3880 = vpack.c.b16 %v3240, %v3230
        %v3881 = vpack.c.b16 %v3241, %v3231
        %v3882 = vpack.c.b16 %v3242, %v3232
        %v3883 = vpack.c.b16 %v3253, %v3243
        %v3884 = vpack.c.b16 %v3254, %v3244
        %v3885 = vpack.c.b16 %v3255, %v3245
        %v3886 = vpack.c.b16 %v3256, %v3246
        %v3887 = vpack.c.b16 %v3257, %v3247
        %v3888 = vpack.c.b16 %v3258, %v3248
        %v3889 = vpack.c.b16 %v3259, %v3249
        %v3890 = vpack.c.b16 %v3260, %v3250
        %v3891 = vpack.c.b16 %v3261, %v3251
        %v3892 = vpack.c.b16 %v3262, %v3252
        %v3893 = vpack.c.b16 %v3273, %v3263
        %v3894 = vpack.c.b16 %v3274, %v3264
        %v3895 = vpack.c.b16 %v3275, %v3265
        %v3896 = vpack.c.b16 %v3276, %v3266
        %v3897 = vpack.c.b16 %v3277, %v3267
        %v3898 = vpack.c.b16 %v3278, %v3268
        %v3899 = vpack.c.b16 %v3279, %v3269
        %v3900 = vpack.c.b16 %v3280, %v3270
        %v3901 = vpack.c.b16 %v3281, %v3271
        %v3902 = vpack.c.b16 %v3282, %v3272
        %v3903 = vpack.c.b16 %v3293, %v3283
        %v3904 = vpack.c.b16 %v3294, %v3284
        %v3905 = vpack.c.b16 %v3295, %v3285
        %v3906 = vpack.c.b16 %v3296, %v3286
        %v3907 = vpack.c.b16 %v3297, %v3287
        %v3908 = vpack.c.b16 %v3298, %v3288
        %v3909 = vpack.c.b16 %v3299, %v3289
        %v3910 = vpack.c.b16 %v3300, %v3290
        %v3911 = vpack.c.b16 %v3301, %v3291
        %v3912 = vpack.c.b16 %v3302, %v3292
        %v3913 = vpack.c.b16 %v3313, %v3303
        %v3914 = vpack.c.b16 %v3314, %v3304
        %v3915 = vpack.c.b16 %v3315, %v3305
        %v3916 = vpack.c.b16 %v3316, %v3306
        %v3917 = vpack.c.b16 %v3317, %v3307
        %v3918 = vpack.c.b16 %v3318, %v3308
        %v3919 = vpack.c.b16 %v3319, %v3309
        %v3920 = vpack.c.b16 %v3320, %v3310
        %v3921 = vpack.c.b16 %v3321, %v3311
        %v3922 = vpack.c.b16 %v3322, %v3312
        %v3923 = vpack.c.b16 %v3333, %v3323
        %v3924 = vpack.c.b16 %v3334, %v3324
        %v3925 = vpack.c.b16 %v3335, %v3325
        %v3926 = vpack.c.b16 %v3336, %v3326
        %v3927 = vpack.c.b16 %v3337, %v3327
        %v3928 = vpack.c.b16 %v3338, %v3328
        %v3929 = vpack.c.b16 %v3339, %v3329
        %v3930 = vpack.c.b16 %v3340, %v3330
        %v3931 = vpack.c.b16 %v3341, %v3331
        %v3932 = vpack.c.b16 %v3342, %v3332
        %v3933 = vpack.c.b16 %v3353, %v3343
        %v3934 = vpack.c.b16 %v3354, %v3344
        %v3935 = vpack.c.b16 %v3355, %v3345
        %v3936 = vpack.c.b16 %v3356, %v3346
        %v3937 = vpack.c.b16 %v3357, %v3347
        %v3938 = vpack.c.b16 %v3358, %v3348
        %v3939 = vpack.c.b16 %v3359, %v3349
        %v3940 = vpack.c.b16 %v3360, %v3350
        %v3941 = vpack.c.b16 %v3361, %v3351
        %v3942 = vpack.c.b16 %v3362, %v3352
        %v3943 = vpack.c.b16 %v3373, %v3363
        %v3944 = vpack.c.b16 %v3374, %v3364
        %v3945 = vpack.c.b16 %v3375, %v3365
        %v3946 = vpack.c.b16 %v3376, %v3366
        %v3947 = vpack.c.b16 %v3377, %v3367
        %v3948 = vpack.c.b16 %v3378, %v3368
        %v3949 = vpack.c.b16 %v3379, %v3369
        %v3950 = vpack.c.b16 %v3380, %v3370
        %v3951 = vpack.c.b16 %v3381, %v3371
        %v3952 = vpack.c.b16 %v3382, %v3372
        %v3953 = vpack.c.b16 %v3393, %v3383
        %v3954 = vpack.c.b16 %v3394, %v3384
        %v3955 = vpack.c.b16 %v3395, %v3385
        %v3956 = vpack.c.b16 %v3396, %v3386
        %v3957 = vpack.c.b16 %v3397, %v3387
        %v3958 = vpack.c.b16 %v3398, %v3388
        %v3959 = vpack.c.b16 %v3399, %v3389
        %v3960 = vpack.c.b16 %v3400, %v3390
        %v3961 = vpack.c.b16 %v3401, %v3391
        %v3962 = vpack.c.b16 %v3402, %v3392
        %4523 = vmatprep.subr.bf16.mxu0 0
        %4524 = vmatpush1.bf16.msra.mxu0 %v1090
        %4525 = vmatprep.subr.bf16.mxu0 0
        %4526 = vmatpush1.bf16.msra.mxu0 %v1089
        %4527 = vmatprep.subr.bf16.mxu0 0
        %4528 = vmatpush1.bf16.msra.mxu0 %v1088
        %4529 = vmatprep.subr.bf16.mxu0 0
        %4530 = vmatpush1.bf16.msra.mxu0 %v1087
        %4531 = vmatprep.subr.bf16.mxu0 0
        %4532 = vmatpush1.bf16.msra.mxu0 %v1086
        %4533 = vmatprep.subr.bf16.mxu0 0
        %4534 = vmatpush1.bf16.msra.mxu0 %v1085
        %4535 = vmatprep.subr.bf16.mxu0 0
        %4536 = vmatpush1.bf16.msra.mxu0 %v1084
        %4537 = vmatprep.subr.bf16.mxu0 0
        %4538 = vmatpush1.bf16.msra.mxu0 %v1083
        %4539 = vmatprep.subr.bf16.mxu0 0
        %4540 = vmatpush2.bf16.msra.mxu0 %v1098
        %4541 = vmatprep.subr.bf16.mxu0 0
        %4542 = vmatpush2.bf16.msra.mxu0 %v1097
        %4543 = vmatprep.subr.bf16.mxu0 0
        %4544 = vmatpush2.bf16.msra.mxu0 %v1096
        %4545 = vmatprep.subr.bf16.mxu0 0
        %4546 = vmatpush2.bf16.msra.mxu0 %v1095
        %4547 = vmatprep.subr.bf16.mxu0 0
        %4548 = vmatpush2.bf16.msra.mxu0 %v1094
        %4549 = vmatprep.subr.bf16.mxu0 0
        %4550 = vmatpush2.bf16.msra.mxu0 %v1093
        %4551 = vmatprep.subr.bf16.mxu0 0
        %4552 = vmatpush2.bf16.msra.mxu0 %v1092
        %4553 = vmatprep.subr.bf16.mxu0 0
        %4554 = vmatpush2.bf16.msra.mxu0 %v1091
        %4555 = vmatprep.mubr.bf16.mxu0 %v3404
        %4556 = vmatmul.mubr.bf16.gmra.mxu0 %v3403
        %v4557 = vpop.f32.mrf.mxu0
        %v4558 = vadd.f32 %v1166, %v4557
        %v4559 = vpop.f32.mrf.mxu0
        %v4560 = vpop.f32.mrf.mxu0
        %v4561 = vadd.f32 %v1171, %v4560
        %v4562 = vpop.f32.mrf.mxu0
        %4563 = vmatprep.mubr.bf16.mxu0 %v3414
        %4564 = vmatmul.mubr.bf16.gmra.mxu0 %v3413
        %v4565 = vpop.f32.mrf.mxu0
        %v4566 = vadd.f32 %v1176, %v4565
        %v4567 = vpop.f32.mrf.mxu0
        %v4568 = vpop.f32.mrf.mxu0
        %v4569 = vadd.f32 %v1181, %v4568
        %v4570 = vpop.f32.mrf.mxu0
        %4571 = vmatprep.mubr.bf16.mxu0 %v3424
        %4572 = vmatmul.mubr.bf16.gmra.mxu0 %v3423
        %v4573 = vpop.f32.mrf.mxu0
        %v4574 = vadd.f32 %v1186, %v4573
        %v4575 = vpop.f32.mrf.mxu0
        %v4576 = vpop.f32.mrf.mxu0
        %v4577 = vadd.f32 %v1191, %v4576
        %v4578 = vpop.f32.mrf.mxu0
        %4579 = vmatprep.mubr.bf16.mxu0 %v3434
        %4580 = vmatmul.mubr.bf16.gmra.mxu0 %v3433
        %v4581 = vpop.f32.mrf.mxu0
        %v4582 = vadd.f32 %v1196, %v4581
        %v4583 = vpop.f32.mrf.mxu0
        %v4584 = vpop.f32.mrf.mxu0
        %v4585 = vadd.f32 %v1201, %v4584
        %v4586 = vpop.f32.mrf.mxu0
        %4587 = vmatprep.mubr.bf16.mxu0 %v3444
        %4588 = vmatmul.mubr.bf16.gmra.mxu0 %v3443
        %v4589 = vpop.f32.mrf.mxu0
        %v4590 = vadd.f32 %v1206, %v4589
        %v4591 = vpop.f32.mrf.mxu0
        %v4592 = vpop.f32.mrf.mxu0
        %v4593 = vadd.f32 %v1211, %v4592
        %v4594 = vpop.f32.mrf.mxu0
        %4595 = vmatprep.mubr.bf16.mxu0 %v3454
        %4596 = vmatmul.mubr.bf16.gmra.mxu0 %v3453
        %v4597 = vpop.f32.mrf.mxu0
        %v4598 = vadd.f32 %v1216, %v4597
        %v4599 = vpop.f32.mrf.mxu0
        %v4600 = vpop.f32.mrf.mxu0
        %v4601 = vadd.f32 %v1221, %v4600
        %v4602 = vpop.f32.mrf.mxu0
        %4603 = vmatprep.mubr.bf16.mxu0 %v3464
        %4604 = vmatmul.mubr.bf16.gmra.mxu0 %v3463
        %v4605 = vpop.f32.mrf.mxu0
        %v4606 = vadd.f32 %v1226, %v4605
        %v4607 = vpop.f32.mrf.mxu0
        %v4608 = vpop.f32.mrf.mxu0
        %v4609 = vadd.f32 %v1231, %v4608
        %v4610 = vpop.f32.mrf.mxu0
        %4611 = vmatprep.mubr.bf16.mxu0 %v3474
        %4612 = vmatmul.mubr.bf16.gmra.mxu0 %v3473
        %v4613 = vpop.f32.mrf.mxu0
        %v4614 = vadd.f32 %v1236, %v4613
        %v4615 = vpop.f32.mrf.mxu0
        %v4616 = vpop.f32.mrf.mxu0
        %v4617 = vadd.f32 %v1241, %v4616
        %v4618 = vpop.f32.mrf.mxu0
        %4619 = vmatprep.mubr.bf16.mxu0 %v3484
        %4620 = vmatmul.mubr.bf16.gmra.mxu0 %v3483
        %v4621 = vpop.f32.mrf.mxu0
        %v4622 = vadd.f32 %v1246, %v4621
        %v4623 = vpop.f32.mrf.mxu0
        %v4624 = vpop.f32.mrf.mxu0
        %v4625 = vadd.f32 %v1251, %v4624
        %v4626 = vpop.f32.mrf.mxu0
        %4627 = vmatprep.mubr.bf16.mxu0 %v3494
        %4628 = vmatmul.mubr.bf16.gmra.mxu0 %v3493
        %v4629 = vpop.f32.mrf.mxu0
        %v4630 = vadd.f32 %v1256, %v4629
        %v4631 = vpop.f32.mrf.mxu0
        %v4632 = vpop.f32.mrf.mxu0
        %v4633 = vadd.f32 %v1261, %v4632
        %v4634 = vpop.f32.mrf.mxu0
        %4635 = vmatprep.mubr.bf16.mxu0 %v3504
        %4636 = vmatmul.mubr.bf16.gmra.mxu0 %v3503
        %v4637 = vpop.f32.mrf.mxu0
        %v4638 = vadd.f32 %v1266, %v4637
        %v4639 = vpop.f32.mrf.mxu0
        %v4640 = vpop.f32.mrf.mxu0
        %v4641 = vadd.f32 %v1271, %v4640
        %v4642 = vpop.f32.mrf.mxu0
        %4643 = vmatprep.mubr.bf16.mxu0 %v3514
        %4644 = vmatmul.mubr.bf16.gmra.mxu0 %v3513
        %v4645 = vpop.f32.mrf.mxu0
        %v4646 = vadd.f32 %v1276, %v4645
        %v4647 = vpop.f32.mrf.mxu0
        %v4648 = vpop.f32.mrf.mxu0
        %v4649 = vadd.f32 %v1281, %v4648
        %v4650 = vpop.f32.mrf.mxu0
        %4651 = vmatprep.mubr.bf16.mxu0 %v3524
        %4652 = vmatmul.mubr.bf16.gmra.mxu0 %v3523
        %v4653 = vpop.f32.mrf.mxu0
        %v4654 = vadd.f32 %v1286, %v4653
        %v4655 = vpop.f32.mrf.mxu0
        %v4656 = vpop.f32.mrf.mxu0
        %v4657 = vadd.f32 %v1291, %v4656
        %v4658 = vpop.f32.mrf.mxu0
        %4659 = vmatprep.mubr.bf16.mxu0 %v3534
        %4660 = vmatmul.mubr.bf16.gmra.mxu0 %v3533
        %v4661 = vpop.f32.mrf.mxu0
        %v4662 = vadd.f32 %v1296, %v4661
        %v4663 = vpop.f32.mrf.mxu0
        %v4664 = vpop.f32.mrf.mxu0
        %v4665 = vadd.f32 %v1301, %v4664
        %v4666 = vpop.f32.mrf.mxu0
        %4667 = vmatprep.mubr.bf16.mxu0 %v3544
        %4668 = vmatmul.mubr.bf16.gmra.mxu0 %v3543
        %v4669 = vpop.f32.mrf.mxu0
        %v4670 = vadd.f32 %v1306, %v4669
        %v4671 = vpop.f32.mrf.mxu0
        %v4672 = vpop.f32.mrf.mxu0
        %v4673 = vadd.f32 %v1311, %v4672
        %v4674 = vpop.f32.mrf.mxu0
        %4675 = vmatprep.mubr.bf16.mxu0 %v3554
        %4676 = vmatmul.mubr.bf16.gmra.mxu0 %v3553
        %v4677 = vpop.f32.mrf.mxu0
        %v4678 = vadd.f32 %v1316, %v4677
        %v4679 = vpop.f32.mrf.mxu0
        %v4680 = vpop.f32.mrf.mxu0
        %v4681 = vadd.f32 %v1321, %v4680
        %v4682 = vpop.f32.mrf.mxu0
        %4683 = vmatprep.mubr.bf16.mxu0 %v3564
        %4684 = vmatmul.mubr.bf16.gmra.mxu0 %v3563
        %v4685 = vpop.f32.mrf.mxu0
        %v4686 = vadd.f32 %v1326, %v4685
        %v4687 = vpop.f32.mrf.mxu0
        %v4688 = vpop.f32.mrf.mxu0
        %v4689 = vadd.f32 %v1331, %v4688
        %v4690 = vpop.f32.mrf.mxu0
        %4691 = vmatprep.mubr.bf16.mxu0 %v3574
        %4692 = vmatmul.mubr.bf16.gmra.mxu0 %v3573
        %v4693 = vpop.f32.mrf.mxu0
        %v4694 = vadd.f32 %v1336, %v4693
        %v4695 = vpop.f32.mrf.mxu0
        %v4696 = vpop.f32.mrf.mxu0
        %v4697 = vadd.f32 %v1341, %v4696
        %v4698 = vpop.f32.mrf.mxu0
        %4699 = vmatprep.mubr.bf16.mxu0 %v3584
        %4700 = vmatmul.mubr.bf16.gmra.mxu0 %v3583
        %v4701 = vpop.f32.mrf.mxu0
        %v4702 = vadd.f32 %v1346, %v4701
        %v4703 = vpop.f32.mrf.mxu0
        %v4704 = vpop.f32.mrf.mxu0
        %v4705 = vadd.f32 %v1351, %v4704
        %v4706 = vpop.f32.mrf.mxu0
        %4707 = vmatprep.mubr.bf16.mxu0 %v3594
        %4708 = vmatmul.mubr.bf16.gmra.mxu0 %v3593
        %v4709 = vpop.f32.mrf.mxu0
        %v4710 = vadd.f32 %v1356, %v4709
        %v4711 = vpop.f32.mrf.mxu0
        %v4712 = vpop.f32.mrf.mxu0
        %v4713 = vadd.f32 %v1361, %v4712
        %v4714 = vpop.f32.mrf.mxu0
        %4715 = vmatprep.mubr.bf16.mxu0 %v3604
        %4716 = vmatmul.mubr.bf16.gmra.mxu0 %v3603
        %v4717 = vpop.f32.mrf.mxu0
        %v4718 = vadd.f32 %v1366, %v4717
        %v4719 = vpop.f32.mrf.mxu0
        %v4720 = vpop.f32.mrf.mxu0
        %v4721 = vadd.f32 %v1371, %v4720
        %v4722 = vpop.f32.mrf.mxu0
        %4723 = vmatprep.mubr.bf16.mxu0 %v3614
        %4724 = vmatmul.mubr.bf16.gmra.mxu0 %v3613
        %v4725 = vpop.f32.mrf.mxu0
        %v4726 = vadd.f32 %v1376, %v4725
        %v4727 = vpop.f32.mrf.mxu0
        %v4728 = vpop.f32.mrf.mxu0
        %v4729 = vadd.f32 %v1381, %v4728
        %v4730 = vpop.f32.mrf.mxu0
        %4731 = vmatprep.mubr.bf16.mxu0 %v3624
        %4732 = vmatmul.mubr.bf16.gmra.mxu0 %v3623
        %v4733 = vpop.f32.mrf.mxu0
        %v4734 = vadd.f32 %v1386, %v4733
        %v4735 = vpop.f32.mrf.mxu0
        %v4736 = vpop.f32.mrf.mxu0
        %v4737 = vadd.f32 %v1391, %v4736
        %v4738 = vpop.f32.mrf.mxu0
        %4739 = vmatprep.mubr.bf16.mxu0 %v3634
        %4740 = vmatmul.mubr.bf16.gmra.mxu0 %v3633
        %v4741 = vpop.f32.mrf.mxu0
        %v4742 = vadd.f32 %v1396, %v4741
        %v4743 = vpop.f32.mrf.mxu0
        %v4744 = vpop.f32.mrf.mxu0
        %v4745 = vadd.f32 %v1401, %v4744
        %v4746 = vpop.f32.mrf.mxu0
        %4747 = vmatprep.mubr.bf16.mxu0 %v3644
        %4748 = vmatmul.mubr.bf16.gmra.mxu0 %v3643
        %v4749 = vpop.f32.mrf.mxu0
        %v4750 = vadd.f32 %v1406, %v4749
        %v4751 = vpop.f32.mrf.mxu0
        %v4752 = vpop.f32.mrf.mxu0
        %v4753 = vadd.f32 %v1411, %v4752
        %v4754 = vpop.f32.mrf.mxu0
        %4755 = vmatprep.mubr.bf16.mxu0 %v3654
        %4756 = vmatmul.mubr.bf16.gmra.mxu0 %v3653
        %v4757 = vpop.f32.mrf.mxu0
        %v4758 = vadd.f32 %v1416, %v4757
        %v4759 = vpop.f32.mrf.mxu0
        %v4760 = vpop.f32.mrf.mxu0
        %v4761 = vadd.f32 %v1421, %v4760
        %v4762 = vpop.f32.mrf.mxu0
        %4763 = vmatprep.mubr.bf16.mxu0 %v3664
        %4764 = vmatmul.mubr.bf16.gmra.mxu0 %v3663
        %v4765 = vpop.f32.mrf.mxu0
        %v4766 = vadd.f32 %v1426, %v4765
        %v4767 = vpop.f32.mrf.mxu0
        %v4768 = vpop.f32.mrf.mxu0
        %v4769 = vadd.f32 %v1431, %v4768
        %v4770 = vpop.f32.mrf.mxu0
        %4771 = vmatprep.mubr.bf16.mxu0 %v3674
        %4772 = vmatmul.mubr.bf16.gmra.mxu0 %v3673
        %v4773 = vpop.f32.mrf.mxu0
        %v4774 = vadd.f32 %v1436, %v4773
        %v4775 = vpop.f32.mrf.mxu0
        %v4776 = vpop.f32.mrf.mxu0
        %v4777 = vadd.f32 %v1441, %v4776
        %v4778 = vpop.f32.mrf.mxu0
        %4779 = vmatprep.mubr.bf16.mxu0 %v3684
        %4780 = vmatmul.mubr.bf16.gmra.mxu0 %v3683
        %v4781 = vpop.f32.mrf.mxu0
        %v4782 = vadd.f32 %v1446, %v4781
        %v4783 = vpop.f32.mrf.mxu0
        %v4784 = vpop.f32.mrf.mxu0
        %v4785 = vadd.f32 %v1451, %v4784
        %v4786 = vpop.f32.mrf.mxu0
        %4787 = vmatprep.mubr.bf16.mxu0 %v3694
        %4788 = vmatmul.mubr.bf16.gmra.mxu0 %v3693
        %v4789 = vpop.f32.mrf.mxu0
        %v4790 = vadd.f32 %v1456, %v4789
        %v4791 = vpop.f32.mrf.mxu0
        %v4792 = vpop.f32.mrf.mxu0
        %v4793 = vadd.f32 %v1461, %v4792
        %v4794 = vpop.f32.mrf.mxu0
        %4795 = vmatprep.mubr.bf16.mxu0 %v3704
        %4796 = vmatmul.mubr.bf16.gmra.mxu0 %v3703
        %v4797 = vpop.f32.mrf.mxu0
        %v4798 = vadd.f32 %v1466, %v4797
        %v4799 = vpop.f32.mrf.mxu0
        %v4800 = vpop.f32.mrf.mxu0
        %v4801 = vadd.f32 %v1471, %v4800
        %v4802 = vpop.f32.mrf.mxu0
        %4803 = vmatprep.mubr.bf16.mxu0 %v3714
        %4804 = vmatmul.mubr.bf16.gmra.mxu0 %v3713
        %v4805 = vpop.f32.mrf.mxu0
        %v4806 = vadd.f32 %v1476, %v4805
        %v4807 = vpop.f32.mrf.mxu0
        %v4808 = vpop.f32.mrf.mxu0
        %v4809 = vadd.f32 %v1481, %v4808
        %v4810 = vpop.f32.mrf.mxu0
        %4811 = vmatprep.mubr.bf16.mxu0 %v3724
        %4812 = vmatmul.mubr.bf16.gmra.mxu0 %v3723
        %v4813 = vpop.f32.mrf.mxu0
        %v4814 = vadd.f32 %v1486, %v4813
        %v4815 = vpop.f32.mrf.mxu0
        %v4816 = vpop.f32.mrf.mxu0
        %v4817 = vadd.f32 %v1491, %v4816
        %v4818 = vpop.f32.mrf.mxu0
        %4819 = vmatprep.mubr.bf16.mxu0 %v3734
        %4820 = vmatmul.mubr.bf16.gmra.mxu0 %v3733
        %v4821 = vpop.f32.mrf.mxu0
        %v4822 = vadd.f32 %v1496, %v4821
        %v4823 = vpop.f32.mrf.mxu0
        %v4824 = vpop.f32.mrf.mxu0
        %v4825 = vadd.f32 %v1501, %v4824
        %v4826 = vpop.f32.mrf.mxu0
        %4827 = vmatprep.mubr.bf16.mxu0 %v3744
        %4828 = vmatmul.mubr.bf16.gmra.mxu0 %v3743
        %v4829 = vpop.f32.mrf.mxu0
        %v4830 = vadd.f32 %v1506, %v4829
        %v4831 = vpop.f32.mrf.mxu0
        %v4832 = vpop.f32.mrf.mxu0
        %v4833 = vadd.f32 %v1511, %v4832
        %v4834 = vpop.f32.mrf.mxu0
        %4835 = vmatprep.mubr.bf16.mxu0 %v3754
        %4836 = vmatmul.mubr.bf16.gmra.mxu0 %v3753
        %v4837 = vpop.f32.mrf.mxu0
        %v4838 = vadd.f32 %v1516, %v4837
        %v4839 = vpop.f32.mrf.mxu0
        %v4840 = vpop.f32.mrf.mxu0
        %v4841 = vadd.f32 %v1521, %v4840
        %v4842 = vpop.f32.mrf.mxu0
        %4843 = vmatprep.mubr.bf16.mxu0 %v3764
        %4844 = vmatmul.mubr.bf16.gmra.mxu0 %v3763
        %v4845 = vpop.f32.mrf.mxu0
        %v4846 = vadd.f32 %v1526, %v4845
        %v4847 = vpop.f32.mrf.mxu0
        %v4848 = vpop.f32.mrf.mxu0
        %v4849 = vadd.f32 %v1531, %v4848
        %v4850 = vpop.f32.mrf.mxu0
        %4851 = vmatprep.mubr.bf16.mxu0 %v3774
        %4852 = vmatmul.mubr.bf16.gmra.mxu0 %v3773
        %v4853 = vpop.f32.mrf.mxu0
        %v4854 = vadd.f32 %v1536, %v4853
        %v4855 = vpop.f32.mrf.mxu0
        %v4856 = vpop.f32.mrf.mxu0
        %v4857 = vadd.f32 %v1541, %v4856
        %v4858 = vpop.f32.mrf.mxu0
        %4859 = vmatprep.mubr.bf16.mxu0 %v3784
        %4860 = vmatmul.mubr.bf16.gmra.mxu0 %v3783
        %v4861 = vpop.f32.mrf.mxu0
        %v4862 = vadd.f32 %v1546, %v4861
        %v4863 = vpop.f32.mrf.mxu0
        %v4864 = vpop.f32.mrf.mxu0
        %v4865 = vadd.f32 %v1551, %v4864
        %v4866 = vpop.f32.mrf.mxu0
        %4867 = vmatprep.mubr.bf16.mxu0 %v3794
        %4868 = vmatmul.mubr.bf16.gmra.mxu0 %v3793
        %v4869 = vpop.f32.mrf.mxu0
        %v4870 = vadd.f32 %v1556, %v4869
        %v4871 = vpop.f32.mrf.mxu0
        %v4872 = vpop.f32.mrf.mxu0
        %v4873 = vadd.f32 %v1561, %v4872
        %v4874 = vpop.f32.mrf.mxu0
        %4875 = vmatprep.mubr.bf16.mxu0 %v3804
        %4876 = vmatmul.mubr.bf16.gmra.mxu0 %v3803
        %v4877 = vpop.f32.mrf.mxu0
        %v4878 = vadd.f32 %v1566, %v4877
        %v4879 = vpop.f32.mrf.mxu0
        %v4880 = vpop.f32.mrf.mxu0
        %v4881 = vadd.f32 %v1571, %v4880
        %v4882 = vpop.f32.mrf.mxu0
        %4883 = vmatprep.mubr.bf16.mxu0 %v3814
        %4884 = vmatmul.mubr.bf16.gmra.mxu0 %v3813
        %v4885 = vpop.f32.mrf.mxu0
        %v4886 = vadd.f32 %v1576, %v4885
        %v4887 = vpop.f32.mrf.mxu0
        %v4888 = vpop.f32.mrf.mxu0
        %v4889 = vadd.f32 %v1581, %v4888
        %v4890 = vpop.f32.mrf.mxu0
        %4891 = vmatprep.mubr.bf16.mxu0 %v3824
        %4892 = vmatmul.mubr.bf16.gmra.mxu0 %v3823
        %v4893 = vpop.f32.mrf.mxu0
        %v4894 = vadd.f32 %v1586, %v4893
        %v4895 = vpop.f32.mrf.mxu0
        %v4896 = vpop.f32.mrf.mxu0
        %v4897 = vadd.f32 %v1591, %v4896
        %v4898 = vpop.f32.mrf.mxu0
        %4899 = vmatprep.mubr.bf16.mxu0 %v3834
        %4900 = vmatmul.mubr.bf16.gmra.mxu0 %v3833
        %v4901 = vpop.f32.mrf.mxu0
        %v4902 = vadd.f32 %v1596, %v4901
        %v4903 = vpop.f32.mrf.mxu0
        %v4904 = vpop.f32.mrf.mxu0
        %v4905 = vadd.f32 %v1601, %v4904
        %v4906 = vpop.f32.mrf.mxu0
        %4907 = vmatprep.mubr.bf16.mxu0 %v3844
        %4908 = vmatmul.mubr.bf16.gmra.mxu0 %v3843
        %v4909 = vpop.f32.mrf.mxu0
        %v4910 = vadd.f32 %v1606, %v4909
        %v4911 = vpop.f32.mrf.mxu0
        %v4912 = vpop.f32.mrf.mxu0
        %v4913 = vadd.f32 %v1611, %v4912
        %v4914 = vpop.f32.mrf.mxu0
        %4915 = vmatprep.mubr.bf16.mxu0 %v3854
        %4916 = vmatmul.mubr.bf16.gmra.mxu0 %v3853
        %v4917 = vpop.f32.mrf.mxu0
        %v4918 = vadd.f32 %v1616, %v4917
        %v4919 = vpop.f32.mrf.mxu0
        %v4920 = vpop.f32.mrf.mxu0
        %v4921 = vadd.f32 %v1621, %v4920
        %v4922 = vpop.f32.mrf.mxu0
        %4923 = vmatprep.mubr.bf16.mxu0 %v3864
        %4924 = vmatmul.mubr.bf16.gmra.mxu0 %v3863
        %v4925 = vpop.f32.mrf.mxu0
        %v4926 = vadd.f32 %v1626, %v4925
        %v4927 = vpop.f32.mrf.mxu0
        %v4928 = vpop.f32.mrf.mxu0
        %v4929 = vadd.f32 %v1631, %v4928
        %v4930 = vpop.f32.mrf.mxu0
        %4931 = vmatprep.mubr.bf16.mxu0 %v3874
        %4932 = vmatmul.mubr.bf16.gmra.mxu0 %v3873
        %v4933 = vpop.f32.mrf.mxu0
        %v4934 = vadd.f32 %v1636, %v4933
        %v4935 = vpop.f32.mrf.mxu0
        %v4936 = vpop.f32.mrf.mxu0
        %v4937 = vadd.f32 %v1641, %v4936
        %v4938 = vpop.f32.mrf.mxu0
        %4939 = vmatprep.mubr.bf16.mxu0 %v3884
        %4940 = vmatmul.mubr.bf16.gmra.mxu0 %v3883
        %v4941 = vpop.f32.mrf.mxu0
        %v4942 = vadd.f32 %v1646, %v4941
        %v4943 = vpop.f32.mrf.mxu0
        %v4944 = vpop.f32.mrf.mxu0
        %v4945 = vadd.f32 %v1651, %v4944
        %v4946 = vpop.f32.mrf.mxu0
        %4947 = vmatprep.mubr.bf16.mxu0 %v3894
        %4948 = vmatmul.mubr.bf16.gmra.mxu0 %v3893
        %v4949 = vpop.f32.mrf.mxu0
        %v4950 = vadd.f32 %v1656, %v4949
        %v4951 = vpop.f32.mrf.mxu0
        %v4952 = vpop.f32.mrf.mxu0
        %v4953 = vadd.f32 %v1661, %v4952
        %v4954 = vpop.f32.mrf.mxu0
        %4955 = vmatprep.mubr.bf16.mxu0 %v3904
        %4956 = vmatmul.mubr.bf16.gmra.mxu0 %v3903
        %v4957 = vpop.f32.mrf.mxu0
        %v4958 = vadd.f32 %v1666, %v4957
        %v4959 = vpop.f32.mrf.mxu0
        %v4960 = vpop.f32.mrf.mxu0
        %v4961 = vadd.f32 %v1671, %v4960
        %v4962 = vpop.f32.mrf.mxu0
        %4963 = vmatprep.mubr.bf16.mxu0 %v3914
        %4964 = vmatmul.mubr.bf16.gmra.mxu0 %v3913
        %v4965 = vpop.f32.mrf.mxu0
        %v4966 = vadd.f32 %v1676, %v4965
        %v4967 = vpop.f32.mrf.mxu0
        %v4968 = vpop.f32.mrf.mxu0
        %v4969 = vadd.f32 %v1681, %v4968
        %v4970 = vpop.f32.mrf.mxu0
        %4971 = vmatprep.mubr.bf16.mxu0 %v3924
        %4972 = vmatmul.mubr.bf16.gmra.mxu0 %v3923
        %v4973 = vpop.f32.mrf.mxu0
        %v4974 = vadd.f32 %v1686, %v4973
        %v4975 = vpop.f32.mrf.mxu0
        %v4976 = vpop.f32.mrf.mxu0
        %v4977 = vadd.f32 %v1691, %v4976
        %v4978 = vpop.f32.mrf.mxu0
        %4979 = vmatprep.mubr.bf16.mxu0 %v3934
        %4980 = vmatmul.mubr.bf16.gmra.mxu0 %v3933
        %v4981 = vpop.f32.mrf.mxu0
        %v4982 = vadd.f32 %v1696, %v4981
        %v4983 = vpop.f32.mrf.mxu0
        %v4984 = vpop.f32.mrf.mxu0
        %v4985 = vadd.f32 %v1701, %v4984
        %v4986 = vpop.f32.mrf.mxu0
        %4987 = vmatprep.mubr.bf16.mxu0 %v3944
        %4988 = vmatmul.mubr.bf16.gmra.mxu0 %v3943
        %v4989 = vpop.f32.mrf.mxu0
        %v4990 = vadd.f32 %v1706, %v4989
        %v4991 = vpop.f32.mrf.mxu0
        %v4992 = vpop.f32.mrf.mxu0
        %v4993 = vadd.f32 %v1711, %v4992
        %v4994 = vpop.f32.mrf.mxu0
        %4995 = vmatprep.mubr.bf16.mxu0 %v3954
        %4996 = vmatmul.mubr.bf16.gmra.mxu0 %v3953
        %v4997 = vpop.f32.mrf.mxu0
        %v4998 = vadd.f32 %v1716, %v4997
        %v4999 = vpop.f32.mrf.mxu0
        %v5000 = vpop.f32.mrf.mxu0
        %v5001 = vadd.f32 %v1721, %v5000
        %v5002 = vpop.f32.mrf.mxu0
        %5003 = vdwg.mxu0
        %5004 = vmatprep.subr.bf16.mxu0 0
        %5005 = vmatpush1.bf16.msra.mxu0 %v1106
        %5006 = vmatprep.subr.bf16.mxu0 0
        %5007 = vmatpush1.bf16.msra.mxu0 %v1105
        %5008 = vmatprep.subr.bf16.mxu0 0
        %5009 = vmatpush1.bf16.msra.mxu0 %v1104
        %5010 = vmatprep.subr.bf16.mxu0 0
        %5011 = vmatpush1.bf16.msra.mxu0 %v1103
        %5012 = vmatprep.subr.bf16.mxu0 0
        %5013 = vmatpush1.bf16.msra.mxu0 %v1102
        %5014 = vmatprep.subr.bf16.mxu0 0
        %5015 = vmatpush1.bf16.msra.mxu0 %v1101
        %5016 = vmatprep.subr.bf16.mxu0 0
        %5017 = vmatpush1.bf16.msra.mxu0 %v1100
        %5018 = vmatprep.subr.bf16.mxu0 0
        %5019 = vmatpush1.bf16.msra.mxu0 %v1099
        %5020 = vmatprep.subr.bf16.mxu0 0
        %5021 = vmatpush2.bf16.msra.mxu0 %v1114
        %5022 = vmatprep.subr.bf16.mxu0 0
        %5023 = vmatpush2.bf16.msra.mxu0 %v1113
        %5024 = vmatprep.subr.bf16.mxu0 0
        %5025 = vmatpush2.bf16.msra.mxu0 %v1112
        %5026 = vmatprep.subr.bf16.mxu0 0
        %5027 = vmatpush2.bf16.msra.mxu0 %v1111
        %5028 = vmatprep.subr.bf16.mxu0 0
        %5029 = vmatpush2.bf16.msra.mxu0 %v1110
        %5030 = vmatprep.subr.bf16.mxu0 0
        %5031 = vmatpush2.bf16.msra.mxu0 %v1109
        %5032 = vmatprep.subr.bf16.mxu0 0
        %5033 = vmatpush2.bf16.msra.mxu0 %v1108
        %5034 = vmatprep.subr.bf16.mxu0 0
        %5035 = vmatpush2.bf16.msra.mxu0 %v1107
        %5036 = vmatprep.mubr.bf16.mxu0 %v3406
        %5037 = vmatmul.mubr.bf16.gmra.mxu0 %v3405
        %v5038 = vpop.f32.mrf.mxu0
        %v5039 = vadd.f32 %v4558, %v5038
        %v5040 = vpop.f32.mrf.mxu0
        %v5041 = vpop.f32.mrf.mxu0
        %v5042 = vadd.f32 %v4561, %v5041
        %v5043 = vpop.f32.mrf.mxu0
        %5044 = vmatprep.mubr.bf16.mxu0 %v3416
        %5045 = vmatmul.mubr.bf16.gmra.mxu0 %v3415
        %v5046 = vpop.f32.mrf.mxu0
        %v5047 = vadd.f32 %v4566, %v5046
        %v5048 = vpop.f32.mrf.mxu0
        %v5049 = vpop.f32.mrf.mxu0
        %v5050 = vadd.f32 %v4569, %v5049
        %v5051 = vpop.f32.mrf.mxu0
        %5052 = vmatprep.mubr.bf16.mxu0 %v3426
        %5053 = vmatmul.mubr.bf16.gmra.mxu0 %v3425
        %v5054 = vpop.f32.mrf.mxu0
        %v5055 = vadd.f32 %v4574, %v5054
        %v5056 = vpop.f32.mrf.mxu0
        %v5057 = vpop.f32.mrf.mxu0
        %v5058 = vadd.f32 %v4577, %v5057
        %v5059 = vpop.f32.mrf.mxu0
        %5060 = vmatprep.mubr.bf16.mxu0 %v3436
        %5061 = vmatmul.mubr.bf16.gmra.mxu0 %v3435
        %v5062 = vpop.f32.mrf.mxu0
        %v5063 = vadd.f32 %v4582, %v5062
        %v5064 = vpop.f32.mrf.mxu0
        %v5065 = vpop.f32.mrf.mxu0
        %v5066 = vadd.f32 %v4585, %v5065
        %v5067 = vpop.f32.mrf.mxu0
        %5068 = vmatprep.mubr.bf16.mxu0 %v3446
        %5069 = vmatmul.mubr.bf16.gmra.mxu0 %v3445
        %v5070 = vpop.f32.mrf.mxu0
        %v5071 = vadd.f32 %v4590, %v5070
        %v5072 = vpop.f32.mrf.mxu0
        %v5073 = vpop.f32.mrf.mxu0
        %v5074 = vadd.f32 %v4593, %v5073
        %v5075 = vpop.f32.mrf.mxu0
        %5076 = vmatprep.mubr.bf16.mxu0 %v3456
        %5077 = vmatmul.mubr.bf16.gmra.mxu0 %v3455
        %v5078 = vpop.f32.mrf.mxu0
        %v5079 = vadd.f32 %v4598, %v5078
        %v5080 = vpop.f32.mrf.mxu0
        %v5081 = vpop.f32.mrf.mxu0
        %v5082 = vadd.f32 %v4601, %v5081
        %v5083 = vpop.f32.mrf.mxu0
        %5084 = vmatprep.mubr.bf16.mxu0 %v3466
        %5085 = vmatmul.mubr.bf16.gmra.mxu0 %v3465
        %v5086 = vpop.f32.mrf.mxu0
        %v5087 = vadd.f32 %v4606, %v5086
        %v5088 = vpop.f32.mrf.mxu0
        %v5089 = vpop.f32.mrf.mxu0
        %v5090 = vadd.f32 %v4609, %v5089
        %v5091 = vpop.f32.mrf.mxu0
        %5092 = vmatprep.mubr.bf16.mxu0 %v3476
        %5093 = vmatmul.mubr.bf16.gmra.mxu0 %v3475
        %v5094 = vpop.f32.mrf.mxu0
        %v5095 = vadd.f32 %v4614, %v5094
        %v5096 = vpop.f32.mrf.mxu0
        %v5097 = vpop.f32.mrf.mxu0
        %v5098 = vadd.f32 %v4617, %v5097
        %v5099 = vpop.f32.mrf.mxu0
        %5100 = vmatprep.mubr.bf16.mxu0 %v3486
        %5101 = vmatmul.mubr.bf16.gmra.mxu0 %v3485
        %v5102 = vpop.f32.mrf.mxu0
        %v5103 = vadd.f32 %v4622, %v5102
        %v5104 = vpop.f32.mrf.mxu0
        %v5105 = vpop.f32.mrf.mxu0
        %v5106 = vadd.f32 %v4625, %v5105
        %v5107 = vpop.f32.mrf.mxu0
        %5108 = vmatprep.mubr.bf16.mxu0 %v3496
        %5109 = vmatmul.mubr.bf16.gmra.mxu0 %v3495
        %v5110 = vpop.f32.mrf.mxu0
        %v5111 = vadd.f32 %v4630, %v5110
        %v5112 = vpop.f32.mrf.mxu0
        %v5113 = vpop.f32.mrf.mxu0
        %v5114 = vadd.f32 %v4633, %v5113
        %v5115 = vpop.f32.mrf.mxu0
        %5116 = vmatprep.mubr.bf16.mxu0 %v3506
        %5117 = vmatmul.mubr.bf16.gmra.mxu0 %v3505
        %v5118 = vpop.f32.mrf.mxu0
        %v5119 = vadd.f32 %v4638, %v5118
        %v5120 = vpop.f32.mrf.mxu0
        %v5121 = vpop.f32.mrf.mxu0
        %v5122 = vadd.f32 %v4641, %v5121
        %v5123 = vpop.f32.mrf.mxu0
        %5124 = vmatprep.mubr.bf16.mxu0 %v3516
        %5125 = vmatmul.mubr.bf16.gmra.mxu0 %v3515
        %v5126 = vpop.f32.mrf.mxu0
        %v5127 = vadd.f32 %v4646, %v5126
        %v5128 = vpop.f32.mrf.mxu0
        %v5129 = vpop.f32.mrf.mxu0
        %v5130 = vadd.f32 %v4649, %v5129
        %v5131 = vpop.f32.mrf.mxu0
        %5132 = vmatprep.mubr.bf16.mxu0 %v3526
        %5133 = vmatmul.mubr.bf16.gmra.mxu0 %v3525
        %v5134 = vpop.f32.mrf.mxu0
        %v5135 = vadd.f32 %v4654, %v5134
        %v5136 = vpop.f32.mrf.mxu0
        %v5137 = vpop.f32.mrf.mxu0
        %v5138 = vadd.f32 %v4657, %v5137
        %v5139 = vpop.f32.mrf.mxu0
        %5140 = vmatprep.mubr.bf16.mxu0 %v3536
        %5141 = vmatmul.mubr.bf16.gmra.mxu0 %v3535
        %v5142 = vpop.f32.mrf.mxu0
        %v5143 = vadd.f32 %v4662, %v5142
        %v5144 = vpop.f32.mrf.mxu0
        %v5145 = vpop.f32.mrf.mxu0
        %v5146 = vadd.f32 %v4665, %v5145
        %v5147 = vpop.f32.mrf.mxu0
        %5148 = vmatprep.mubr.bf16.mxu0 %v3546
        %5149 = vmatmul.mubr.bf16.gmra.mxu0 %v3545
        %v5150 = vpop.f32.mrf.mxu0
        %v5151 = vadd.f32 %v4670, %v5150
        %v5152 = vpop.f32.mrf.mxu0
        %v5153 = vpop.f32.mrf.mxu0
        %v5154 = vadd.f32 %v4673, %v5153
        %v5155 = vpop.f32.mrf.mxu0
        %5156 = vmatprep.mubr.bf16.mxu0 %v3556
        %5157 = vmatmul.mubr.bf16.gmra.mxu0 %v3555
        %v5158 = vpop.f32.mrf.mxu0
        %v5159 = vadd.f32 %v4678, %v5158
        %v5160 = vpop.f32.mrf.mxu0
        %v5161 = vpop.f32.mrf.mxu0
        %v5162 = vadd.f32 %v4681, %v5161
        %v5163 = vpop.f32.mrf.mxu0
        %5164 = vmatprep.mubr.bf16.mxu0 %v3566
        %5165 = vmatmul.mubr.bf16.gmra.mxu0 %v3565
        %v5166 = vpop.f32.mrf.mxu0
        %v5167 = vadd.f32 %v4686, %v5166
        %v5168 = vpop.f32.mrf.mxu0
        %v5169 = vpop.f32.mrf.mxu0
        %v5170 = vadd.f32 %v4689, %v5169
        %v5171 = vpop.f32.mrf.mxu0
        %5172 = vmatprep.mubr.bf16.mxu0 %v3576
        %5173 = vmatmul.mubr.bf16.gmra.mxu0 %v3575
        %v5174 = vpop.f32.mrf.mxu0
        %v5175 = vadd.f32 %v4694, %v5174
        %v5176 = vpop.f32.mrf.mxu0
        %v5177 = vpop.f32.mrf.mxu0
        %v5178 = vadd.f32 %v4697, %v5177
        %v5179 = vpop.f32.mrf.mxu0
        %5180 = vmatprep.mubr.bf16.mxu0 %v3586
        %5181 = vmatmul.mubr.bf16.gmra.mxu0 %v3585
        %v5182 = vpop.f32.mrf.mxu0
        %v5183 = vadd.f32 %v4702, %v5182
        %v5184 = vpop.f32.mrf.mxu0
        %v5185 = vpop.f32.mrf.mxu0
        %v5186 = vadd.f32 %v4705, %v5185
        %v5187 = vpop.f32.mrf.mxu0
        %5188 = vmatprep.mubr.bf16.mxu0 %v3596
        %5189 = vmatmul.mubr.bf16.gmra.mxu0 %v3595
        %v5190 = vpop.f32.mrf.mxu0
        %v5191 = vadd.f32 %v4710, %v5190
        %v5192 = vpop.f32.mrf.mxu0
        %v5193 = vpop.f32.mrf.mxu0
        %v5194 = vadd.f32 %v4713, %v5193
        %v5195 = vpop.f32.mrf.mxu0
        %5196 = vmatprep.mubr.bf16.mxu0 %v3606
        %5197 = vmatmul.mubr.bf16.gmra.mxu0 %v3605
        %v5198 = vpop.f32.mrf.mxu0
        %v5199 = vadd.f32 %v4718, %v5198
        %v5200 = vpop.f32.mrf.mxu0
        %v5201 = vpop.f32.mrf.mxu0
        %v5202 = vadd.f32 %v4721, %v5201
        %v5203 = vpop.f32.mrf.mxu0
        %5204 = vmatprep.mubr.bf16.mxu0 %v3616
        %5205 = vmatmul.mubr.bf16.gmra.mxu0 %v3615
        %v5206 = vpop.f32.mrf.mxu0
        %v5207 = vadd.f32 %v4726, %v5206
        %v5208 = vpop.f32.mrf.mxu0
        %v5209 = vpop.f32.mrf.mxu0
        %v5210 = vadd.f32 %v4729, %v5209
        %v5211 = vpop.f32.mrf.mxu0
        %5212 = vmatprep.mubr.bf16.mxu0 %v3626
        %5213 = vmatmul.mubr.bf16.gmra.mxu0 %v3625
        %v5214 = vpop.f32.mrf.mxu0
        %v5215 = vadd.f32 %v4734, %v5214
        %v5216 = vpop.f32.mrf.mxu0
        %v5217 = vpop.f32.mrf.mxu0
        %v5218 = vadd.f32 %v4737, %v5217
        %v5219 = vpop.f32.mrf.mxu0
        %5220 = vmatprep.mubr.bf16.mxu0 %v3636
        %5221 = vmatmul.mubr.bf16.gmra.mxu0 %v3635
        %v5222 = vpop.f32.mrf.mxu0
        %v5223 = vadd.f32 %v4742, %v5222
        %v5224 = vpop.f32.mrf.mxu0
        %v5225 = vpop.f32.mrf.mxu0
        %v5226 = vadd.f32 %v4745, %v5225
        %v5227 = vpop.f32.mrf.mxu0
        %5228 = vmatprep.mubr.bf16.mxu0 %v3646
        %5229 = vmatmul.mubr.bf16.gmra.mxu0 %v3645
        %v5230 = vpop.f32.mrf.mxu0
        %v5231 = vadd.f32 %v4750, %v5230
        %v5232 = vpop.f32.mrf.mxu0
        %v5233 = vpop.f32.mrf.mxu0
        %v5234 = vadd.f32 %v4753, %v5233
        %v5235 = vpop.f32.mrf.mxu0
        %5236 = vmatprep.mubr.bf16.mxu0 %v3656
        %5237 = vmatmul.mubr.bf16.gmra.mxu0 %v3655
        %v5238 = vpop.f32.mrf.mxu0
        %v5239 = vadd.f32 %v4758, %v5238
        %v5240 = vpop.f32.mrf.mxu0
        %v5241 = vpop.f32.mrf.mxu0
        %v5242 = vadd.f32 %v4761, %v5241
        %v5243 = vpop.f32.mrf.mxu0
        %5244 = vmatprep.mubr.bf16.mxu0 %v3666
        %5245 = vmatmul.mubr.bf16.gmra.mxu0 %v3665
        %v5246 = vpop.f32.mrf.mxu0
        %v5247 = vadd.f32 %v4766, %v5246
        %v5248 = vpop.f32.mrf.mxu0
        %v5249 = vpop.f32.mrf.mxu0
        %v5250 = vadd.f32 %v4769, %v5249
        %v5251 = vpop.f32.mrf.mxu0
        %5252 = vmatprep.mubr.bf16.mxu0 %v3676
        %5253 = vmatmul.mubr.bf16.gmra.mxu0 %v3675
        %v5254 = vpop.f32.mrf.mxu0
        %v5255 = vadd.f32 %v4774, %v5254
        %v5256 = vpop.f32.mrf.mxu0
        %v5257 = vpop.f32.mrf.mxu0
        %v5258 = vadd.f32 %v4777, %v5257
        %v5259 = vpop.f32.mrf.mxu0
        %5260 = vmatprep.mubr.bf16.mxu0 %v3686
        %5261 = vmatmul.mubr.bf16.gmra.mxu0 %v3685
        %v5262 = vpop.f32.mrf.mxu0
        %v5263 = vadd.f32 %v4782, %v5262
        %v5264 = vpop.f32.mrf.mxu0
        %v5265 = vpop.f32.mrf.mxu0
        %v5266 = vadd.f32 %v4785, %v5265
        %v5267 = vpop.f32.mrf.mxu0
        %5268 = vmatprep.mubr.bf16.mxu0 %v3696
        %5269 = vmatmul.mubr.bf16.gmra.mxu0 %v3695
        %v5270 = vpop.f32.mrf.mxu0
        %v5271 = vadd.f32 %v4790, %v5270
        %v5272 = vpop.f32.mrf.mxu0
        %v5273 = vpop.f32.mrf.mxu0
        %v5274 = vadd.f32 %v4793, %v5273
        %v5275 = vpop.f32.mrf.mxu0
        %5276 = vmatprep.mubr.bf16.mxu0 %v3706
        %5277 = vmatmul.mubr.bf16.gmra.mxu0 %v3705
        %v5278 = vpop.f32.mrf.mxu0
        %v5279 = vadd.f32 %v4798, %v5278
        %v5280 = vpop.f32.mrf.mxu0
        %v5281 = vpop.f32.mrf.mxu0
        %v5282 = vadd.f32 %v4801, %v5281
        %v5283 = vpop.f32.mrf.mxu0
        %5284 = vmatprep.mubr.bf16.mxu0 %v3716
        %5285 = vmatmul.mubr.bf16.gmra.mxu0 %v3715
        %v5286 = vpop.f32.mrf.mxu0
        %v5287 = vadd.f32 %v4806, %v5286
        %v5288 = vpop.f32.mrf.mxu0
        %v5289 = vpop.f32.mrf.mxu0
        %v5290 = vadd.f32 %v4809, %v5289
        %v5291 = vpop.f32.mrf.mxu0
        %5292 = vmatprep.mubr.bf16.mxu0 %v3726
        %5293 = vmatmul.mubr.bf16.gmra.mxu0 %v3725
        %v5294 = vpop.f32.mrf.mxu0
        %v5295 = vadd.f32 %v4814, %v5294
        %v5296 = vpop.f32.mrf.mxu0
        %v5297 = vpop.f32.mrf.mxu0
        %v5298 = vadd.f32 %v4817, %v5297
        %v5299 = vpop.f32.mrf.mxu0
        %5300 = vmatprep.mubr.bf16.mxu0 %v3736
        %5301 = vmatmul.mubr.bf16.gmra.mxu0 %v3735
        %v5302 = vpop.f32.mrf.mxu0
        %v5303 = vadd.f32 %v4822, %v5302
        %v5304 = vpop.f32.mrf.mxu0
        %v5305 = vpop.f32.mrf.mxu0
        %v5306 = vadd.f32 %v4825, %v5305
        %v5307 = vpop.f32.mrf.mxu0
        %5308 = vmatprep.mubr.bf16.mxu0 %v3746
        %5309 = vmatmul.mubr.bf16.gmra.mxu0 %v3745
        %v5310 = vpop.f32.mrf.mxu0
        %v5311 = vadd.f32 %v4830, %v5310
        %v5312 = vpop.f32.mrf.mxu0
        %v5313 = vpop.f32.mrf.mxu0
        %v5314 = vadd.f32 %v4833, %v5313
        %v5315 = vpop.f32.mrf.mxu0
        %5316 = vmatprep.mubr.bf16.mxu0 %v3756
        %5317 = vmatmul.mubr.bf16.gmra.mxu0 %v3755
        %v5318 = vpop.f32.mrf.mxu0
        %v5319 = vadd.f32 %v4838, %v5318
        %v5320 = vpop.f32.mrf.mxu0
        %v5321 = vpop.f32.mrf.mxu0
        %v5322 = vadd.f32 %v4841, %v5321
        %v5323 = vpop.f32.mrf.mxu0
        %5324 = vmatprep.mubr.bf16.mxu0 %v3766
        %5325 = vmatmul.mubr.bf16.gmra.mxu0 %v3765
        %v5326 = vpop.f32.mrf.mxu0
        %v5327 = vadd.f32 %v4846, %v5326
        %v5328 = vpop.f32.mrf.mxu0
        %v5329 = vpop.f32.mrf.mxu0
        %v5330 = vadd.f32 %v4849, %v5329
        %v5331 = vpop.f32.mrf.mxu0
        %5332 = vmatprep.mubr.bf16.mxu0 %v3776
        %5333 = vmatmul.mubr.bf16.gmra.mxu0 %v3775
        %v5334 = vpop.f32.mrf.mxu0
        %v5335 = vadd.f32 %v4854, %v5334
        %v5336 = vpop.f32.mrf.mxu0
        %v5337 = vpop.f32.mrf.mxu0
        %v5338 = vadd.f32 %v4857, %v5337
        %v5339 = vpop.f32.mrf.mxu0
        %5340 = vmatprep.mubr.bf16.mxu0 %v3786
        %5341 = vmatmul.mubr.bf16.gmra.mxu0 %v3785
        %v5342 = vpop.f32.mrf.mxu0
        %v5343 = vadd.f32 %v4862, %v5342
        %v5344 = vpop.f32.mrf.mxu0
        %v5345 = vpop.f32.mrf.mxu0
        %v5346 = vadd.f32 %v4865, %v5345
        %v5347 = vpop.f32.mrf.mxu0
        %5348 = vmatprep.mubr.bf16.mxu0 %v3796
        %5349 = vmatmul.mubr.bf16.gmra.mxu0 %v3795
        %v5350 = vpop.f32.mrf.mxu0
        %v5351 = vadd.f32 %v4870, %v5350
        %v5352 = vpop.f32.mrf.mxu0
        %v5353 = vpop.f32.mrf.mxu0
        %v5354 = vadd.f32 %v4873, %v5353
        %v5355 = vpop.f32.mrf.mxu0
        %5356 = vmatprep.mubr.bf16.mxu0 %v3806
        %5357 = vmatmul.mubr.bf16.gmra.mxu0 %v3805
        %v5358 = vpop.f32.mrf.mxu0
        %v5359 = vadd.f32 %v4878, %v5358
        %v5360 = vpop.f32.mrf.mxu0
        %v5361 = vpop.f32.mrf.mxu0
        %v5362 = vadd.f32 %v4881, %v5361
        %v5363 = vpop.f32.mrf.mxu0
        %5364 = vmatprep.mubr.bf16.mxu0 %v3816
        %5365 = vmatmul.mubr.bf16.gmra.mxu0 %v3815
        %v5366 = vpop.f32.mrf.mxu0
        %v5367 = vadd.f32 %v4886, %v5366
        %v5368 = vpop.f32.mrf.mxu0
        %v5369 = vpop.f32.mrf.mxu0
        %v5370 = vadd.f32 %v4889, %v5369
        %v5371 = vpop.f32.mrf.mxu0
        %5372 = vmatprep.mubr.bf16.mxu0 %v3826
        %5373 = vmatmul.mubr.bf16.gmra.mxu0 %v3825
        %v5374 = vpop.f32.mrf.mxu0
        %v5375 = vadd.f32 %v4894, %v5374
        %v5376 = vpop.f32.mrf.mxu0
        %v5377 = vpop.f32.mrf.mxu0
        %v5378 = vadd.f32 %v4897, %v5377
        %v5379 = vpop.f32.mrf.mxu0
        %5380 = vmatprep.mubr.bf16.mxu0 %v3836
        %5381 = vmatmul.mubr.bf16.gmra.mxu0 %v3835
        %v5382 = vpop.f32.mrf.mxu0
        %v5383 = vadd.f32 %v4902, %v5382
        %v5384 = vpop.f32.mrf.mxu0
        %v5385 = vpop.f32.mrf.mxu0
        %v5386 = vadd.f32 %v4905, %v5385
        %v5387 = vpop.f32.mrf.mxu0
        %5388 = vmatprep.mubr.bf16.mxu0 %v3846
        %5389 = vmatmul.mubr.bf16.gmra.mxu0 %v3845
        %v5390 = vpop.f32.mrf.mxu0
        %v5391 = vadd.f32 %v4910, %v5390
        %v5392 = vpop.f32.mrf.mxu0
        %v5393 = vpop.f32.mrf.mxu0
        %v5394 = vadd.f32 %v4913, %v5393
        %v5395 = vpop.f32.mrf.mxu0
        %5396 = vmatprep.mubr.bf16.mxu0 %v3856
        %5397 = vmatmul.mubr.bf16.gmra.mxu0 %v3855
        %v5398 = vpop.f32.mrf.mxu0
        %v5399 = vadd.f32 %v4918, %v5398
        %v5400 = vpop.f32.mrf.mxu0
        %v5401 = vpop.f32.mrf.mxu0
        %v5402 = vadd.f32 %v4921, %v5401
        %v5403 = vpop.f32.mrf.mxu0
        %5404 = vmatprep.mubr.bf16.mxu0 %v3866
        %5405 = vmatmul.mubr.bf16.gmra.mxu0 %v3865
        %v5406 = vpop.f32.mrf.mxu0
        %v5407 = vadd.f32 %v4926, %v5406
        %v5408 = vpop.f32.mrf.mxu0
        %v5409 = vpop.f32.mrf.mxu0
        %v5410 = vadd.f32 %v4929, %v5409
        %v5411 = vpop.f32.mrf.mxu0
        %5412 = vmatprep.mubr.bf16.mxu0 %v3876
        %5413 = vmatmul.mubr.bf16.gmra.mxu0 %v3875
        %v5414 = vpop.f32.mrf.mxu0
        %v5415 = vadd.f32 %v4934, %v5414
        %v5416 = vpop.f32.mrf.mxu0
        %v5417 = vpop.f32.mrf.mxu0
        %v5418 = vadd.f32 %v4937, %v5417
        %v5419 = vpop.f32.mrf.mxu0
        %5420 = vmatprep.mubr.bf16.mxu0 %v3886
        %5421 = vmatmul.mubr.bf16.gmra.mxu0 %v3885
        %v5422 = vpop.f32.mrf.mxu0
        %v5423 = vadd.f32 %v4942, %v5422
        %v5424 = vpop.f32.mrf.mxu0
        %v5425 = vpop.f32.mrf.mxu0
        %v5426 = vadd.f32 %v4945, %v5425
        %v5427 = vpop.f32.mrf.mxu0
        %5428 = vmatprep.mubr.bf16.mxu0 %v3896
        %5429 = vmatmul.mubr.bf16.gmra.mxu0 %v3895
        %v5430 = vpop.f32.mrf.mxu0
        %v5431 = vadd.f32 %v4950, %v5430
        %v5432 = vpop.f32.mrf.mxu0
        %v5433 = vpop.f32.mrf.mxu0
        %v5434 = vadd.f32 %v4953, %v5433
        %v5435 = vpop.f32.mrf.mxu0
        %5436 = vmatprep.mubr.bf16.mxu0 %v3906
        %5437 = vmatmul.mubr.bf16.gmra.mxu0 %v3905
        %v5438 = vpop.f32.mrf.mxu0
        %v5439 = vadd.f32 %v4958, %v5438
        %v5440 = vpop.f32.mrf.mxu0
        %v5441 = vpop.f32.mrf.mxu0
        %v5442 = vadd.f32 %v4961, %v5441
        %v5443 = vpop.f32.mrf.mxu0
        %5444 = vmatprep.mubr.bf16.mxu0 %v3916
        %5445 = vmatmul.mubr.bf16.gmra.mxu0 %v3915
        %v5446 = vpop.f32.mrf.mxu0
        %v5447 = vadd.f32 %v4966, %v5446
        %v5448 = vpop.f32.mrf.mxu0
        %v5449 = vpop.f32.mrf.mxu0
        %v5450 = vadd.f32 %v4969, %v5449
        %v5451 = vpop.f32.mrf.mxu0
        %5452 = vmatprep.mubr.bf16.mxu0 %v3926
        %5453 = vmatmul.mubr.bf16.gmra.mxu0 %v3925
        %v5454 = vpop.f32.mrf.mxu0
        %v5455 = vadd.f32 %v4974, %v5454
        %v5456 = vpop.f32.mrf.mxu0
        %v5457 = vpop.f32.mrf.mxu0
        %v5458 = vadd.f32 %v4977, %v5457
        %v5459 = vpop.f32.mrf.mxu0
        %5460 = vmatprep.mubr.bf16.mxu0 %v3936
        %5461 = vmatmul.mubr.bf16.gmra.mxu0 %v3935
        %v5462 = vpop.f32.mrf.mxu0
        %v5463 = vadd.f32 %v4982, %v5462
        %v5464 = vpop.f32.mrf.mxu0
        %v5465 = vpop.f32.mrf.mxu0
        %v5466 = vadd.f32 %v4985, %v5465
        %v5467 = vpop.f32.mrf.mxu0
        %5468 = vmatprep.mubr.bf16.mxu0 %v3946
        %5469 = vmatmul.mubr.bf16.gmra.mxu0 %v3945
        %v5470 = vpop.f32.mrf.mxu0
        %v5471 = vadd.f32 %v4990, %v5470
        %v5472 = vpop.f32.mrf.mxu0
        %v5473 = vpop.f32.mrf.mxu0
        %v5474 = vadd.f32 %v4993, %v5473
        %v5475 = vpop.f32.mrf.mxu0
        %5476 = vmatprep.mubr.bf16.mxu0 %v3956
        %5477 = vmatmul.mubr.bf16.gmra.mxu0 %v3955
        %v5478 = vpop.f32.mrf.mxu0
        %v5479 = vadd.f32 %v4998, %v5478
        %v5480 = vpop.f32.mrf.mxu0
        %v5481 = vpop.f32.mrf.mxu0
        %v5482 = vadd.f32 %v5001, %v5481
        %v5483 = vpop.f32.mrf.mxu0
        %5484 = vdwg.mxu0
        %5485 = vmatprep.subr.bf16.mxu0 0
        %5486 = vmatpush1.bf16.msra.mxu0 %v1122
        %5487 = vmatprep.subr.bf16.mxu0 0
        %5488 = vmatpush1.bf16.msra.mxu0 %v1121
        %5489 = vmatprep.subr.bf16.mxu0 0
        %5490 = vmatpush1.bf16.msra.mxu0 %v1120
        %5491 = vmatprep.subr.bf16.mxu0 0
        %5492 = vmatpush1.bf16.msra.mxu0 %v1119
        %5493 = vmatprep.subr.bf16.mxu0 0
        %5494 = vmatpush1.bf16.msra.mxu0 %v1118
        %5495 = vmatprep.subr.bf16.mxu0 0
        %5496 = vmatpush1.bf16.msra.mxu0 %v1117
        %5497 = vmatprep.subr.bf16.mxu0 0
        %5498 = vmatpush1.bf16.msra.mxu0 %v1116
        %5499 = vmatprep.subr.bf16.mxu0 0
        %5500 = vmatpush1.bf16.msra.mxu0 %v1115
        %5501 = vmatprep.subr.bf16.mxu0 0
        %5502 = vmatpush2.bf16.msra.mxu0 %v1130
        %5503 = vmatprep.subr.bf16.mxu0 0
        %5504 = vmatpush2.bf16.msra.mxu0 %v1129
        %5505 = vmatprep.subr.bf16.mxu0 0
        %5506 = vmatpush2.bf16.msra.mxu0 %v1128
        %5507 = vmatprep.subr.bf16.mxu0 0
        %5508 = vmatpush2.bf16.msra.mxu0 %v1127
        %5509 = vmatprep.subr.bf16.mxu0 0
        %5510 = vmatpush2.bf16.msra.mxu0 %v1126
        %5511 = vmatprep.subr.bf16.mxu0 0
        %5512 = vmatpush2.bf16.msra.mxu0 %v1125
        %5513 = vmatprep.subr.bf16.mxu0 0
        %5514 = vmatpush2.bf16.msra.mxu0 %v1124
        %5515 = vmatprep.subr.bf16.mxu0 0
        %5516 = vmatpush2.bf16.msra.mxu0 %v1123
        %5517 = vmatprep.mubr.bf16.mxu0 %v3408
        %5518 = vmatmul.mubr.bf16.gmra.mxu0 %v3407
        %v5519 = vpop.f32.mrf.mxu0
        %v5520 = vadd.f32 %v5039, %v5519
        %v5521 = vpop.f32.mrf.mxu0
        %v5522 = vpop.f32.mrf.mxu0
        %v5523 = vadd.f32 %v5042, %v5522
        %v5524 = vpop.f32.mrf.mxu0
        %5525 = vmatprep.mubr.bf16.mxu0 %v3418
        %5526 = vmatmul.mubr.bf16.gmra.mxu0 %v3417
        %v5527 = vpop.f32.mrf.mxu0
        %v5528 = vadd.f32 %v5047, %v5527
        %v5529 = vpop.f32.mrf.mxu0
        %v5530 = vpop.f32.mrf.mxu0
        %v5531 = vadd.f32 %v5050, %v5530
        %v5532 = vpop.f32.mrf.mxu0
        %5533 = vmatprep.mubr.bf16.mxu0 %v3428
        %5534 = vmatmul.mubr.bf16.gmra.mxu0 %v3427
        %v5535 = vpop.f32.mrf.mxu0
        %v5536 = vadd.f32 %v5055, %v5535
        %v5537 = vpop.f32.mrf.mxu0
        %v5538 = vpop.f32.mrf.mxu0
        %v5539 = vadd.f32 %v5058, %v5538
        %v5540 = vpop.f32.mrf.mxu0
        %5541 = vmatprep.mubr.bf16.mxu0 %v3438
        %5542 = vmatmul.mubr.bf16.gmra.mxu0 %v3437
        %v5543 = vpop.f32.mrf.mxu0
        %v5544 = vadd.f32 %v5063, %v5543
        %v5545 = vpop.f32.mrf.mxu0
        %v5546 = vpop.f32.mrf.mxu0
        %v5547 = vadd.f32 %v5066, %v5546
        %v5548 = vpop.f32.mrf.mxu0
        %5549 = vmatprep.mubr.bf16.mxu0 %v3448
        %5550 = vmatmul.mubr.bf16.gmra.mxu0 %v3447
        %v5551 = vpop.f32.mrf.mxu0
        %v5552 = vadd.f32 %v5071, %v5551
        %v5553 = vpop.f32.mrf.mxu0
        %v5554 = vpop.f32.mrf.mxu0
        %v5555 = vadd.f32 %v5074, %v5554
        %v5556 = vpop.f32.mrf.mxu0
        %5557 = vmatprep.mubr.bf16.mxu0 %v3458
        %5558 = vmatmul.mubr.bf16.gmra.mxu0 %v3457
        %v5559 = vpop.f32.mrf.mxu0
        %v5560 = vadd.f32 %v5079, %v5559
        %v5561 = vpop.f32.mrf.mxu0
        %v5562 = vpop.f32.mrf.mxu0
        %v5563 = vadd.f32 %v5082, %v5562
        %v5564 = vpop.f32.mrf.mxu0
        %5565 = vmatprep.mubr.bf16.mxu0 %v3468
        %5566 = vmatmul.mubr.bf16.gmra.mxu0 %v3467
        %v5567 = vpop.f32.mrf.mxu0
        %v5568 = vadd.f32 %v5087, %v5567
        %v5569 = vpop.f32.mrf.mxu0
        %v5570 = vpop.f32.mrf.mxu0
        %v5571 = vadd.f32 %v5090, %v5570
        %v5572 = vpop.f32.mrf.mxu0
        %5573 = vmatprep.mubr.bf16.mxu0 %v3478
        %5574 = vmatmul.mubr.bf16.gmra.mxu0 %v3477
        %v5575 = vpop.f32.mrf.mxu0
        %v5576 = vadd.f32 %v5095, %v5575
        %v5577 = vpop.f32.mrf.mxu0
        %v5578 = vpop.f32.mrf.mxu0
        %v5579 = vadd.f32 %v5098, %v5578
        %v5580 = vpop.f32.mrf.mxu0
        %5581 = vmatprep.mubr.bf16.mxu0 %v3488
        %5582 = vmatmul.mubr.bf16.gmra.mxu0 %v3487
        %v5583 = vpop.f32.mrf.mxu0
        %v5584 = vadd.f32 %v5103, %v5583
        %v5585 = vpop.f32.mrf.mxu0
        %v5586 = vpop.f32.mrf.mxu0
        %v5587 = vadd.f32 %v5106, %v5586
        %v5588 = vpop.f32.mrf.mxu0
        %5589 = vmatprep.mubr.bf16.mxu0 %v3498
        %5590 = vmatmul.mubr.bf16.gmra.mxu0 %v3497
        %v5591 = vpop.f32.mrf.mxu0
        %v5592 = vadd.f32 %v5111, %v5591
        %v5593 = vpop.f32.mrf.mxu0
        %v5594 = vpop.f32.mrf.mxu0
        %v5595 = vadd.f32 %v5114, %v5594
        %v5596 = vpop.f32.mrf.mxu0
        %5597 = vmatprep.mubr.bf16.mxu0 %v3508
        %5598 = vmatmul.mubr.bf16.gmra.mxu0 %v3507
        %v5599 = vpop.f32.mrf.mxu0
        %v5600 = vadd.f32 %v5119, %v5599
        %v5601 = vpop.f32.mrf.mxu0
        %v5602 = vpop.f32.mrf.mxu0
        %v5603 = vadd.f32 %v5122, %v5602
        %v5604 = vpop.f32.mrf.mxu0
        %5605 = vmatprep.mubr.bf16.mxu0 %v3518
        %5606 = vmatmul.mubr.bf16.gmra.mxu0 %v3517
        %v5607 = vpop.f32.mrf.mxu0
        %v5608 = vadd.f32 %v5127, %v5607
        %v5609 = vpop.f32.mrf.mxu0
        %v5610 = vpop.f32.mrf.mxu0
        %v5611 = vadd.f32 %v5130, %v5610
        %v5612 = vpop.f32.mrf.mxu0
        %5613 = vmatprep.mubr.bf16.mxu0 %v3528
        %5614 = vmatmul.mubr.bf16.gmra.mxu0 %v3527
        %v5615 = vpop.f32.mrf.mxu0
        %v5616 = vadd.f32 %v5135, %v5615
        %v5617 = vpop.f32.mrf.mxu0
        %v5618 = vpop.f32.mrf.mxu0
        %v5619 = vadd.f32 %v5138, %v5618
        %v5620 = vpop.f32.mrf.mxu0
        %5621 = vmatprep.mubr.bf16.mxu0 %v3538
        %5622 = vmatmul.mubr.bf16.gmra.mxu0 %v3537
        %v5623 = vpop.f32.mrf.mxu0
        %v5624 = vadd.f32 %v5143, %v5623
        %v5625 = vpop.f32.mrf.mxu0
        %v5626 = vpop.f32.mrf.mxu0
        %v5627 = vadd.f32 %v5146, %v5626
        %v5628 = vpop.f32.mrf.mxu0
        %5629 = vmatprep.mubr.bf16.mxu0 %v3548
        %5630 = vmatmul.mubr.bf16.gmra.mxu0 %v3547
        %v5631 = vpop.f32.mrf.mxu0
        %v5632 = vadd.f32 %v5151, %v5631
        %v5633 = vpop.f32.mrf.mxu0
        %v5634 = vpop.f32.mrf.mxu0
        %v5635 = vadd.f32 %v5154, %v5634
        %v5636 = vpop.f32.mrf.mxu0
        %5637 = vmatprep.mubr.bf16.mxu0 %v3558
        %5638 = vmatmul.mubr.bf16.gmra.mxu0 %v3557
        %v5639 = vpop.f32.mrf.mxu0
        %v5640 = vadd.f32 %v5159, %v5639
        %v5641 = vpop.f32.mrf.mxu0
        %v5642 = vpop.f32.mrf.mxu0
        %v5643 = vadd.f32 %v5162, %v5642
        %v5644 = vpop.f32.mrf.mxu0
        %5645 = vmatprep.mubr.bf16.mxu0 %v3568
        %5646 = vmatmul.mubr.bf16.gmra.mxu0 %v3567
        %v5647 = vpop.f32.mrf.mxu0
        %v5648 = vadd.f32 %v5167, %v5647
        %v5649 = vpop.f32.mrf.mxu0
        %v5650 = vpop.f32.mrf.mxu0
        %v5651 = vadd.f32 %v5170, %v5650
        %v5652 = vpop.f32.mrf.mxu0
        %5653 = vmatprep.mubr.bf16.mxu0 %v3578
        %5654 = vmatmul.mubr.bf16.gmra.mxu0 %v3577
        %v5655 = vpop.f32.mrf.mxu0
        %v5656 = vadd.f32 %v5175, %v5655
        %v5657 = vpop.f32.mrf.mxu0
        %v5658 = vpop.f32.mrf.mxu0
        %v5659 = vadd.f32 %v5178, %v5658
        %v5660 = vpop.f32.mrf.mxu0
        %5661 = vmatprep.mubr.bf16.mxu0 %v3588
        %5662 = vmatmul.mubr.bf16.gmra.mxu0 %v3587
        %v5663 = vpop.f32.mrf.mxu0
        %v5664 = vadd.f32 %v5183, %v5663
        %v5665 = vpop.f32.mrf.mxu0
        %v5666 = vpop.f32.mrf.mxu0
        %v5667 = vadd.f32 %v5186, %v5666
        %v5668 = vpop.f32.mrf.mxu0
        %5669 = vmatprep.mubr.bf16.mxu0 %v3598
        %5670 = vmatmul.mubr.bf16.gmra.mxu0 %v3597
        %v5671 = vpop.f32.mrf.mxu0
        %v5672 = vadd.f32 %v5191, %v5671
        %v5673 = vpop.f32.mrf.mxu0
        %v5674 = vpop.f32.mrf.mxu0
        %v5675 = vadd.f32 %v5194, %v5674
        %v5676 = vpop.f32.mrf.mxu0
        %5677 = vmatprep.mubr.bf16.mxu0 %v3608
        %5678 = vmatmul.mubr.bf16.gmra.mxu0 %v3607
        %v5679 = vpop.f32.mrf.mxu0
        %v5680 = vadd.f32 %v5199, %v5679
        %v5681 = vpop.f32.mrf.mxu0
        %v5682 = vpop.f32.mrf.mxu0
        %v5683 = vadd.f32 %v5202, %v5682
        %v5684 = vpop.f32.mrf.mxu0
        %5685 = vmatprep.mubr.bf16.mxu0 %v3618
        %5686 = vmatmul.mubr.bf16.gmra.mxu0 %v3617
        %v5687 = vpop.f32.mrf.mxu0
        %v5688 = vadd.f32 %v5207, %v5687
        %v5689 = vpop.f32.mrf.mxu0
        %v5690 = vpop.f32.mrf.mxu0
        %v5691 = vadd.f32 %v5210, %v5690
        %v5692 = vpop.f32.mrf.mxu0
        %5693 = vmatprep.mubr.bf16.mxu0 %v3628
        %5694 = vmatmul.mubr.bf16.gmra.mxu0 %v3627
        %v5695 = vpop.f32.mrf.mxu0
        %v5696 = vadd.f32 %v5215, %v5695
        %v5697 = vpop.f32.mrf.mxu0
        %v5698 = vpop.f32.mrf.mxu0
        %v5699 = vadd.f32 %v5218, %v5698
        %v5700 = vpop.f32.mrf.mxu0
        %5701 = vmatprep.mubr.bf16.mxu0 %v3638
        %5702 = vmatmul.mubr.bf16.gmra.mxu0 %v3637
        %v5703 = vpop.f32.mrf.mxu0
        %v5704 = vadd.f32 %v5223, %v5703
        %v5705 = vpop.f32.mrf.mxu0
        %v5706 = vpop.f32.mrf.mxu0
        %v5707 = vadd.f32 %v5226, %v5706
        %v5708 = vpop.f32.mrf.mxu0
        %5709 = vmatprep.mubr.bf16.mxu0 %v3648
        %5710 = vmatmul.mubr.bf16.gmra.mxu0 %v3647
        %v5711 = vpop.f32.mrf.mxu0
        %v5712 = vadd.f32 %v5231, %v5711
        %v5713 = vpop.f32.mrf.mxu0
        %v5714 = vpop.f32.mrf.mxu0
        %v5715 = vadd.f32 %v5234, %v5714
        %v5716 = vpop.f32.mrf.mxu0
        %5717 = vmatprep.mubr.bf16.mxu0 %v3658
        %5718 = vmatmul.mubr.bf16.gmra.mxu0 %v3657
        %v5719 = vpop.f32.mrf.mxu0
        %v5720 = vadd.f32 %v5239, %v5719
        %v5721 = vpop.f32.mrf.mxu0
        %v5722 = vpop.f32.mrf.mxu0
        %v5723 = vadd.f32 %v5242, %v5722
        %v5724 = vpop.f32.mrf.mxu0
        %5725 = vmatprep.mubr.bf16.mxu0 %v3668
        %5726 = vmatmul.mubr.bf16.gmra.mxu0 %v3667
        %v5727 = vpop.f32.mrf.mxu0
        %v5728 = vadd.f32 %v5247, %v5727
        %v5729 = vpop.f32.mrf.mxu0
        %v5730 = vpop.f32.mrf.mxu0
        %v5731 = vadd.f32 %v5250, %v5730
        %v5732 = vpop.f32.mrf.mxu0
        %5733 = vmatprep.mubr.bf16.mxu0 %v3678
        %5734 = vmatmul.mubr.bf16.gmra.mxu0 %v3677
        %v5735 = vpop.f32.mrf.mxu0
        %v5736 = vadd.f32 %v5255, %v5735
        %v5737 = vpop.f32.mrf.mxu0
        %v5738 = vpop.f32.mrf.mxu0
        %v5739 = vadd.f32 %v5258, %v5738
        %v5740 = vpop.f32.mrf.mxu0
        %5741 = vmatprep.mubr.bf16.mxu0 %v3688
        %5742 = vmatmul.mubr.bf16.gmra.mxu0 %v3687
        %v5743 = vpop.f32.mrf.mxu0
        %v5744 = vadd.f32 %v5263, %v5743
        %v5745 = vpop.f32.mrf.mxu0
        %v5746 = vpop.f32.mrf.mxu0
        %v5747 = vadd.f32 %v5266, %v5746
        %v5748 = vpop.f32.mrf.mxu0
        %5749 = vmatprep.mubr.bf16.mxu0 %v3698
        %5750 = vmatmul.mubr.bf16.gmra.mxu0 %v3697
        %v5751 = vpop.f32.mrf.mxu0
        %v5752 = vadd.f32 %v5271, %v5751
        %v5753 = vpop.f32.mrf.mxu0
        %v5754 = vpop.f32.mrf.mxu0
        %v5755 = vadd.f32 %v5274, %v5754
        %v5756 = vpop.f32.mrf.mxu0
        %5757 = vmatprep.mubr.bf16.mxu0 %v3708
        %5758 = vmatmul.mubr.bf16.gmra.mxu0 %v3707
        %v5759 = vpop.f32.mrf.mxu0
        %v5760 = vadd.f32 %v5279, %v5759
        %v5761 = vpop.f32.mrf.mxu0
        %v5762 = vpop.f32.mrf.mxu0
        %v5763 = vadd.f32 %v5282, %v5762
        %v5764 = vpop.f32.mrf.mxu0
        %5765 = vmatprep.mubr.bf16.mxu0 %v3718
        %5766 = vmatmul.mubr.bf16.gmra.mxu0 %v3717
        %v5767 = vpop.f32.mrf.mxu0
        %v5768 = vadd.f32 %v5287, %v5767
        %v5769 = vpop.f32.mrf.mxu0
        %v5770 = vpop.f32.mrf.mxu0
        %v5771 = vadd.f32 %v5290, %v5770
        %v5772 = vpop.f32.mrf.mxu0
        %5773 = vmatprep.mubr.bf16.mxu0 %v3728
        %5774 = vmatmul.mubr.bf16.gmra.mxu0 %v3727
        %v5775 = vpop.f32.mrf.mxu0
        %v5776 = vadd.f32 %v5295, %v5775
        %v5777 = vpop.f32.mrf.mxu0
        %v5778 = vpop.f32.mrf.mxu0
        %v5779 = vadd.f32 %v5298, %v5778
        %v5780 = vpop.f32.mrf.mxu0
        %5781 = vmatprep.mubr.bf16.mxu0 %v3738
        %5782 = vmatmul.mubr.bf16.gmra.mxu0 %v3737
        %v5783 = vpop.f32.mrf.mxu0
        %v5784 = vadd.f32 %v5303, %v5783
        %v5785 = vpop.f32.mrf.mxu0
        %v5786 = vpop.f32.mrf.mxu0
        %v5787 = vadd.f32 %v5306, %v5786
        %v5788 = vpop.f32.mrf.mxu0
        %5789 = vmatprep.mubr.bf16.mxu0 %v3748
        %5790 = vmatmul.mubr.bf16.gmra.mxu0 %v3747
        %v5791 = vpop.f32.mrf.mxu0
        %v5792 = vadd.f32 %v5311, %v5791
        %v5793 = vpop.f32.mrf.mxu0
        %v5794 = vpop.f32.mrf.mxu0
        %v5795 = vadd.f32 %v5314, %v5794
        %v5796 = vpop.f32.mrf.mxu0
        %5797 = vmatprep.mubr.bf16.mxu0 %v3758
        %5798 = vmatmul.mubr.bf16.gmra.mxu0 %v3757
        %v5799 = vpop.f32.mrf.mxu0
        %v5800 = vadd.f32 %v5319, %v5799
        %v5801 = vpop.f32.mrf.mxu0
        %v5802 = vpop.f32.mrf.mxu0
        %v5803 = vadd.f32 %v5322, %v5802
        %v5804 = vpop.f32.mrf.mxu0
        %5805 = vmatprep.mubr.bf16.mxu0 %v3768
        %5806 = vmatmul.mubr.bf16.gmra.mxu0 %v3767
        %v5807 = vpop.f32.mrf.mxu0
        %v5808 = vadd.f32 %v5327, %v5807
        %v5809 = vpop.f32.mrf.mxu0
        %v5810 = vpop.f32.mrf.mxu0
        %v5811 = vadd.f32 %v5330, %v5810
        %v5812 = vpop.f32.mrf.mxu0
        %5813 = vmatprep.mubr.bf16.mxu0 %v3778
        %5814 = vmatmul.mubr.bf16.gmra.mxu0 %v3777
        %v5815 = vpop.f32.mrf.mxu0
        %v5816 = vadd.f32 %v5335, %v5815
        %v5817 = vpop.f32.mrf.mxu0
        %v5818 = vpop.f32.mrf.mxu0
        %v5819 = vadd.f32 %v5338, %v5818
        %v5820 = vpop.f32.mrf.mxu0
        %5821 = vmatprep.mubr.bf16.mxu0 %v3788
        %5822 = vmatmul.mubr.bf16.gmra.mxu0 %v3787
        %v5823 = vpop.f32.mrf.mxu0
        %v5824 = vadd.f32 %v5343, %v5823
        %v5825 = vpop.f32.mrf.mxu0
        %v5826 = vpop.f32.mrf.mxu0
        %v5827 = vadd.f32 %v5346, %v5826
        %v5828 = vpop.f32.mrf.mxu0
        %5829 = vmatprep.mubr.bf16.mxu0 %v3798
        %5830 = vmatmul.mubr.bf16.gmra.mxu0 %v3797
        %v5831 = vpop.f32.mrf.mxu0
        %v5832 = vadd.f32 %v5351, %v5831
        %v5833 = vpop.f32.mrf.mxu0
        %v5834 = vpop.f32.mrf.mxu0
        %v5835 = vadd.f32 %v5354, %v5834
        %v5836 = vpop.f32.mrf.mxu0
        %5837 = vmatprep.mubr.bf16.mxu0 %v3808
        %5838 = vmatmul.mubr.bf16.gmra.mxu0 %v3807
        %v5839 = vpop.f32.mrf.mxu0
        %v5840 = vadd.f32 %v5359, %v5839
        %v5841 = vpop.f32.mrf.mxu0
        %v5842 = vpop.f32.mrf.mxu0
        %v5843 = vadd.f32 %v5362, %v5842
        %v5844 = vpop.f32.mrf.mxu0
        %5845 = vmatprep.mubr.bf16.mxu0 %v3818
        %5846 = vmatmul.mubr.bf16.gmra.mxu0 %v3817
        %v5847 = vpop.f32.mrf.mxu0
        %v5848 = vadd.f32 %v5367, %v5847
        %v5849 = vpop.f32.mrf.mxu0
        %v5850 = vpop.f32.mrf.mxu0
        %v5851 = vadd.f32 %v5370, %v5850
        %v5852 = vpop.f32.mrf.mxu0
        %5853 = vmatprep.mubr.bf16.mxu0 %v3828
        %5854 = vmatmul.mubr.bf16.gmra.mxu0 %v3827
        %v5855 = vpop.f32.mrf.mxu0
        %v5856 = vadd.f32 %v5375, %v5855
        %v5857 = vpop.f32.mrf.mxu0
        %v5858 = vpop.f32.mrf.mxu0
        %v5859 = vadd.f32 %v5378, %v5858
        %v5860 = vpop.f32.mrf.mxu0
        %5861 = vmatprep.mubr.bf16.mxu0 %v3838
        %5862 = vmatmul.mubr.bf16.gmra.mxu0 %v3837
        %v5863 = vpop.f32.mrf.mxu0
        %v5864 = vadd.f32 %v5383, %v5863
        %v5865 = vpop.f32.mrf.mxu0
        %v5866 = vpop.f32.mrf.mxu0
        %v5867 = vadd.f32 %v5386, %v5866
        %v5868 = vpop.f32.mrf.mxu0
        %5869 = vmatprep.mubr.bf16.mxu0 %v3848
        %5870 = vmatmul.mubr.bf16.gmra.mxu0 %v3847
        %v5871 = vpop.f32.mrf.mxu0
        %v5872 = vadd.f32 %v5391, %v5871
        %v5873 = vpop.f32.mrf.mxu0
        %v5874 = vpop.f32.mrf.mxu0
        %v5875 = vadd.f32 %v5394, %v5874
        %v5876 = vpop.f32.mrf.mxu0
        %5877 = vmatprep.mubr.bf16.mxu0 %v3858
        %5878 = vmatmul.mubr.bf16.gmra.mxu0 %v3857
        %v5879 = vpop.f32.mrf.mxu0
        %v5880 = vadd.f32 %v5399, %v5879
        %v5881 = vpop.f32.mrf.mxu0
        %v5882 = vpop.f32.mrf.mxu0
        %v5883 = vadd.f32 %v5402, %v5882
        %v5884 = vpop.f32.mrf.mxu0
        %5885 = vmatprep.mubr.bf16.mxu0 %v3868
        %5886 = vmatmul.mubr.bf16.gmra.mxu0 %v3867
        %v5887 = vpop.f32.mrf.mxu0
        %v5888 = vadd.f32 %v5407, %v5887
        %v5889 = vpop.f32.mrf.mxu0
        %v5890 = vpop.f32.mrf.mxu0
        %v5891 = vadd.f32 %v5410, %v5890
        %v5892 = vpop.f32.mrf.mxu0
        %5893 = vmatprep.mubr.bf16.mxu0 %v3878
        %5894 = vmatmul.mubr.bf16.gmra.mxu0 %v3877
        %v5895 = vpop.f32.mrf.mxu0
        %v5896 = vadd.f32 %v5415, %v5895
        %v5897 = vpop.f32.mrf.mxu0
        %v5898 = vpop.f32.mrf.mxu0
        %v5899 = vadd.f32 %v5418, %v5898
        %v5900 = vpop.f32.mrf.mxu0
        %5901 = vmatprep.mubr.bf16.mxu0 %v3888
        %5902 = vmatmul.mubr.bf16.gmra.mxu0 %v3887
        %v5903 = vpop.f32.mrf.mxu0
        %v5904 = vadd.f32 %v5423, %v5903
        %v5905 = vpop.f32.mrf.mxu0
        %v5906 = vpop.f32.mrf.mxu0
        %v5907 = vadd.f32 %v5426, %v5906
        %v5908 = vpop.f32.mrf.mxu0
        %5909 = vmatprep.mubr.bf16.mxu0 %v3898
        %5910 = vmatmul.mubr.bf16.gmra.mxu0 %v3897
        %v5911 = vpop.f32.mrf.mxu0
        %v5912 = vadd.f32 %v5431, %v5911
        %v5913 = vpop.f32.mrf.mxu0
        %v5914 = vpop.f32.mrf.mxu0
        %v5915 = vadd.f32 %v5434, %v5914
        %v5916 = vpop.f32.mrf.mxu0
        %5917 = vmatprep.mubr.bf16.mxu0 %v3908
        %5918 = vmatmul.mubr.bf16.gmra.mxu0 %v3907
        %v5919 = vpop.f32.mrf.mxu0
        %v5920 = vadd.f32 %v5439, %v5919
        %v5921 = vpop.f32.mrf.mxu0
        %v5922 = vpop.f32.mrf.mxu0
        %v5923 = vadd.f32 %v5442, %v5922
        %v5924 = vpop.f32.mrf.mxu0
        %5925 = vmatprep.mubr.bf16.mxu0 %v3918
        %5926 = vmatmul.mubr.bf16.gmra.mxu0 %v3917
        %v5927 = vpop.f32.mrf.mxu0
        %v5928 = vadd.f32 %v5447, %v5927
        %v5929 = vpop.f32.mrf.mxu0
        %v5930 = vpop.f32.mrf.mxu0
        %v5931 = vadd.f32 %v5450, %v5930
        %v5932 = vpop.f32.mrf.mxu0
        %5933 = vmatprep.mubr.bf16.mxu0 %v3928
        %5934 = vmatmul.mubr.bf16.gmra.mxu0 %v3927
        %v5935 = vpop.f32.mrf.mxu0
        %v5936 = vadd.f32 %v5455, %v5935
        %v5937 = vpop.f32.mrf.mxu0
        %v5938 = vpop.f32.mrf.mxu0
        %v5939 = vadd.f32 %v5458, %v5938
        %v5940 = vpop.f32.mrf.mxu0
        %5941 = vmatprep.mubr.bf16.mxu0 %v3938
        %5942 = vmatmul.mubr.bf16.gmra.mxu0 %v3937
        %v5943 = vpop.f32.mrf.mxu0
        %v5944 = vadd.f32 %v5463, %v5943
        %v5945 = vpop.f32.mrf.mxu0
        %v5946 = vpop.f32.mrf.mxu0
        %v5947 = vadd.f32 %v5466, %v5946
        %v5948 = vpop.f32.mrf.mxu0
        %5949 = vmatprep.mubr.bf16.mxu0 %v3948
        %5950 = vmatmul.mubr.bf16.gmra.mxu0 %v3947
        %v5951 = vpop.f32.mrf.mxu0
        %v5952 = vadd.f32 %v5471, %v5951
        %v5953 = vpop.f32.mrf.mxu0
        %v5954 = vpop.f32.mrf.mxu0
        %v5955 = vadd.f32 %v5474, %v5954
        %v5956 = vpop.f32.mrf.mxu0
        %5957 = vmatprep.mubr.bf16.mxu0 %v3958
        %5958 = vmatmul.mubr.bf16.gmra.mxu0 %v3957
        %v5959 = vpop.f32.mrf.mxu0
        %v5960 = vadd.f32 %v5479, %v5959
        %v5961 = vpop.f32.mrf.mxu0
        %v5962 = vpop.f32.mrf.mxu0
        %v5963 = vadd.f32 %v5482, %v5962
        %v5964 = vpop.f32.mrf.mxu0
        %5965 = vdwg.mxu0
        %5966 = vmatprep.subr.bf16.mxu0 0
        %5967 = vmatpush1.bf16.msra.mxu0 %v1138
        %5968 = vmatprep.subr.bf16.mxu0 0
        %5969 = vmatpush1.bf16.msra.mxu0 %v1137
        %5970 = vmatprep.subr.bf16.mxu0 0
        %5971 = vmatpush1.bf16.msra.mxu0 %v1136
        %5972 = vmatprep.subr.bf16.mxu0 0
        %5973 = vmatpush1.bf16.msra.mxu0 %v1135
        %5974 = vmatprep.subr.bf16.mxu0 0
        %5975 = vmatpush1.bf16.msra.mxu0 %v1134
        %5976 = vmatprep.subr.bf16.mxu0 0
        %5977 = vmatpush1.bf16.msra.mxu0 %v1133
        %5978 = vmatprep.subr.bf16.mxu0 0
        %5979 = vmatpush1.bf16.msra.mxu0 %v1132
        %5980 = vmatprep.subr.bf16.mxu0 0
        %5981 = vmatpush1.bf16.msra.mxu0 %v1131
        %5982 = vmatprep.subr.bf16.mxu0 0
        %5983 = vmatpush2.bf16.msra.mxu0 %v1146
        %5984 = vmatprep.subr.bf16.mxu0 0
        %5985 = vmatpush2.bf16.msra.mxu0 %v1145
        %5986 = vmatprep.subr.bf16.mxu0 0
        %5987 = vmatpush2.bf16.msra.mxu0 %v1144
        %5988 = vmatprep.subr.bf16.mxu0 0
        %5989 = vmatpush2.bf16.msra.mxu0 %v1143
        %5990 = vmatprep.subr.bf16.mxu0 0
        %5991 = vmatpush2.bf16.msra.mxu0 %v1142
        %5992 = vmatprep.subr.bf16.mxu0 0
        %5993 = vmatpush2.bf16.msra.mxu0 %v1141
        %5994 = vmatprep.subr.bf16.mxu0 0
        %5995 = vmatpush2.bf16.msra.mxu0 %v1140
        %5996 = vmatprep.subr.bf16.mxu0 0
        %5997 = vmatpush2.bf16.msra.mxu0 %v1139
        %5998 = vmatprep.mubr.bf16.mxu0 %v3410
        %5999 = vmatmul.mubr.bf16.gmra.mxu0 %v3409
        %v6000 = vpop.f32.mrf.mxu0
        %v6001 = vadd.f32 %v5520, %v6000
        %v6002 = vpop.f32.mrf.mxu0
        %v6003 = vpop.f32.mrf.mxu0
        %v6004 = vadd.f32 %v5523, %v6003
        %v6005 = vpop.f32.mrf.mxu0
        %6006 = vmatprep.mubr.bf16.mxu0 %v3420
        %6007 = vmatmul.mubr.bf16.gmra.mxu0 %v3419
        %v6008 = vpop.f32.mrf.mxu0
        %v6009 = vadd.f32 %v5528, %v6008
        %v6010 = vpop.f32.mrf.mxu0
        %v6011 = vpop.f32.mrf.mxu0
        %v6012 = vadd.f32 %v5531, %v6011
        %v6013 = vpop.f32.mrf.mxu0
        %6014 = vmatprep.mubr.bf16.mxu0 %v3430
        %6015 = vmatmul.mubr.bf16.gmra.mxu0 %v3429
        %v6016 = vpop.f32.mrf.mxu0
        %v6017 = vadd.f32 %v5536, %v6016
        %v6018 = vpop.f32.mrf.mxu0
        %v6019 = vpop.f32.mrf.mxu0
        %v6020 = vadd.f32 %v5539, %v6019
        %v6021 = vpop.f32.mrf.mxu0
        %6022 = vmatprep.mubr.bf16.mxu0 %v3440
        %6023 = vmatmul.mubr.bf16.gmra.mxu0 %v3439
        %v6024 = vpop.f32.mrf.mxu0
        %v6025 = vadd.f32 %v5544, %v6024
        %v6026 = vpop.f32.mrf.mxu0
        %v6027 = vpop.f32.mrf.mxu0
        %v6028 = vadd.f32 %v5547, %v6027
        %v6029 = vpop.f32.mrf.mxu0
        %6030 = vmatprep.mubr.bf16.mxu0 %v3450
        %6031 = vmatmul.mubr.bf16.gmra.mxu0 %v3449
        %v6032 = vpop.f32.mrf.mxu0
        %v6033 = vadd.f32 %v5552, %v6032
        %v6034 = vpop.f32.mrf.mxu0
        %v6035 = vpop.f32.mrf.mxu0
        %v6036 = vadd.f32 %v5555, %v6035
        %v6037 = vpop.f32.mrf.mxu0
        %6038 = vmatprep.mubr.bf16.mxu0 %v3460
        %6039 = vmatmul.mubr.bf16.gmra.mxu0 %v3459
        %v6040 = vpop.f32.mrf.mxu0
        %v6041 = vadd.f32 %v5560, %v6040
        %v6042 = vpop.f32.mrf.mxu0
        %v6043 = vpop.f32.mrf.mxu0
        %v6044 = vadd.f32 %v5563, %v6043
        %v6045 = vpop.f32.mrf.mxu0
        %6046 = vmatprep.mubr.bf16.mxu0 %v3470
        %6047 = vmatmul.mubr.bf16.gmra.mxu0 %v3469
        %v6048 = vpop.f32.mrf.mxu0
        %v6049 = vadd.f32 %v5568, %v6048
        %v6050 = vpop.f32.mrf.mxu0
        %v6051 = vpop.f32.mrf.mxu0
        %v6052 = vadd.f32 %v5571, %v6051
        %v6053 = vpop.f32.mrf.mxu0
        %6054 = vmatprep.mubr.bf16.mxu0 %v3480
        %6055 = vmatmul.mubr.bf16.gmra.mxu0 %v3479
        %v6056 = vpop.f32.mrf.mxu0
        %v6057 = vadd.f32 %v5576, %v6056
        %v6058 = vpop.f32.mrf.mxu0
        %v6059 = vpop.f32.mrf.mxu0
        %v6060 = vadd.f32 %v5579, %v6059
        %v6061 = vpop.f32.mrf.mxu0
        %6062 = vmatprep.mubr.bf16.mxu0 %v3490
        %6063 = vmatmul.mubr.bf16.gmra.mxu0 %v3489
        %v6064 = vpop.f32.mrf.mxu0
        %v6065 = vadd.f32 %v5584, %v6064
        %v6066 = vpop.f32.mrf.mxu0
        %v6067 = vpop.f32.mrf.mxu0
        %v6068 = vadd.f32 %v5587, %v6067
        %v6069 = vpop.f32.mrf.mxu0
        %6070 = vmatprep.mubr.bf16.mxu0 %v3500
        %6071 = vmatmul.mubr.bf16.gmra.mxu0 %v3499
        %v6072 = vpop.f32.mrf.mxu0
        %v6073 = vadd.f32 %v5592, %v6072
        %v6074 = vpop.f32.mrf.mxu0
        %v6075 = vpop.f32.mrf.mxu0
        %v6076 = vadd.f32 %v5595, %v6075
        %v6077 = vpop.f32.mrf.mxu0
        %6078 = vmatprep.mubr.bf16.mxu0 %v3510
        %6079 = vmatmul.mubr.bf16.gmra.mxu0 %v3509
        %v6080 = vpop.f32.mrf.mxu0
        %v6081 = vadd.f32 %v5600, %v6080
        %v6082 = vpop.f32.mrf.mxu0
        %v6083 = vpop.f32.mrf.mxu0
        %v6084 = vadd.f32 %v5603, %v6083
        %v6085 = vpop.f32.mrf.mxu0
        %6086 = vmatprep.mubr.bf16.mxu0 %v3520
        %6087 = vmatmul.mubr.bf16.gmra.mxu0 %v3519
        %v6088 = vpop.f32.mrf.mxu0
        %v6089 = vadd.f32 %v5608, %v6088
        %v6090 = vpop.f32.mrf.mxu0
        %v6091 = vpop.f32.mrf.mxu0
        %v6092 = vadd.f32 %v5611, %v6091
        %v6093 = vpop.f32.mrf.mxu0
        %6094 = vmatprep.mubr.bf16.mxu0 %v3530
        %6095 = vmatmul.mubr.bf16.gmra.mxu0 %v3529
        %v6096 = vpop.f32.mrf.mxu0
        %v6097 = vadd.f32 %v5616, %v6096
        %v6098 = vpop.f32.mrf.mxu0
        %v6099 = vpop.f32.mrf.mxu0
        %v6100 = vadd.f32 %v5619, %v6099
        %v6101 = vpop.f32.mrf.mxu0
        %6102 = vmatprep.mubr.bf16.mxu0 %v3540
        %6103 = vmatmul.mubr.bf16.gmra.mxu0 %v3539
        %v6104 = vpop.f32.mrf.mxu0
        %v6105 = vadd.f32 %v5624, %v6104
        %v6106 = vpop.f32.mrf.mxu0
        %v6107 = vpop.f32.mrf.mxu0
        %v6108 = vadd.f32 %v5627, %v6107
        %v6109 = vpop.f32.mrf.mxu0
        %6110 = vmatprep.mubr.bf16.mxu0 %v3550
        %6111 = vmatmul.mubr.bf16.gmra.mxu0 %v3549
        %v6112 = vpop.f32.mrf.mxu0
        %v6113 = vadd.f32 %v5632, %v6112
        %v6114 = vpop.f32.mrf.mxu0
        %v6115 = vpop.f32.mrf.mxu0
        %v6116 = vadd.f32 %v5635, %v6115
        %v6117 = vpop.f32.mrf.mxu0
        %6118 = vmatprep.mubr.bf16.mxu0 %v3560
        %6119 = vmatmul.mubr.bf16.gmra.mxu0 %v3559
        %v6120 = vpop.f32.mrf.mxu0
        %v6121 = vadd.f32 %v5640, %v6120
        %v6122 = vpop.f32.mrf.mxu0
        %v6123 = vpop.f32.mrf.mxu0
        %v6124 = vadd.f32 %v5643, %v6123
        %v6125 = vpop.f32.mrf.mxu0
        %6126 = vmatprep.mubr.bf16.mxu0 %v3570
        %6127 = vmatmul.mubr.bf16.gmra.mxu0 %v3569
        %v6128 = vpop.f32.mrf.mxu0
        %v6129 = vadd.f32 %v5648, %v6128
        %v6130 = vpop.f32.mrf.mxu0
        %v6131 = vpop.f32.mrf.mxu0
        %v6132 = vadd.f32 %v5651, %v6131
        %v6133 = vpop.f32.mrf.mxu0
        %6134 = vmatprep.mubr.bf16.mxu0 %v3580
        %6135 = vmatmul.mubr.bf16.gmra.mxu0 %v3579
        %v6136 = vpop.f32.mrf.mxu0
        %v6137 = vadd.f32 %v5656, %v6136
        %v6138 = vpop.f32.mrf.mxu0
        %v6139 = vpop.f32.mrf.mxu0
        %v6140 = vadd.f32 %v5659, %v6139
        %v6141 = vpop.f32.mrf.mxu0
        %6142 = vmatprep.mubr.bf16.mxu0 %v3590
        %6143 = vmatmul.mubr.bf16.gmra.mxu0 %v3589
        %v6144 = vpop.f32.mrf.mxu0
        %v6145 = vadd.f32 %v5664, %v6144
        %v6146 = vpop.f32.mrf.mxu0
        %v6147 = vpop.f32.mrf.mxu0
        %v6148 = vadd.f32 %v5667, %v6147
        %v6149 = vpop.f32.mrf.mxu0
        %6150 = vmatprep.mubr.bf16.mxu0 %v3600
        %6151 = vmatmul.mubr.bf16.gmra.mxu0 %v3599
        %v6152 = vpop.f32.mrf.mxu0
        %v6153 = vadd.f32 %v5672, %v6152
        %v6154 = vpop.f32.mrf.mxu0
        %v6155 = vpop.f32.mrf.mxu0
        %v6156 = vadd.f32 %v5675, %v6155
        %v6157 = vpop.f32.mrf.mxu0
        %6158 = vmatprep.mubr.bf16.mxu0 %v3610
        %6159 = vmatmul.mubr.bf16.gmra.mxu0 %v3609
        %v6160 = vpop.f32.mrf.mxu0
        %v6161 = vadd.f32 %v5680, %v6160
        %v6162 = vpop.f32.mrf.mxu0
        %v6163 = vpop.f32.mrf.mxu0
        %v6164 = vadd.f32 %v5683, %v6163
        %v6165 = vpop.f32.mrf.mxu0
        %6166 = vmatprep.mubr.bf16.mxu0 %v3620
        %6167 = vmatmul.mubr.bf16.gmra.mxu0 %v3619
        %v6168 = vpop.f32.mrf.mxu0
        %v6169 = vadd.f32 %v5688, %v6168
        %v6170 = vpop.f32.mrf.mxu0
        %v6171 = vpop.f32.mrf.mxu0
        %v6172 = vadd.f32 %v5691, %v6171
        %v6173 = vpop.f32.mrf.mxu0
        %6174 = vmatprep.mubr.bf16.mxu0 %v3630
        %6175 = vmatmul.mubr.bf16.gmra.mxu0 %v3629
        %v6176 = vpop.f32.mrf.mxu0
        %v6177 = vadd.f32 %v5696, %v6176
        %v6178 = vpop.f32.mrf.mxu0
        %v6179 = vpop.f32.mrf.mxu0
        %v6180 = vadd.f32 %v5699, %v6179
        %v6181 = vpop.f32.mrf.mxu0
        %6182 = vmatprep.mubr.bf16.mxu0 %v3640
        %6183 = vmatmul.mubr.bf16.gmra.mxu0 %v3639
        %v6184 = vpop.f32.mrf.mxu0
        %v6185 = vadd.f32 %v5704, %v6184
        %v6186 = vpop.f32.mrf.mxu0
        %v6187 = vpop.f32.mrf.mxu0
        %v6188 = vadd.f32 %v5707, %v6187
        %v6189 = vpop.f32.mrf.mxu0
        %6190 = vmatprep.mubr.bf16.mxu0 %v3650
        %6191 = vmatmul.mubr.bf16.gmra.mxu0 %v3649
        %v6192 = vpop.f32.mrf.mxu0
        %v6193 = vadd.f32 %v5712, %v6192
        %v6194 = vpop.f32.mrf.mxu0
        %v6195 = vpop.f32.mrf.mxu0
        %v6196 = vadd.f32 %v5715, %v6195
        %v6197 = vpop.f32.mrf.mxu0
        %6198 = vmatprep.mubr.bf16.mxu0 %v3660
        %6199 = vmatmul.mubr.bf16.gmra.mxu0 %v3659
        %v6200 = vpop.f32.mrf.mxu0
        %v6201 = vadd.f32 %v5720, %v6200
        %v6202 = vpop.f32.mrf.mxu0
        %v6203 = vpop.f32.mrf.mxu0
        %v6204 = vadd.f32 %v5723, %v6203
        %v6205 = vpop.f32.mrf.mxu0
        %6206 = vmatprep.mubr.bf16.mxu0 %v3670
        %6207 = vmatmul.mubr.bf16.gmra.mxu0 %v3669
        %v6208 = vpop.f32.mrf.mxu0
        %v6209 = vadd.f32 %v5728, %v6208
        %v6210 = vpop.f32.mrf.mxu0
        %v6211 = vpop.f32.mrf.mxu0
        %v6212 = vadd.f32 %v5731, %v6211
        %v6213 = vpop.f32.mrf.mxu0
        %6214 = vmatprep.mubr.bf16.mxu0 %v3680
        %6215 = vmatmul.mubr.bf16.gmra.mxu0 %v3679
        %v6216 = vpop.f32.mrf.mxu0
        %v6217 = vadd.f32 %v5736, %v6216
        %v6218 = vpop.f32.mrf.mxu0
        %v6219 = vpop.f32.mrf.mxu0
        %v6220 = vadd.f32 %v5739, %v6219
        %v6221 = vpop.f32.mrf.mxu0
        %6222 = vmatprep.mubr.bf16.mxu0 %v3690
        %6223 = vmatmul.mubr.bf16.gmra.mxu0 %v3689
        %v6224 = vpop.f32.mrf.mxu0
        %v6225 = vadd.f32 %v5744, %v6224
        %v6226 = vpop.f32.mrf.mxu0
        %v6227 = vpop.f32.mrf.mxu0
        %v6228 = vadd.f32 %v5747, %v6227
        %v6229 = vpop.f32.mrf.mxu0
        %6230 = vmatprep.mubr.bf16.mxu0 %v3700
        %6231 = vmatmul.mubr.bf16.gmra.mxu0 %v3699
        %v6232 = vpop.f32.mrf.mxu0
        %v6233 = vadd.f32 %v5752, %v6232
        %v6234 = vpop.f32.mrf.mxu0
        %v6235 = vpop.f32.mrf.mxu0
        %v6236 = vadd.f32 %v5755, %v6235
        %v6237 = vpop.f32.mrf.mxu0
        %6238 = vmatprep.mubr.bf16.mxu0 %v3710
        %6239 = vmatmul.mubr.bf16.gmra.mxu0 %v3709
        %v6240 = vpop.f32.mrf.mxu0
        %v6241 = vadd.f32 %v5760, %v6240
        %v6242 = vpop.f32.mrf.mxu0
        %v6243 = vpop.f32.mrf.mxu0
        %v6244 = vadd.f32 %v5763, %v6243
        %v6245 = vpop.f32.mrf.mxu0
        %6246 = vmatprep.mubr.bf16.mxu0 %v3720
        %6247 = vmatmul.mubr.bf16.gmra.mxu0 %v3719
        %v6248 = vpop.f32.mrf.mxu0
        %v6249 = vadd.f32 %v5768, %v6248
        %v6250 = vpop.f32.mrf.mxu0
        %v6251 = vpop.f32.mrf.mxu0
        %v6252 = vadd.f32 %v5771, %v6251
        %v6253 = vpop.f32.mrf.mxu0
        %6254 = vmatprep.mubr.bf16.mxu0 %v3730
        %6255 = vmatmul.mubr.bf16.gmra.mxu0 %v3729
        %v6256 = vpop.f32.mrf.mxu0
        %v6257 = vadd.f32 %v5776, %v6256
        %v6258 = vpop.f32.mrf.mxu0
        %v6259 = vpop.f32.mrf.mxu0
        %v6260 = vadd.f32 %v5779, %v6259
        %v6261 = vpop.f32.mrf.mxu0
        %6262 = vmatprep.mubr.bf16.mxu0 %v3740
        %6263 = vmatmul.mubr.bf16.gmra.mxu0 %v3739
        %v6264 = vpop.f32.mrf.mxu0
        %v6265 = vadd.f32 %v5784, %v6264
        %v6266 = vpop.f32.mrf.mxu0
        %v6267 = vpop.f32.mrf.mxu0
        %v6268 = vadd.f32 %v5787, %v6267
        %v6269 = vpop.f32.mrf.mxu0
        %6270 = vmatprep.mubr.bf16.mxu0 %v3750
        %6271 = vmatmul.mubr.bf16.gmra.mxu0 %v3749
        %v6272 = vpop.f32.mrf.mxu0
        %v6273 = vadd.f32 %v5792, %v6272
        %v6274 = vpop.f32.mrf.mxu0
        %v6275 = vpop.f32.mrf.mxu0
        %v6276 = vadd.f32 %v5795, %v6275
        %v6277 = vpop.f32.mrf.mxu0
        %6278 = vmatprep.mubr.bf16.mxu0 %v3760
        %6279 = vmatmul.mubr.bf16.gmra.mxu0 %v3759
        %v6280 = vpop.f32.mrf.mxu0
        %v6281 = vadd.f32 %v5800, %v6280
        %v6282 = vpop.f32.mrf.mxu0
        %v6283 = vpop.f32.mrf.mxu0
        %v6284 = vadd.f32 %v5803, %v6283
        %v6285 = vpop.f32.mrf.mxu0
        %6286 = vmatprep.mubr.bf16.mxu0 %v3770
        %6287 = vmatmul.mubr.bf16.gmra.mxu0 %v3769
        %v6288 = vpop.f32.mrf.mxu0
        %v6289 = vadd.f32 %v5808, %v6288
        %v6290 = vpop.f32.mrf.mxu0
        %v6291 = vpop.f32.mrf.mxu0
        %v6292 = vadd.f32 %v5811, %v6291
        %v6293 = vpop.f32.mrf.mxu0
        %6294 = vmatprep.mubr.bf16.mxu0 %v3780
        %6295 = vmatmul.mubr.bf16.gmra.mxu0 %v3779
        %v6296 = vpop.f32.mrf.mxu0
        %v6297 = vadd.f32 %v5816, %v6296
        %v6298 = vpop.f32.mrf.mxu0
        %v6299 = vpop.f32.mrf.mxu0
        %v6300 = vadd.f32 %v5819, %v6299
        %v6301 = vpop.f32.mrf.mxu0
        %6302 = vmatprep.mubr.bf16.mxu0 %v3790
        %6303 = vmatmul.mubr.bf16.gmra.mxu0 %v3789
        %v6304 = vpop.f32.mrf.mxu0
        %v6305 = vadd.f32 %v5824, %v6304
        %v6306 = vpop.f32.mrf.mxu0
        %v6307 = vpop.f32.mrf.mxu0
        %v6308 = vadd.f32 %v5827, %v6307
        %v6309 = vpop.f32.mrf.mxu0
        %6310 = vmatprep.mubr.bf16.mxu0 %v3800
        %6311 = vmatmul.mubr.bf16.gmra.mxu0 %v3799
        %v6312 = vpop.f32.mrf.mxu0
        %v6313 = vadd.f32 %v5832, %v6312
        %v6314 = vpop.f32.mrf.mxu0
        %v6315 = vpop.f32.mrf.mxu0
        %v6316 = vadd.f32 %v5835, %v6315
        %v6317 = vpop.f32.mrf.mxu0
        %6318 = vmatprep.mubr.bf16.mxu0 %v3810
        %6319 = vmatmul.mubr.bf16.gmra.mxu0 %v3809
        %v6320 = vpop.f32.mrf.mxu0
        %v6321 = vadd.f32 %v5840, %v6320
        %v6322 = vpop.f32.mrf.mxu0
        %v6323 = vpop.f32.mrf.mxu0
        %v6324 = vadd.f32 %v5843, %v6323
        %v6325 = vpop.f32.mrf.mxu0
        %6326 = vmatprep.mubr.bf16.mxu0 %v3820
        %6327 = vmatmul.mubr.bf16.gmra.mxu0 %v3819
        %v6328 = vpop.f32.mrf.mxu0
        %v6329 = vadd.f32 %v5848, %v6328
        %v6330 = vpop.f32.mrf.mxu0
        %v6331 = vpop.f32.mrf.mxu0
        %v6332 = vadd.f32 %v5851, %v6331
        %v6333 = vpop.f32.mrf.mxu0
        %6334 = vmatprep.mubr.bf16.mxu0 %v3830
        %6335 = vmatmul.mubr.bf16.gmra.mxu0 %v3829
        %v6336 = vpop.f32.mrf.mxu0
        %v6337 = vadd.f32 %v5856, %v6336
        %v6338 = vpop.f32.mrf.mxu0
        %v6339 = vpop.f32.mrf.mxu0
        %v6340 = vadd.f32 %v5859, %v6339
        %v6341 = vpop.f32.mrf.mxu0
        %6342 = vmatprep.mubr.bf16.mxu0 %v3840
        %6343 = vmatmul.mubr.bf16.gmra.mxu0 %v3839
        %v6344 = vpop.f32.mrf.mxu0
        %v6345 = vadd.f32 %v5864, %v6344
        %v6346 = vpop.f32.mrf.mxu0
        %v6347 = vpop.f32.mrf.mxu0
        %v6348 = vadd.f32 %v5867, %v6347
        %v6349 = vpop.f32.mrf.mxu0
        %6350 = vmatprep.mubr.bf16.mxu0 %v3850
        %6351 = vmatmul.mubr.bf16.gmra.mxu0 %v3849
        %v6352 = vpop.f32.mrf.mxu0
        %v6353 = vadd.f32 %v5872, %v6352
        %v6354 = vpop.f32.mrf.mxu0
        %v6355 = vpop.f32.mrf.mxu0
        %v6356 = vadd.f32 %v5875, %v6355
        %v6357 = vpop.f32.mrf.mxu0
        %6358 = vmatprep.mubr.bf16.mxu0 %v3860
        %6359 = vmatmul.mubr.bf16.gmra.mxu0 %v3859
        %v6360 = vpop.f32.mrf.mxu0
        %v6361 = vadd.f32 %v5880, %v6360
        %v6362 = vpop.f32.mrf.mxu0
        %v6363 = vpop.f32.mrf.mxu0
        %v6364 = vadd.f32 %v5883, %v6363
        %v6365 = vpop.f32.mrf.mxu0
        %6366 = vmatprep.mubr.bf16.mxu0 %v3870
        %6367 = vmatmul.mubr.bf16.gmra.mxu0 %v3869
        %v6368 = vpop.f32.mrf.mxu0
        %v6369 = vadd.f32 %v5888, %v6368
        %v6370 = vpop.f32.mrf.mxu0
        %v6371 = vpop.f32.mrf.mxu0
        %v6372 = vadd.f32 %v5891, %v6371
        %v6373 = vpop.f32.mrf.mxu0
        %6374 = vmatprep.mubr.bf16.mxu0 %v3880
        %6375 = vmatmul.mubr.bf16.gmra.mxu0 %v3879
        %v6376 = vpop.f32.mrf.mxu0
        %v6377 = vadd.f32 %v5896, %v6376
        %v6378 = vpop.f32.mrf.mxu0
        %v6379 = vpop.f32.mrf.mxu0
        %v6380 = vadd.f32 %v5899, %v6379
        %v6381 = vpop.f32.mrf.mxu0
        %6382 = vmatprep.mubr.bf16.mxu0 %v3890
        %6383 = vmatmul.mubr.bf16.gmra.mxu0 %v3889
        %v6384 = vpop.f32.mrf.mxu0
        %v6385 = vadd.f32 %v5904, %v6384
        %v6386 = vpop.f32.mrf.mxu0
        %v6387 = vpop.f32.mrf.mxu0
        %v6388 = vadd.f32 %v5907, %v6387
        %v6389 = vpop.f32.mrf.mxu0
        %6390 = vmatprep.mubr.bf16.mxu0 %v3900
        %6391 = vmatmul.mubr.bf16.gmra.mxu0 %v3899
        %v6392 = vpop.f32.mrf.mxu0
        %v6393 = vadd.f32 %v5912, %v6392
        %v6394 = vpop.f32.mrf.mxu0
        %v6395 = vpop.f32.mrf.mxu0
        %v6396 = vadd.f32 %v5915, %v6395
        %v6397 = vpop.f32.mrf.mxu0
        %6398 = vmatprep.mubr.bf16.mxu0 %v3910
        %6399 = vmatmul.mubr.bf16.gmra.mxu0 %v3909
        %v6400 = vpop.f32.mrf.mxu0
        %v6401 = vadd.f32 %v5920, %v6400
        %v6402 = vpop.f32.mrf.mxu0
        %v6403 = vpop.f32.mrf.mxu0
        %v6404 = vadd.f32 %v5923, %v6403
        %v6405 = vpop.f32.mrf.mxu0
        %6406 = vmatprep.mubr.bf16.mxu0 %v3920
        %6407 = vmatmul.mubr.bf16.gmra.mxu0 %v3919
        %v6408 = vpop.f32.mrf.mxu0
        %v6409 = vadd.f32 %v5928, %v6408
        %v6410 = vpop.f32.mrf.mxu0
        %v6411 = vpop.f32.mrf.mxu0
        %v6412 = vadd.f32 %v5931, %v6411
        %v6413 = vpop.f32.mrf.mxu0
        %6414 = vmatprep.mubr.bf16.mxu0 %v3930
        %6415 = vmatmul.mubr.bf16.gmra.mxu0 %v3929
        %v6416 = vpop.f32.mrf.mxu0
        %v6417 = vadd.f32 %v5936, %v6416
        %v6418 = vpop.f32.mrf.mxu0
        %v6419 = vpop.f32.mrf.mxu0
        %v6420 = vadd.f32 %v5939, %v6419
        %v6421 = vpop.f32.mrf.mxu0
        %6422 = vmatprep.mubr.bf16.mxu0 %v3940
        %6423 = vmatmul.mubr.bf16.gmra.mxu0 %v3939
        %v6424 = vpop.f32.mrf.mxu0
        %v6425 = vadd.f32 %v5944, %v6424
        %v6426 = vpop.f32.mrf.mxu0
        %v6427 = vpop.f32.mrf.mxu0
        %v6428 = vadd.f32 %v5947, %v6427
        %v6429 = vpop.f32.mrf.mxu0
        %6430 = vmatprep.mubr.bf16.mxu0 %v3950
        %6431 = vmatmul.mubr.bf16.gmra.mxu0 %v3949
        %v6432 = vpop.f32.mrf.mxu0
        %v6433 = vadd.f32 %v5952, %v6432
        %v6434 = vpop.f32.mrf.mxu0
        %v6435 = vpop.f32.mrf.mxu0
        %v6436 = vadd.f32 %v5955, %v6435
        %v6437 = vpop.f32.mrf.mxu0
        %6438 = vmatprep.mubr.bf16.mxu0 %v3960
        %6439 = vmatmul.mubr.bf16.gmra.mxu0 %v3959
        %v6440 = vpop.f32.mrf.mxu0
        %v6441 = vadd.f32 %v5960, %v6440
        %v6442 = vpop.f32.mrf.mxu0
        %v6443 = vpop.f32.mrf.mxu0
        %v6444 = vadd.f32 %v5963, %v6443
        %v6445 = vpop.f32.mrf.mxu0
        %6446 = vdwg.mxu0
        %6447 = vmatprep.subr.bf16.mxu0 0
        %6448 = vmatpush1.bf16.msra.mxu0 %v1154
        %6449 = vmatprep.subr.bf16.mxu0 0
        %6450 = vmatpush1.bf16.msra.mxu0 %v1153
        %6451 = vmatprep.subr.bf16.mxu0 0
        %6452 = vmatpush1.bf16.msra.mxu0 %v1152
        %6453 = vmatprep.subr.bf16.mxu0 0
        %6454 = vmatpush1.bf16.msra.mxu0 %v1151
        %6455 = vmatprep.subr.bf16.mxu0 0
        %6456 = vmatpush1.bf16.msra.mxu0 %v1150
        %6457 = vmatprep.subr.bf16.mxu0 0
        %6458 = vmatpush1.bf16.msra.mxu0 %v1149
        %6459 = vmatprep.subr.bf16.mxu0 0
        %6460 = vmatpush1.bf16.msra.mxu0 %v1148
        %6461 = vmatprep.subr.bf16.mxu0 0
        %6462 = vmatpush1.bf16.msra.mxu0 %v1147
        %6463 = vmatprep.subr.bf16.mxu0 0
        %6464 = vmatpush2.bf16.msra.mxu0 %v1162
        %6465 = vmatprep.subr.bf16.mxu0 0
        %6466 = vmatpush2.bf16.msra.mxu0 %v1161
        %6467 = vmatprep.subr.bf16.mxu0 0
        %6468 = vmatpush2.bf16.msra.mxu0 %v1160
        %6469 = vmatprep.subr.bf16.mxu0 0
        %6470 = vmatpush2.bf16.msra.mxu0 %v1159
        %6471 = vmatprep.subr.bf16.mxu0 0
        %6472 = vmatpush2.bf16.msra.mxu0 %v1158
        %6473 = vmatprep.subr.bf16.mxu0 0
        %6474 = vmatpush2.bf16.msra.mxu0 %v1157
        %6475 = vmatprep.subr.bf16.mxu0 0
        %6476 = vmatpush2.bf16.msra.mxu0 %v1156
        %6477 = vmatprep.subr.bf16.mxu0 0
        %6478 = vmatpush2.bf16.msra.mxu0 %v1155
        %6479 = vmatprep.mubr.bf16.mxu0 %v3412
        %6480 = vmatmul.mubr.bf16.gmra.mxu0 %v3411
        %v6481 = vpop.f32.mrf.mxu0
        %v6482 = vadd.f32 %v6001, %v6481
        %v6483 = vpop.f32.mrf.mxu0
        %v6484 = vpop.f32.mrf.mxu0
        %v6485 = vadd.f32 %v6004, %v6484
        %v6486 = vpop.f32.mrf.mxu0
        %6487 = vmatprep.mubr.bf16.mxu0 %v3422
        %6488 = vmatmul.mubr.bf16.gmra.mxu0 %v3421
        %v6489 = vpop.f32.mrf.mxu0
        %v6490 = vadd.f32 %v6009, %v6489
        %v6491 = vpop.f32.mrf.mxu0
        %v6492 = vpop.f32.mrf.mxu0
        %v6493 = vadd.f32 %v6012, %v6492
        %v6494 = vpop.f32.mrf.mxu0
        %6495 = vmatprep.mubr.bf16.mxu0 %v3432
        %6496 = vmatmul.mubr.bf16.gmra.mxu0 %v3431
        %v6497 = vpop.f32.mrf.mxu0
        %v6498 = vadd.f32 %v6017, %v6497
        %v6499 = vpop.f32.mrf.mxu0
        %v6500 = vpop.f32.mrf.mxu0
        %v6501 = vadd.f32 %v6020, %v6500
        %v6502 = vpop.f32.mrf.mxu0
        %6503 = vmatprep.mubr.bf16.mxu0 %v3442
        %6504 = vmatmul.mubr.bf16.gmra.mxu0 %v3441
        %v6505 = vpop.f32.mrf.mxu0
        %v6506 = vadd.f32 %v6025, %v6505
        %v6507 = vpop.f32.mrf.mxu0
        %v6508 = vpop.f32.mrf.mxu0
        %v6509 = vadd.f32 %v6028, %v6508
        %v6510 = vpop.f32.mrf.mxu0
        %6511 = vmatprep.mubr.bf16.mxu0 %v3452
        %6512 = vmatmul.mubr.bf16.gmra.mxu0 %v3451
        %v6513 = vpop.f32.mrf.mxu0
        %v6514 = vadd.f32 %v6033, %v6513
        %v6515 = vpop.f32.mrf.mxu0
        %v6516 = vpop.f32.mrf.mxu0
        %v6517 = vadd.f32 %v6036, %v6516
        %v6518 = vpop.f32.mrf.mxu0
        %6519 = vmatprep.mubr.bf16.mxu0 %v3462
        %6520 = vmatmul.mubr.bf16.gmra.mxu0 %v3461
        %v6521 = vpop.f32.mrf.mxu0
        %v6522 = vadd.f32 %v6041, %v6521
        %v6523 = vpop.f32.mrf.mxu0
        %v6524 = vpop.f32.mrf.mxu0
        %v6525 = vadd.f32 %v6044, %v6524
        %v6526 = vpop.f32.mrf.mxu0
        %6527 = vmatprep.mubr.bf16.mxu0 %v3472
        %6528 = vmatmul.mubr.bf16.gmra.mxu0 %v3471
        %v6529 = vpop.f32.mrf.mxu0
        %v6530 = vadd.f32 %v6049, %v6529
        %v6531 = vpop.f32.mrf.mxu0
        %v6532 = vpop.f32.mrf.mxu0
        %v6533 = vadd.f32 %v6052, %v6532
        %v6534 = vpop.f32.mrf.mxu0
        %6535 = vmatprep.mubr.bf16.mxu0 %v3482
        %6536 = vmatmul.mubr.bf16.gmra.mxu0 %v3481
        %v6537 = vpop.f32.mrf.mxu0
        %v6538 = vadd.f32 %v6057, %v6537
        %v6539 = vpop.f32.mrf.mxu0
        %v6540 = vpop.f32.mrf.mxu0
        %v6541 = vadd.f32 %v6060, %v6540
        %v6542 = vpop.f32.mrf.mxu0
        %6543 = vmatprep.mubr.bf16.mxu0 %v3492
        %6544 = vmatmul.mubr.bf16.gmra.mxu0 %v3491
        %v6545 = vpop.f32.mrf.mxu0
        %v6546 = vadd.f32 %v6065, %v6545
        %v6547 = vpop.f32.mrf.mxu0
        %v6548 = vpop.f32.mrf.mxu0
        %v6549 = vadd.f32 %v6068, %v6548
        %v6550 = vpop.f32.mrf.mxu0
        %6551 = vmatprep.mubr.bf16.mxu0 %v3502
        %6552 = vmatmul.mubr.bf16.gmra.mxu0 %v3501
        %v6553 = vpop.f32.mrf.mxu0
        %v6554 = vadd.f32 %v6073, %v6553
        %v6555 = vpop.f32.mrf.mxu0
        %v6556 = vpop.f32.mrf.mxu0
        %v6557 = vadd.f32 %v6076, %v6556
        %v6558 = vpop.f32.mrf.mxu0
        %6559 = vmatprep.mubr.bf16.mxu0 %v3512
        %6560 = vmatmul.mubr.bf16.gmra.mxu0 %v3511
        %v6561 = vpop.f32.mrf.mxu0
        %v6562 = vadd.f32 %v6081, %v6561
        %v6563 = vpop.f32.mrf.mxu0
        %v6564 = vpop.f32.mrf.mxu0
        %v6565 = vadd.f32 %v6084, %v6564
        %v6566 = vpop.f32.mrf.mxu0
        %6567 = vmatprep.mubr.bf16.mxu0 %v3522
        %6568 = vmatmul.mubr.bf16.gmra.mxu0 %v3521
        %v6569 = vpop.f32.mrf.mxu0
        %v6570 = vadd.f32 %v6089, %v6569
        %v6571 = vpop.f32.mrf.mxu0
        %v6572 = vpop.f32.mrf.mxu0
        %v6573 = vadd.f32 %v6092, %v6572
        %v6574 = vpop.f32.mrf.mxu0
        %6575 = vmatprep.mubr.bf16.mxu0 %v3532
        %6576 = vmatmul.mubr.bf16.gmra.mxu0 %v3531
        %v6577 = vpop.f32.mrf.mxu0
        %v6578 = vadd.f32 %v6097, %v6577
        %v6579 = vpop.f32.mrf.mxu0
        %v6580 = vpop.f32.mrf.mxu0
        %v6581 = vadd.f32 %v6100, %v6580
        %v6582 = vpop.f32.mrf.mxu0
        %6583 = vmatprep.mubr.bf16.mxu0 %v3542
        %6584 = vmatmul.mubr.bf16.gmra.mxu0 %v3541
        %v6585 = vpop.f32.mrf.mxu0
        %v6586 = vadd.f32 %v6105, %v6585
        %v6587 = vpop.f32.mrf.mxu0
        %v6588 = vpop.f32.mrf.mxu0
        %v6589 = vadd.f32 %v6108, %v6588
        %v6590 = vpop.f32.mrf.mxu0
        %6591 = vmatprep.mubr.bf16.mxu0 %v3552
        %6592 = vmatmul.mubr.bf16.gmra.mxu0 %v3551
        %v6593 = vpop.f32.mrf.mxu0
        %v6594 = vadd.f32 %v6113, %v6593
        %v6595 = vpop.f32.mrf.mxu0
        %v6596 = vpop.f32.mrf.mxu0
        %v6597 = vadd.f32 %v6116, %v6596
        %v6598 = vpop.f32.mrf.mxu0
        %6599 = vmatprep.mubr.bf16.mxu0 %v3562
        %6600 = vmatmul.mubr.bf16.gmra.mxu0 %v3561
        %v6601 = vpop.f32.mrf.mxu0
        %v6602 = vadd.f32 %v6121, %v6601
        %v6603 = vpop.f32.mrf.mxu0
        %v6604 = vpop.f32.mrf.mxu0
        %v6605 = vadd.f32 %v6124, %v6604
        %v6606 = vpop.f32.mrf.mxu0
        %6607 = vmatprep.mubr.bf16.mxu0 %v3572
        %6608 = vmatmul.mubr.bf16.gmra.mxu0 %v3571
        %v6609 = vpop.f32.mrf.mxu0
        %v6610 = vadd.f32 %v6129, %v6609
        %v6611 = vpop.f32.mrf.mxu0
        %v6612 = vpop.f32.mrf.mxu0
        %v6613 = vadd.f32 %v6132, %v6612
        %v6614 = vpop.f32.mrf.mxu0
        %6615 = vmatprep.mubr.bf16.mxu0 %v3582
        %6616 = vmatmul.mubr.bf16.gmra.mxu0 %v3581
        %v6617 = vpop.f32.mrf.mxu0
        %v6618 = vadd.f32 %v6137, %v6617
        %v6619 = vpop.f32.mrf.mxu0
        %v6620 = vpop.f32.mrf.mxu0
        %v6621 = vadd.f32 %v6140, %v6620
        %v6622 = vpop.f32.mrf.mxu0
        %6623 = vmatprep.mubr.bf16.mxu0 %v3592
        %6624 = vmatmul.mubr.bf16.gmra.mxu0 %v3591
        %v6625 = vpop.f32.mrf.mxu0
        %v6626 = vadd.f32 %v6145, %v6625
        %v6627 = vpop.f32.mrf.mxu0
        %v6628 = vpop.f32.mrf.mxu0
        %v6629 = vadd.f32 %v6148, %v6628
        %v6630 = vpop.f32.mrf.mxu0
        %6631 = vmatprep.mubr.bf16.mxu0 %v3602
        %6632 = vmatmul.mubr.bf16.gmra.mxu0 %v3601
        %v6633 = vpop.f32.mrf.mxu0
        %v6634 = vadd.f32 %v6153, %v6633
        %v6635 = vpop.f32.mrf.mxu0
        %v6636 = vpop.f32.mrf.mxu0
        %v6637 = vadd.f32 %v6156, %v6636
        %v6638 = vpop.f32.mrf.mxu0
        %6639 = vmatprep.mubr.bf16.mxu0 %v3612
        %6640 = vmatmul.mubr.bf16.gmra.mxu0 %v3611
        %v6641 = vpop.f32.mrf.mxu0
        %v6642 = vadd.f32 %v6161, %v6641
        %v6643 = vpop.f32.mrf.mxu0
        %v6644 = vpop.f32.mrf.mxu0
        %v6645 = vadd.f32 %v6164, %v6644
        %v6646 = vpop.f32.mrf.mxu0
        %6647 = vmatprep.mubr.bf16.mxu0 %v3622
        %6648 = vmatmul.mubr.bf16.gmra.mxu0 %v3621
        %v6649 = vpop.f32.mrf.mxu0
        %v6650 = vadd.f32 %v6169, %v6649
        %v6651 = vpop.f32.mrf.mxu0
        %v6652 = vpop.f32.mrf.mxu0
        %v6653 = vadd.f32 %v6172, %v6652
        %v6654 = vpop.f32.mrf.mxu0
        %6655 = vmatprep.mubr.bf16.mxu0 %v3632
        %6656 = vmatmul.mubr.bf16.gmra.mxu0 %v3631
        %v6657 = vpop.f32.mrf.mxu0
        %v6658 = vadd.f32 %v6177, %v6657
        %v6659 = vpop.f32.mrf.mxu0
        %v6660 = vpop.f32.mrf.mxu0
        %v6661 = vadd.f32 %v6180, %v6660
        %v6662 = vpop.f32.mrf.mxu0
        %6663 = vmatprep.mubr.bf16.mxu0 %v3642
        %6664 = vmatmul.mubr.bf16.gmra.mxu0 %v3641
        %v6665 = vpop.f32.mrf.mxu0
        %v6666 = vadd.f32 %v6185, %v6665
        %v6667 = vpop.f32.mrf.mxu0
        %v6668 = vpop.f32.mrf.mxu0
        %v6669 = vadd.f32 %v6188, %v6668
        %v6670 = vpop.f32.mrf.mxu0
        %6671 = vmatprep.mubr.bf16.mxu0 %v3652
        %6672 = vmatmul.mubr.bf16.gmra.mxu0 %v3651
        %v6673 = vpop.f32.mrf.mxu0
        %v6674 = vadd.f32 %v6193, %v6673
        %v6675 = vpop.f32.mrf.mxu0
        %v6676 = vpop.f32.mrf.mxu0
        %v6677 = vadd.f32 %v6196, %v6676
        %v6678 = vpop.f32.mrf.mxu0
        %6679 = vmatprep.mubr.bf16.mxu0 %v3662
        %6680 = vmatmul.mubr.bf16.gmra.mxu0 %v3661
        %v6681 = vpop.f32.mrf.mxu0
        %v6682 = vadd.f32 %v6201, %v6681
        %v6683 = vpop.f32.mrf.mxu0
        %v6684 = vpop.f32.mrf.mxu0
        %v6685 = vadd.f32 %v6204, %v6684
        %v6686 = vpop.f32.mrf.mxu0
        %6687 = vmatprep.mubr.bf16.mxu0 %v3672
        %6688 = vmatmul.mubr.bf16.gmra.mxu0 %v3671
        %v6689 = vpop.f32.mrf.mxu0
        %v6690 = vadd.f32 %v6209, %v6689
        %v6691 = vpop.f32.mrf.mxu0
        %v6692 = vpop.f32.mrf.mxu0
        %v6693 = vadd.f32 %v6212, %v6692
        %v6694 = vpop.f32.mrf.mxu0
        %6695 = vmatprep.mubr.bf16.mxu0 %v3682
        %6696 = vmatmul.mubr.bf16.gmra.mxu0 %v3681
        %v6697 = vpop.f32.mrf.mxu0
        %v6698 = vadd.f32 %v6217, %v6697
        %v6699 = vpop.f32.mrf.mxu0
        %v6700 = vpop.f32.mrf.mxu0
        %v6701 = vadd.f32 %v6220, %v6700
        %v6702 = vpop.f32.mrf.mxu0
        %6703 = vmatprep.mubr.bf16.mxu0 %v3692
        %6704 = vmatmul.mubr.bf16.gmra.mxu0 %v3691
        %v6705 = vpop.f32.mrf.mxu0
        %v6706 = vadd.f32 %v6225, %v6705
        %v6707 = vpop.f32.mrf.mxu0
        %v6708 = vpop.f32.mrf.mxu0
        %v6709 = vadd.f32 %v6228, %v6708
        %v6710 = vpop.f32.mrf.mxu0
        %6711 = vmatprep.mubr.bf16.mxu0 %v3702
        %6712 = vmatmul.mubr.bf16.gmra.mxu0 %v3701
        %v6713 = vpop.f32.mrf.mxu0
        %v6714 = vadd.f32 %v6233, %v6713
        %v6715 = vpop.f32.mrf.mxu0
        %v6716 = vpop.f32.mrf.mxu0
        %v6717 = vadd.f32 %v6236, %v6716
        %v6718 = vpop.f32.mrf.mxu0
        %6719 = vmatprep.mubr.bf16.mxu0 %v3712
        %6720 = vmatmul.mubr.bf16.gmra.mxu0 %v3711
        %v6721 = vpop.f32.mrf.mxu0
        %v6722 = vadd.f32 %v6241, %v6721
        %v6723 = vpop.f32.mrf.mxu0
        %v6724 = vpop.f32.mrf.mxu0
        %v6725 = vadd.f32 %v6244, %v6724
        %v6726 = vpop.f32.mrf.mxu0
        %6727 = vmatprep.mubr.bf16.mxu0 %v3722
        %6728 = vmatmul.mubr.bf16.gmra.mxu0 %v3721
        %v6729 = vpop.f32.mrf.mxu0
        %v6730 = vadd.f32 %v6249, %v6729
        %v6731 = vpop.f32.mrf.mxu0
        %v6732 = vpop.f32.mrf.mxu0
        %v6733 = vadd.f32 %v6252, %v6732
        %v6734 = vpop.f32.mrf.mxu0
        %6735 = vmatprep.mubr.bf16.mxu0 %v3732
        %6736 = vmatmul.mubr.bf16.gmra.mxu0 %v3731
        %v6737 = vpop.f32.mrf.mxu0
        %v6738 = vadd.f32 %v6257, %v6737
        %v6739 = vpop.f32.mrf.mxu0
        %v6740 = vpop.f32.mrf.mxu0
        %v6741 = vadd.f32 %v6260, %v6740
        %v6742 = vpop.f32.mrf.mxu0
        %6743 = vmatprep.mubr.bf16.mxu0 %v3742
        %6744 = vmatmul.mubr.bf16.gmra.mxu0 %v3741
        %v6745 = vpop.f32.mrf.mxu0
        %v6746 = vadd.f32 %v6265, %v6745
        %v6747 = vpop.f32.mrf.mxu0
        %v6748 = vpop.f32.mrf.mxu0
        %v6749 = vadd.f32 %v6268, %v6748
        %v6750 = vpop.f32.mrf.mxu0
        %6751 = vmatprep.mubr.bf16.mxu0 %v3752
        %6752 = vmatmul.mubr.bf16.gmra.mxu0 %v3751
        %v6753 = vpop.f32.mrf.mxu0
        %v6754 = vadd.f32 %v6273, %v6753
        %v6755 = vpop.f32.mrf.mxu0
        %v6756 = vpop.f32.mrf.mxu0
        %v6757 = vadd.f32 %v6276, %v6756
        %v6758 = vpop.f32.mrf.mxu0
        %6759 = vmatprep.mubr.bf16.mxu0 %v3762
        %6760 = vmatmul.mubr.bf16.gmra.mxu0 %v3761
        %v6761 = vpop.f32.mrf.mxu0
        %v6762 = vadd.f32 %v6281, %v6761
        %v6763 = vpop.f32.mrf.mxu0
        %v6764 = vpop.f32.mrf.mxu0
        %v6765 = vadd.f32 %v6284, %v6764
        %v6766 = vpop.f32.mrf.mxu0
        %6767 = vmatprep.mubr.bf16.mxu0 %v3772
        %6768 = vmatmul.mubr.bf16.gmra.mxu0 %v3771
        %v6769 = vpop.f32.mrf.mxu0
        %v6770 = vadd.f32 %v6289, %v6769
        %v6771 = vpop.f32.mrf.mxu0
        %v6772 = vpop.f32.mrf.mxu0
        %v6773 = vadd.f32 %v6292, %v6772
        %v6774 = vpop.f32.mrf.mxu0
        %6775 = vmatprep.mubr.bf16.mxu0 %v3782
        %6776 = vmatmul.mubr.bf16.gmra.mxu0 %v3781
        %v6777 = vpop.f32.mrf.mxu0
        %v6778 = vadd.f32 %v6297, %v6777
        %v6779 = vpop.f32.mrf.mxu0
        %v6780 = vpop.f32.mrf.mxu0
        %v6781 = vadd.f32 %v6300, %v6780
        %v6782 = vpop.f32.mrf.mxu0
        %6783 = vmatprep.mubr.bf16.mxu0 %v3792
        %6784 = vmatmul.mubr.bf16.gmra.mxu0 %v3791
        %v6785 = vpop.f32.mrf.mxu0
        %v6786 = vadd.f32 %v6305, %v6785
        %v6787 = vpop.f32.mrf.mxu0
        %v6788 = vpop.f32.mrf.mxu0
        %v6789 = vadd.f32 %v6308, %v6788
        %v6790 = vpop.f32.mrf.mxu0
        %6791 = vmatprep.mubr.bf16.mxu0 %v3802
        %6792 = vmatmul.mubr.bf16.gmra.mxu0 %v3801
        %v6793 = vpop.f32.mrf.mxu0
        %v6794 = vadd.f32 %v6313, %v6793
        %v6795 = vpop.f32.mrf.mxu0
        %v6796 = vpop.f32.mrf.mxu0
        %v6797 = vadd.f32 %v6316, %v6796
        %v6798 = vpop.f32.mrf.mxu0
        %6799 = vmatprep.mubr.bf16.mxu0 %v3812
        %6800 = vmatmul.mubr.bf16.gmra.mxu0 %v3811
        %v6801 = vpop.f32.mrf.mxu0
        %v6802 = vadd.f32 %v6321, %v6801
        %v6803 = vpop.f32.mrf.mxu0
        %v6804 = vpop.f32.mrf.mxu0
        %v6805 = vadd.f32 %v6324, %v6804
        %v6806 = vpop.f32.mrf.mxu0
        %6807 = vmatprep.mubr.bf16.mxu0 %v3822
        %6808 = vmatmul.mubr.bf16.gmra.mxu0 %v3821
        %v6809 = vpop.f32.mrf.mxu0
        %v6810 = vadd.f32 %v6329, %v6809
        %v6811 = vpop.f32.mrf.mxu0
        %v6812 = vpop.f32.mrf.mxu0
        %v6813 = vadd.f32 %v6332, %v6812
        %v6814 = vpop.f32.mrf.mxu0
        %6815 = vmatprep.mubr.bf16.mxu0 %v3832
        %6816 = vmatmul.mubr.bf16.gmra.mxu0 %v3831
        %v6817 = vpop.f32.mrf.mxu0
        %v6818 = vadd.f32 %v6337, %v6817
        %v6819 = vpop.f32.mrf.mxu0
        %v6820 = vpop.f32.mrf.mxu0
        %v6821 = vadd.f32 %v6340, %v6820
        %v6822 = vpop.f32.mrf.mxu0
        %6823 = vmatprep.mubr.bf16.mxu0 %v3842
        %6824 = vmatmul.mubr.bf16.gmra.mxu0 %v3841
        %v6825 = vpop.f32.mrf.mxu0
        %v6826 = vadd.f32 %v6345, %v6825
        %v6827 = vpop.f32.mrf.mxu0
        %v6828 = vpop.f32.mrf.mxu0
        %v6829 = vadd.f32 %v6348, %v6828
        %v6830 = vpop.f32.mrf.mxu0
        %6831 = vmatprep.mubr.bf16.mxu0 %v3852
        %6832 = vmatmul.mubr.bf16.gmra.mxu0 %v3851
        %v6833 = vpop.f32.mrf.mxu0
        %v6834 = vadd.f32 %v6353, %v6833
        %v6835 = vpop.f32.mrf.mxu0
        %v6836 = vpop.f32.mrf.mxu0
        %v6837 = vadd.f32 %v6356, %v6836
        %v6838 = vpop.f32.mrf.mxu0
        %6839 = vmatprep.mubr.bf16.mxu0 %v3862
        %6840 = vmatmul.mubr.bf16.gmra.mxu0 %v3861
        %v6841 = vpop.f32.mrf.mxu0
        %v6842 = vadd.f32 %v6361, %v6841
        %v6843 = vpop.f32.mrf.mxu0
        %v6844 = vpop.f32.mrf.mxu0
        %v6845 = vadd.f32 %v6364, %v6844
        %v6846 = vpop.f32.mrf.mxu0
        %6847 = vmatprep.mubr.bf16.mxu0 %v3872
        %6848 = vmatmul.mubr.bf16.gmra.mxu0 %v3871
        %v6849 = vpop.f32.mrf.mxu0
        %v6850 = vadd.f32 %v6369, %v6849
        %v6851 = vpop.f32.mrf.mxu0
        %v6852 = vpop.f32.mrf.mxu0
        %v6853 = vadd.f32 %v6372, %v6852
        %v6854 = vpop.f32.mrf.mxu0
        %6855 = vmatprep.mubr.bf16.mxu0 %v3882
        %6856 = vmatmul.mubr.bf16.gmra.mxu0 %v3881
        %v6857 = vpop.f32.mrf.mxu0
        %v6858 = vadd.f32 %v6377, %v6857
        %v6859 = vpop.f32.mrf.mxu0
        %v6860 = vpop.f32.mrf.mxu0
        %v6861 = vadd.f32 %v6380, %v6860
        %v6862 = vpop.f32.mrf.mxu0
        %6863 = vmatprep.mubr.bf16.mxu0 %v3892
        %6864 = vmatmul.mubr.bf16.gmra.mxu0 %v3891
        %v6865 = vpop.f32.mrf.mxu0
        %v6866 = vadd.f32 %v6385, %v6865
        %v6867 = vpop.f32.mrf.mxu0
        %v6868 = vpop.f32.mrf.mxu0
        %v6869 = vadd.f32 %v6388, %v6868
        %v6870 = vpop.f32.mrf.mxu0
        %6871 = vmatprep.mubr.bf16.mxu0 %v3902
        %6872 = vmatmul.mubr.bf16.gmra.mxu0 %v3901
        %v6873 = vpop.f32.mrf.mxu0
        %v6874 = vadd.f32 %v6393, %v6873
        %v6875 = vpop.f32.mrf.mxu0
        %v6876 = vpop.f32.mrf.mxu0
        %v6877 = vadd.f32 %v6396, %v6876
        %v6878 = vpop.f32.mrf.mxu0
        %6879 = vmatprep.mubr.bf16.mxu0 %v3912
        %6880 = vmatmul.mubr.bf16.gmra.mxu0 %v3911
        %v6881 = vpop.f32.mrf.mxu0
        %v6882 = vadd.f32 %v6401, %v6881
        %v6883 = vpop.f32.mrf.mxu0
        %v6884 = vpop.f32.mrf.mxu0
        %v6885 = vadd.f32 %v6404, %v6884
        %v6886 = vpop.f32.mrf.mxu0
        %6887 = vmatprep.mubr.bf16.mxu0 %v3922
        %6888 = vmatmul.mubr.bf16.gmra.mxu0 %v3921
        %v6889 = vpop.f32.mrf.mxu0
        %v6890 = vadd.f32 %v6409, %v6889
        %v6891 = vpop.f32.mrf.mxu0
        %v6892 = vpop.f32.mrf.mxu0
        %v6893 = vadd.f32 %v6412, %v6892
        %v6894 = vpop.f32.mrf.mxu0
        %6895 = vmatprep.mubr.bf16.mxu0 %v3932
        %6896 = vmatmul.mubr.bf16.gmra.mxu0 %v3931
        %v6897 = vpop.f32.mrf.mxu0
        %v6898 = vadd.f32 %v6417, %v6897
        %v6899 = vpop.f32.mrf.mxu0
        %v6900 = vpop.f32.mrf.mxu0
        %v6901 = vadd.f32 %v6420, %v6900
        %v6902 = vpop.f32.mrf.mxu0
        %6903 = vmatprep.mubr.bf16.mxu0 %v3942
        %6904 = vmatmul.mubr.bf16.gmra.mxu0 %v3941
        %v6905 = vpop.f32.mrf.mxu0
        %v6906 = vadd.f32 %v6425, %v6905
        %v6907 = vpop.f32.mrf.mxu0
        %v6908 = vpop.f32.mrf.mxu0
        %v6909 = vadd.f32 %v6428, %v6908
        %v6910 = vpop.f32.mrf.mxu0
        %6911 = vmatprep.mubr.bf16.mxu0 %v3952
        %6912 = vmatmul.mubr.bf16.gmra.mxu0 %v3951
        %v6913 = vpop.f32.mrf.mxu0
        %v6914 = vadd.f32 %v6433, %v6913
        %v6915 = vpop.f32.mrf.mxu0
        %v6916 = vpop.f32.mrf.mxu0
        %v6917 = vadd.f32 %v6436, %v6916
        %v6918 = vpop.f32.mrf.mxu0
        %6919 = vmatprep.mubr.bf16.mxu0 %v3962
        %6920 = vmatmul.mubr.bf16.gmra.mxu0 %v3961
        %v6921 = vpop.f32.mrf.mxu0
        %v6922 = vadd.f32 %v6441, %v6921
        %v6923 = vpop.f32.mrf.mxu0
        %v6924 = vpop.f32.mrf.mxu0
        %v6925 = vadd.f32 %v6444, %v6924
        %v6926 = vpop.f32.mrf.mxu0
        %6927 = vdwg.mxu0
        %vm6928 = vcmask 523264
        %6929 = vst.msk [vmem:[%s233] sm:$0xff] %vm6928, %v6482
        %6930 = vst.msk [vmem:[%s233 + $0x8] sm:$0xff] %vm6928, %v6485
        %6931 = vst.msk [vmem:[%s233 + $0x10] sm:$0xff] %vm6928, %v6490
        %6932 = vst.msk [vmem:[%s233 + $0x18] sm:$0xff] %vm6928, %v6493
        %6933 = vst.msk [vmem:[%s233 + $0x20] sm:$0xff] %vm6928, %v6498
        %6934 = vst.msk [vmem:[%s233 + $0x28] sm:$0xff] %vm6928, %v6501
        %6935 = vst.msk [vmem:[%s233 + $0x30] sm:$0xff] %vm6928, %v6506
        %6936 = vst.msk [vmem:[%s233 + $0x38] sm:$0xff] %vm6928, %v6509
        %6937 = vst.msk [vmem:[%s233 + $0x40] sm:$0xff] %vm6928, %v6514
        %6938 = vst.msk [vmem:[%s233 + $0x48] sm:$0xff] %vm6928, %v6517
        %6939 = vst.msk [vmem:[%s233 + $0x50] sm:$0xff] %vm6928, %v6522
        %6940 = vst.msk [vmem:[%s233 + $0x58] sm:$0xff] %vm6928, %v6525
        %6941 = vst.msk [vmem:[%s233 + $0x60] sm:$0xff] %vm6928, %v6530
        %6942 = vst.msk [vmem:[%s233 + $0x68] sm:$0xff] %vm6928, %v6533
        %6943 = vst.msk [vmem:[%s233 + $0x70] sm:$0xff] %vm6928, %v6538
        %6944 = vst.msk [vmem:[%s233 + $0x78] sm:$0xff] %vm6928, %v6541
        %6945 = vst.msk [vmem:[%s233 + $0x80] sm:$0xff] %vm6928, %v6546
        %6946 = vst.msk [vmem:[%s233 + $0x88] sm:$0xff] %vm6928, %v6549
        %6947 = vst.msk [vmem:[%s233 + $0x90] sm:$0xff] %vm6928, %v6554
        %6948 = vst.msk [vmem:[%s233 + $0x98] sm:$0xff] %vm6928, %v6557
        %6949 = vst.msk [vmem:[%s233 + $0xa0] sm:$0xff] %vm6928, %v6562
        %6950 = vst.msk [vmem:[%s233 + $0xa8] sm:$0xff] %vm6928, %v6565
        %6951 = vst.msk [vmem:[%s233 + $0xb0] sm:$0xff] %vm6928, %v6570
        %6952 = vst.msk [vmem:[%s233 + $0xb8] sm:$0xff] %vm6928, %v6573
        %6953 = vst.msk [vmem:[%s233 + $0xc0] sm:$0xff] %vm6928, %v6578
        %6954 = vst.msk [vmem:[%s233 + $0xc8] sm:$0xff] %vm6928, %v6581
        %6955 = vst.msk [vmem:[%s233 + $0xd0] sm:$0xff] %vm6928, %v6586
        %6956 = vst.msk [vmem:[%s233 + $0xd8] sm:$0xff] %vm6928, %v6589
        %6957 = vst.msk [vmem:[%s233 + $0xe0] sm:$0xff] %vm6928, %v6594
        %6958 = vst.msk [vmem:[%s233 + $0xe8] sm:$0xff] %vm6928, %v6597
        %6959 = vst.msk [vmem:[%s233 + $0xf0] sm:$0xff] %vm6928, %v6602
        %6960 = vst.msk [vmem:[%s233 + $0xf8] sm:$0xff] %vm6928, %v6605
        %6961 = vst.msk [vmem:[%s233 + $0x100] sm:$0xff] %vm6928, %v6610
        %6962 = vst.msk [vmem:[%s233 + $0x108] sm:$0xff] %vm6928, %v6613
        %6963 = vst.msk [vmem:[%s233 + $0x110] sm:$0xff] %vm6928, %v6618
        %6964 = vst.msk [vmem:[%s233 + $0x118] sm:$0xff] %vm6928, %v6621
        %6965 = vst.msk [vmem:[%s233 + $0x120] sm:$0xff] %vm6928, %v6626
        %6966 = vst.msk [vmem:[%s233 + $0x128] sm:$0xff] %vm6928, %v6629
        %6967 = vst.msk [vmem:[%s233 + $0x130] sm:$0xff] %vm6928, %v6634
        %6968 = vst.msk [vmem:[%s233 + $0x138] sm:$0xff] %vm6928, %v6637
        %6969 = vst.msk [vmem:[%s233 + $0x140] sm:$0xff] %vm6928, %v6642
        %6970 = vst.msk [vmem:[%s233 + $0x148] sm:$0xff] %vm6928, %v6645
        %6971 = vst.msk [vmem:[%s233 + $0x150] sm:$0xff] %vm6928, %v6650
        %6972 = vst.msk [vmem:[%s233 + $0x158] sm:$0xff] %vm6928, %v6653
        %6973 = vst.msk [vmem:[%s233 + $0x160] sm:$0xff] %vm6928, %v6658
        %6974 = vst.msk [vmem:[%s233 + $0x168] sm:$0xff] %vm6928, %v6661
        %6975 = vst.msk [vmem:[%s233 + $0x170] sm:$0xff] %vm6928, %v6666
        %6976 = vst.msk [vmem:[%s233 + $0x178] sm:$0xff] %vm6928, %v6669
        %6977 = vst.msk [vmem:[%s233 + $0x180] sm:$0xff] %vm6928, %v6674
        %6978 = vst.msk [vmem:[%s233 + $0x188] sm:$0xff] %vm6928, %v6677
        %6979 = vst.msk [vmem:[%s233 + $0x190] sm:$0xff] %vm6928, %v6682
        %6980 = vst.msk [vmem:[%s233 + $0x198] sm:$0xff] %vm6928, %v6685
        %6981 = vst.msk [vmem:[%s233 + $0x1a0] sm:$0xff] %vm6928, %v6690
        %6982 = vst.msk [vmem:[%s233 + $0x1a8] sm:$0xff] %vm6928, %v6693
        %6983 = vst.msk [vmem:[%s233 + $0x1b0] sm:$0xff] %vm6928, %v6698
        %6984 = vst.msk [vmem:[%s233 + $0x1b8] sm:$0xff] %vm6928, %v6701
        %6985 = vst.msk [vmem:[%s233 + $0x1c0] sm:$0xff] %vm6928, %v6706
        %6986 = vst.msk [vmem:[%s233 + $0x1c8] sm:$0xff] %vm6928, %v6709
        %6987 = vst.msk [vmem:[%s233 + $0x1d0] sm:$0xff] %vm6928, %v6714
        %6988 = vst.msk [vmem:[%s233 + $0x1d8] sm:$0xff] %vm6928, %v6717
        %6989 = vst.msk [vmem:[%s233 + $0x1e0] sm:$0xff] %vm6928, %v6722
        %6990 = vst.msk [vmem:[%s233 + $0x1e8] sm:$0xff] %vm6928, %v6725
        %6991 = vst.msk [vmem:[%s233 + $0x1f0] sm:$0xff] %vm6928, %v6730
        %6992 = vst.msk [vmem:[%s233 + $0x1f8] sm:$0xff] %vm6928, %v6733
        %6993 = vst.msk [vmem:[%s233 + $0x200] sm:$0xff] %vm6928, %v6738
        %6994 = vst.msk [vmem:[%s233 + $0x208] sm:$0xff] %vm6928, %v6741
        %6995 = vst.msk [vmem:[%s233 + $0x210] sm:$0xff] %vm6928, %v6746
        %6996 = vst.msk [vmem:[%s233 + $0x218] sm:$0xff] %vm6928, %v6749
        %6997 = vst.msk [vmem:[%s233 + $0x220] sm:$0xff] %vm6928, %v6754
        %6998 = vst.msk [vmem:[%s233 + $0x228] sm:$0xff] %vm6928, %v6757
        %6999 = vst.msk [vmem:[%s233 + $0x230] sm:$0xff] %vm6928, %v6762
        %7000 = vst.msk [vmem:[%s233 + $0x238] sm:$0xff] %vm6928, %v6765
        %7001 = vst.msk [vmem:[%s233 + $0x240] sm:$0xff] %vm6928, %v6770
        %7002 = vst.msk [vmem:[%s233 + $0x248] sm:$0xff] %vm6928, %v6773
        %7003 = vst.msk [vmem:[%s233 + $0x250] sm:$0xff] %vm6928, %v6778
        %7004 = vst.msk [vmem:[%s233 + $0x258] sm:$0xff] %vm6928, %v6781
        %7005 = vst.msk [vmem:[%s233 + $0x260] sm:$0xff] %vm6928, %v6786
        %7006 = vst.msk [vmem:[%s233 + $0x268] sm:$0xff] %vm6928, %v6789
        %7007 = vst.msk [vmem:[%s233 + $0x270] sm:$0xff] %vm6928, %v6794
        %7008 = vst.msk [vmem:[%s233 + $0x278] sm:$0xff] %vm6928, %v6797
        %7009 = vst.msk [vmem:[%s233 + $0x280] sm:$0xff] %vm6928, %v6802
        %7010 = vst.msk [vmem:[%s233 + $0x288] sm:$0xff] %vm6928, %v6805
        %7011 = vst.msk [vmem:[%s233 + $0x290] sm:$0xff] %vm6928, %v6810
        %7012 = vst.msk [vmem:[%s233 + $0x298] sm:$0xff] %vm6928, %v6813
        %7013 = vst.msk [vmem:[%s233 + $0x2a0] sm:$0xff] %vm6928, %v6818
        %7014 = vst.msk [vmem:[%s233 + $0x2a8] sm:$0xff] %vm6928, %v6821
        %7015 = vst.msk [vmem:[%s233 + $0x2b0] sm:$0xff] %vm6928, %v6826
        %7016 = vst.msk [vmem:[%s233 + $0x2b8] sm:$0xff] %vm6928, %v6829
        %7017 = vst.msk [vmem:[%s233 + $0x2c0] sm:$0xff] %vm6928, %v6834
        %7018 = vst.msk [vmem:[%s233 + $0x2c8] sm:$0xff] %vm6928, %v6837
        %7019 = vst.msk [vmem:[%s233 + $0x2d0] sm:$0xff] %vm6928, %v6842
        %7020 = vst.msk [vmem:[%s233 + $0x2d8] sm:$0xff] %vm6928, %v6845
        %7021 = vst.msk [vmem:[%s233 + $0x2e0] sm:$0xff] %vm6928, %v6850
        %7022 = vst.msk [vmem:[%s233 + $0x2e8] sm:$0xff] %vm6928, %v6853
        %7023 = vst.msk [vmem:[%s233 + $0x2f0] sm:$0xff] %vm6928, %v6858
        %7024 = vst.msk [vmem:[%s233 + $0x2f8] sm:$0xff] %vm6928, %v6861
        %7025 = vst.msk [vmem:[%s233 + $0x300] sm:$0xff] %vm6928, %v6866
        %7026 = vst.msk [vmem:[%s233 + $0x308] sm:$0xff] %vm6928, %v6869
        %7027 = vst.msk [vmem:[%s233 + $0x310] sm:$0xff] %vm6928, %v6874
        %7028 = vst.msk [vmem:[%s233 + $0x318] sm:$0xff] %vm6928, %v6877
        %7029 = vst.msk [vmem:[%s233 + $0x320] sm:$0xff] %vm6928, %v6882
        %7030 = vst.msk [vmem:[%s233 + $0x328] sm:$0xff] %vm6928, %v6885
        %7031 = vst.msk [vmem:[%s233 + $0x330] sm:$0xff] %vm6928, %v6890
        %7032 = vst.msk [vmem:[%s233 + $0x338] sm:$0xff] %vm6928, %v6893
        %7033 = vst.msk [vmem:[%s233 + $0x340] sm:$0xff] %vm6928, %v6898
        %7034 = vst.msk [vmem:[%s233 + $0x348] sm:$0xff] %vm6928, %v6901
        %7035 = vst.msk [vmem:[%s233 + $0x350] sm:$0xff] %vm6928, %v6906
        %7036 = vst.msk [vmem:[%s233 + $0x358] sm:$0xff] %vm6928, %v6909
        %7037 = vst.msk [vmem:[%s233 + $0x360] sm:$0xff] %vm6928, %v6914
        %7038 = vst.msk [vmem:[%s233 + $0x368] sm:$0xff] %vm6928, %v6917
        %7039 = vst.msk [vmem:[%s233 + $0x370] sm:$0xff] %vm6928, %v6922
        %7040 = vst.msk [vmem:[%s233 + $0x378] sm:$0xff] %vm6928, %v6925
        %s7041 = scalar_lea.vmem %s239, 1280
        %v7042 = vld [vmem:[%s7041] sm:$0xff]
        %v7043 = vld [vmem:[%s7041 + $0x8] sm:$0xff]
        %v7044 = vld [vmem:[%s7041 + $0x10] sm:$0xff]
        %v7045 = vld [vmem:[%s7041 + $0x18] sm:$0xff]
        %v7046 = vld [vmem:[%s7041 + $0x20] sm:$0xff]
        %v7047 = vld [vmem:[%s7041 + $0x28] sm:$0xff]
        %v7048 = vld [vmem:[%s7041 + $0x30] sm:$0xff]
        %v7049 = vld [vmem:[%s7041 + $0x38] sm:$0xff]
        %v7050 = vld [vmem:[%s7041 + $0x40] sm:$0xff]
        %v7051 = vld [vmem:[%s7041 + $0x48] sm:$0xff]
        %v7052 = vld [vmem:[%s7041 + $0x50] sm:$0xff]
        %v7053 = vld [vmem:[%s7041 + $0x58] sm:$0xff]
        %v7054 = vld [vmem:[%s7041 + $0x60] sm:$0xff]
        %v7055 = vld [vmem:[%s7041 + $0x68] sm:$0xff]
        %v7056 = vld [vmem:[%s7041 + $0x70] sm:$0xff]
        %v7057 = vld [vmem:[%s7041 + $0x78] sm:$0xff]
        %v7058 = vld [vmem:[%s7041 + $0x80] sm:$0xff]
        %v7059 = vld [vmem:[%s7041 + $0x88] sm:$0xff]
        %v7060 = vld [vmem:[%s7041 + $0x90] sm:$0xff]
        %v7061 = vld [vmem:[%s7041 + $0x98] sm:$0xff]
        %v7062 = vld [vmem:[%s7041 + $0xa0] sm:$0xff]
        %v7063 = vld [vmem:[%s7041 + $0xa8] sm:$0xff]
        %v7064 = vld [vmem:[%s7041 + $0xb0] sm:$0xff]
        %v7065 = vld [vmem:[%s7041 + $0xb8] sm:$0xff]
        %v7066 = vld [vmem:[%s7041 + $0xc0] sm:$0xff]
        %v7067 = vld [vmem:[%s7041 + $0xc8] sm:$0xff]
        %v7068 = vld [vmem:[%s7041 + $0xd0] sm:$0xff]
        %v7069 = vld [vmem:[%s7041 + $0xd8] sm:$0xff]
        %v7070 = vld [vmem:[%s7041 + $0xe0] sm:$0xff]
        %v7071 = vld [vmem:[%s7041 + $0xe8] sm:$0xff]
        %v7072 = vld [vmem:[%s7041 + $0xf0] sm:$0xff]
        %v7073 = vld [vmem:[%s7041 + $0xf8] sm:$0xff]
        %v7074 = vld [vmem:[%s7041 + $0x100] sm:$0xff]
        %v7075 = vld [vmem:[%s7041 + $0x108] sm:$0xff]
        %v7076 = vld [vmem:[%s7041 + $0x110] sm:$0xff]
        %v7077 = vld [vmem:[%s7041 + $0x118] sm:$0xff]
        %v7078 = vld [vmem:[%s7041 + $0x120] sm:$0xff]
        %v7079 = vld [vmem:[%s7041 + $0x128] sm:$0xff]
        %v7080 = vld [vmem:[%s7041 + $0x130] sm:$0xff]
        %v7081 = vld [vmem:[%s7041 + $0x138] sm:$0xff]
        %v7082 = vld [vmem:[%s7041 + $0x140] sm:$0xff]
        %v7083 = vld [vmem:[%s7041 + $0x148] sm:$0xff]
        %v7084 = vld [vmem:[%s7041 + $0x150] sm:$0xff]
        %v7085 = vld [vmem:[%s7041 + $0x158] sm:$0xff]
        %v7086 = vld [vmem:[%s7041 + $0x160] sm:$0xff]
        %v7087 = vld [vmem:[%s7041 + $0x168] sm:$0xff]
        %v7088 = vld [vmem:[%s7041 + $0x170] sm:$0xff]
        %v7089 = vld [vmem:[%s7041 + $0x178] sm:$0xff]
        %v7090 = vld [vmem:[%s7041 + $0x180] sm:$0xff]
        %v7091 = vld [vmem:[%s7041 + $0x188] sm:$0xff]
        %v7092 = vld [vmem:[%s7041 + $0x190] sm:$0xff]
        %v7093 = vld [vmem:[%s7041 + $0x198] sm:$0xff]
        %v7094 = vld [vmem:[%s7041 + $0x1a0] sm:$0xff]
        %v7095 = vld [vmem:[%s7041 + $0x1a8] sm:$0xff]
        %v7096 = vld [vmem:[%s7041 + $0x1b0] sm:$0xff]
        %v7097 = vld [vmem:[%s7041 + $0x1b8] sm:$0xff]
        %v7098 = vld [vmem:[%s7041 + $0x1c0] sm:$0xff]
        %v7099 = vld [vmem:[%s7041 + $0x1c8] sm:$0xff]
        %v7100 = vld [vmem:[%s7041 + $0x1d0] sm:$0xff]
        %v7101 = vld [vmem:[%s7041 + $0x1d8] sm:$0xff]
        %v7102 = vld [vmem:[%s7041 + $0x1e0] sm:$0xff]
        %v7103 = vld [vmem:[%s7041 + $0x1e8] sm:$0xff]
        %v7104 = vld [vmem:[%s7041 + $0x1f0] sm:$0xff]
        %v7105 = vld [vmem:[%s7041 + $0x1f8] sm:$0xff]
        %v7106 = vld [vmem:[%s7041 + $0x200] sm:$0xff]
        %v7107 = vld [vmem:[%s7041 + $0x208] sm:$0xff]
        %v7108 = vld [vmem:[%s7041 + $0x210] sm:$0xff]
        %v7109 = vld [vmem:[%s7041 + $0x218] sm:$0xff]
        %v7110 = vld [vmem:[%s7041 + $0x220] sm:$0xff]
        %v7111 = vld [vmem:[%s7041 + $0x228] sm:$0xff]
        %v7112 = vld [vmem:[%s7041 + $0x230] sm:$0xff]
        %v7113 = vld [vmem:[%s7041 + $0x238] sm:$0xff]
        %v7114 = vld [vmem:[%s7041 + $0x240] sm:$0xff]
        %v7115 = vld [vmem:[%s7041 + $0x248] sm:$0xff]
        %v7116 = vld [vmem:[%s7041 + $0x250] sm:$0xff]
        %v7117 = vld [vmem:[%s7041 + $0x258] sm:$0xff]
        %v7118 = vld [vmem:[%s7041 + $0x260] sm:$0xff]
        %v7119 = vld [vmem:[%s7041 + $0x268] sm:$0xff]
        %v7120 = vld [vmem:[%s7041 + $0x270] sm:$0xff]
        %v7121 = vld [vmem:[%s7041 + $0x278] sm:$0xff]
        %v7122 = vld [vmem:[%s7041 + $0x280] sm:$0xff]
        %v7123 = vld [vmem:[%s7041 + $0x288] sm:$0xff]
        %v7124 = vld [vmem:[%s7041 + $0x290] sm:$0xff]
        %v7125 = vld [vmem:[%s7041 + $0x298] sm:$0xff]
        %v7126 = vld [vmem:[%s7041 + $0x2a0] sm:$0xff]
        %v7127 = vld [vmem:[%s7041 + $0x2a8] sm:$0xff]
        %v7128 = vld [vmem:[%s7041 + $0x2b0] sm:$0xff]
        %v7129 = vld [vmem:[%s7041 + $0x2b8] sm:$0xff]
        %v7130 = vld [vmem:[%s7041 + $0x2c0] sm:$0xff]
        %v7131 = vld [vmem:[%s7041 + $0x2c8] sm:$0xff]
        %v7132 = vld [vmem:[%s7041 + $0x2d0] sm:$0xff]
        %v7133 = vld [vmem:[%s7041 + $0x2d8] sm:$0xff]
        %v7134 = vld [vmem:[%s7041 + $0x2e0] sm:$0xff]
        %v7135 = vld [vmem:[%s7041 + $0x2e8] sm:$0xff]
        %v7136 = vld [vmem:[%s7041 + $0x2f0] sm:$0xff]
        %v7137 = vld [vmem:[%s7041 + $0x2f8] sm:$0xff]
        %v7138 = vld [vmem:[%s7041 + $0x300] sm:$0xff]
        %v7139 = vld [vmem:[%s7041 + $0x308] sm:$0xff]
        %v7140 = vld [vmem:[%s7041 + $0x310] sm:$0xff]
        %v7141 = vld [vmem:[%s7041 + $0x318] sm:$0xff]
        %v7142 = vld [vmem:[%s7041 + $0x320] sm:$0xff]
        %v7143 = vld [vmem:[%s7041 + $0x328] sm:$0xff]
        %v7144 = vld [vmem:[%s7041 + $0x330] sm:$0xff]
        %v7145 = vld [vmem:[%s7041 + $0x338] sm:$0xff]
        %v7146 = vld [vmem:[%s7041 + $0x340] sm:$0xff]
        %v7147 = vld [vmem:[%s7041 + $0x348] sm:$0xff]
        %v7148 = vld [vmem:[%s7041 + $0x350] sm:$0xff]
        %v7149 = vld [vmem:[%s7041 + $0x358] sm:$0xff]
        %v7150 = vld [vmem:[%s7041 + $0x360] sm:$0xff]
        %v7151 = vld [vmem:[%s7041 + $0x368] sm:$0xff]
        %v7152 = vld [vmem:[%s7041 + $0x370] sm:$0xff]
        %v7153 = vld [vmem:[%s7041 + $0x378] sm:$0xff]
        %v7154 = vld [vmem:[%s7041 + $0x380] sm:$0xff]
        %v7155 = vld [vmem:[%s7041 + $0x388] sm:$0xff]
        %v7156 = vld [vmem:[%s7041 + $0x390] sm:$0xff]
        %v7157 = vld [vmem:[%s7041 + $0x398] sm:$0xff]
        %v7158 = vld [vmem:[%s7041 + $0x3a0] sm:$0xff]
        %v7159 = vld [vmem:[%s7041 + $0x3a8] sm:$0xff]
        %v7160 = vld [vmem:[%s7041 + $0x3b0] sm:$0xff]
        %v7161 = vld [vmem:[%s7041 + $0x3b8] sm:$0xff]
        %v7162 = vld [vmem:[%s7041 + $0x3c0] sm:$0xff]
        %v7163 = vld [vmem:[%s7041 + $0x3c8] sm:$0xff]
        %v7164 = vld [vmem:[%s7041 + $0x3d0] sm:$0xff]
        %v7165 = vld [vmem:[%s7041 + $0x3d8] sm:$0xff]
        %v7166 = vld [vmem:[%s7041 + $0x3e0] sm:$0xff]
        %v7167 = vld [vmem:[%s7041 + $0x3e8] sm:$0xff]
        %v7168 = vld [vmem:[%s7041 + $0x3f0] sm:$0xff]
        %v7169 = vld [vmem:[%s7041 + $0x3f8] sm:$0xff]
        %v7170 = vld [vmem:[%s7041 + $0x400] sm:$0xff]
        %v7171 = vld [vmem:[%s7041 + $0x408] sm:$0xff]
        %v7172 = vld [vmem:[%s7041 + $0x410] sm:$0xff]
        %v7173 = vld [vmem:[%s7041 + $0x418] sm:$0xff]
        %v7174 = vld [vmem:[%s7041 + $0x420] sm:$0xff]
        %v7175 = vld [vmem:[%s7041 + $0x428] sm:$0xff]
        %v7176 = vld [vmem:[%s7041 + $0x430] sm:$0xff]
        %v7177 = vld [vmem:[%s7041 + $0x438] sm:$0xff]
        %v7178 = vld [vmem:[%s7041 + $0x440] sm:$0xff]
        %v7179 = vld [vmem:[%s7041 + $0x448] sm:$0xff]
        %v7180 = vld [vmem:[%s7041 + $0x450] sm:$0xff]
        %v7181 = vld [vmem:[%s7041 + $0x458] sm:$0xff]
        %v7182 = vld [vmem:[%s7041 + $0x460] sm:$0xff]
        %v7183 = vld [vmem:[%s7041 + $0x468] sm:$0xff]
        %v7184 = vld [vmem:[%s7041 + $0x470] sm:$0xff]
        %v7185 = vld [vmem:[%s7041 + $0x478] sm:$0xff]
        %v7186 = vld [vmem:[%s7041 + $0x480] sm:$0xff]
        %v7187 = vld [vmem:[%s7041 + $0x488] sm:$0xff]
        %v7188 = vld [vmem:[%s7041 + $0x490] sm:$0xff]
        %v7189 = vld [vmem:[%s7041 + $0x498] sm:$0xff]
        %v7190 = vld [vmem:[%s7041 + $0x4a0] sm:$0xff]
        %v7191 = vld [vmem:[%s7041 + $0x4a8] sm:$0xff]
        %v7192 = vld [vmem:[%s7041 + $0x4b0] sm:$0xff]
        %v7193 = vld [vmem:[%s7041 + $0x4b8] sm:$0xff]
        %v7194 = vld [vmem:[%s7041 + $0x4c0] sm:$0xff]
        %v7195 = vld [vmem:[%s7041 + $0x4c8] sm:$0xff]
        %v7196 = vld [vmem:[%s7041 + $0x4d0] sm:$0xff]
        %v7197 = vld [vmem:[%s7041 + $0x4d8] sm:$0xff]
        %v7198 = vld [vmem:[%s7041 + $0x4e0] sm:$0xff]
        %v7199 = vld [vmem:[%s7041 + $0x4e8] sm:$0xff]
        %v7200 = vld [vmem:[%s7041 + $0x4f0] sm:$0xff]
        %v7201 = vld [vmem:[%s7041 + $0x4f8] sm:$0xff]
        %v7202 = vpack.c.bf16 %v7043, %v7042
        %v7203 = vpack.c.bf16 %v7045, %v7044
        %v7204 = vpack.c.bf16 %v7047, %v7046
        %v7205 = vpack.c.bf16 %v7049, %v7048
        %v7206 = vpack.c.bf16 %v7051, %v7050
        %v7207 = vpack.c.bf16 %v7053, %v7052
        %v7208 = vpack.c.bf16 %v7055, %v7054
        %v7209 = vpack.c.bf16 %v7057, %v7056
        %v7210 = vpack.c.bf16 %v7059, %v7058
        %v7211 = vpack.c.bf16 %v7061, %v7060
        %v7212 = vpack.c.bf16 %v7063, %v7062
        %v7213 = vpack.c.bf16 %v7065, %v7064
        %v7214 = vpack.c.bf16 %v7067, %v7066
        %v7215 = vpack.c.bf16 %v7069, %v7068
        %v7216 = vpack.c.bf16 %v7071, %v7070
        %v7217 = vpack.c.bf16 %v7073, %v7072
        %v7218 = vpack.c.bf16 %v7075, %v7074
        %v7219 = vpack.c.bf16 %v7077, %v7076
        %v7220 = vpack.c.bf16 %v7079, %v7078
        %v7221 = vpack.c.bf16 %v7081, %v7080
        %v7222 = vpack.c.bf16 %v7083, %v7082
        %v7223 = vpack.c.bf16 %v7085, %v7084
        %v7224 = vpack.c.bf16 %v7087, %v7086
        %v7225 = vpack.c.bf16 %v7089, %v7088
        %v7226 = vpack.c.bf16 %v7091, %v7090
        %v7227 = vpack.c.bf16 %v7093, %v7092
        %v7228 = vpack.c.bf16 %v7095, %v7094
        %v7229 = vpack.c.bf16 %v7097, %v7096
        %v7230 = vpack.c.bf16 %v7099, %v7098
        %v7231 = vpack.c.bf16 %v7101, %v7100
        %v7232 = vpack.c.bf16 %v7103, %v7102
        %v7233 = vpack.c.bf16 %v7105, %v7104
        %v7234 = vpack.c.bf16 %v7107, %v7106
        %v7235 = vpack.c.bf16 %v7109, %v7108
        %v7236 = vpack.c.bf16 %v7111, %v7110
        %v7237 = vpack.c.bf16 %v7113, %v7112
        %v7238 = vpack.c.bf16 %v7115, %v7114
        %v7239 = vpack.c.bf16 %v7117, %v7116
        %v7240 = vpack.c.bf16 %v7119, %v7118
        %v7241 = vpack.c.bf16 %v7121, %v7120
        %v7242 = vpack.c.bf16 %v7123, %v7122
        %v7243 = vpack.c.bf16 %v7125, %v7124
        %v7244 = vpack.c.bf16 %v7127, %v7126
        %v7245 = vpack.c.bf16 %v7129, %v7128
        %v7246 = vpack.c.bf16 %v7131, %v7130
        %v7247 = vpack.c.bf16 %v7133, %v7132
        %v7248 = vpack.c.bf16 %v7135, %v7134
        %v7249 = vpack.c.bf16 %v7137, %v7136
        %v7250 = vpack.c.bf16 %v7139, %v7138
        %v7251 = vpack.c.bf16 %v7141, %v7140
        %v7252 = vpack.c.bf16 %v7143, %v7142
        %v7253 = vpack.c.bf16 %v7145, %v7144
        %v7254 = vpack.c.bf16 %v7147, %v7146
        %v7255 = vpack.c.bf16 %v7149, %v7148
        %v7256 = vpack.c.bf16 %v7151, %v7150
        %v7257 = vpack.c.bf16 %v7153, %v7152
        %v7258 = vpack.c.bf16 %v7155, %v7154
        %v7259 = vpack.c.bf16 %v7157, %v7156
        %v7260 = vpack.c.bf16 %v7159, %v7158
        %v7261 = vpack.c.bf16 %v7161, %v7160
        %v7262 = vpack.c.bf16 %v7163, %v7162
        %v7263 = vpack.c.bf16 %v7165, %v7164
        %v7264 = vpack.c.bf16 %v7167, %v7166
        %v7265 = vpack.c.bf16 %v7169, %v7168
        %v7266 = vpack.c.bf16 %v7171, %v7170
        %v7267 = vpack.c.bf16 %v7173, %v7172
        %v7268 = vpack.c.bf16 %v7175, %v7174
        %v7269 = vpack.c.bf16 %v7177, %v7176
        %v7270 = vpack.c.bf16 %v7179, %v7178
        %v7271 = vpack.c.bf16 %v7181, %v7180
        %v7272 = vpack.c.bf16 %v7183, %v7182
        %v7273 = vpack.c.bf16 %v7185, %v7184
        %v7274 = vpack.c.bf16 %v7187, %v7186
        %v7275 = vpack.c.bf16 %v7189, %v7188
        %v7276 = vpack.c.bf16 %v7191, %v7190
        %v7277 = vpack.c.bf16 %v7193, %v7192
        %v7278 = vpack.c.bf16 %v7195, %v7194
        %v7279 = vpack.c.bf16 %v7197, %v7196
        %v7280 = vpack.c.bf16 %v7199, %v7198
        %v7281 = vpack.c.bf16 %v7201, %v7200
        %7282 = vmatprep.subr.bf16.mxu0 0
        %7283 = vmatpush1.bf16.msra.mxu0 %v7209
        %7284 = vmatprep.subr.bf16.mxu0 0
        %7285 = vmatpush1.bf16.msra.mxu0 %v7208
        %7286 = vmatprep.subr.bf16.mxu0 0
        %7287 = vmatpush1.bf16.msra.mxu0 %v7207
        %7288 = vmatprep.subr.bf16.mxu0 0
        %7289 = vmatpush1.bf16.msra.mxu0 %v7206
        %7290 = vmatprep.subr.bf16.mxu0 0
        %7291 = vmatpush1.bf16.msra.mxu0 %v7205
        %7292 = vmatprep.subr.bf16.mxu0 0
        %7293 = vmatpush1.bf16.msra.mxu0 %v7204
        %7294 = vmatprep.subr.bf16.mxu0 0
        %7295 = vmatpush1.bf16.msra.mxu0 %v7203
        %7296 = vmatprep.subr.bf16.mxu0 0
        %7297 = vmatpush1.bf16.msra.mxu0 %v7202
        %7298 = vmatprep.subr.bf16.mxu0 0
        %7299 = vmatpush2.bf16.msra.mxu0 %v7217
        %7300 = vmatprep.subr.bf16.mxu0 0
        %7301 = vmatpush2.bf16.msra.mxu0 %v7216
        %7302 = vmatprep.subr.bf16.mxu0 0
        %7303 = vmatpush2.bf16.msra.mxu0 %v7215
        %7304 = vmatprep.subr.bf16.mxu0 0
        %7305 = vmatpush2.bf16.msra.mxu0 %v7214
        %7306 = vmatprep.subr.bf16.mxu0 0
        %7307 = vmatpush2.bf16.msra.mxu0 %v7213
        %7308 = vmatprep.subr.bf16.mxu0 0
        %7309 = vmatpush2.bf16.msra.mxu0 %v7212
        %7310 = vmatprep.subr.bf16.mxu0 0
        %7311 = vmatpush2.bf16.msra.mxu0 %v7211
        %7312 = vmatprep.subr.bf16.mxu0 0
        %7313 = vmatpush2.bf16.msra.mxu0 %v7210
        %7314 = vmatprep.mubr.bf16.mxu0 %v3404
        %7315 = vmatmul.mubr.bf16.gmra.mxu0 %v3403
        %v7316 = vpop.f32.mrf.mxu0
        %v7317 = vadd.f32 %v1166, %v7316
        %v7318 = vpop.f32.mrf.mxu0
        %v7319 = vpop.f32.mrf.mxu0
        %v7320 = vadd.f32 %v1171, %v7319
        %v7321 = vpop.f32.mrf.mxu0
        %7322 = vmatprep.mubr.bf16.mxu0 %v3414
        %7323 = vmatmul.mubr.bf16.gmra.mxu0 %v3413
        %v7324 = vpop.f32.mrf.mxu0
        %v7325 = vadd.f32 %v1176, %v7324
        %v7326 = vpop.f32.mrf.mxu0
        %v7327 = vpop.f32.mrf.mxu0
        %v7328 = vadd.f32 %v1181, %v7327
        %v7329 = vpop.f32.mrf.mxu0
        %7330 = vmatprep.mubr.bf16.mxu0 %v3424
        %7331 = vmatmul.mubr.bf16.gmra.mxu0 %v3423
        %v7332 = vpop.f32.mrf.mxu0
        %v7333 = vadd.f32 %v1186, %v7332
        %v7334 = vpop.f32.mrf.mxu0
        %v7335 = vpop.f32.mrf.mxu0
        %v7336 = vadd.f32 %v1191, %v7335
        %v7337 = vpop.f32.mrf.mxu0
        %7338 = vmatprep.mubr.bf16.mxu0 %v3434
        %7339 = vmatmul.mubr.bf16.gmra.mxu0 %v3433
        %v7340 = vpop.f32.mrf.mxu0
        %v7341 = vadd.f32 %v1196, %v7340
        %v7342 = vpop.f32.mrf.mxu0
        %v7343 = vpop.f32.mrf.mxu0
        %v7344 = vadd.f32 %v1201, %v7343
        %v7345 = vpop.f32.mrf.mxu0
        %7346 = vmatprep.mubr.bf16.mxu0 %v3444
        %7347 = vmatmul.mubr.bf16.gmra.mxu0 %v3443
        %v7348 = vpop.f32.mrf.mxu0
        %v7349 = vadd.f32 %v1206, %v7348
        %v7350 = vpop.f32.mrf.mxu0
        %v7351 = vpop.f32.mrf.mxu0
        %v7352 = vadd.f32 %v1211, %v7351
        %v7353 = vpop.f32.mrf.mxu0
        %7354 = vmatprep.mubr.bf16.mxu0 %v3454
        %7355 = vmatmul.mubr.bf16.gmra.mxu0 %v3453
        %v7356 = vpop.f32.mrf.mxu0
        %v7357 = vadd.f32 %v1216, %v7356
        %v7358 = vpop.f32.mrf.mxu0
        %v7359 = vpop.f32.mrf.mxu0
        %v7360 = vadd.f32 %v1221, %v7359
        %v7361 = vpop.f32.mrf.mxu0
        %7362 = vmatprep.mubr.bf16.mxu0 %v3464
        %7363 = vmatmul.mubr.bf16.gmra.mxu0 %v3463
        %v7364 = vpop.f32.mrf.mxu0
        %v7365 = vadd.f32 %v1226, %v7364
        %v7366 = vpop.f32.mrf.mxu0
        %v7367 = vpop.f32.mrf.mxu0
        %v7368 = vadd.f32 %v1231, %v7367
        %v7369 = vpop.f32.mrf.mxu0
        %7370 = vmatprep.mubr.bf16.mxu0 %v3474
        %7371 = vmatmul.mubr.bf16.gmra.mxu0 %v3473
        %v7372 = vpop.f32.mrf.mxu0
        %v7373 = vadd.f32 %v1236, %v7372
        %v7374 = vpop.f32.mrf.mxu0
        %v7375 = vpop.f32.mrf.mxu0
        %v7376 = vadd.f32 %v1241, %v7375
        %v7377 = vpop.f32.mrf.mxu0
        %7378 = vmatprep.mubr.bf16.mxu0 %v3484
        %7379 = vmatmul.mubr.bf16.gmra.mxu0 %v3483
        %v7380 = vpop.f32.mrf.mxu0
        %v7381 = vadd.f32 %v1246, %v7380
        %v7382 = vpop.f32.mrf.mxu0
        %v7383 = vpop.f32.mrf.mxu0
        %v7384 = vadd.f32 %v1251, %v7383
        %v7385 = vpop.f32.mrf.mxu0
        %7386 = vmatprep.mubr.bf16.mxu0 %v3494
        %7387 = vmatmul.mubr.bf16.gmra.mxu0 %v3493
        %v7388 = vpop.f32.mrf.mxu0
        %v7389 = vadd.f32 %v1256, %v7388
        %v7390 = vpop.f32.mrf.mxu0
        %v7391 = vpop.f32.mrf.mxu0
        %v7392 = vadd.f32 %v1261, %v7391
        %v7393 = vpop.f32.mrf.mxu0
        %7394 = vmatprep.mubr.bf16.mxu0 %v3504
        %7395 = vmatmul.mubr.bf16.gmra.mxu0 %v3503
        %v7396 = vpop.f32.mrf.mxu0
        %v7397 = vadd.f32 %v1266, %v7396
        %v7398 = vpop.f32.mrf.mxu0
        %v7399 = vpop.f32.mrf.mxu0
        %v7400 = vadd.f32 %v1271, %v7399
        %v7401 = vpop.f32.mrf.mxu0
        %7402 = vmatprep.mubr.bf16.mxu0 %v3514
        %7403 = vmatmul.mubr.bf16.gmra.mxu0 %v3513
        %v7404 = vpop.f32.mrf.mxu0
        %v7405 = vadd.f32 %v1276, %v7404
        %v7406 = vpop.f32.mrf.mxu0
        %v7407 = vpop.f32.mrf.mxu0
        %v7408 = vadd.f32 %v1281, %v7407
        %v7409 = vpop.f32.mrf.mxu0
        %7410 = vmatprep.mubr.bf16.mxu0 %v3524
        %7411 = vmatmul.mubr.bf16.gmra.mxu0 %v3523
        %v7412 = vpop.f32.mrf.mxu0
        %v7413 = vadd.f32 %v1286, %v7412
        %v7414 = vpop.f32.mrf.mxu0
        %v7415 = vpop.f32.mrf.mxu0
        %v7416 = vadd.f32 %v1291, %v7415
        %v7417 = vpop.f32.mrf.mxu0
        %7418 = vmatprep.mubr.bf16.mxu0 %v3534
        %7419 = vmatmul.mubr.bf16.gmra.mxu0 %v3533
        %v7420 = vpop.f32.mrf.mxu0
        %v7421 = vadd.f32 %v1296, %v7420
        %v7422 = vpop.f32.mrf.mxu0
        %v7423 = vpop.f32.mrf.mxu0
        %v7424 = vadd.f32 %v1301, %v7423
        %v7425 = vpop.f32.mrf.mxu0
        %7426 = vmatprep.mubr.bf16.mxu0 %v3544
        %7427 = vmatmul.mubr.bf16.gmra.mxu0 %v3543
        %v7428 = vpop.f32.mrf.mxu0
        %v7429 = vadd.f32 %v1306, %v7428
        %v7430 = vpop.f32.mrf.mxu0
        %v7431 = vpop.f32.mrf.mxu0
        %v7432 = vadd.f32 %v1311, %v7431
        %v7433 = vpop.f32.mrf.mxu0
        %7434 = vmatprep.mubr.bf16.mxu0 %v3554
        %7435 = vmatmul.mubr.bf16.gmra.mxu0 %v3553
        %v7436 = vpop.f32.mrf.mxu0
        %v7437 = vadd.f32 %v1316, %v7436
        %v7438 = vpop.f32.mrf.mxu0
        %v7439 = vpop.f32.mrf.mxu0
        %v7440 = vadd.f32 %v1321, %v7439
        %v7441 = vpop.f32.mrf.mxu0
        %7442 = vmatprep.mubr.bf16.mxu0 %v3564
        %7443 = vmatmul.mubr.bf16.gmra.mxu0 %v3563
        %v7444 = vpop.f32.mrf.mxu0
        %v7445 = vadd.f32 %v1326, %v7444
        %v7446 = vpop.f32.mrf.mxu0
        %v7447 = vpop.f32.mrf.mxu0
        %v7448 = vadd.f32 %v1331, %v7447
        %v7449 = vpop.f32.mrf.mxu0
        %7450 = vmatprep.mubr.bf16.mxu0 %v3574
        %7451 = vmatmul.mubr.bf16.gmra.mxu0 %v3573
        %v7452 = vpop.f32.mrf.mxu0
        %v7453 = vadd.f32 %v1336, %v7452
        %v7454 = vpop.f32.mrf.mxu0
        %v7455 = vpop.f32.mrf.mxu0
        %v7456 = vadd.f32 %v1341, %v7455
        %v7457 = vpop.f32.mrf.mxu0
        %7458 = vmatprep.mubr.bf16.mxu0 %v3584
        %7459 = vmatmul.mubr.bf16.gmra.mxu0 %v3583
        %v7460 = vpop.f32.mrf.mxu0
        %v7461 = vadd.f32 %v1346, %v7460
        %v7462 = vpop.f32.mrf.mxu0
        %v7463 = vpop.f32.mrf.mxu0
        %v7464 = vadd.f32 %v1351, %v7463
        %v7465 = vpop.f32.mrf.mxu0
        %7466 = vmatprep.mubr.bf16.mxu0 %v3594
        %7467 = vmatmul.mubr.bf16.gmra.mxu0 %v3593
        %v7468 = vpop.f32.mrf.mxu0
        %v7469 = vadd.f32 %v1356, %v7468
        %v7470 = vpop.f32.mrf.mxu0
        %v7471 = vpop.f32.mrf.mxu0
        %v7472 = vadd.f32 %v1361, %v7471
        %v7473 = vpop.f32.mrf.mxu0
        %7474 = vmatprep.mubr.bf16.mxu0 %v3604
        %7475 = vmatmul.mubr.bf16.gmra.mxu0 %v3603
        %v7476 = vpop.f32.mrf.mxu0
        %v7477 = vadd.f32 %v1366, %v7476
        %v7478 = vpop.f32.mrf.mxu0
        %v7479 = vpop.f32.mrf.mxu0
        %v7480 = vadd.f32 %v1371, %v7479
        %v7481 = vpop.f32.mrf.mxu0
        %7482 = vmatprep.mubr.bf16.mxu0 %v3614
        %7483 = vmatmul.mubr.bf16.gmra.mxu0 %v3613
        %v7484 = vpop.f32.mrf.mxu0
        %v7485 = vadd.f32 %v1376, %v7484
        %v7486 = vpop.f32.mrf.mxu0
        %v7487 = vpop.f32.mrf.mxu0
        %v7488 = vadd.f32 %v1381, %v7487
        %v7489 = vpop.f32.mrf.mxu0
        %7490 = vmatprep.mubr.bf16.mxu0 %v3624
        %7491 = vmatmul.mubr.bf16.gmra.mxu0 %v3623
        %v7492 = vpop.f32.mrf.mxu0
        %v7493 = vadd.f32 %v1386, %v7492
        %v7494 = vpop.f32.mrf.mxu0
        %v7495 = vpop.f32.mrf.mxu0
        %v7496 = vadd.f32 %v1391, %v7495
        %v7497 = vpop.f32.mrf.mxu0
        %7498 = vmatprep.mubr.bf16.mxu0 %v3634
        %7499 = vmatmul.mubr.bf16.gmra.mxu0 %v3633
        %v7500 = vpop.f32.mrf.mxu0
        %v7501 = vadd.f32 %v1396, %v7500
        %v7502 = vpop.f32.mrf.mxu0
        %v7503 = vpop.f32.mrf.mxu0
        %v7504 = vadd.f32 %v1401, %v7503
        %v7505 = vpop.f32.mrf.mxu0
        %7506 = vmatprep.mubr.bf16.mxu0 %v3644
        %7507 = vmatmul.mubr.bf16.gmra.mxu0 %v3643
        %v7508 = vpop.f32.mrf.mxu0
        %v7509 = vadd.f32 %v1406, %v7508
        %v7510 = vpop.f32.mrf.mxu0
        %v7511 = vpop.f32.mrf.mxu0
        %v7512 = vadd.f32 %v1411, %v7511
        %v7513 = vpop.f32.mrf.mxu0
        %7514 = vmatprep.mubr.bf16.mxu0 %v3654
        %7515 = vmatmul.mubr.bf16.gmra.mxu0 %v3653
        %v7516 = vpop.f32.mrf.mxu0
        %v7517 = vadd.f32 %v1416, %v7516
        %v7518 = vpop.f32.mrf.mxu0
        %v7519 = vpop.f32.mrf.mxu0
        %v7520 = vadd.f32 %v1421, %v7519
        %v7521 = vpop.f32.mrf.mxu0
        %7522 = vmatprep.mubr.bf16.mxu0 %v3664
        %7523 = vmatmul.mubr.bf16.gmra.mxu0 %v3663
        %v7524 = vpop.f32.mrf.mxu0
        %v7525 = vadd.f32 %v1426, %v7524
        %v7526 = vpop.f32.mrf.mxu0
        %v7527 = vpop.f32.mrf.mxu0
        %v7528 = vadd.f32 %v1431, %v7527
        %v7529 = vpop.f32.mrf.mxu0
        %7530 = vmatprep.mubr.bf16.mxu0 %v3674
        %7531 = vmatmul.mubr.bf16.gmra.mxu0 %v3673
        %v7532 = vpop.f32.mrf.mxu0
        %v7533 = vadd.f32 %v1436, %v7532
        %v7534 = vpop.f32.mrf.mxu0
        %v7535 = vpop.f32.mrf.mxu0
        %v7536 = vadd.f32 %v1441, %v7535
        %v7537 = vpop.f32.mrf.mxu0
        %7538 = vmatprep.mubr.bf16.mxu0 %v3684
        %7539 = vmatmul.mubr.bf16.gmra.mxu0 %v3683
        %v7540 = vpop.f32.mrf.mxu0
        %v7541 = vadd.f32 %v1446, %v7540
        %v7542 = vpop.f32.mrf.mxu0
        %v7543 = vpop.f32.mrf.mxu0
        %v7544 = vadd.f32 %v1451, %v7543
        %v7545 = vpop.f32.mrf.mxu0
        %7546 = vmatprep.mubr.bf16.mxu0 %v3694
        %7547 = vmatmul.mubr.bf16.gmra.mxu0 %v3693
        %v7548 = vpop.f32.mrf.mxu0
        %v7549 = vadd.f32 %v1456, %v7548
        %v7550 = vpop.f32.mrf.mxu0
        %v7551 = vpop.f32.mrf.mxu0
        %v7552 = vadd.f32 %v1461, %v7551
        %v7553 = vpop.f32.mrf.mxu0
        %7554 = vmatprep.mubr.bf16.mxu0 %v3704
        %7555 = vmatmul.mubr.bf16.gmra.mxu0 %v3703
        %v7556 = vpop.f32.mrf.mxu0
        %v7557 = vadd.f32 %v1466, %v7556
        %v7558 = vpop.f32.mrf.mxu0
        %v7559 = vpop.f32.mrf.mxu0
        %v7560 = vadd.f32 %v1471, %v7559
        %v7561 = vpop.f32.mrf.mxu0
        %7562 = vmatprep.mubr.bf16.mxu0 %v3714
        %7563 = vmatmul.mubr.bf16.gmra.mxu0 %v3713
        %v7564 = vpop.f32.mrf.mxu0
        %v7565 = vadd.f32 %v1476, %v7564
        %v7566 = vpop.f32.mrf.mxu0
        %v7567 = vpop.f32.mrf.mxu0
        %v7568 = vadd.f32 %v1481, %v7567
        %v7569 = vpop.f32.mrf.mxu0
        %7570 = vmatprep.mubr.bf16.mxu0 %v3724
        %7571 = vmatmul.mubr.bf16.gmra.mxu0 %v3723
        %v7572 = vpop.f32.mrf.mxu0
        %v7573 = vadd.f32 %v1486, %v7572
        %v7574 = vpop.f32.mrf.mxu0
        %v7575 = vpop.f32.mrf.mxu0
        %v7576 = vadd.f32 %v1491, %v7575
        %v7577 = vpop.f32.mrf.mxu0
        %7578 = vmatprep.mubr.bf16.mxu0 %v3734
        %7579 = vmatmul.mubr.bf16.gmra.mxu0 %v3733
        %v7580 = vpop.f32.mrf.mxu0
        %v7581 = vadd.f32 %v1496, %v7580
        %v7582 = vpop.f32.mrf.mxu0
        %v7583 = vpop.f32.mrf.mxu0
        %v7584 = vadd.f32 %v1501, %v7583
        %v7585 = vpop.f32.mrf.mxu0
        %7586 = vmatprep.mubr.bf16.mxu0 %v3744
        %7587 = vmatmul.mubr.bf16.gmra.mxu0 %v3743
        %v7588 = vpop.f32.mrf.mxu0
        %v7589 = vadd.f32 %v1506, %v7588
        %v7590 = vpop.f32.mrf.mxu0
        %v7591 = vpop.f32.mrf.mxu0
        %v7592 = vadd.f32 %v1511, %v7591
        %v7593 = vpop.f32.mrf.mxu0
        %7594 = vmatprep.mubr.bf16.mxu0 %v3754
        %7595 = vmatmul.mubr.bf16.gmra.mxu0 %v3753
        %v7596 = vpop.f32.mrf.mxu0
        %v7597 = vadd.f32 %v1516, %v7596
        %v7598 = vpop.f32.mrf.mxu0
        %v7599 = vpop.f32.mrf.mxu0
        %v7600 = vadd.f32 %v1521, %v7599
        %v7601 = vpop.f32.mrf.mxu0
        %7602 = vmatprep.mubr.bf16.mxu0 %v3764
        %7603 = vmatmul.mubr.bf16.gmra.mxu0 %v3763
        %v7604 = vpop.f32.mrf.mxu0
        %v7605 = vadd.f32 %v1526, %v7604
        %v7606 = vpop.f32.mrf.mxu0
        %v7607 = vpop.f32.mrf.mxu0
        %v7608 = vadd.f32 %v1531, %v7607
        %v7609 = vpop.f32.mrf.mxu0
        %7610 = vmatprep.mubr.bf16.mxu0 %v3774
        %7611 = vmatmul.mubr.bf16.gmra.mxu0 %v3773
        %v7612 = vpop.f32.mrf.mxu0
        %v7613 = vadd.f32 %v1536, %v7612
        %v7614 = vpop.f32.mrf.mxu0
        %v7615 = vpop.f32.mrf.mxu0
        %v7616 = vadd.f32 %v1541, %v7615
        %v7617 = vpop.f32.mrf.mxu0
        %7618 = vmatprep.mubr.bf16.mxu0 %v3784
        %7619 = vmatmul.mubr.bf16.gmra.mxu0 %v3783
        %v7620 = vpop.f32.mrf.mxu0
        %v7621 = vadd.f32 %v1546, %v7620
        %v7622 = vpop.f32.mrf.mxu0
        %v7623 = vpop.f32.mrf.mxu0
        %v7624 = vadd.f32 %v1551, %v7623
        %v7625 = vpop.f32.mrf.mxu0
        %7626 = vmatprep.mubr.bf16.mxu0 %v3794
        %7627 = vmatmul.mubr.bf16.gmra.mxu0 %v3793
        %v7628 = vpop.f32.mrf.mxu0
        %v7629 = vadd.f32 %v1556, %v7628
        %v7630 = vpop.f32.mrf.mxu0
        %v7631 = vpop.f32.mrf.mxu0
        %v7632 = vadd.f32 %v1561, %v7631
        %v7633 = vpop.f32.mrf.mxu0
        %7634 = vmatprep.mubr.bf16.mxu0 %v3804
        %7635 = vmatmul.mubr.bf16.gmra.mxu0 %v3803
        %v7636 = vpop.f32.mrf.mxu0
        %v7637 = vadd.f32 %v1566, %v7636
        %v7638 = vpop.f32.mrf.mxu0
        %v7639 = vpop.f32.mrf.mxu0
        %v7640 = vadd.f32 %v1571, %v7639
        %v7641 = vpop.f32.mrf.mxu0
        %7642 = vmatprep.mubr.bf16.mxu0 %v3814
        %7643 = vmatmul.mubr.bf16.gmra.mxu0 %v3813
        %v7644 = vpop.f32.mrf.mxu0
        %v7645 = vadd.f32 %v1576, %v7644
        %v7646 = vpop.f32.mrf.mxu0
        %v7647 = vpop.f32.mrf.mxu0
        %v7648 = vadd.f32 %v1581, %v7647
        %v7649 = vpop.f32.mrf.mxu0
        %7650 = vmatprep.mubr.bf16.mxu0 %v3824
        %7651 = vmatmul.mubr.bf16.gmra.mxu0 %v3823
        %v7652 = vpop.f32.mrf.mxu0
        %v7653 = vadd.f32 %v1586, %v7652
        %v7654 = vpop.f32.mrf.mxu0
        %v7655 = vpop.f32.mrf.mxu0
        %v7656 = vadd.f32 %v1591, %v7655
        %v7657 = vpop.f32.mrf.mxu0
        %7658 = vmatprep.mubr.bf16.mxu0 %v3834
        %7659 = vmatmul.mubr.bf16.gmra.mxu0 %v3833
        %v7660 = vpop.f32.mrf.mxu0
        %v7661 = vadd.f32 %v1596, %v7660
        %v7662 = vpop.f32.mrf.mxu0
        %v7663 = vpop.f32.mrf.mxu0
        %v7664 = vadd.f32 %v1601, %v7663
        %v7665 = vpop.f32.mrf.mxu0
        %7666 = vmatprep.mubr.bf16.mxu0 %v3844
        %7667 = vmatmul.mubr.bf16.gmra.mxu0 %v3843
        %v7668 = vpop.f32.mrf.mxu0
        %v7669 = vadd.f32 %v1606, %v7668
        %v7670 = vpop.f32.mrf.mxu0
        %v7671 = vpop.f32.mrf.mxu0
        %v7672 = vadd.f32 %v1611, %v7671
        %v7673 = vpop.f32.mrf.mxu0
        %7674 = vmatprep.mubr.bf16.mxu0 %v3854
        %7675 = vmatmul.mubr.bf16.gmra.mxu0 %v3853
        %v7676 = vpop.f32.mrf.mxu0
        %v7677 = vadd.f32 %v1616, %v7676
        %v7678 = vpop.f32.mrf.mxu0
        %v7679 = vpop.f32.mrf.mxu0
        %v7680 = vadd.f32 %v1621, %v7679
        %v7681 = vpop.f32.mrf.mxu0
        %7682 = vmatprep.mubr.bf16.mxu0 %v3864
        %7683 = vmatmul.mubr.bf16.gmra.mxu0 %v3863
        %v7684 = vpop.f32.mrf.mxu0
        %v7685 = vadd.f32 %v1626, %v7684
        %v7686 = vpop.f32.mrf.mxu0
        %v7687 = vpop.f32.mrf.mxu0
        %v7688 = vadd.f32 %v1631, %v7687
        %v7689 = vpop.f32.mrf.mxu0
        %7690 = vmatprep.mubr.bf16.mxu0 %v3874
        %7691 = vmatmul.mubr.bf16.gmra.mxu0 %v3873
        %v7692 = vpop.f32.mrf.mxu0
        %v7693 = vadd.f32 %v1636, %v7692
        %v7694 = vpop.f32.mrf.mxu0
        %v7695 = vpop.f32.mrf.mxu0
        %v7696 = vadd.f32 %v1641, %v7695
        %v7697 = vpop.f32.mrf.mxu0
        %7698 = vmatprep.mubr.bf16.mxu0 %v3884
        %7699 = vmatmul.mubr.bf16.gmra.mxu0 %v3883
        %v7700 = vpop.f32.mrf.mxu0
        %v7701 = vadd.f32 %v1646, %v7700
        %v7702 = vpop.f32.mrf.mxu0
        %v7703 = vpop.f32.mrf.mxu0
        %v7704 = vadd.f32 %v1651, %v7703
        %v7705 = vpop.f32.mrf.mxu0
        %7706 = vmatprep.mubr.bf16.mxu0 %v3894
        %7707 = vmatmul.mubr.bf16.gmra.mxu0 %v3893
        %v7708 = vpop.f32.mrf.mxu0
        %v7709 = vadd.f32 %v1656, %v7708
        %v7710 = vpop.f32.mrf.mxu0
        %v7711 = vpop.f32.mrf.mxu0
        %v7712 = vadd.f32 %v1661, %v7711
        %v7713 = vpop.f32.mrf.mxu0
        %7714 = vmatprep.mubr.bf16.mxu0 %v3904
        %7715 = vmatmul.mubr.bf16.gmra.mxu0 %v3903
        %v7716 = vpop.f32.mrf.mxu0
        %v7717 = vadd.f32 %v1666, %v7716
        %v7718 = vpop.f32.mrf.mxu0
        %v7719 = vpop.f32.mrf.mxu0
        %v7720 = vadd.f32 %v1671, %v7719
        %v7721 = vpop.f32.mrf.mxu0
        %7722 = vmatprep.mubr.bf16.mxu0 %v3914
        %7723 = vmatmul.mubr.bf16.gmra.mxu0 %v3913
        %v7724 = vpop.f32.mrf.mxu0
        %v7725 = vadd.f32 %v1676, %v7724
        %v7726 = vpop.f32.mrf.mxu0
        %v7727 = vpop.f32.mrf.mxu0
        %v7728 = vadd.f32 %v1681, %v7727
        %v7729 = vpop.f32.mrf.mxu0
        %7730 = vmatprep.mubr.bf16.mxu0 %v3924
        %7731 = vmatmul.mubr.bf16.gmra.mxu0 %v3923
        %v7732 = vpop.f32.mrf.mxu0
        %v7733 = vadd.f32 %v1686, %v7732
        %v7734 = vpop.f32.mrf.mxu0
        %v7735 = vpop.f32.mrf.mxu0
        %v7736 = vadd.f32 %v1691, %v7735
        %v7737 = vpop.f32.mrf.mxu0
        %7738 = vmatprep.mubr.bf16.mxu0 %v3934
        %7739 = vmatmul.mubr.bf16.gmra.mxu0 %v3933
        %v7740 = vpop.f32.mrf.mxu0
        %v7741 = vadd.f32 %v1696, %v7740
        %v7742 = vpop.f32.mrf.mxu0
        %v7743 = vpop.f32.mrf.mxu0
        %v7744 = vadd.f32 %v1701, %v7743
        %v7745 = vpop.f32.mrf.mxu0
        %7746 = vmatprep.mubr.bf16.mxu0 %v3944
        %7747 = vmatmul.mubr.bf16.gmra.mxu0 %v3943
        %v7748 = vpop.f32.mrf.mxu0
        %v7749 = vadd.f32 %v1706, %v7748
        %v7750 = vpop.f32.mrf.mxu0
        %v7751 = vpop.f32.mrf.mxu0
        %v7752 = vadd.f32 %v1711, %v7751
        %v7753 = vpop.f32.mrf.mxu0
        %7754 = vmatprep.mubr.bf16.mxu0 %v3954
        %7755 = vmatmul.mubr.bf16.gmra.mxu0 %v3953
        %v7756 = vpop.f32.mrf.mxu0
        %v7757 = vadd.f32 %v1716, %v7756
        %v7758 = vpop.f32.mrf.mxu0
        %v7759 = vpop.f32.mrf.mxu0
        %v7760 = vadd.f32 %v1721, %v7759
        %v7761 = vpop.f32.mrf.mxu0
        %7762 = vdwg.mxu0
        %7763 = vmatprep.subr.bf16.mxu0 0
        %7764 = vmatpush1.bf16.msra.mxu0 %v7225
        %7765 = vmatprep.subr.bf16.mxu0 0
        %7766 = vmatpush1.bf16.msra.mxu0 %v7224
        %7767 = vmatprep.subr.bf16.mxu0 0
        %7768 = vmatpush1.bf16.msra.mxu0 %v7223
        %7769 = vmatprep.subr.bf16.mxu0 0
        %7770 = vmatpush1.bf16.msra.mxu0 %v7222
        %7771 = vmatprep.subr.bf16.mxu0 0
        %7772 = vmatpush1.bf16.msra.mxu0 %v7221
        %7773 = vmatprep.subr.bf16.mxu0 0
        %7774 = vmatpush1.bf16.msra.mxu0 %v7220
        %7775 = vmatprep.subr.bf16.mxu0 0
        %7776 = vmatpush1.bf16.msra.mxu0 %v7219
        %7777 = vmatprep.subr.bf16.mxu0 0
        %7778 = vmatpush1.bf16.msra.mxu0 %v7218
        %7779 = vmatprep.subr.bf16.mxu0 0
        %7780 = vmatpush2.bf16.msra.mxu0 %v7233
        %7781 = vmatprep.subr.bf16.mxu0 0
        %7782 = vmatpush2.bf16.msra.mxu0 %v7232
        %7783 = vmatprep.subr.bf16.mxu0 0
        %7784 = vmatpush2.bf16.msra.mxu0 %v7231
        %7785 = vmatprep.subr.bf16.mxu0 0
        %7786 = vmatpush2.bf16.msra.mxu0 %v7230
        %7787 = vmatprep.subr.bf16.mxu0 0
        %7788 = vmatpush2.bf16.msra.mxu0 %v7229
        %7789 = vmatprep.subr.bf16.mxu0 0
        %7790 = vmatpush2.bf16.msra.mxu0 %v7228
        %7791 = vmatprep.subr.bf16.mxu0 0
        %7792 = vmatpush2.bf16.msra.mxu0 %v7227
        %7793 = vmatprep.subr.bf16.mxu0 0
        %7794 = vmatpush2.bf16.msra.mxu0 %v7226
        %7795 = vmatprep.mubr.bf16.mxu0 %v3406
        %7796 = vmatmul.mubr.bf16.gmra.mxu0 %v3405
        %v7797 = vpop.f32.mrf.mxu0
        %v7798 = vadd.f32 %v7317, %v7797
        %v7799 = vpop.f32.mrf.mxu0
        %v7800 = vpop.f32.mrf.mxu0
        %v7801 = vadd.f32 %v7320, %v7800
        %v7802 = vpop.f32.mrf.mxu0
        %7803 = vmatprep.mubr.bf16.mxu0 %v3416
        %7804 = vmatmul.mubr.bf16.gmra.mxu0 %v3415
        %v7805 = vpop.f32.mrf.mxu0
        %v7806 = vadd.f32 %v7325, %v7805
        %v7807 = vpop.f32.mrf.mxu0
        %v7808 = vpop.f32.mrf.mxu0
        %v7809 = vadd.f32 %v7328, %v7808
        %v7810 = vpop.f32.mrf.mxu0
        %7811 = vmatprep.mubr.bf16.mxu0 %v3426
        %7812 = vmatmul.mubr.bf16.gmra.mxu0 %v3425
        %v7813 = vpop.f32.mrf.mxu0
        %v7814 = vadd.f32 %v7333, %v7813
        %v7815 = vpop.f32.mrf.mxu0
        %v7816 = vpop.f32.mrf.mxu0
        %v7817 = vadd.f32 %v7336, %v7816
        %v7818 = vpop.f32.mrf.mxu0
        %7819 = vmatprep.mubr.bf16.mxu0 %v3436
        %7820 = vmatmul.mubr.bf16.gmra.mxu0 %v3435
        %v7821 = vpop.f32.mrf.mxu0
        %v7822 = vadd.f32 %v7341, %v7821
        %v7823 = vpop.f32.mrf.mxu0
        %v7824 = vpop.f32.mrf.mxu0
        %v7825 = vadd.f32 %v7344, %v7824
        %v7826 = vpop.f32.mrf.mxu0
        %7827 = vmatprep.mubr.bf16.mxu0 %v3446
        %7828 = vmatmul.mubr.bf16.gmra.mxu0 %v3445
        %v7829 = vpop.f32.mrf.mxu0
        %v7830 = vadd.f32 %v7349, %v7829
        %v7831 = vpop.f32.mrf.mxu0
        %v7832 = vpop.f32.mrf.mxu0
        %v7833 = vadd.f32 %v7352, %v7832
        %v7834 = vpop.f32.mrf.mxu0
        %7835 = vmatprep.mubr.bf16.mxu0 %v3456
        %7836 = vmatmul.mubr.bf16.gmra.mxu0 %v3455
        %v7837 = vpop.f32.mrf.mxu0
        %v7838 = vadd.f32 %v7357, %v7837
        %v7839 = vpop.f32.mrf.mxu0
        %v7840 = vpop.f32.mrf.mxu0
        %v7841 = vadd.f32 %v7360, %v7840
        %v7842 = vpop.f32.mrf.mxu0
        %7843 = vmatprep.mubr.bf16.mxu0 %v3466
        %7844 = vmatmul.mubr.bf16.gmra.mxu0 %v3465
        %v7845 = vpop.f32.mrf.mxu0
        %v7846 = vadd.f32 %v7365, %v7845
        %v7847 = vpop.f32.mrf.mxu0
        %v7848 = vpop.f32.mrf.mxu0
        %v7849 = vadd.f32 %v7368, %v7848
        %v7850 = vpop.f32.mrf.mxu0
        %7851 = vmatprep.mubr.bf16.mxu0 %v3476
        %7852 = vmatmul.mubr.bf16.gmra.mxu0 %v3475
        %v7853 = vpop.f32.mrf.mxu0
        %v7854 = vadd.f32 %v7373, %v7853
        %v7855 = vpop.f32.mrf.mxu0
        %v7856 = vpop.f32.mrf.mxu0
        %v7857 = vadd.f32 %v7376, %v7856
        %v7858 = vpop.f32.mrf.mxu0
        %7859 = vmatprep.mubr.bf16.mxu0 %v3486
        %7860 = vmatmul.mubr.bf16.gmra.mxu0 %v3485
        %v7861 = vpop.f32.mrf.mxu0
        %v7862 = vadd.f32 %v7381, %v7861
        %v7863 = vpop.f32.mrf.mxu0
        %v7864 = vpop.f32.mrf.mxu0
        %v7865 = vadd.f32 %v7384, %v7864
        %v7866 = vpop.f32.mrf.mxu0
        %7867 = vmatprep.mubr.bf16.mxu0 %v3496
        %7868 = vmatmul.mubr.bf16.gmra.mxu0 %v3495
        %v7869 = vpop.f32.mrf.mxu0
        %v7870 = vadd.f32 %v7389, %v7869
        %v7871 = vpop.f32.mrf.mxu0
        %v7872 = vpop.f32.mrf.mxu0
        %v7873 = vadd.f32 %v7392, %v7872
        %v7874 = vpop.f32.mrf.mxu0
        %7875 = vmatprep.mubr.bf16.mxu0 %v3506
        %7876 = vmatmul.mubr.bf16.gmra.mxu0 %v3505
        %v7877 = vpop.f32.mrf.mxu0
        %v7878 = vadd.f32 %v7397, %v7877
        %v7879 = vpop.f32.mrf.mxu0
        %v7880 = vpop.f32.mrf.mxu0
        %v7881 = vadd.f32 %v7400, %v7880
        %v7882 = vpop.f32.mrf.mxu0
        %7883 = vmatprep.mubr.bf16.mxu0 %v3516
        %7884 = vmatmul.mubr.bf16.gmra.mxu0 %v3515
        %v7885 = vpop.f32.mrf.mxu0
        %v7886 = vadd.f32 %v7405, %v7885
        %v7887 = vpop.f32.mrf.mxu0
        %v7888 = vpop.f32.mrf.mxu0
        %v7889 = vadd.f32 %v7408, %v7888
        %v7890 = vpop.f32.mrf.mxu0
        %7891 = vmatprep.mubr.bf16.mxu0 %v3526
        %7892 = vmatmul.mubr.bf16.gmra.mxu0 %v3525
        %v7893 = vpop.f32.mrf.mxu0
        %v7894 = vadd.f32 %v7413, %v7893
        %v7895 = vpop.f32.mrf.mxu0
        %v7896 = vpop.f32.mrf.mxu0
        %v7897 = vadd.f32 %v7416, %v7896
        %v7898 = vpop.f32.mrf.mxu0
        %7899 = vmatprep.mubr.bf16.mxu0 %v3536
        %7900 = vmatmul.mubr.bf16.gmra.mxu0 %v3535
        %v7901 = vpop.f32.mrf.mxu0
        %v7902 = vadd.f32 %v7421, %v7901
        %v7903 = vpop.f32.mrf.mxu0
        %v7904 = vpop.f32.mrf.mxu0
        %v7905 = vadd.f32 %v7424, %v7904
        %v7906 = vpop.f32.mrf.mxu0
        %7907 = vmatprep.mubr.bf16.mxu0 %v3546
        %7908 = vmatmul.mubr.bf16.gmra.mxu0 %v3545
        %v7909 = vpop.f32.mrf.mxu0
        %v7910 = vadd.f32 %v7429, %v7909
        %v7911 = vpop.f32.mrf.mxu0
        %v7912 = vpop.f32.mrf.mxu0
        %v7913 = vadd.f32 %v7432, %v7912
        %v7914 = vpop.f32.mrf.mxu0
        %7915 = vmatprep.mubr.bf16.mxu0 %v3556
        %7916 = vmatmul.mubr.bf16.gmra.mxu0 %v3555
        %v7917 = vpop.f32.mrf.mxu0
        %v7918 = vadd.f32 %v7437, %v7917
        %v7919 = vpop.f32.mrf.mxu0
        %v7920 = vpop.f32.mrf.mxu0
        %v7921 = vadd.f32 %v7440, %v7920
        %v7922 = vpop.f32.mrf.mxu0
        %7923 = vmatprep.mubr.bf16.mxu0 %v3566
        %7924 = vmatmul.mubr.bf16.gmra.mxu0 %v3565
        %v7925 = vpop.f32.mrf.mxu0
        %v7926 = vadd.f32 %v7445, %v7925
        %v7927 = vpop.f32.mrf.mxu0
        %v7928 = vpop.f32.mrf.mxu0
        %v7929 = vadd.f32 %v7448, %v7928
        %v7930 = vpop.f32.mrf.mxu0
        %7931 = vmatprep.mubr.bf16.mxu0 %v3576
        %7932 = vmatmul.mubr.bf16.gmra.mxu0 %v3575
        %v7933 = vpop.f32.mrf.mxu0
        %v7934 = vadd.f32 %v7453, %v7933
        %v7935 = vpop.f32.mrf.mxu0
        %v7936 = vpop.f32.mrf.mxu0
        %v7937 = vadd.f32 %v7456, %v7936
        %v7938 = vpop.f32.mrf.mxu0
        %7939 = vmatprep.mubr.bf16.mxu0 %v3586
        %7940 = vmatmul.mubr.bf16.gmra.mxu0 %v3585
        %v7941 = vpop.f32.mrf.mxu0
        %v7942 = vadd.f32 %v7461, %v7941
        %v7943 = vpop.f32.mrf.mxu0
        %v7944 = vpop.f32.mrf.mxu0
        %v7945 = vadd.f32 %v7464, %v7944
        %v7946 = vpop.f32.mrf.mxu0
        %7947 = vmatprep.mubr.bf16.mxu0 %v3596
        %7948 = vmatmul.mubr.bf16.gmra.mxu0 %v3595
        %v7949 = vpop.f32.mrf.mxu0
        %v7950 = vadd.f32 %v7469, %v7949
        %v7951 = vpop.f32.mrf.mxu0
        %v7952 = vpop.f32.mrf.mxu0
        %v7953 = vadd.f32 %v7472, %v7952
        %v7954 = vpop.f32.mrf.mxu0
        %7955 = vmatprep.mubr.bf16.mxu0 %v3606
        %7956 = vmatmul.mubr.bf16.gmra.mxu0 %v3605
        %v7957 = vpop.f32.mrf.mxu0
        %v7958 = vadd.f32 %v7477, %v7957
        %v7959 = vpop.f32.mrf.mxu0
        %v7960 = vpop.f32.mrf.mxu0
        %v7961 = vadd.f32 %v7480, %v7960
        %v7962 = vpop.f32.mrf.mxu0
        %7963 = vmatprep.mubr.bf16.mxu0 %v3616
        %7964 = vmatmul.mubr.bf16.gmra.mxu0 %v3615
        %v7965 = vpop.f32.mrf.mxu0
        %v7966 = vadd.f32 %v7485, %v7965
        %v7967 = vpop.f32.mrf.mxu0
        %v7968 = vpop.f32.mrf.mxu0
        %v7969 = vadd.f32 %v7488, %v7968
        %v7970 = vpop.f32.mrf.mxu0
        %7971 = vmatprep.mubr.bf16.mxu0 %v3626
        %7972 = vmatmul.mubr.bf16.gmra.mxu0 %v3625
        %v7973 = vpop.f32.mrf.mxu0
        %v7974 = vadd.f32 %v7493, %v7973
        %v7975 = vpop.f32.mrf.mxu0
        %v7976 = vpop.f32.mrf.mxu0
        %v7977 = vadd.f32 %v7496, %v7976
        %v7978 = vpop.f32.mrf.mxu0
        %7979 = vmatprep.mubr.bf16.mxu0 %v3636
        %7980 = vmatmul.mubr.bf16.gmra.mxu0 %v3635
        %v7981 = vpop.f32.mrf.mxu0
        %v7982 = vadd.f32 %v7501, %v7981
        %v7983 = vpop.f32.mrf.mxu0
        %v7984 = vpop.f32.mrf.mxu0
        %v7985 = vadd.f32 %v7504, %v7984
        %v7986 = vpop.f32.mrf.mxu0
        %7987 = vmatprep.mubr.bf16.mxu0 %v3646
        %7988 = vmatmul.mubr.bf16.gmra.mxu0 %v3645
        %v7989 = vpop.f32.mrf.mxu0
        %v7990 = vadd.f32 %v7509, %v7989
        %v7991 = vpop.f32.mrf.mxu0
        %v7992 = vpop.f32.mrf.mxu0
        %v7993 = vadd.f32 %v7512, %v7992
        %v7994 = vpop.f32.mrf.mxu0
        %7995 = vmatprep.mubr.bf16.mxu0 %v3656
        %7996 = vmatmul.mubr.bf16.gmra.mxu0 %v3655
        %v7997 = vpop.f32.mrf.mxu0
        %v7998 = vadd.f32 %v7517, %v7997
        %v7999 = vpop.f32.mrf.mxu0
        %v8000 = vpop.f32.mrf.mxu0
        %v8001 = vadd.f32 %v7520, %v8000
        %v8002 = vpop.f32.mrf.mxu0
        %8003 = vmatprep.mubr.bf16.mxu0 %v3666
        %8004 = vmatmul.mubr.bf16.gmra.mxu0 %v3665
        %v8005 = vpop.f32.mrf.mxu0
        %v8006 = vadd.f32 %v7525, %v8005
        %v8007 = vpop.f32.mrf.mxu0
        %v8008 = vpop.f32.mrf.mxu0
        %v8009 = vadd.f32 %v7528, %v8008
        %v8010 = vpop.f32.mrf.mxu0
        %8011 = vmatprep.mubr.bf16.mxu0 %v3676
        %8012 = vmatmul.mubr.bf16.gmra.mxu0 %v3675
        %v8013 = vpop.f32.mrf.mxu0
        %v8014 = vadd.f32 %v7533, %v8013
        %v8015 = vpop.f32.mrf.mxu0
        %v8016 = vpop.f32.mrf.mxu0
        %v8017 = vadd.f32 %v7536, %v8016
        %v8018 = vpop.f32.mrf.mxu0
        %8019 = vmatprep.mubr.bf16.mxu0 %v3686
        %8020 = vmatmul.mubr.bf16.gmra.mxu0 %v3685
        %v8021 = vpop.f32.mrf.mxu0
        %v8022 = vadd.f32 %v7541, %v8021
        %v8023 = vpop.f32.mrf.mxu0
        %v8024 = vpop.f32.mrf.mxu0
        %v8025 = vadd.f32 %v7544, %v8024
        %v8026 = vpop.f32.mrf.mxu0
        %8027 = vmatprep.mubr.bf16.mxu0 %v3696
        %8028 = vmatmul.mubr.bf16.gmra.mxu0 %v3695
        %v8029 = vpop.f32.mrf.mxu0
        %v8030 = vadd.f32 %v7549, %v8029
        %v8031 = vpop.f32.mrf.mxu0
        %v8032 = vpop.f32.mrf.mxu0
        %v8033 = vadd.f32 %v7552, %v8032
        %v8034 = vpop.f32.mrf.mxu0
        %8035 = vmatprep.mubr.bf16.mxu0 %v3706
        %8036 = vmatmul.mubr.bf16.gmra.mxu0 %v3705
        %v8037 = vpop.f32.mrf.mxu0
        %v8038 = vadd.f32 %v7557, %v8037
        %v8039 = vpop.f32.mrf.mxu0
        %v8040 = vpop.f32.mrf.mxu0
        %v8041 = vadd.f32 %v7560, %v8040
        %v8042 = vpop.f32.mrf.mxu0
        %8043 = vmatprep.mubr.bf16.mxu0 %v3716
        %8044 = vmatmul.mubr.bf16.gmra.mxu0 %v3715
        %v8045 = vpop.f32.mrf.mxu0
        %v8046 = vadd.f32 %v7565, %v8045
        %v8047 = vpop.f32.mrf.mxu0
        %v8048 = vpop.f32.mrf.mxu0
        %v8049 = vadd.f32 %v7568, %v8048
        %v8050 = vpop.f32.mrf.mxu0
        %8051 = vmatprep.mubr.bf16.mxu0 %v3726
        %8052 = vmatmul.mubr.bf16.gmra.mxu0 %v3725
        %v8053 = vpop.f32.mrf.mxu0
        %v8054 = vadd.f32 %v7573, %v8053
        %v8055 = vpop.f32.mrf.mxu0
        %v8056 = vpop.f32.mrf.mxu0
        %v8057 = vadd.f32 %v7576, %v8056
        %v8058 = vpop.f32.mrf.mxu0
        %8059 = vmatprep.mubr.bf16.mxu0 %v3736
        %8060 = vmatmul.mubr.bf16.gmra.mxu0 %v3735
        %v8061 = vpop.f32.mrf.mxu0
        %v8062 = vadd.f32 %v7581, %v8061
        %v8063 = vpop.f32.mrf.mxu0
        %v8064 = vpop.f32.mrf.mxu0
        %v8065 = vadd.f32 %v7584, %v8064
        %v8066 = vpop.f32.mrf.mxu0
        %8067 = vmatprep.mubr.bf16.mxu0 %v3746
        %8068 = vmatmul.mubr.bf16.gmra.mxu0 %v3745
        %v8069 = vpop.f32.mrf.mxu0
        %v8070 = vadd.f32 %v7589, %v8069
        %v8071 = vpop.f32.mrf.mxu0
        %v8072 = vpop.f32.mrf.mxu0
        %v8073 = vadd.f32 %v7592, %v8072
        %v8074 = vpop.f32.mrf.mxu0
        %8075 = vmatprep.mubr.bf16.mxu0 %v3756
        %8076 = vmatmul.mubr.bf16.gmra.mxu0 %v3755
        %v8077 = vpop.f32.mrf.mxu0
        %v8078 = vadd.f32 %v7597, %v8077
        %v8079 = vpop.f32.mrf.mxu0
        %v8080 = vpop.f32.mrf.mxu0
        %v8081 = vadd.f32 %v7600, %v8080
        %v8082 = vpop.f32.mrf.mxu0
        %8083 = vmatprep.mubr.bf16.mxu0 %v3766
        %8084 = vmatmul.mubr.bf16.gmra.mxu0 %v3765
        %v8085 = vpop.f32.mrf.mxu0
        %v8086 = vadd.f32 %v7605, %v8085
        %v8087 = vpop.f32.mrf.mxu0
        %v8088 = vpop.f32.mrf.mxu0
        %v8089 = vadd.f32 %v7608, %v8088
        %v8090 = vpop.f32.mrf.mxu0
        %8091 = vmatprep.mubr.bf16.mxu0 %v3776
        %8092 = vmatmul.mubr.bf16.gmra.mxu0 %v3775
        %v8093 = vpop.f32.mrf.mxu0
        %v8094 = vadd.f32 %v7613, %v8093
        %v8095 = vpop.f32.mrf.mxu0
        %v8096 = vpop.f32.mrf.mxu0
        %v8097 = vadd.f32 %v7616, %v8096
        %v8098 = vpop.f32.mrf.mxu0
        %8099 = vmatprep.mubr.bf16.mxu0 %v3786
        %8100 = vmatmul.mubr.bf16.gmra.mxu0 %v3785
        %v8101 = vpop.f32.mrf.mxu0
        %v8102 = vadd.f32 %v7621, %v8101
        %v8103 = vpop.f32.mrf.mxu0
        %v8104 = vpop.f32.mrf.mxu0
        %v8105 = vadd.f32 %v7624, %v8104
        %v8106 = vpop.f32.mrf.mxu0
        %8107 = vmatprep.mubr.bf16.mxu0 %v3796
        %8108 = vmatmul.mubr.bf16.gmra.mxu0 %v3795
        %v8109 = vpop.f32.mrf.mxu0
        %v8110 = vadd.f32 %v7629, %v8109
        %v8111 = vpop.f32.mrf.mxu0
        %v8112 = vpop.f32.mrf.mxu0
        %v8113 = vadd.f32 %v7632, %v8112
        %v8114 = vpop.f32.mrf.mxu0
        %8115 = vmatprep.mubr.bf16.mxu0 %v3806
        %8116 = vmatmul.mubr.bf16.gmra.mxu0 %v3805
        %v8117 = vpop.f32.mrf.mxu0
        %v8118 = vadd.f32 %v7637, %v8117
        %v8119 = vpop.f32.mrf.mxu0
        %v8120 = vpop.f32.mrf.mxu0
        %v8121 = vadd.f32 %v7640, %v8120
        %v8122 = vpop.f32.mrf.mxu0
        %8123 = vmatprep.mubr.bf16.mxu0 %v3816
        %8124 = vmatmul.mubr.bf16.gmra.mxu0 %v3815
        %v8125 = vpop.f32.mrf.mxu0
        %v8126 = vadd.f32 %v7645, %v8125
        %v8127 = vpop.f32.mrf.mxu0
        %v8128 = vpop.f32.mrf.mxu0
        %v8129 = vadd.f32 %v7648, %v8128
        %v8130 = vpop.f32.mrf.mxu0
        %8131 = vmatprep.mubr.bf16.mxu0 %v3826
        %8132 = vmatmul.mubr.bf16.gmra.mxu0 %v3825
        %v8133 = vpop.f32.mrf.mxu0
        %v8134 = vadd.f32 %v7653, %v8133
        %v8135 = vpop.f32.mrf.mxu0
        %v8136 = vpop.f32.mrf.mxu0
        %v8137 = vadd.f32 %v7656, %v8136
        %v8138 = vpop.f32.mrf.mxu0
        %8139 = vmatprep.mubr.bf16.mxu0 %v3836
        %8140 = vmatmul.mubr.bf16.gmra.mxu0 %v3835
        %v8141 = vpop.f32.mrf.mxu0
        %v8142 = vadd.f32 %v7661, %v8141
        %v8143 = vpop.f32.mrf.mxu0
        %v8144 = vpop.f32.mrf.mxu0
        %v8145 = vadd.f32 %v7664, %v8144
        %v8146 = vpop.f32.mrf.mxu0
        %8147 = vmatprep.mubr.bf16.mxu0 %v3846
        %8148 = vmatmul.mubr.bf16.gmra.mxu0 %v3845
        %v8149 = vpop.f32.mrf.mxu0
        %v8150 = vadd.f32 %v7669, %v8149
        %v8151 = vpop.f32.mrf.mxu0
        %v8152 = vpop.f32.mrf.mxu0
        %v8153 = vadd.f32 %v7672, %v8152
        %v8154 = vpop.f32.mrf.mxu0
        %8155 = vmatprep.mubr.bf16.mxu0 %v3856
        %8156 = vmatmul.mubr.bf16.gmra.mxu0 %v3855
        %v8157 = vpop.f32.mrf.mxu0
        %v8158 = vadd.f32 %v7677, %v8157
        %v8159 = vpop.f32.mrf.mxu0
        %v8160 = vpop.f32.mrf.mxu0
        %v8161 = vadd.f32 %v7680, %v8160
        %v8162 = vpop.f32.mrf.mxu0
        %8163 = vmatprep.mubr.bf16.mxu0 %v3866
        %8164 = vmatmul.mubr.bf16.gmra.mxu0 %v3865
        %v8165 = vpop.f32.mrf.mxu0
        %v8166 = vadd.f32 %v7685, %v8165
        %v8167 = vpop.f32.mrf.mxu0
        %v8168 = vpop.f32.mrf.mxu0
        %v8169 = vadd.f32 %v7688, %v8168
        %v8170 = vpop.f32.mrf.mxu0
        %8171 = vmatprep.mubr.bf16.mxu0 %v3876
        %8172 = vmatmul.mubr.bf16.gmra.mxu0 %v3875
        %v8173 = vpop.f32.mrf.mxu0
        %v8174 = vadd.f32 %v7693, %v8173
        %v8175 = vpop.f32.mrf.mxu0
        %v8176 = vpop.f32.mrf.mxu0
        %v8177 = vadd.f32 %v7696, %v8176
        %v8178 = vpop.f32.mrf.mxu0
        %8179 = vmatprep.mubr.bf16.mxu0 %v3886
        %8180 = vmatmul.mubr.bf16.gmra.mxu0 %v3885
        %v8181 = vpop.f32.mrf.mxu0
        %v8182 = vadd.f32 %v7701, %v8181
        %v8183 = vpop.f32.mrf.mxu0
        %v8184 = vpop.f32.mrf.mxu0
        %v8185 = vadd.f32 %v7704, %v8184
        %v8186 = vpop.f32.mrf.mxu0
        %8187 = vmatprep.mubr.bf16.mxu0 %v3896
        %8188 = vmatmul.mubr.bf16.gmra.mxu0 %v3895
        %v8189 = vpop.f32.mrf.mxu0
        %v8190 = vadd.f32 %v7709, %v8189
        %v8191 = vpop.f32.mrf.mxu0
        %v8192 = vpop.f32.mrf.mxu0
        %v8193 = vadd.f32 %v7712, %v8192
        %v8194 = vpop.f32.mrf.mxu0
        %8195 = vmatprep.mubr.bf16.mxu0 %v3906
        %8196 = vmatmul.mubr.bf16.gmra.mxu0 %v3905
        %v8197 = vpop.f32.mrf.mxu0
        %v8198 = vadd.f32 %v7717, %v8197
        %v8199 = vpop.f32.mrf.mxu0
        %v8200 = vpop.f32.mrf.mxu0
        %v8201 = vadd.f32 %v7720, %v8200
        %v8202 = vpop.f32.mrf.mxu0
        %8203 = vmatprep.mubr.bf16.mxu0 %v3916
        %8204 = vmatmul.mubr.bf16.gmra.mxu0 %v3915
        %v8205 = vpop.f32.mrf.mxu0
        %v8206 = vadd.f32 %v7725, %v8205
        %v8207 = vpop.f32.mrf.mxu0
        %v8208 = vpop.f32.mrf.mxu0
        %v8209 = vadd.f32 %v7728, %v8208
        %v8210 = vpop.f32.mrf.mxu0
        %8211 = vmatprep.mubr.bf16.mxu0 %v3926
        %8212 = vmatmul.mubr.bf16.gmra.mxu0 %v3925
        %v8213 = vpop.f32.mrf.mxu0
        %v8214 = vadd.f32 %v7733, %v8213
        %v8215 = vpop.f32.mrf.mxu0
        %v8216 = vpop.f32.mrf.mxu0
        %v8217 = vadd.f32 %v7736, %v8216
        %v8218 = vpop.f32.mrf.mxu0
        %8219 = vmatprep.mubr.bf16.mxu0 %v3936
        %8220 = vmatmul.mubr.bf16.gmra.mxu0 %v3935
        %v8221 = vpop.f32.mrf.mxu0
        %v8222 = vadd.f32 %v7741, %v8221
        %v8223 = vpop.f32.mrf.mxu0
        %v8224 = vpop.f32.mrf.mxu0
        %v8225 = vadd.f32 %v7744, %v8224
        %v8226 = vpop.f32.mrf.mxu0
        %8227 = vmatprep.mubr.bf16.mxu0 %v3946
        %8228 = vmatmul.mubr.bf16.gmra.mxu0 %v3945
        %v8229 = vpop.f32.mrf.mxu0
        %v8230 = vadd.f32 %v7749, %v8229
        %v8231 = vpop.f32.mrf.mxu0
        %v8232 = vpop.f32.mrf.mxu0
        %v8233 = vadd.f32 %v7752, %v8232
        %v8234 = vpop.f32.mrf.mxu0
        %8235 = vmatprep.mubr.bf16.mxu0 %v3956
        %8236 = vmatmul.mubr.bf16.gmra.mxu0 %v3955
        %v8237 = vpop.f32.mrf.mxu0
        %v8238 = vadd.f32 %v7757, %v8237
        %v8239 = vpop.f32.mrf.mxu0
        %v8240 = vpop.f32.mrf.mxu0
        %v8241 = vadd.f32 %v7760, %v8240
        %v8242 = vpop.f32.mrf.mxu0
        %8243 = vdwg.mxu0
        %8244 = vmatprep.subr.bf16.mxu0 0
        %8245 = vmatpush1.bf16.msra.mxu0 %v7241
        %8246 = vmatprep.subr.bf16.mxu0 0
        %8247 = vmatpush1.bf16.msra.mxu0 %v7240
        %8248 = vmatprep.subr.bf16.mxu0 0
        %8249 = vmatpush1.bf16.msra.mxu0 %v7239
        %8250 = vmatprep.subr.bf16.mxu0 0
        %8251 = vmatpush1.bf16.msra.mxu0 %v7238
        %8252 = vmatprep.subr.bf16.mxu0 0
        %8253 = vmatpush1.bf16.msra.mxu0 %v7237
        %8254 = vmatprep.subr.bf16.mxu0 0
        %8255 = vmatpush1.bf16.msra.mxu0 %v7236
        %8256 = vmatprep.subr.bf16.mxu0 0
        %8257 = vmatpush1.bf16.msra.mxu0 %v7235
        %8258 = vmatprep.subr.bf16.mxu0 0
        %8259 = vmatpush1.bf16.msra.mxu0 %v7234
        %8260 = vmatprep.subr.bf16.mxu0 0
        %8261 = vmatpush2.bf16.msra.mxu0 %v7249
        %8262 = vmatprep.subr.bf16.mxu0 0
        %8263 = vmatpush2.bf16.msra.mxu0 %v7248
        %8264 = vmatprep.subr.bf16.mxu0 0
        %8265 = vmatpush2.bf16.msra.mxu0 %v7247
        %8266 = vmatprep.subr.bf16.mxu0 0
        %8267 = vmatpush2.bf16.msra.mxu0 %v7246
        %8268 = vmatprep.subr.bf16.mxu0 0
        %8269 = vmatpush2.bf16.msra.mxu0 %v7245
        %8270 = vmatprep.subr.bf16.mxu0 0
        %8271 = vmatpush2.bf16.msra.mxu0 %v7244
        %8272 = vmatprep.subr.bf16.mxu0 0
        %8273 = vmatpush2.bf16.msra.mxu0 %v7243
        %8274 = vmatprep.subr.bf16.mxu0 0
        %8275 = vmatpush2.bf16.msra.mxu0 %v7242
        %8276 = vmatprep.mubr.bf16.mxu0 %v3408
        %8277 = vmatmul.mubr.bf16.gmra.mxu0 %v3407
        %v8278 = vpop.f32.mrf.mxu0
        %v8279 = vadd.f32 %v7798, %v8278
        %v8280 = vpop.f32.mrf.mxu0
        %v8281 = vpop.f32.mrf.mxu0
        %v8282 = vadd.f32 %v7801, %v8281
        %v8283 = vpop.f32.mrf.mxu0
        %8284 = vmatprep.mubr.bf16.mxu0 %v3418
        %8285 = vmatmul.mubr.bf16.gmra.mxu0 %v3417
        %v8286 = vpop.f32.mrf.mxu0
        %v8287 = vadd.f32 %v7806, %v8286
        %v8288 = vpop.f32.mrf.mxu0
        %v8289 = vpop.f32.mrf.mxu0
        %v8290 = vadd.f32 %v7809, %v8289
        %v8291 = vpop.f32.mrf.mxu0
        %8292 = vmatprep.mubr.bf16.mxu0 %v3428
        %8293 = vmatmul.mubr.bf16.gmra.mxu0 %v3427
        %v8294 = vpop.f32.mrf.mxu0
        %v8295 = vadd.f32 %v7814, %v8294
        %v8296 = vpop.f32.mrf.mxu0
        %v8297 = vpop.f32.mrf.mxu0
        %v8298 = vadd.f32 %v7817, %v8297
        %v8299 = vpop.f32.mrf.mxu0
        %8300 = vmatprep.mubr.bf16.mxu0 %v3438
        %8301 = vmatmul.mubr.bf16.gmra.mxu0 %v3437
        %v8302 = vpop.f32.mrf.mxu0
        %v8303 = vadd.f32 %v7822, %v8302
        %v8304 = vpop.f32.mrf.mxu0
        %v8305 = vpop.f32.mrf.mxu0
        %v8306 = vadd.f32 %v7825, %v8305
        %v8307 = vpop.f32.mrf.mxu0
        %8308 = vmatprep.mubr.bf16.mxu0 %v3448
        %8309 = vmatmul.mubr.bf16.gmra.mxu0 %v3447
        %v8310 = vpop.f32.mrf.mxu0
        %v8311 = vadd.f32 %v7830, %v8310
        %v8312 = vpop.f32.mrf.mxu0
        %v8313 = vpop.f32.mrf.mxu0
        %v8314 = vadd.f32 %v7833, %v8313
        %v8315 = vpop.f32.mrf.mxu0
        %8316 = vmatprep.mubr.bf16.mxu0 %v3458
        %8317 = vmatmul.mubr.bf16.gmra.mxu0 %v3457
        %v8318 = vpop.f32.mrf.mxu0
        %v8319 = vadd.f32 %v7838, %v8318
        %v8320 = vpop.f32.mrf.mxu0
        %v8321 = vpop.f32.mrf.mxu0
        %v8322 = vadd.f32 %v7841, %v8321
        %v8323 = vpop.f32.mrf.mxu0
        %8324 = vmatprep.mubr.bf16.mxu0 %v3468
        %8325 = vmatmul.mubr.bf16.gmra.mxu0 %v3467
        %v8326 = vpop.f32.mrf.mxu0
        %v8327 = vadd.f32 %v7846, %v8326
        %v8328 = vpop.f32.mrf.mxu0
        %v8329 = vpop.f32.mrf.mxu0
        %v8330 = vadd.f32 %v7849, %v8329
        %v8331 = vpop.f32.mrf.mxu0
        %8332 = vmatprep.mubr.bf16.mxu0 %v3478
        %8333 = vmatmul.mubr.bf16.gmra.mxu0 %v3477
        %v8334 = vpop.f32.mrf.mxu0
        %v8335 = vadd.f32 %v7854, %v8334
        %v8336 = vpop.f32.mrf.mxu0
        %v8337 = vpop.f32.mrf.mxu0
        %v8338 = vadd.f32 %v7857, %v8337
        %v8339 = vpop.f32.mrf.mxu0
        %8340 = vmatprep.mubr.bf16.mxu0 %v3488
        %8341 = vmatmul.mubr.bf16.gmra.mxu0 %v3487
        %v8342 = vpop.f32.mrf.mxu0
        %v8343 = vadd.f32 %v7862, %v8342
        %v8344 = vpop.f32.mrf.mxu0
        %v8345 = vpop.f32.mrf.mxu0
        %v8346 = vadd.f32 %v7865, %v8345
        %v8347 = vpop.f32.mrf.mxu0
        %8348 = vmatprep.mubr.bf16.mxu0 %v3498
        %8349 = vmatmul.mubr.bf16.gmra.mxu0 %v3497
        %v8350 = vpop.f32.mrf.mxu0
        %v8351 = vadd.f32 %v7870, %v8350
        %v8352 = vpop.f32.mrf.mxu0
        %v8353 = vpop.f32.mrf.mxu0
        %v8354 = vadd.f32 %v7873, %v8353
        %v8355 = vpop.f32.mrf.mxu0
        %8356 = vmatprep.mubr.bf16.mxu0 %v3508
        %8357 = vmatmul.mubr.bf16.gmra.mxu0 %v3507
        %v8358 = vpop.f32.mrf.mxu0
        %v8359 = vadd.f32 %v7878, %v8358
        %v8360 = vpop.f32.mrf.mxu0
        %v8361 = vpop.f32.mrf.mxu0
        %v8362 = vadd.f32 %v7881, %v8361
        %v8363 = vpop.f32.mrf.mxu0
        %8364 = vmatprep.mubr.bf16.mxu0 %v3518
        %8365 = vmatmul.mubr.bf16.gmra.mxu0 %v3517
        %v8366 = vpop.f32.mrf.mxu0
        %v8367 = vadd.f32 %v7886, %v8366
        %v8368 = vpop.f32.mrf.mxu0
        %v8369 = vpop.f32.mrf.mxu0
        %v8370 = vadd.f32 %v7889, %v8369
        %v8371 = vpop.f32.mrf.mxu0
        %8372 = vmatprep.mubr.bf16.mxu0 %v3528
        %8373 = vmatmul.mubr.bf16.gmra.mxu0 %v3527
        %v8374 = vpop.f32.mrf.mxu0
        %v8375 = vadd.f32 %v7894, %v8374
        %v8376 = vpop.f32.mrf.mxu0
        %v8377 = vpop.f32.mrf.mxu0
        %v8378 = vadd.f32 %v7897, %v8377
        %v8379 = vpop.f32.mrf.mxu0
        %8380 = vmatprep.mubr.bf16.mxu0 %v3538
        %8381 = vmatmul.mubr.bf16.gmra.mxu0 %v3537
        %v8382 = vpop.f32.mrf.mxu0
        %v8383 = vadd.f32 %v7902, %v8382
        %v8384 = vpop.f32.mrf.mxu0
        %v8385 = vpop.f32.mrf.mxu0
        %v8386 = vadd.f32 %v7905, %v8385
        %v8387 = vpop.f32.mrf.mxu0
        %8388 = vmatprep.mubr.bf16.mxu0 %v3548
        %8389 = vmatmul.mubr.bf16.gmra.mxu0 %v3547
        %v8390 = vpop.f32.mrf.mxu0
        %v8391 = vadd.f32 %v7910, %v8390
        %v8392 = vpop.f32.mrf.mxu0
        %v8393 = vpop.f32.mrf.mxu0
        %v8394 = vadd.f32 %v7913, %v8393
        %v8395 = vpop.f32.mrf.mxu0
        %8396 = vmatprep.mubr.bf16.mxu0 %v3558
        %8397 = vmatmul.mubr.bf16.gmra.mxu0 %v3557
        %v8398 = vpop.f32.mrf.mxu0
        %v8399 = vadd.f32 %v7918, %v8398
        %v8400 = vpop.f32.mrf.mxu0
        %v8401 = vpop.f32.mrf.mxu0
        %v8402 = vadd.f32 %v7921, %v8401
        %v8403 = vpop.f32.mrf.mxu0
        %8404 = vmatprep.mubr.bf16.mxu0 %v3568
        %8405 = vmatmul.mubr.bf16.gmra.mxu0 %v3567
        %v8406 = vpop.f32.mrf.mxu0
        %v8407 = vadd.f32 %v7926, %v8406
        %v8408 = vpop.f32.mrf.mxu0
        %v8409 = vpop.f32.mrf.mxu0
        %v8410 = vadd.f32 %v7929, %v8409
        %v8411 = vpop.f32.mrf.mxu0
        %8412 = vmatprep.mubr.bf16.mxu0 %v3578
        %8413 = vmatmul.mubr.bf16.gmra.mxu0 %v3577
        %v8414 = vpop.f32.mrf.mxu0
        %v8415 = vadd.f32 %v7934, %v8414
        %v8416 = vpop.f32.mrf.mxu0
        %v8417 = vpop.f32.mrf.mxu0
        %v8418 = vadd.f32 %v7937, %v8417
        %v8419 = vpop.f32.mrf.mxu0
        %8420 = vmatprep.mubr.bf16.mxu0 %v3588
        %8421 = vmatmul.mubr.bf16.gmra.mxu0 %v3587
        %v8422 = vpop.f32.mrf.mxu0
        %v8423 = vadd.f32 %v7942, %v8422
        %v8424 = vpop.f32.mrf.mxu0
        %v8425 = vpop.f32.mrf.mxu0
        %v8426 = vadd.f32 %v7945, %v8425
        %v8427 = vpop.f32.mrf.mxu0
        %8428 = vmatprep.mubr.bf16.mxu0 %v3598
        %8429 = vmatmul.mubr.bf16.gmra.mxu0 %v3597
        %v8430 = vpop.f32.mrf.mxu0
        %v8431 = vadd.f32 %v7950, %v8430
        %v8432 = vpop.f32.mrf.mxu0
        %v8433 = vpop.f32.mrf.mxu0
        %v8434 = vadd.f32 %v7953, %v8433
        %v8435 = vpop.f32.mrf.mxu0
        %8436 = vmatprep.mubr.bf16.mxu0 %v3608
        %8437 = vmatmul.mubr.bf16.gmra.mxu0 %v3607
        %v8438 = vpop.f32.mrf.mxu0
        %v8439 = vadd.f32 %v7958, %v8438
        %v8440 = vpop.f32.mrf.mxu0
        %v8441 = vpop.f32.mrf.mxu0
        %v8442 = vadd.f32 %v7961, %v8441
        %v8443 = vpop.f32.mrf.mxu0
        %8444 = vmatprep.mubr.bf16.mxu0 %v3618
        %8445 = vmatmul.mubr.bf16.gmra.mxu0 %v3617
        %v8446 = vpop.f32.mrf.mxu0
        %v8447 = vadd.f32 %v7966, %v8446
        %v8448 = vpop.f32.mrf.mxu0
        %v8449 = vpop.f32.mrf.mxu0
        %v8450 = vadd.f32 %v7969, %v8449
        %v8451 = vpop.f32.mrf.mxu0
        %8452 = vmatprep.mubr.bf16.mxu0 %v3628
        %8453 = vmatmul.mubr.bf16.gmra.mxu0 %v3627
        %v8454 = vpop.f32.mrf.mxu0
        %v8455 = vadd.f32 %v7974, %v8454
        %v8456 = vpop.f32.mrf.mxu0
        %v8457 = vpop.f32.mrf.mxu0
        %v8458 = vadd.f32 %v7977, %v8457
        %v8459 = vpop.f32.mrf.mxu0
        %8460 = vmatprep.mubr.bf16.mxu0 %v3638
        %8461 = vmatmul.mubr.bf16.gmra.mxu0 %v3637
        %v8462 = vpop.f32.mrf.mxu0
        %v8463 = vadd.f32 %v7982, %v8462
        %v8464 = vpop.f32.mrf.mxu0
        %v8465 = vpop.f32.mrf.mxu0
        %v8466 = vadd.f32 %v7985, %v8465
        %v8467 = vpop.f32.mrf.mxu0
        %8468 = vmatprep.mubr.bf16.mxu0 %v3648
        %8469 = vmatmul.mubr.bf16.gmra.mxu0 %v3647
        %v8470 = vpop.f32.mrf.mxu0
        %v8471 = vadd.f32 %v7990, %v8470
        %v8472 = vpop.f32.mrf.mxu0
        %v8473 = vpop.f32.mrf.mxu0
        %v8474 = vadd.f32 %v7993, %v8473
        %v8475 = vpop.f32.mrf.mxu0
        %8476 = vmatprep.mubr.bf16.mxu0 %v3658
        %8477 = vmatmul.mubr.bf16.gmra.mxu0 %v3657
        %v8478 = vpop.f32.mrf.mxu0
        %v8479 = vadd.f32 %v7998, %v8478
        %v8480 = vpop.f32.mrf.mxu0
        %v8481 = vpop.f32.mrf.mxu0
        %v8482 = vadd.f32 %v8001, %v8481
        %v8483 = vpop.f32.mrf.mxu0
        %8484 = vmatprep.mubr.bf16.mxu0 %v3668
        %8485 = vmatmul.mubr.bf16.gmra.mxu0 %v3667
        %v8486 = vpop.f32.mrf.mxu0
        %v8487 = vadd.f32 %v8006, %v8486
        %v8488 = vpop.f32.mrf.mxu0
        %v8489 = vpop.f32.mrf.mxu0
        %v8490 = vadd.f32 %v8009, %v8489
        %v8491 = vpop.f32.mrf.mxu0
        %8492 = vmatprep.mubr.bf16.mxu0 %v3678
        %8493 = vmatmul.mubr.bf16.gmra.mxu0 %v3677
        %v8494 = vpop.f32.mrf.mxu0
        %v8495 = vadd.f32 %v8014, %v8494
        %v8496 = vpop.f32.mrf.mxu0
        %v8497 = vpop.f32.mrf.mxu0
        %v8498 = vadd.f32 %v8017, %v8497
        %v8499 = vpop.f32.mrf.mxu0
        %8500 = vmatprep.mubr.bf16.mxu0 %v3688
        %8501 = vmatmul.mubr.bf16.gmra.mxu0 %v3687
        %v8502 = vpop.f32.mrf.mxu0
        %v8503 = vadd.f32 %v8022, %v8502
        %v8504 = vpop.f32.mrf.mxu0
        %v8505 = vpop.f32.mrf.mxu0
        %v8506 = vadd.f32 %v8025, %v8505
        %v8507 = vpop.f32.mrf.mxu0
        %8508 = vmatprep.mubr.bf16.mxu0 %v3698
        %8509 = vmatmul.mubr.bf16.gmra.mxu0 %v3697
        %v8510 = vpop.f32.mrf.mxu0
        %v8511 = vadd.f32 %v8030, %v8510
        %v8512 = vpop.f32.mrf.mxu0
        %v8513 = vpop.f32.mrf.mxu0
        %v8514 = vadd.f32 %v8033, %v8513
        %v8515 = vpop.f32.mrf.mxu0
        %8516 = vmatprep.mubr.bf16.mxu0 %v3708
        %8517 = vmatmul.mubr.bf16.gmra.mxu0 %v3707
        %v8518 = vpop.f32.mrf.mxu0
        %v8519 = vadd.f32 %v8038, %v8518
        %v8520 = vpop.f32.mrf.mxu0
        %v8521 = vpop.f32.mrf.mxu0
        %v8522 = vadd.f32 %v8041, %v8521
        %v8523 = vpop.f32.mrf.mxu0
        %8524 = vmatprep.mubr.bf16.mxu0 %v3718
        %8525 = vmatmul.mubr.bf16.gmra.mxu0 %v3717
        %v8526 = vpop.f32.mrf.mxu0
        %v8527 = vadd.f32 %v8046, %v8526
        %v8528 = vpop.f32.mrf.mxu0
        %v8529 = vpop.f32.mrf.mxu0
        %v8530 = vadd.f32 %v8049, %v8529
        %v8531 = vpop.f32.mrf.mxu0
        %8532 = vmatprep.mubr.bf16.mxu0 %v3728
        %8533 = vmatmul.mubr.bf16.gmra.mxu0 %v3727
        %v8534 = vpop.f32.mrf.mxu0
        %v8535 = vadd.f32 %v8054, %v8534
        %v8536 = vpop.f32.mrf.mxu0
        %v8537 = vpop.f32.mrf.mxu0
        %v8538 = vadd.f32 %v8057, %v8537
        %v8539 = vpop.f32.mrf.mxu0
        %8540 = vmatprep.mubr.bf16.mxu0 %v3738
        %8541 = vmatmul.mubr.bf16.gmra.mxu0 %v3737
        %v8542 = vpop.f32.mrf.mxu0
        %v8543 = vadd.f32 %v8062, %v8542
        %v8544 = vpop.f32.mrf.mxu0
        %v8545 = vpop.f32.mrf.mxu0
        %v8546 = vadd.f32 %v8065, %v8545
        %v8547 = vpop.f32.mrf.mxu0
        %8548 = vmatprep.mubr.bf16.mxu0 %v3748
        %8549 = vmatmul.mubr.bf16.gmra.mxu0 %v3747
        %v8550 = vpop.f32.mrf.mxu0
        %v8551 = vadd.f32 %v8070, %v8550
        %v8552 = vpop.f32.mrf.mxu0
        %v8553 = vpop.f32.mrf.mxu0
        %v8554 = vadd.f32 %v8073, %v8553
        %v8555 = vpop.f32.mrf.mxu0
        %8556 = vmatprep.mubr.bf16.mxu0 %v3758
        %8557 = vmatmul.mubr.bf16.gmra.mxu0 %v3757
        %v8558 = vpop.f32.mrf.mxu0
        %v8559 = vadd.f32 %v8078, %v8558
        %v8560 = vpop.f32.mrf.mxu0
        %v8561 = vpop.f32.mrf.mxu0
        %v8562 = vadd.f32 %v8081, %v8561
        %v8563 = vpop.f32.mrf.mxu0
        %8564 = vmatprep.mubr.bf16.mxu0 %v3768
        %8565 = vmatmul.mubr.bf16.gmra.mxu0 %v3767
        %v8566 = vpop.f32.mrf.mxu0
        %v8567 = vadd.f32 %v8086, %v8566
        %v8568 = vpop.f32.mrf.mxu0
        %v8569 = vpop.f32.mrf.mxu0
        %v8570 = vadd.f32 %v8089, %v8569
        %v8571 = vpop.f32.mrf.mxu0
        %8572 = vmatprep.mubr.bf16.mxu0 %v3778
        %8573 = vmatmul.mubr.bf16.gmra.mxu0 %v3777
        %v8574 = vpop.f32.mrf.mxu0
        %v8575 = vadd.f32 %v8094, %v8574
        %v8576 = vpop.f32.mrf.mxu0
        %v8577 = vpop.f32.mrf.mxu0
        %v8578 = vadd.f32 %v8097, %v8577
        %v8579 = vpop.f32.mrf.mxu0
        %8580 = vmatprep.mubr.bf16.mxu0 %v3788
        %8581 = vmatmul.mubr.bf16.gmra.mxu0 %v3787
        %v8582 = vpop.f32.mrf.mxu0
        %v8583 = vadd.f32 %v8102, %v8582
        %v8584 = vpop.f32.mrf.mxu0
        %v8585 = vpop.f32.mrf.mxu0
        %v8586 = vadd.f32 %v8105, %v8585
        %v8587 = vpop.f32.mrf.mxu0
        %8588 = vmatprep.mubr.bf16.mxu0 %v3798
        %8589 = vmatmul.mubr.bf16.gmra.mxu0 %v3797
        %v8590 = vpop.f32.mrf.mxu0
        %v8591 = vadd.f32 %v8110, %v8590
        %v8592 = vpop.f32.mrf.mxu0
        %v8593 = vpop.f32.mrf.mxu0
        %v8594 = vadd.f32 %v8113, %v8593
        %v8595 = vpop.f32.mrf.mxu0
        %8596 = vmatprep.mubr.bf16.mxu0 %v3808
        %8597 = vmatmul.mubr.bf16.gmra.mxu0 %v3807
        %v8598 = vpop.f32.mrf.mxu0
        %v8599 = vadd.f32 %v8118, %v8598
        %v8600 = vpop.f32.mrf.mxu0
        %v8601 = vpop.f32.mrf.mxu0
        %v8602 = vadd.f32 %v8121, %v8601
        %v8603 = vpop.f32.mrf.mxu0
        %8604 = vmatprep.mubr.bf16.mxu0 %v3818
        %8605 = vmatmul.mubr.bf16.gmra.mxu0 %v3817
        %v8606 = vpop.f32.mrf.mxu0
        %v8607 = vadd.f32 %v8126, %v8606
        %v8608 = vpop.f32.mrf.mxu0
        %v8609 = vpop.f32.mrf.mxu0
        %v8610 = vadd.f32 %v8129, %v8609
        %v8611 = vpop.f32.mrf.mxu0
        %8612 = vmatprep.mubr.bf16.mxu0 %v3828
        %8613 = vmatmul.mubr.bf16.gmra.mxu0 %v3827
        %v8614 = vpop.f32.mrf.mxu0
        %v8615 = vadd.f32 %v8134, %v8614
        %v8616 = vpop.f32.mrf.mxu0
        %v8617 = vpop.f32.mrf.mxu0
        %v8618 = vadd.f32 %v8137, %v8617
        %v8619 = vpop.f32.mrf.mxu0
        %8620 = vmatprep.mubr.bf16.mxu0 %v3838
        %8621 = vmatmul.mubr.bf16.gmra.mxu0 %v3837
        %v8622 = vpop.f32.mrf.mxu0
        %v8623 = vadd.f32 %v8142, %v8622
        %v8624 = vpop.f32.mrf.mxu0
        %v8625 = vpop.f32.mrf.mxu0
        %v8626 = vadd.f32 %v8145, %v8625
        %v8627 = vpop.f32.mrf.mxu0
        %8628 = vmatprep.mubr.bf16.mxu0 %v3848
        %8629 = vmatmul.mubr.bf16.gmra.mxu0 %v3847
        %v8630 = vpop.f32.mrf.mxu0
        %v8631 = vadd.f32 %v8150, %v8630
        %v8632 = vpop.f32.mrf.mxu0
        %v8633 = vpop.f32.mrf.mxu0
        %v8634 = vadd.f32 %v8153, %v8633
        %v8635 = vpop.f32.mrf.mxu0
        %8636 = vmatprep.mubr.bf16.mxu0 %v3858
        %8637 = vmatmul.mubr.bf16.gmra.mxu0 %v3857
        %v8638 = vpop.f32.mrf.mxu0
        %v8639 = vadd.f32 %v8158, %v8638
        %v8640 = vpop.f32.mrf.mxu0
        %v8641 = vpop.f32.mrf.mxu0
        %v8642 = vadd.f32 %v8161, %v8641
        %v8643 = vpop.f32.mrf.mxu0
        %8644 = vmatprep.mubr.bf16.mxu0 %v3868
        %8645 = vmatmul.mubr.bf16.gmra.mxu0 %v3867
        %v8646 = vpop.f32.mrf.mxu0
        %v8647 = vadd.f32 %v8166, %v8646
        %v8648 = vpop.f32.mrf.mxu0
        %v8649 = vpop.f32.mrf.mxu0
        %v8650 = vadd.f32 %v8169, %v8649
        %v8651 = vpop.f32.mrf.mxu0
        %8652 = vmatprep.mubr.bf16.mxu0 %v3878
        %8653 = vmatmul.mubr.bf16.gmra.mxu0 %v3877
        %v8654 = vpop.f32.mrf.mxu0
        %v8655 = vadd.f32 %v8174, %v8654
        %v8656 = vpop.f32.mrf.mxu0
        %v8657 = vpop.f32.mrf.mxu0
        %v8658 = vadd.f32 %v8177, %v8657
        %v8659 = vpop.f32.mrf.mxu0
        %8660 = vmatprep.mubr.bf16.mxu0 %v3888
        %8661 = vmatmul.mubr.bf16.gmra.mxu0 %v3887
        %v8662 = vpop.f32.mrf.mxu0
        %v8663 = vadd.f32 %v8182, %v8662
        %v8664 = vpop.f32.mrf.mxu0
        %v8665 = vpop.f32.mrf.mxu0
        %v8666 = vadd.f32 %v8185, %v8665
        %v8667 = vpop.f32.mrf.mxu0
        %8668 = vmatprep.mubr.bf16.mxu0 %v3898
        %8669 = vmatmul.mubr.bf16.gmra.mxu0 %v3897
        %v8670 = vpop.f32.mrf.mxu0
        %v8671 = vadd.f32 %v8190, %v8670
        %v8672 = vpop.f32.mrf.mxu0
        %v8673 = vpop.f32.mrf.mxu0
        %v8674 = vadd.f32 %v8193, %v8673
        %v8675 = vpop.f32.mrf.mxu0
        %8676 = vmatprep.mubr.bf16.mxu0 %v3908
        %8677 = vmatmul.mubr.bf16.gmra.mxu0 %v3907
        %v8678 = vpop.f32.mrf.mxu0
        %v8679 = vadd.f32 %v8198, %v8678
        %v8680 = vpop.f32.mrf.mxu0
        %v8681 = vpop.f32.mrf.mxu0
        %v8682 = vadd.f32 %v8201, %v8681
        %v8683 = vpop.f32.mrf.mxu0
        %8684 = vmatprep.mubr.bf16.mxu0 %v3918
        %8685 = vmatmul.mubr.bf16.gmra.mxu0 %v3917
        %v8686 = vpop.f32.mrf.mxu0
        %v8687 = vadd.f32 %v8206, %v8686
        %v8688 = vpop.f32.mrf.mxu0
        %v8689 = vpop.f32.mrf.mxu0
        %v8690 = vadd.f32 %v8209, %v8689
        %v8691 = vpop.f32.mrf.mxu0
        %8692 = vmatprep.mubr.bf16.mxu0 %v3928
        %8693 = vmatmul.mubr.bf16.gmra.mxu0 %v3927
        %v8694 = vpop.f32.mrf.mxu0
        %v8695 = vadd.f32 %v8214, %v8694
        %v8696 = vpop.f32.mrf.mxu0
        %v8697 = vpop.f32.mrf.mxu0
        %v8698 = vadd.f32 %v8217, %v8697
        %v8699 = vpop.f32.mrf.mxu0
        %8700 = vmatprep.mubr.bf16.mxu0 %v3938
        %8701 = vmatmul.mubr.bf16.gmra.mxu0 %v3937
        %v8702 = vpop.f32.mrf.mxu0
        %v8703 = vadd.f32 %v8222, %v8702
        %v8704 = vpop.f32.mrf.mxu0
        %v8705 = vpop.f32.mrf.mxu0
        %v8706 = vadd.f32 %v8225, %v8705
        %v8707 = vpop.f32.mrf.mxu0
        %8708 = vmatprep.mubr.bf16.mxu0 %v3948
        %8709 = vmatmul.mubr.bf16.gmra.mxu0 %v3947
        %v8710 = vpop.f32.mrf.mxu0
        %v8711 = vadd.f32 %v8230, %v8710
        %v8712 = vpop.f32.mrf.mxu0
        %v8713 = vpop.f32.mrf.mxu0
        %v8714 = vadd.f32 %v8233, %v8713
        %v8715 = vpop.f32.mrf.mxu0
        %8716 = vmatprep.mubr.bf16.mxu0 %v3958
        %8717 = vmatmul.mubr.bf16.gmra.mxu0 %v3957
        %v8718 = vpop.f32.mrf.mxu0
        %v8719 = vadd.f32 %v8238, %v8718
        %v8720 = vpop.f32.mrf.mxu0
        %v8721 = vpop.f32.mrf.mxu0
        %v8722 = vadd.f32 %v8241, %v8721
        %v8723 = vpop.f32.mrf.mxu0
        %8724 = vdwg.mxu0
        %8725 = vmatprep.subr.bf16.mxu0 0
        %8726 = vmatpush1.bf16.msra.mxu0 %v7257
        %8727 = vmatprep.subr.bf16.mxu0 0
        %8728 = vmatpush1.bf16.msra.mxu0 %v7256
        %8729 = vmatprep.subr.bf16.mxu0 0
        %8730 = vmatpush1.bf16.msra.mxu0 %v7255
        %8731 = vmatprep.subr.bf16.mxu0 0
        %8732 = vmatpush1.bf16.msra.mxu0 %v7254
        %8733 = vmatprep.subr.bf16.mxu0 0
        %8734 = vmatpush1.bf16.msra.mxu0 %v7253
        %8735 = vmatprep.subr.bf16.mxu0 0
        %8736 = vmatpush1.bf16.msra.mxu0 %v7252
        %8737 = vmatprep.subr.bf16.mxu0 0
        %8738 = vmatpush1.bf16.msra.mxu0 %v7251
        %8739 = vmatprep.subr.bf16.mxu0 0
        %8740 = vmatpush1.bf16.msra.mxu0 %v7250
        %8741 = vmatprep.subr.bf16.mxu0 0
        %8742 = vmatpush2.bf16.msra.mxu0 %v7265
        %8743 = vmatprep.subr.bf16.mxu0 0
        %8744 = vmatpush2.bf16.msra.mxu0 %v7264
        %8745 = vmatprep.subr.bf16.mxu0 0
        %8746 = vmatpush2.bf16.msra.mxu0 %v7263
        %8747 = vmatprep.subr.bf16.mxu0 0
        %8748 = vmatpush2.bf16.msra.mxu0 %v7262
        %8749 = vmatprep.subr.bf16.mxu0 0
        %8750 = vmatpush2.bf16.msra.mxu0 %v7261
        %8751 = vmatprep.subr.bf16.mxu0 0
        %8752 = vmatpush2.bf16.msra.mxu0 %v7260
        %8753 = vmatprep.subr.bf16.mxu0 0
        %8754 = vmatpush2.bf16.msra.mxu0 %v7259
        %8755 = vmatprep.subr.bf16.mxu0 0
        %8756 = vmatpush2.bf16.msra.mxu0 %v7258
        %8757 = vmatprep.mubr.bf16.mxu0 %v3410
        %8758 = vmatmul.mubr.bf16.gmra.mxu0 %v3409
        %v8759 = vpop.f32.mrf.mxu0
        %v8760 = vadd.f32 %v8279, %v8759
        %v8761 = vpop.f32.mrf.mxu0
        %v8762 = vpop.f32.mrf.mxu0
        %v8763 = vadd.f32 %v8282, %v8762
        %v8764 = vpop.f32.mrf.mxu0
        %8765 = vmatprep.mubr.bf16.mxu0 %v3420
        %8766 = vmatmul.mubr.bf16.gmra.mxu0 %v3419
        %v8767 = vpop.f32.mrf.mxu0
        %v8768 = vadd.f32 %v8287, %v8767
        %v8769 = vpop.f32.mrf.mxu0
        %v8770 = vpop.f32.mrf.mxu0
        %v8771 = vadd.f32 %v8290, %v8770
        %v8772 = vpop.f32.mrf.mxu0
        %8773 = vmatprep.mubr.bf16.mxu0 %v3430
        %8774 = vmatmul.mubr.bf16.gmra.mxu0 %v3429
        %v8775 = vpop.f32.mrf.mxu0
        %v8776 = vadd.f32 %v8295, %v8775
        %v8777 = vpop.f32.mrf.mxu0
        %v8778 = vpop.f32.mrf.mxu0
        %v8779 = vadd.f32 %v8298, %v8778
        %v8780 = vpop.f32.mrf.mxu0
        %8781 = vmatprep.mubr.bf16.mxu0 %v3440
        %8782 = vmatmul.mubr.bf16.gmra.mxu0 %v3439
        %v8783 = vpop.f32.mrf.mxu0
        %v8784 = vadd.f32 %v8303, %v8783
        %v8785 = vpop.f32.mrf.mxu0
        %v8786 = vpop.f32.mrf.mxu0
        %v8787 = vadd.f32 %v8306, %v8786
        %v8788 = vpop.f32.mrf.mxu0
        %8789 = vmatprep.mubr.bf16.mxu0 %v3450
        %8790 = vmatmul.mubr.bf16.gmra.mxu0 %v3449
        %v8791 = vpop.f32.mrf.mxu0
        %v8792 = vadd.f32 %v8311, %v8791
        %v8793 = vpop.f32.mrf.mxu0
        %v8794 = vpop.f32.mrf.mxu0
        %v8795 = vadd.f32 %v8314, %v8794
        %v8796 = vpop.f32.mrf.mxu0
        %8797 = vmatprep.mubr.bf16.mxu0 %v3460
        %8798 = vmatmul.mubr.bf16.gmra.mxu0 %v3459
        %v8799 = vpop.f32.mrf.mxu0
        %v8800 = vadd.f32 %v8319, %v8799
        %v8801 = vpop.f32.mrf.mxu0
        %v8802 = vpop.f32.mrf.mxu0
        %v8803 = vadd.f32 %v8322, %v8802
        %v8804 = vpop.f32.mrf.mxu0
        %8805 = vmatprep.mubr.bf16.mxu0 %v3470
        %8806 = vmatmul.mubr.bf16.gmra.mxu0 %v3469
        %v8807 = vpop.f32.mrf.mxu0
        %v8808 = vadd.f32 %v8327, %v8807
        %v8809 = vpop.f32.mrf.mxu0
        %v8810 = vpop.f32.mrf.mxu0
        %v8811 = vadd.f32 %v8330, %v8810
        %v8812 = vpop.f32.mrf.mxu0
        %8813 = vmatprep.mubr.bf16.mxu0 %v3480
        %8814 = vmatmul.mubr.bf16.gmra.mxu0 %v3479
        %v8815 = vpop.f32.mrf.mxu0
        %v8816 = vadd.f32 %v8335, %v8815
        %v8817 = vpop.f32.mrf.mxu0
        %v8818 = vpop.f32.mrf.mxu0
        %v8819 = vadd.f32 %v8338, %v8818
        %v8820 = vpop.f32.mrf.mxu0
        %8821 = vmatprep.mubr.bf16.mxu0 %v3490
        %8822 = vmatmul.mubr.bf16.gmra.mxu0 %v3489
        %v8823 = vpop.f32.mrf.mxu0
        %v8824 = vadd.f32 %v8343, %v8823
        %v8825 = vpop.f32.mrf.mxu0
        %v8826 = vpop.f32.mrf.mxu0
        %v8827 = vadd.f32 %v8346, %v8826
        %v8828 = vpop.f32.mrf.mxu0
        %8829 = vmatprep.mubr.bf16.mxu0 %v3500
        %8830 = vmatmul.mubr.bf16.gmra.mxu0 %v3499
        %v8831 = vpop.f32.mrf.mxu0
        %v8832 = vadd.f32 %v8351, %v8831
        %v8833 = vpop.f32.mrf.mxu0
        %v8834 = vpop.f32.mrf.mxu0
        %v8835 = vadd.f32 %v8354, %v8834
        %v8836 = vpop.f32.mrf.mxu0
        %8837 = vmatprep.mubr.bf16.mxu0 %v3510
        %8838 = vmatmul.mubr.bf16.gmra.mxu0 %v3509
        %v8839 = vpop.f32.mrf.mxu0
        %v8840 = vadd.f32 %v8359, %v8839
        %v8841 = vpop.f32.mrf.mxu0
        %v8842 = vpop.f32.mrf.mxu0
        %v8843 = vadd.f32 %v8362, %v8842
        %v8844 = vpop.f32.mrf.mxu0
        %8845 = vmatprep.mubr.bf16.mxu0 %v3520
        %8846 = vmatmul.mubr.bf16.gmra.mxu0 %v3519
        %v8847 = vpop.f32.mrf.mxu0
        %v8848 = vadd.f32 %v8367, %v8847
        %v8849 = vpop.f32.mrf.mxu0
        %v8850 = vpop.f32.mrf.mxu0
        %v8851 = vadd.f32 %v8370, %v8850
        %v8852 = vpop.f32.mrf.mxu0
        %8853 = vmatprep.mubr.bf16.mxu0 %v3530
        %8854 = vmatmul.mubr.bf16.gmra.mxu0 %v3529
        %v8855 = vpop.f32.mrf.mxu0
        %v8856 = vadd.f32 %v8375, %v8855
        %v8857 = vpop.f32.mrf.mxu0
        %v8858 = vpop.f32.mrf.mxu0
        %v8859 = vadd.f32 %v8378, %v8858
        %v8860 = vpop.f32.mrf.mxu0
        %8861 = vmatprep.mubr.bf16.mxu0 %v3540
        %8862 = vmatmul.mubr.bf16.gmra.mxu0 %v3539
        %v8863 = vpop.f32.mrf.mxu0
        %v8864 = vadd.f32 %v8383, %v8863
        %v8865 = vpop.f32.mrf.mxu0
        %v8866 = vpop.f32.mrf.mxu0
        %v8867 = vadd.f32 %v8386, %v8866
        %v8868 = vpop.f32.mrf.mxu0
        %8869 = vmatprep.mubr.bf16.mxu0 %v3550
        %8870 = vmatmul.mubr.bf16.gmra.mxu0 %v3549
        %v8871 = vpop.f32.mrf.mxu0
        %v8872 = vadd.f32 %v8391, %v8871
        %v8873 = vpop.f32.mrf.mxu0
        %v8874 = vpop.f32.mrf.mxu0
        %v8875 = vadd.f32 %v8394, %v8874
        %v8876 = vpop.f32.mrf.mxu0
        %8877 = vmatprep.mubr.bf16.mxu0 %v3560
        %8878 = vmatmul.mubr.bf16.gmra.mxu0 %v3559
        %v8879 = vpop.f32.mrf.mxu0
        %v8880 = vadd.f32 %v8399, %v8879
        %v8881 = vpop.f32.mrf.mxu0
        %v8882 = vpop.f32.mrf.mxu0
        %v8883 = vadd.f32 %v8402, %v8882
        %v8884 = vpop.f32.mrf.mxu0
        %8885 = vmatprep.mubr.bf16.mxu0 %v3570
        %8886 = vmatmul.mubr.bf16.gmra.mxu0 %v3569
        %v8887 = vpop.f32.mrf.mxu0
        %v8888 = vadd.f32 %v8407, %v8887
        %v8889 = vpop.f32.mrf.mxu0
        %v8890 = vpop.f32.mrf.mxu0
        %v8891 = vadd.f32 %v8410, %v8890
        %v8892 = vpop.f32.mrf.mxu0
        %8893 = vmatprep.mubr.bf16.mxu0 %v3580
        %8894 = vmatmul.mubr.bf16.gmra.mxu0 %v3579
        %v8895 = vpop.f32.mrf.mxu0
        %v8896 = vadd.f32 %v8415, %v8895
        %v8897 = vpop.f32.mrf.mxu0
        %v8898 = vpop.f32.mrf.mxu0
        %v8899 = vadd.f32 %v8418, %v8898
        %v8900 = vpop.f32.mrf.mxu0
        %8901 = vmatprep.mubr.bf16.mxu0 %v3590
        %8902 = vmatmul.mubr.bf16.gmra.mxu0 %v3589
        %v8903 = vpop.f32.mrf.mxu0
        %v8904 = vadd.f32 %v8423, %v8903
        %v8905 = vpop.f32.mrf.mxu0
        %v8906 = vpop.f32.mrf.mxu0
        %v8907 = vadd.f32 %v8426, %v8906
        %v8908 = vpop.f32.mrf.mxu0
        %8909 = vmatprep.mubr.bf16.mxu0 %v3600
        %8910 = vmatmul.mubr.bf16.gmra.mxu0 %v3599
        %v8911 = vpop.f32.mrf.mxu0
        %v8912 = vadd.f32 %v8431, %v8911
        %v8913 = vpop.f32.mrf.mxu0
        %v8914 = vpop.f32.mrf.mxu0
        %v8915 = vadd.f32 %v8434, %v8914
        %v8916 = vpop.f32.mrf.mxu0
        %8917 = vmatprep.mubr.bf16.mxu0 %v3610
        %8918 = vmatmul.mubr.bf16.gmra.mxu0 %v3609
        %v8919 = vpop.f32.mrf.mxu0
        %v8920 = vadd.f32 %v8439, %v8919
        %v8921 = vpop.f32.mrf.mxu0
        %v8922 = vpop.f32.mrf.mxu0
        %v8923 = vadd.f32 %v8442, %v8922
        %v8924 = vpop.f32.mrf.mxu0
        %8925 = vmatprep.mubr.bf16.mxu0 %v3620
        %8926 = vmatmul.mubr.bf16.gmra.mxu0 %v3619
        %v8927 = vpop.f32.mrf.mxu0
        %v8928 = vadd.f32 %v8447, %v8927
        %v8929 = vpop.f32.mrf.mxu0
        %v8930 = vpop.f32.mrf.mxu0
        %v8931 = vadd.f32 %v8450, %v8930
        %v8932 = vpop.f32.mrf.mxu0
        %8933 = vmatprep.mubr.bf16.mxu0 %v3630
        %8934 = vmatmul.mubr.bf16.gmra.mxu0 %v3629
        %v8935 = vpop.f32.mrf.mxu0
        %v8936 = vadd.f32 %v8455, %v8935
        %v8937 = vpop.f32.mrf.mxu0
        %v8938 = vpop.f32.mrf.mxu0
        %v8939 = vadd.f32 %v8458, %v8938
        %v8940 = vpop.f32.mrf.mxu0
        %8941 = vmatprep.mubr.bf16.mxu0 %v3640
        %8942 = vmatmul.mubr.bf16.gmra.mxu0 %v3639
        %v8943 = vpop.f32.mrf.mxu0
        %v8944 = vadd.f32 %v8463, %v8943
        %v8945 = vpop.f32.mrf.mxu0
        %v8946 = vpop.f32.mrf.mxu0
        %v8947 = vadd.f32 %v8466, %v8946
        %v8948 = vpop.f32.mrf.mxu0
        %8949 = vmatprep.mubr.bf16.mxu0 %v3650
        %8950 = vmatmul.mubr.bf16.gmra.mxu0 %v3649
        %v8951 = vpop.f32.mrf.mxu0
        %v8952 = vadd.f32 %v8471, %v8951
        %v8953 = vpop.f32.mrf.mxu0
        %v8954 = vpop.f32.mrf.mxu0
        %v8955 = vadd.f32 %v8474, %v8954
        %v8956 = vpop.f32.mrf.mxu0
        %8957 = vmatprep.mubr.bf16.mxu0 %v3660
        %8958 = vmatmul.mubr.bf16.gmra.mxu0 %v3659
        %v8959 = vpop.f32.mrf.mxu0
        %v8960 = vadd.f32 %v8479, %v8959
        %v8961 = vpop.f32.mrf.mxu0
        %v8962 = vpop.f32.mrf.mxu0
        %v8963 = vadd.f32 %v8482, %v8962
        %v8964 = vpop.f32.mrf.mxu0
        %8965 = vmatprep.mubr.bf16.mxu0 %v3670
        %8966 = vmatmul.mubr.bf16.gmra.mxu0 %v3669
        %v8967 = vpop.f32.mrf.mxu0
        %v8968 = vadd.f32 %v8487, %v8967
        %v8969 = vpop.f32.mrf.mxu0
        %v8970 = vpop.f32.mrf.mxu0
        %v8971 = vadd.f32 %v8490, %v8970
        %v8972 = vpop.f32.mrf.mxu0
        %8973 = vmatprep.mubr.bf16.mxu0 %v3680
        %8974 = vmatmul.mubr.bf16.gmra.mxu0 %v3679
        %v8975 = vpop.f32.mrf.mxu0
        %v8976 = vadd.f32 %v8495, %v8975
        %v8977 = vpop.f32.mrf.mxu0
        %v8978 = vpop.f32.mrf.mxu0
        %v8979 = vadd.f32 %v8498, %v8978
        %v8980 = vpop.f32.mrf.mxu0
        %8981 = vmatprep.mubr.bf16.mxu0 %v3690
        %8982 = vmatmul.mubr.bf16.gmra.mxu0 %v3689
        %v8983 = vpop.f32.mrf.mxu0
        %v8984 = vadd.f32 %v8503, %v8983
        %v8985 = vpop.f32.mrf.mxu0
        %v8986 = vpop.f32.mrf.mxu0
        %v8987 = vadd.f32 %v8506, %v8986
        %v8988 = vpop.f32.mrf.mxu0
        %8989 = vmatprep.mubr.bf16.mxu0 %v3700
        %8990 = vmatmul.mubr.bf16.gmra.mxu0 %v3699
        %v8991 = vpop.f32.mrf.mxu0
        %v8992 = vadd.f32 %v8511, %v8991
        %v8993 = vpop.f32.mrf.mxu0
        %v8994 = vpop.f32.mrf.mxu0
        %v8995 = vadd.f32 %v8514, %v8994
        %v8996 = vpop.f32.mrf.mxu0
        %8997 = vmatprep.mubr.bf16.mxu0 %v3710
        %8998 = vmatmul.mubr.bf16.gmra.mxu0 %v3709
        %v8999 = vpop.f32.mrf.mxu0
        %v9000 = vadd.f32 %v8519, %v8999
        %v9001 = vpop.f32.mrf.mxu0
        %v9002 = vpop.f32.mrf.mxu0
        %v9003 = vadd.f32 %v8522, %v9002
        %v9004 = vpop.f32.mrf.mxu0
        %9005 = vmatprep.mubr.bf16.mxu0 %v3720
        %9006 = vmatmul.mubr.bf16.gmra.mxu0 %v3719
        %v9007 = vpop.f32.mrf.mxu0
        %v9008 = vadd.f32 %v8527, %v9007
        %v9009 = vpop.f32.mrf.mxu0
        %v9010 = vpop.f32.mrf.mxu0
        %v9011 = vadd.f32 %v8530, %v9010
        %v9012 = vpop.f32.mrf.mxu0
        %9013 = vmatprep.mubr.bf16.mxu0 %v3730
        %9014 = vmatmul.mubr.bf16.gmra.mxu0 %v3729
        %v9015 = vpop.f32.mrf.mxu0
        %v9016 = vadd.f32 %v8535, %v9015
        %v9017 = vpop.f32.mrf.mxu0
        %v9018 = vpop.f32.mrf.mxu0
        %v9019 = vadd.f32 %v8538, %v9018
        %v9020 = vpop.f32.mrf.mxu0
        %9021 = vmatprep.mubr.bf16.mxu0 %v3740
        %9022 = vmatmul.mubr.bf16.gmra.mxu0 %v3739
        %v9023 = vpop.f32.mrf.mxu0
        %v9024 = vadd.f32 %v8543, %v9023
        %v9025 = vpop.f32.mrf.mxu0
        %v9026 = vpop.f32.mrf.mxu0
        %v9027 = vadd.f32 %v8546, %v9026
        %v9028 = vpop.f32.mrf.mxu0
        %9029 = vmatprep.mubr.bf16.mxu0 %v3750
        %9030 = vmatmul.mubr.bf16.gmra.mxu0 %v3749
        %v9031 = vpop.f32.mrf.mxu0
        %v9032 = vadd.f32 %v8551, %v9031
        %v9033 = vpop.f32.mrf.mxu0
        %v9034 = vpop.f32.mrf.mxu0
        %v9035 = vadd.f32 %v8554, %v9034
        %v9036 = vpop.f32.mrf.mxu0
        %9037 = vmatprep.mubr.bf16.mxu0 %v3760
        %9038 = vmatmul.mubr.bf16.gmra.mxu0 %v3759
        %v9039 = vpop.f32.mrf.mxu0
        %v9040 = vadd.f32 %v8559, %v9039
        %v9041 = vpop.f32.mrf.mxu0
        %v9042 = vpop.f32.mrf.mxu0
        %v9043 = vadd.f32 %v8562, %v9042
        %v9044 = vpop.f32.mrf.mxu0
        %9045 = vmatprep.mubr.bf16.mxu0 %v3770
        %9046 = vmatmul.mubr.bf16.gmra.mxu0 %v3769
        %v9047 = vpop.f32.mrf.mxu0
        %v9048 = vadd.f32 %v8567, %v9047
        %v9049 = vpop.f32.mrf.mxu0
        %v9050 = vpop.f32.mrf.mxu0
        %v9051 = vadd.f32 %v8570, %v9050
        %v9052 = vpop.f32.mrf.mxu0
        %9053 = vmatprep.mubr.bf16.mxu0 %v3780
        %9054 = vmatmul.mubr.bf16.gmra.mxu0 %v3779
        %v9055 = vpop.f32.mrf.mxu0
        %v9056 = vadd.f32 %v8575, %v9055
        %v9057 = vpop.f32.mrf.mxu0
        %v9058 = vpop.f32.mrf.mxu0
        %v9059 = vadd.f32 %v8578, %v9058
        %v9060 = vpop.f32.mrf.mxu0
        %9061 = vmatprep.mubr.bf16.mxu0 %v3790
        %9062 = vmatmul.mubr.bf16.gmra.mxu0 %v3789
        %v9063 = vpop.f32.mrf.mxu0
        %v9064 = vadd.f32 %v8583, %v9063
        %v9065 = vpop.f32.mrf.mxu0
        %v9066 = vpop.f32.mrf.mxu0
        %v9067 = vadd.f32 %v8586, %v9066
        %v9068 = vpop.f32.mrf.mxu0
        %9069 = vmatprep.mubr.bf16.mxu0 %v3800
        %9070 = vmatmul.mubr.bf16.gmra.mxu0 %v3799
        %v9071 = vpop.f32.mrf.mxu0
        %v9072 = vadd.f32 %v8591, %v9071
        %v9073 = vpop.f32.mrf.mxu0
        %v9074 = vpop.f32.mrf.mxu0
        %v9075 = vadd.f32 %v8594, %v9074
        %v9076 = vpop.f32.mrf.mxu0
        %9077 = vmatprep.mubr.bf16.mxu0 %v3810
        %9078 = vmatmul.mubr.bf16.gmra.mxu0 %v3809
        %v9079 = vpop.f32.mrf.mxu0
        %v9080 = vadd.f32 %v8599, %v9079
        %v9081 = vpop.f32.mrf.mxu0
        %v9082 = vpop.f32.mrf.mxu0
        %v9083 = vadd.f32 %v8602, %v9082
        %v9084 = vpop.f32.mrf.mxu0
        %9085 = vmatprep.mubr.bf16.mxu0 %v3820
        %9086 = vmatmul.mubr.bf16.gmra.mxu0 %v3819
        %v9087 = vpop.f32.mrf.mxu0
        %v9088 = vadd.f32 %v8607, %v9087
        %v9089 = vpop.f32.mrf.mxu0
        %v9090 = vpop.f32.mrf.mxu0
        %v9091 = vadd.f32 %v8610, %v9090
        %v9092 = vpop.f32.mrf.mxu0
        %9093 = vmatprep.mubr.bf16.mxu0 %v3830
        %9094 = vmatmul.mubr.bf16.gmra.mxu0 %v3829
        %v9095 = vpop.f32.mrf.mxu0
        %v9096 = vadd.f32 %v8615, %v9095
        %v9097 = vpop.f32.mrf.mxu0
        %v9098 = vpop.f32.mrf.mxu0
        %v9099 = vadd.f32 %v8618, %v9098
        %v9100 = vpop.f32.mrf.mxu0
        %9101 = vmatprep.mubr.bf16.mxu0 %v3840
        %9102 = vmatmul.mubr.bf16.gmra.mxu0 %v3839
        %v9103 = vpop.f32.mrf.mxu0
        %v9104 = vadd.f32 %v8623, %v9103
        %v9105 = vpop.f32.mrf.mxu0
        %v9106 = vpop.f32.mrf.mxu0
        %v9107 = vadd.f32 %v8626, %v9106
        %v9108 = vpop.f32.mrf.mxu0
        %9109 = vmatprep.mubr.bf16.mxu0 %v3850
        %9110 = vmatmul.mubr.bf16.gmra.mxu0 %v3849
        %v9111 = vpop.f32.mrf.mxu0
        %v9112 = vadd.f32 %v8631, %v9111
        %v9113 = vpop.f32.mrf.mxu0
        %v9114 = vpop.f32.mrf.mxu0
        %v9115 = vadd.f32 %v8634, %v9114
        %v9116 = vpop.f32.mrf.mxu0
        %9117 = vmatprep.mubr.bf16.mxu0 %v3860
        %9118 = vmatmul.mubr.bf16.gmra.mxu0 %v3859
        %v9119 = vpop.f32.mrf.mxu0
        %v9120 = vadd.f32 %v8639, %v9119
        %v9121 = vpop.f32.mrf.mxu0
        %v9122 = vpop.f32.mrf.mxu0
        %v9123 = vadd.f32 %v8642, %v9122
        %v9124 = vpop.f32.mrf.mxu0
        %9125 = vmatprep.mubr.bf16.mxu0 %v3870
        %9126 = vmatmul.mubr.bf16.gmra.mxu0 %v3869
        %v9127 = vpop.f32.mrf.mxu0
        %v9128 = vadd.f32 %v8647, %v9127
        %v9129 = vpop.f32.mrf.mxu0
        %v9130 = vpop.f32.mrf.mxu0
        %v9131 = vadd.f32 %v8650, %v9130
        %v9132 = vpop.f32.mrf.mxu0
        %9133 = vmatprep.mubr.bf16.mxu0 %v3880
        %9134 = vmatmul.mubr.bf16.gmra.mxu0 %v3879
        %v9135 = vpop.f32.mrf.mxu0
        %v9136 = vadd.f32 %v8655, %v9135
        %v9137 = vpop.f32.mrf.mxu0
        %v9138 = vpop.f32.mrf.mxu0
        %v9139 = vadd.f32 %v8658, %v9138
        %v9140 = vpop.f32.mrf.mxu0
        %9141 = vmatprep.mubr.bf16.mxu0 %v3890
        %9142 = vmatmul.mubr.bf16.gmra.mxu0 %v3889
        %v9143 = vpop.f32.mrf.mxu0
        %v9144 = vadd.f32 %v8663, %v9143
        %v9145 = vpop.f32.mrf.mxu0
        %v9146 = vpop.f32.mrf.mxu0
        %v9147 = vadd.f32 %v8666, %v9146
        %v9148 = vpop.f32.mrf.mxu0
        %9149 = vmatprep.mubr.bf16.mxu0 %v3900
        %9150 = vmatmul.mubr.bf16.gmra.mxu0 %v3899
        %v9151 = vpop.f32.mrf.mxu0
        %v9152 = vadd.f32 %v8671, %v9151
        %v9153 = vpop.f32.mrf.mxu0
        %v9154 = vpop.f32.mrf.mxu0
        %v9155 = vadd.f32 %v8674, %v9154
        %v9156 = vpop.f32.mrf.mxu0
        %9157 = vmatprep.mubr.bf16.mxu0 %v3910
        %9158 = vmatmul.mubr.bf16.gmra.mxu0 %v3909
        %v9159 = vpop.f32.mrf.mxu0
        %v9160 = vadd.f32 %v8679, %v9159
        %v9161 = vpop.f32.mrf.mxu0
        %v9162 = vpop.f32.mrf.mxu0
        %v9163 = vadd.f32 %v8682, %v9162
        %v9164 = vpop.f32.mrf.mxu0
        %9165 = vmatprep.mubr.bf16.mxu0 %v3920
        %9166 = vmatmul.mubr.bf16.gmra.mxu0 %v3919
        %v9167 = vpop.f32.mrf.mxu0
        %v9168 = vadd.f32 %v8687, %v9167
        %v9169 = vpop.f32.mrf.mxu0
        %v9170 = vpop.f32.mrf.mxu0
        %v9171 = vadd.f32 %v8690, %v9170
        %v9172 = vpop.f32.mrf.mxu0
        %9173 = vmatprep.mubr.bf16.mxu0 %v3930
        %9174 = vmatmul.mubr.bf16.gmra.mxu0 %v3929
        %v9175 = vpop.f32.mrf.mxu0
        %v9176 = vadd.f32 %v8695, %v9175
        %v9177 = vpop.f32.mrf.mxu0
        %v9178 = vpop.f32.mrf.mxu0
        %v9179 = vadd.f32 %v8698, %v9178
        %v9180 = vpop.f32.mrf.mxu0
        %9181 = vmatprep.mubr.bf16.mxu0 %v3940
        %9182 = vmatmul.mubr.bf16.gmra.mxu0 %v3939
        %v9183 = vpop.f32.mrf.mxu0
        %v9184 = vadd.f32 %v8703, %v9183
        %v9185 = vpop.f32.mrf.mxu0
        %v9186 = vpop.f32.mrf.mxu0
        %v9187 = vadd.f32 %v8706, %v9186
        %v9188 = vpop.f32.mrf.mxu0
        %9189 = vmatprep.mubr.bf16.mxu0 %v3950
        %9190 = vmatmul.mubr.bf16.gmra.mxu0 %v3949
        %v9191 = vpop.f32.mrf.mxu0
        %v9192 = vadd.f32 %v8711, %v9191
        %v9193 = vpop.f32.mrf.mxu0
        %v9194 = vpop.f32.mrf.mxu0
        %v9195 = vadd.f32 %v8714, %v9194
        %v9196 = vpop.f32.mrf.mxu0
        %9197 = vmatprep.mubr.bf16.mxu0 %v3960
        %9198 = vmatmul.mubr.bf16.gmra.mxu0 %v3959
        %v9199 = vpop.f32.mrf.mxu0
        %v9200 = vadd.f32 %v8719, %v9199
        %v9201 = vpop.f32.mrf.mxu0
        %v9202 = vpop.f32.mrf.mxu0
        %v9203 = vadd.f32 %v8722, %v9202
        %v9204 = vpop.f32.mrf.mxu0
        %9205 = vdwg.mxu0
        %9206 = vmatprep.subr.bf16.mxu0 0
        %9207 = vmatpush1.bf16.msra.mxu0 %v7273
        %9208 = vmatprep.subr.bf16.mxu0 0
        %9209 = vmatpush1.bf16.msra.mxu0 %v7272
        %9210 = vmatprep.subr.bf16.mxu0 0
        %9211 = vmatpush1.bf16.msra.mxu0 %v7271
        %9212 = vmatprep.subr.bf16.mxu0 0
        %9213 = vmatpush1.bf16.msra.mxu0 %v7270
        %9214 = vmatprep.subr.bf16.mxu0 0
        %9215 = vmatpush1.bf16.msra.mxu0 %v7269
        %9216 = vmatprep.subr.bf16.mxu0 0
        %9217 = vmatpush1.bf16.msra.mxu0 %v7268
        %9218 = vmatprep.subr.bf16.mxu0 0
        %9219 = vmatpush1.bf16.msra.mxu0 %v7267
        %9220 = vmatprep.subr.bf16.mxu0 0
        %9221 = vmatpush1.bf16.msra.mxu0 %v7266
        %9222 = vmatprep.subr.bf16.mxu0 0
        %9223 = vmatpush2.bf16.msra.mxu0 %v7281
        %9224 = vmatprep.subr.bf16.mxu0 0
        %9225 = vmatpush2.bf16.msra.mxu0 %v7280
        %9226 = vmatprep.subr.bf16.mxu0 0
        %9227 = vmatpush2.bf16.msra.mxu0 %v7279
        %9228 = vmatprep.subr.bf16.mxu0 0
        %9229 = vmatpush2.bf16.msra.mxu0 %v7278
        %9230 = vmatprep.subr.bf16.mxu0 0
        %9231 = vmatpush2.bf16.msra.mxu0 %v7277
        %9232 = vmatprep.subr.bf16.mxu0 0
        %9233 = vmatpush2.bf16.msra.mxu0 %v7276
        %9234 = vmatprep.subr.bf16.mxu0 0
        %9235 = vmatpush2.bf16.msra.mxu0 %v7275
        %9236 = vmatprep.subr.bf16.mxu0 0
        %9237 = vmatpush2.bf16.msra.mxu0 %v7274
        %9238 = vmatprep.mubr.bf16.mxu0 %v3412
        %9239 = vmatmul.mubr.bf16.gmra.mxu0 %v3411
        %v9240 = vpop.f32.mrf.mxu0
        %v9241 = vadd.f32 %v8760, %v9240
        %v9242 = vpop.f32.mrf.mxu0
        %v9243 = vpop.f32.mrf.mxu0
        %v9244 = vadd.f32 %v8763, %v9243
        %v9245 = vpop.f32.mrf.mxu0
        %9246 = vmatprep.mubr.bf16.mxu0 %v3422
        %9247 = vmatmul.mubr.bf16.gmra.mxu0 %v3421
        %v9248 = vpop.f32.mrf.mxu0
        %v9249 = vadd.f32 %v8768, %v9248
        %v9250 = vpop.f32.mrf.mxu0
        %v9251 = vpop.f32.mrf.mxu0
        %v9252 = vadd.f32 %v8771, %v9251
        %v9253 = vpop.f32.mrf.mxu0
        %9254 = vmatprep.mubr.bf16.mxu0 %v3432
        %9255 = vmatmul.mubr.bf16.gmra.mxu0 %v3431
        %v9256 = vpop.f32.mrf.mxu0
        %v9257 = vadd.f32 %v8776, %v9256
        %v9258 = vpop.f32.mrf.mxu0
        %v9259 = vpop.f32.mrf.mxu0
        %v9260 = vadd.f32 %v8779, %v9259
        %v9261 = vpop.f32.mrf.mxu0
        %9262 = vmatprep.mubr.bf16.mxu0 %v3442
        %9263 = vmatmul.mubr.bf16.gmra.mxu0 %v3441
        %v9264 = vpop.f32.mrf.mxu0
        %v9265 = vadd.f32 %v8784, %v9264
        %v9266 = vpop.f32.mrf.mxu0
        %v9267 = vpop.f32.mrf.mxu0
        %v9268 = vadd.f32 %v8787, %v9267
        %v9269 = vpop.f32.mrf.mxu0
        %9270 = vmatprep.mubr.bf16.mxu0 %v3452
        %9271 = vmatmul.mubr.bf16.gmra.mxu0 %v3451
        %v9272 = vpop.f32.mrf.mxu0
        %v9273 = vadd.f32 %v8792, %v9272
        %v9274 = vpop.f32.mrf.mxu0
        %v9275 = vpop.f32.mrf.mxu0
        %v9276 = vadd.f32 %v8795, %v9275
        %v9277 = vpop.f32.mrf.mxu0
        %9278 = vmatprep.mubr.bf16.mxu0 %v3462
        %9279 = vmatmul.mubr.bf16.gmra.mxu0 %v3461
        %v9280 = vpop.f32.mrf.mxu0
        %v9281 = vadd.f32 %v8800, %v9280
        %v9282 = vpop.f32.mrf.mxu0
        %v9283 = vpop.f32.mrf.mxu0
        %v9284 = vadd.f32 %v8803, %v9283
        %v9285 = vpop.f32.mrf.mxu0
        %9286 = vmatprep.mubr.bf16.mxu0 %v3472
        %9287 = vmatmul.mubr.bf16.gmra.mxu0 %v3471
        %v9288 = vpop.f32.mrf.mxu0
        %v9289 = vadd.f32 %v8808, %v9288
        %v9290 = vpop.f32.mrf.mxu0
        %v9291 = vpop.f32.mrf.mxu0
        %v9292 = vadd.f32 %v8811, %v9291
        %v9293 = vpop.f32.mrf.mxu0
        %9294 = vmatprep.mubr.bf16.mxu0 %v3482
        %9295 = vmatmul.mubr.bf16.gmra.mxu0 %v3481
        %v9296 = vpop.f32.mrf.mxu0
        %v9297 = vadd.f32 %v8816, %v9296
        %v9298 = vpop.f32.mrf.mxu0
        %v9299 = vpop.f32.mrf.mxu0
        %v9300 = vadd.f32 %v8819, %v9299
        %v9301 = vpop.f32.mrf.mxu0
        %9302 = vmatprep.mubr.bf16.mxu0 %v3492
        %9303 = vmatmul.mubr.bf16.gmra.mxu0 %v3491
        %v9304 = vpop.f32.mrf.mxu0
        %v9305 = vadd.f32 %v8824, %v9304
        %v9306 = vpop.f32.mrf.mxu0
        %v9307 = vpop.f32.mrf.mxu0
        %v9308 = vadd.f32 %v8827, %v9307
        %v9309 = vpop.f32.mrf.mxu0
        %9310 = vmatprep.mubr.bf16.mxu0 %v3502
        %9311 = vmatmul.mubr.bf16.gmra.mxu0 %v3501
        %v9312 = vpop.f32.mrf.mxu0
        %v9313 = vadd.f32 %v8832, %v9312
        %v9314 = vpop.f32.mrf.mxu0
        %v9315 = vpop.f32.mrf.mxu0
        %v9316 = vadd.f32 %v8835, %v9315
        %v9317 = vpop.f32.mrf.mxu0
        %9318 = vmatprep.mubr.bf16.mxu0 %v3512
        %9319 = vmatmul.mubr.bf16.gmra.mxu0 %v3511
        %v9320 = vpop.f32.mrf.mxu0
        %v9321 = vadd.f32 %v8840, %v9320
        %v9322 = vpop.f32.mrf.mxu0
        %v9323 = vpop.f32.mrf.mxu0
        %v9324 = vadd.f32 %v8843, %v9323
        %v9325 = vpop.f32.mrf.mxu0
        %9326 = vmatprep.mubr.bf16.mxu0 %v3522
        %9327 = vmatmul.mubr.bf16.gmra.mxu0 %v3521
        %v9328 = vpop.f32.mrf.mxu0
        %v9329 = vadd.f32 %v8848, %v9328
        %v9330 = vpop.f32.mrf.mxu0
        %v9331 = vpop.f32.mrf.mxu0
        %v9332 = vadd.f32 %v8851, %v9331
        %v9333 = vpop.f32.mrf.mxu0
        %9334 = vmatprep.mubr.bf16.mxu0 %v3532
        %9335 = vmatmul.mubr.bf16.gmra.mxu0 %v3531
        %v9336 = vpop.f32.mrf.mxu0
        %v9337 = vadd.f32 %v8856, %v9336
        %v9338 = vpop.f32.mrf.mxu0
        %v9339 = vpop.f32.mrf.mxu0
        %v9340 = vadd.f32 %v8859, %v9339
        %v9341 = vpop.f32.mrf.mxu0
        %9342 = vmatprep.mubr.bf16.mxu0 %v3542
        %9343 = vmatmul.mubr.bf16.gmra.mxu0 %v3541
        %v9344 = vpop.f32.mrf.mxu0
        %v9345 = vadd.f32 %v8864, %v9344
        %v9346 = vpop.f32.mrf.mxu0
        %v9347 = vpop.f32.mrf.mxu0
        %v9348 = vadd.f32 %v8867, %v9347
        %v9349 = vpop.f32.mrf.mxu0
        %9350 = vmatprep.mubr.bf16.mxu0 %v3552
        %9351 = vmatmul.mubr.bf16.gmra.mxu0 %v3551
        %v9352 = vpop.f32.mrf.mxu0
        %v9353 = vadd.f32 %v8872, %v9352
        %v9354 = vpop.f32.mrf.mxu0
        %v9355 = vpop.f32.mrf.mxu0
        %v9356 = vadd.f32 %v8875, %v9355
        %v9357 = vpop.f32.mrf.mxu0
        %9358 = vmatprep.mubr.bf16.mxu0 %v3562
        %9359 = vmatmul.mubr.bf16.gmra.mxu0 %v3561
        %v9360 = vpop.f32.mrf.mxu0
        %v9361 = vadd.f32 %v8880, %v9360
        %v9362 = vpop.f32.mrf.mxu0
        %v9363 = vpop.f32.mrf.mxu0
        %v9364 = vadd.f32 %v8883, %v9363
        %v9365 = vpop.f32.mrf.mxu0
        %9366 = vmatprep.mubr.bf16.mxu0 %v3572
        %9367 = vmatmul.mubr.bf16.gmra.mxu0 %v3571
        %v9368 = vpop.f32.mrf.mxu0
        %v9369 = vadd.f32 %v8888, %v9368
        %v9370 = vpop.f32.mrf.mxu0
        %v9371 = vpop.f32.mrf.mxu0
        %v9372 = vadd.f32 %v8891, %v9371
        %v9373 = vpop.f32.mrf.mxu0
        %9374 = vmatprep.mubr.bf16.mxu0 %v3582
        %9375 = vmatmul.mubr.bf16.gmra.mxu0 %v3581
        %v9376 = vpop.f32.mrf.mxu0
        %v9377 = vadd.f32 %v8896, %v9376
        %v9378 = vpop.f32.mrf.mxu0
        %v9379 = vpop.f32.mrf.mxu0
        %v9380 = vadd.f32 %v8899, %v9379
        %v9381 = vpop.f32.mrf.mxu0
        %9382 = vmatprep.mubr.bf16.mxu0 %v3592
        %9383 = vmatmul.mubr.bf16.gmra.mxu0 %v3591
        %v9384 = vpop.f32.mrf.mxu0
        %v9385 = vadd.f32 %v8904, %v9384
        %v9386 = vpop.f32.mrf.mxu0
        %v9387 = vpop.f32.mrf.mxu0
        %v9388 = vadd.f32 %v8907, %v9387
        %v9389 = vpop.f32.mrf.mxu0
        %9390 = vmatprep.mubr.bf16.mxu0 %v3602
        %9391 = vmatmul.mubr.bf16.gmra.mxu0 %v3601
        %v9392 = vpop.f32.mrf.mxu0
        %v9393 = vadd.f32 %v8912, %v9392
        %v9394 = vpop.f32.mrf.mxu0
        %v9395 = vpop.f32.mrf.mxu0
        %v9396 = vadd.f32 %v8915, %v9395
        %v9397 = vpop.f32.mrf.mxu0
        %9398 = vmatprep.mubr.bf16.mxu0 %v3612
        %9399 = vmatmul.mubr.bf16.gmra.mxu0 %v3611
        %v9400 = vpop.f32.mrf.mxu0
        %v9401 = vadd.f32 %v8920, %v9400
        %v9402 = vpop.f32.mrf.mxu0
        %v9403 = vpop.f32.mrf.mxu0
        %v9404 = vadd.f32 %v8923, %v9403
        %v9405 = vpop.f32.mrf.mxu0
        %9406 = vmatprep.mubr.bf16.mxu0 %v3622
        %9407 = vmatmul.mubr.bf16.gmra.mxu0 %v3621
        %v9408 = vpop.f32.mrf.mxu0
        %v9409 = vadd.f32 %v8928, %v9408
        %v9410 = vpop.f32.mrf.mxu0
        %v9411 = vpop.f32.mrf.mxu0
        %v9412 = vadd.f32 %v8931, %v9411
        %v9413 = vpop.f32.mrf.mxu0
        %9414 = vmatprep.mubr.bf16.mxu0 %v3632
        %9415 = vmatmul.mubr.bf16.gmra.mxu0 %v3631
        %v9416 = vpop.f32.mrf.mxu0
        %v9417 = vadd.f32 %v8936, %v9416
        %v9418 = vpop.f32.mrf.mxu0
        %v9419 = vpop.f32.mrf.mxu0
        %v9420 = vadd.f32 %v8939, %v9419
        %v9421 = vpop.f32.mrf.mxu0
        %9422 = vmatprep.mubr.bf16.mxu0 %v3642
        %9423 = vmatmul.mubr.bf16.gmra.mxu0 %v3641
        %v9424 = vpop.f32.mrf.mxu0
        %v9425 = vadd.f32 %v8944, %v9424
        %v9426 = vpop.f32.mrf.mxu0
        %v9427 = vpop.f32.mrf.mxu0
        %v9428 = vadd.f32 %v8947, %v9427
        %v9429 = vpop.f32.mrf.mxu0
        %9430 = vmatprep.mubr.bf16.mxu0 %v3652
        %9431 = vmatmul.mubr.bf16.gmra.mxu0 %v3651
        %v9432 = vpop.f32.mrf.mxu0
        %v9433 = vadd.f32 %v8952, %v9432
        %v9434 = vpop.f32.mrf.mxu0
        %v9435 = vpop.f32.mrf.mxu0
        %v9436 = vadd.f32 %v8955, %v9435
        %v9437 = vpop.f32.mrf.mxu0
        %9438 = vmatprep.mubr.bf16.mxu0 %v3662
        %9439 = vmatmul.mubr.bf16.gmra.mxu0 %v3661
        %v9440 = vpop.f32.mrf.mxu0
        %v9441 = vadd.f32 %v8960, %v9440
        %v9442 = vpop.f32.mrf.mxu0
        %v9443 = vpop.f32.mrf.mxu0
        %v9444 = vadd.f32 %v8963, %v9443
        %v9445 = vpop.f32.mrf.mxu0
        %9446 = vmatprep.mubr.bf16.mxu0 %v3672
        %9447 = vmatmul.mubr.bf16.gmra.mxu0 %v3671
        %v9448 = vpop.f32.mrf.mxu0
        %v9449 = vadd.f32 %v8968, %v9448
        %v9450 = vpop.f32.mrf.mxu0
        %v9451 = vpop.f32.mrf.mxu0
        %v9452 = vadd.f32 %v8971, %v9451
        %v9453 = vpop.f32.mrf.mxu0
        %9454 = vmatprep.mubr.bf16.mxu0 %v3682
        %9455 = vmatmul.mubr.bf16.gmra.mxu0 %v3681
        %v9456 = vpop.f32.mrf.mxu0
        %v9457 = vadd.f32 %v8976, %v9456
        %v9458 = vpop.f32.mrf.mxu0
        %v9459 = vpop.f32.mrf.mxu0
        %v9460 = vadd.f32 %v8979, %v9459
        %v9461 = vpop.f32.mrf.mxu0
        %9462 = vmatprep.mubr.bf16.mxu0 %v3692
        %9463 = vmatmul.mubr.bf16.gmra.mxu0 %v3691
        %v9464 = vpop.f32.mrf.mxu0
        %v9465 = vadd.f32 %v8984, %v9464
        %v9466 = vpop.f32.mrf.mxu0
        %v9467 = vpop.f32.mrf.mxu0
        %v9468 = vadd.f32 %v8987, %v9467
        %v9469 = vpop.f32.mrf.mxu0
        %9470 = vmatprep.mubr.bf16.mxu0 %v3702
        %9471 = vmatmul.mubr.bf16.gmra.mxu0 %v3701
        %v9472 = vpop.f32.mrf.mxu0
        %v9473 = vadd.f32 %v8992, %v9472
        %v9474 = vpop.f32.mrf.mxu0
        %v9475 = vpop.f32.mrf.mxu0
        %v9476 = vadd.f32 %v8995, %v9475
        %v9477 = vpop.f32.mrf.mxu0
        %9478 = vmatprep.mubr.bf16.mxu0 %v3712
        %9479 = vmatmul.mubr.bf16.gmra.mxu0 %v3711
        %v9480 = vpop.f32.mrf.mxu0
        %v9481 = vadd.f32 %v9000, %v9480
        %v9482 = vpop.f32.mrf.mxu0
        %v9483 = vpop.f32.mrf.mxu0
        %v9484 = vadd.f32 %v9003, %v9483
        %v9485 = vpop.f32.mrf.mxu0
        %9486 = vmatprep.mubr.bf16.mxu0 %v3722
        %9487 = vmatmul.mubr.bf16.gmra.mxu0 %v3721
        %v9488 = vpop.f32.mrf.mxu0
        %v9489 = vadd.f32 %v9008, %v9488
        %v9490 = vpop.f32.mrf.mxu0
        %v9491 = vpop.f32.mrf.mxu0
        %v9492 = vadd.f32 %v9011, %v9491
        %v9493 = vpop.f32.mrf.mxu0
        %9494 = vmatprep.mubr.bf16.mxu0 %v3732
        %9495 = vmatmul.mubr.bf16.gmra.mxu0 %v3731
        %v9496 = vpop.f32.mrf.mxu0
        %v9497 = vadd.f32 %v9016, %v9496
        %v9498 = vpop.f32.mrf.mxu0
        %v9499 = vpop.f32.mrf.mxu0
        %v9500 = vadd.f32 %v9019, %v9499
        %v9501 = vpop.f32.mrf.mxu0
        %9502 = vmatprep.mubr.bf16.mxu0 %v3742
        %9503 = vmatmul.mubr.bf16.gmra.mxu0 %v3741
        %v9504 = vpop.f32.mrf.mxu0
        %v9505 = vadd.f32 %v9024, %v9504
        %v9506 = vpop.f32.mrf.mxu0
        %v9507 = vpop.f32.mrf.mxu0
        %v9508 = vadd.f32 %v9027, %v9507
        %v9509 = vpop.f32.mrf.mxu0
        %9510 = vmatprep.mubr.bf16.mxu0 %v3752
        %9511 = vmatmul.mubr.bf16.gmra.mxu0 %v3751
        %v9512 = vpop.f32.mrf.mxu0
        %v9513 = vadd.f32 %v9032, %v9512
        %v9514 = vpop.f32.mrf.mxu0
        %v9515 = vpop.f32.mrf.mxu0
        %v9516 = vadd.f32 %v9035, %v9515
        %v9517 = vpop.f32.mrf.mxu0
        %9518 = vmatprep.mubr.bf16.mxu0 %v3762
        %9519 = vmatmul.mubr.bf16.gmra.mxu0 %v3761
        %v9520 = vpop.f32.mrf.mxu0
        %v9521 = vadd.f32 %v9040, %v9520
        %v9522 = vpop.f32.mrf.mxu0
        %v9523 = vpop.f32.mrf.mxu0
        %v9524 = vadd.f32 %v9043, %v9523
        %v9525 = vpop.f32.mrf.mxu0
        %9526 = vmatprep.mubr.bf16.mxu0 %v3772
        %9527 = vmatmul.mubr.bf16.gmra.mxu0 %v3771
        %v9528 = vpop.f32.mrf.mxu0
        %v9529 = vadd.f32 %v9048, %v9528
        %v9530 = vpop.f32.mrf.mxu0
        %v9531 = vpop.f32.mrf.mxu0
        %v9532 = vadd.f32 %v9051, %v9531
        %v9533 = vpop.f32.mrf.mxu0
        %9534 = vmatprep.mubr.bf16.mxu0 %v3782
        %9535 = vmatmul.mubr.bf16.gmra.mxu0 %v3781
        %v9536 = vpop.f32.mrf.mxu0
        %v9537 = vadd.f32 %v9056, %v9536
        %v9538 = vpop.f32.mrf.mxu0
        %v9539 = vpop.f32.mrf.mxu0
        %v9540 = vadd.f32 %v9059, %v9539
        %v9541 = vpop.f32.mrf.mxu0
        %9542 = vmatprep.mubr.bf16.mxu0 %v3792
        %9543 = vmatmul.mubr.bf16.gmra.mxu0 %v3791
        %v9544 = vpop.f32.mrf.mxu0
        %v9545 = vadd.f32 %v9064, %v9544
        %v9546 = vpop.f32.mrf.mxu0
        %v9547 = vpop.f32.mrf.mxu0
        %v9548 = vadd.f32 %v9067, %v9547
        %v9549 = vpop.f32.mrf.mxu0
        %9550 = vmatprep.mubr.bf16.mxu0 %v3802
        %9551 = vmatmul.mubr.bf16.gmra.mxu0 %v3801
        %v9552 = vpop.f32.mrf.mxu0
        %v9553 = vadd.f32 %v9072, %v9552
        %v9554 = vpop.f32.mrf.mxu0
        %v9555 = vpop.f32.mrf.mxu0
        %v9556 = vadd.f32 %v9075, %v9555
        %v9557 = vpop.f32.mrf.mxu0
        %9558 = vmatprep.mubr.bf16.mxu0 %v3812
        %9559 = vmatmul.mubr.bf16.gmra.mxu0 %v3811
        %v9560 = vpop.f32.mrf.mxu0
        %v9561 = vadd.f32 %v9080, %v9560
        %v9562 = vpop.f32.mrf.mxu0
        %v9563 = vpop.f32.mrf.mxu0
        %v9564 = vadd.f32 %v9083, %v9563
        %v9565 = vpop.f32.mrf.mxu0
        %9566 = vmatprep.mubr.bf16.mxu0 %v3822
        %9567 = vmatmul.mubr.bf16.gmra.mxu0 %v3821
        %v9568 = vpop.f32.mrf.mxu0
        %v9569 = vadd.f32 %v9088, %v9568
        %v9570 = vpop.f32.mrf.mxu0
        %v9571 = vpop.f32.mrf.mxu0
        %v9572 = vadd.f32 %v9091, %v9571
        %v9573 = vpop.f32.mrf.mxu0
        %9574 = vmatprep.mubr.bf16.mxu0 %v3832
        %9575 = vmatmul.mubr.bf16.gmra.mxu0 %v3831
        %v9576 = vpop.f32.mrf.mxu0
        %v9577 = vadd.f32 %v9096, %v9576
        %v9578 = vpop.f32.mrf.mxu0
        %v9579 = vpop.f32.mrf.mxu0
        %v9580 = vadd.f32 %v9099, %v9579
        %v9581 = vpop.f32.mrf.mxu0
        %9582 = vmatprep.mubr.bf16.mxu0 %v3842
        %9583 = vmatmul.mubr.bf16.gmra.mxu0 %v3841
        %v9584 = vpop.f32.mrf.mxu0
        %v9585 = vadd.f32 %v9104, %v9584
        %v9586 = vpop.f32.mrf.mxu0
        %v9587 = vpop.f32.mrf.mxu0
        %v9588 = vadd.f32 %v9107, %v9587
        %v9589 = vpop.f32.mrf.mxu0
        %9590 = vmatprep.mubr.bf16.mxu0 %v3852
        %9591 = vmatmul.mubr.bf16.gmra.mxu0 %v3851
        %v9592 = vpop.f32.mrf.mxu0
        %v9593 = vadd.f32 %v9112, %v9592
        %v9594 = vpop.f32.mrf.mxu0
        %v9595 = vpop.f32.mrf.mxu0
        %v9596 = vadd.f32 %v9115, %v9595
        %v9597 = vpop.f32.mrf.mxu0
        %9598 = vmatprep.mubr.bf16.mxu0 %v3862
        %9599 = vmatmul.mubr.bf16.gmra.mxu0 %v3861
        %v9600 = vpop.f32.mrf.mxu0
        %v9601 = vadd.f32 %v9120, %v9600
        %v9602 = vpop.f32.mrf.mxu0
        %v9603 = vpop.f32.mrf.mxu0
        %v9604 = vadd.f32 %v9123, %v9603
        %v9605 = vpop.f32.mrf.mxu0
        %9606 = vmatprep.mubr.bf16.mxu0 %v3872
        %9607 = vmatmul.mubr.bf16.gmra.mxu0 %v3871
        %v9608 = vpop.f32.mrf.mxu0
        %v9609 = vadd.f32 %v9128, %v9608
        %v9610 = vpop.f32.mrf.mxu0
        %v9611 = vpop.f32.mrf.mxu0
        %v9612 = vadd.f32 %v9131, %v9611
        %v9613 = vpop.f32.mrf.mxu0
        %9614 = vmatprep.mubr.bf16.mxu0 %v3882
        %9615 = vmatmul.mubr.bf16.gmra.mxu0 %v3881
        %v9616 = vpop.f32.mrf.mxu0
        %v9617 = vadd.f32 %v9136, %v9616
        %v9618 = vpop.f32.mrf.mxu0
        %v9619 = vpop.f32.mrf.mxu0
        %v9620 = vadd.f32 %v9139, %v9619
        %v9621 = vpop.f32.mrf.mxu0
        %9622 = vmatprep.mubr.bf16.mxu0 %v3892
        %9623 = vmatmul.mubr.bf16.gmra.mxu0 %v3891
        %v9624 = vpop.f32.mrf.mxu0
        %v9625 = vadd.f32 %v9144, %v9624
        %v9626 = vpop.f32.mrf.mxu0
        %v9627 = vpop.f32.mrf.mxu0
        %v9628 = vadd.f32 %v9147, %v9627
        %v9629 = vpop.f32.mrf.mxu0
        %9630 = vmatprep.mubr.bf16.mxu0 %v3902
        %9631 = vmatmul.mubr.bf16.gmra.mxu0 %v3901
        %v9632 = vpop.f32.mrf.mxu0
        %v9633 = vadd.f32 %v9152, %v9632
        %v9634 = vpop.f32.mrf.mxu0
        %v9635 = vpop.f32.mrf.mxu0
        %v9636 = vadd.f32 %v9155, %v9635
        %v9637 = vpop.f32.mrf.mxu0
        %9638 = vmatprep.mubr.bf16.mxu0 %v3912
        %9639 = vmatmul.mubr.bf16.gmra.mxu0 %v3911
        %v9640 = vpop.f32.mrf.mxu0
        %v9641 = vadd.f32 %v9160, %v9640
        %v9642 = vpop.f32.mrf.mxu0
        %v9643 = vpop.f32.mrf.mxu0
        %v9644 = vadd.f32 %v9163, %v9643
        %v9645 = vpop.f32.mrf.mxu0
        %9646 = vmatprep.mubr.bf16.mxu0 %v3922
        %9647 = vmatmul.mubr.bf16.gmra.mxu0 %v3921
        %v9648 = vpop.f32.mrf.mxu0
        %v9649 = vadd.f32 %v9168, %v9648
        %v9650 = vpop.f32.mrf.mxu0
        %v9651 = vpop.f32.mrf.mxu0
        %v9652 = vadd.f32 %v9171, %v9651
        %v9653 = vpop.f32.mrf.mxu0
        %9654 = vmatprep.mubr.bf16.mxu0 %v3932
        %9655 = vmatmul.mubr.bf16.gmra.mxu0 %v3931
        %v9656 = vpop.f32.mrf.mxu0
        %v9657 = vadd.f32 %v9176, %v9656
        %v9658 = vpop.f32.mrf.mxu0
        %v9659 = vpop.f32.mrf.mxu0
        %v9660 = vadd.f32 %v9179, %v9659
        %v9661 = vpop.f32.mrf.mxu0
        %9662 = vmatprep.mubr.bf16.mxu0 %v3942
        %9663 = vmatmul.mubr.bf16.gmra.mxu0 %v3941
        %v9664 = vpop.f32.mrf.mxu0
        %v9665 = vadd.f32 %v9184, %v9664
        %v9666 = vpop.f32.mrf.mxu0
        %v9667 = vpop.f32.mrf.mxu0
        %v9668 = vadd.f32 %v9187, %v9667
        %v9669 = vpop.f32.mrf.mxu0
        %9670 = vmatprep.mubr.bf16.mxu0 %v3952
        %9671 = vmatmul.mubr.bf16.gmra.mxu0 %v3951
        %v9672 = vpop.f32.mrf.mxu0
        %v9673 = vadd.f32 %v9192, %v9672
        %v9674 = vpop.f32.mrf.mxu0
        %v9675 = vpop.f32.mrf.mxu0
        %v9676 = vadd.f32 %v9195, %v9675
        %v9677 = vpop.f32.mrf.mxu0
        %9678 = vmatprep.mubr.bf16.mxu0 %v3962
        %9679 = vmatmul.mubr.bf16.gmra.mxu0 %v3961
        %v9680 = vpop.f32.mrf.mxu0
        %v9681 = vadd.f32 %v9200, %v9680
        %v9682 = vpop.f32.mrf.mxu0
        %v9683 = vpop.f32.mrf.mxu0
        %v9684 = vadd.f32 %v9203, %v9683
        %v9685 = vpop.f32.mrf.mxu0
        %9686 = vdwg.mxu0
        %s9687 = scalar_lea.vmem %s233, 896 [#allocation4]
        %9688 = vst.msk [vmem:[%s9687] sm:$0xff] %vm6928, %v9241
        %9689 = vst.msk [vmem:[%s9687 + $0x8] sm:$0xff] %vm6928, %v9244
        %9690 = vst.msk [vmem:[%s9687 + $0x10] sm:$0xff] %vm6928, %v9249
        %9691 = vst.msk [vmem:[%s9687 + $0x18] sm:$0xff] %vm6928, %v9252
        %9692 = vst.msk [vmem:[%s9687 + $0x20] sm:$0xff] %vm6928, %v9257
        %9693 = vst.msk [vmem:[%s9687 + $0x28] sm:$0xff] %vm6928, %v9260
        %9694 = vst.msk [vmem:[%s9687 + $0x30] sm:$0xff] %vm6928, %v9265
        %9695 = vst.msk [vmem:[%s9687 + $0x38] sm:$0xff] %vm6928, %v9268
        %9696 = vst.msk [vmem:[%s9687 + $0x40] sm:$0xff] %vm6928, %v9273
        %9697 = vst.msk [vmem:[%s9687 + $0x48] sm:$0xff] %vm6928, %v9276
        %9698 = vst.msk [vmem:[%s9687 + $0x50] sm:$0xff] %vm6928, %v9281
        %9699 = vst.msk [vmem:[%s9687 + $0x58] sm:$0xff] %vm6928, %v9284
        %9700 = vst.msk [vmem:[%s9687 + $0x60] sm:$0xff] %vm6928, %v9289
        %9701 = vst.msk [vmem:[%s9687 + $0x68] sm:$0xff] %vm6928, %v9292
        %9702 = vst.msk [vmem:[%s9687 + $0x70] sm:$0xff] %vm6928, %v9297
        %9703 = vst.msk [vmem:[%s9687 + $0x78] sm:$0xff] %vm6928, %v9300
        %9704 = vst.msk [vmem:[%s9687 + $0x80] sm:$0xff] %vm6928, %v9305
        %9705 = vst.msk [vmem:[%s9687 + $0x88] sm:$0xff] %vm6928, %v9308
        %9706 = vst.msk [vmem:[%s9687 + $0x90] sm:$0xff] %vm6928, %v9313
        %9707 = vst.msk [vmem:[%s9687 + $0x98] sm:$0xff] %vm6928, %v9316
        %9708 = vst.msk [vmem:[%s9687 + $0xa0] sm:$0xff] %vm6928, %v9321
        %9709 = vst.msk [vmem:[%s9687 + $0xa8] sm:$0xff] %vm6928, %v9324
        %9710 = vst.msk [vmem:[%s9687 + $0xb0] sm:$0xff] %vm6928, %v9329
        %9711 = vst.msk [vmem:[%s9687 + $0xb8] sm:$0xff] %vm6928, %v9332
        %9712 = vst.msk [vmem:[%s9687 + $0xc0] sm:$0xff] %vm6928, %v9337
        %9713 = vst.msk [vmem:[%s9687 + $0xc8] sm:$0xff] %vm6928, %v9340
        %9714 = vst.msk [vmem:[%s9687 + $0xd0] sm:$0xff] %vm6928, %v9345
        %9715 = vst.msk [vmem:[%s9687 + $0xd8] sm:$0xff] %vm6928, %v9348
        %9716 = vst.msk [vmem:[%s9687 + $0xe0] sm:$0xff] %vm6928, %v9353
        %9717 = vst.msk [vmem:[%s9687 + $0xe8] sm:$0xff] %vm6928, %v9356
        %9718 = vst.msk [vmem:[%s9687 + $0xf0] sm:$0xff] %vm6928, %v9361
        %9719 = vst.msk [vmem:[%s9687 + $0xf8] sm:$0xff] %vm6928, %v9364
        %9720 = vst.msk [vmem:[%s9687 + $0x100] sm:$0xff] %vm6928, %v9369
        %9721 = vst.msk [vmem:[%s9687 + $0x108] sm:$0xff] %vm6928, %v9372
        %9722 = vst.msk [vmem:[%s9687 + $0x110] sm:$0xff] %vm6928, %v9377
        %9723 = vst.msk [vmem:[%s9687 + $0x118] sm:$0xff] %vm6928, %v9380
        %9724 = vst.msk [vmem:[%s9687 + $0x120] sm:$0xff] %vm6928, %v9385
        %9725 = vst.msk [vmem:[%s9687 + $0x128] sm:$0xff] %vm6928, %v9388
        %9726 = vst.msk [vmem:[%s9687 + $0x130] sm:$0xff] %vm6928, %v9393
        %9727 = vst.msk [vmem:[%s9687 + $0x138] sm:$0xff] %vm6928, %v9396
        %9728 = vst.msk [vmem:[%s9687 + $0x140] sm:$0xff] %vm6928, %v9401
        %9729 = vst.msk [vmem:[%s9687 + $0x148] sm:$0xff] %vm6928, %v9404
        %9730 = vst.msk [vmem:[%s9687 + $0x150] sm:$0xff] %vm6928, %v9409
        %9731 = vst.msk [vmem:[%s9687 + $0x158] sm:$0xff] %vm6928, %v9412
        %9732 = vst.msk [vmem:[%s9687 + $0x160] sm:$0xff] %vm6928, %v9417
        %9733 = vst.msk [vmem:[%s9687 + $0x168] sm:$0xff] %vm6928, %v9420
        %9734 = vst.msk [vmem:[%s9687 + $0x170] sm:$0xff] %vm6928, %v9425
        %9735 = vst.msk [vmem:[%s9687 + $0x178] sm:$0xff] %vm6928, %v9428
        %9736 = vst.msk [vmem:[%s9687 + $0x180] sm:$0xff] %vm6928, %v9433
        %9737 = vst.msk [vmem:[%s9687 + $0x188] sm:$0xff] %vm6928, %v9436
        %9738 = vst.msk [vmem:[%s9687 + $0x190] sm:$0xff] %vm6928, %v9441
        %9739 = vst.msk [vmem:[%s9687 + $0x198] sm:$0xff] %vm6928, %v9444
        %9740 = vst.msk [vmem:[%s9687 + $0x1a0] sm:$0xff] %vm6928, %v9449
        %9741 = vst.msk [vmem:[%s9687 + $0x1a8] sm:$0xff] %vm6928, %v9452
        %9742 = vst.msk [vmem:[%s9687 + $0x1b0] sm:$0xff] %vm6928, %v9457
        %9743 = vst.msk [vmem:[%s9687 + $0x1b8] sm:$0xff] %vm6928, %v9460
        %9744 = vst.msk [vmem:[%s9687 + $0x1c0] sm:$0xff] %vm6928, %v9465
        %9745 = vst.msk [vmem:[%s9687 + $0x1c8] sm:$0xff] %vm6928, %v9468
        %9746 = vst.msk [vmem:[%s9687 + $0x1d0] sm:$0xff] %vm6928, %v9473
        %9747 = vst.msk [vmem:[%s9687 + $0x1d8] sm:$0xff] %vm6928, %v9476
        %9748 = vst.msk [vmem:[%s9687 + $0x1e0] sm:$0xff] %vm6928, %v9481
        %9749 = vst.msk [vmem:[%s9687 + $0x1e8] sm:$0xff] %vm6928, %v9484
        %9750 = vst.msk [vmem:[%s9687 + $0x1f0] sm:$0xff] %vm6928, %v9489
        %9751 = vst.msk [vmem:[%s9687 + $0x1f8] sm:$0xff] %vm6928, %v9492
        %9752 = vst.msk [vmem:[%s9687 + $0x200] sm:$0xff] %vm6928, %v9497
        %9753 = vst.msk [vmem:[%s9687 + $0x208] sm:$0xff] %vm6928, %v9500
        %9754 = vst.msk [vmem:[%s9687 + $0x210] sm:$0xff] %vm6928, %v9505
        %9755 = vst.msk [vmem:[%s9687 + $0x218] sm:$0xff] %vm6928, %v9508
        %9756 = vst.msk [vmem:[%s9687 + $0x220] sm:$0xff] %vm6928, %v9513
        %9757 = vst.msk [vmem:[%s9687 + $0x228] sm:$0xff] %vm6928, %v9516
        %9758 = vst.msk [vmem:[%s9687 + $0x230] sm:$0xff] %vm6928, %v9521
        %9759 = vst.msk [vmem:[%s9687 + $0x238] sm:$0xff] %vm6928, %v9524
        %9760 = vst.msk [vmem:[%s9687 + $0x240] sm:$0xff] %vm6928, %v9529
        %9761 = vst.msk [vmem:[%s9687 + $0x248] sm:$0xff] %vm6928, %v9532
        %9762 = vst.msk [vmem:[%s9687 + $0x250] sm:$0xff] %vm6928, %v9537
        %9763 = vst.msk [vmem:[%s9687 + $0x258] sm:$0xff] %vm6928, %v9540
        %9764 = vst.msk [vmem:[%s9687 + $0x260] sm:$0xff] %vm6928, %v9545
        %9765 = vst.msk [vmem:[%s9687 + $0x268] sm:$0xff] %vm6928, %v9548
        %9766 = vst.msk [vmem:[%s9687 + $0x270] sm:$0xff] %vm6928, %v9553
        %9767 = vst.msk [vmem:[%s9687 + $0x278] sm:$0xff] %vm6928, %v9556
        %9768 = vst.msk [vmem:[%s9687 + $0x280] sm:$0xff] %vm6928, %v9561
        %9769 = vst.msk [vmem:[%s9687 + $0x288] sm:$0xff] %vm6928, %v9564
        %9770 = vst.msk [vmem:[%s9687 + $0x290] sm:$0xff] %vm6928, %v9569
        %9771 = vst.msk [vmem:[%s9687 + $0x298] sm:$0xff] %vm6928, %v9572
        %9772 = vst.msk [vmem:[%s9687 + $0x2a0] sm:$0xff] %vm6928, %v9577
        %9773 = vst.msk [vmem:[%s9687 + $0x2a8] sm:$0xff] %vm6928, %v9580
        %9774 = vst.msk [vmem:[%s9687 + $0x2b0] sm:$0xff] %vm6928, %v9585
        %9775 = vst.msk [vmem:[%s9687 + $0x2b8] sm:$0xff] %vm6928, %v9588
        %9776 = vst.msk [vmem:[%s9687 + $0x2c0] sm:$0xff] %vm6928, %v9593
        %9777 = vst.msk [vmem:[%s9687 + $0x2c8] sm:$0xff] %vm6928, %v9596
        %9778 = vst.msk [vmem:[%s9687 + $0x2d0] sm:$0xff] %vm6928, %v9601
        %9779 = vst.msk [vmem:[%s9687 + $0x2d8] sm:$0xff] %vm6928, %v9604
        %9780 = vst.msk [vmem:[%s9687 + $0x2e0] sm:$0xff] %vm6928, %v9609
        %9781 = vst.msk [vmem:[%s9687 + $0x2e8] sm:$0xff] %vm6928, %v9612
        %9782 = vst.msk [vmem:[%s9687 + $0x2f0] sm:$0xff] %vm6928, %v9617
        %9783 = vst.msk [vmem:[%s9687 + $0x2f8] sm:$0xff] %vm6928, %v9620
        %9784 = vst.msk [vmem:[%s9687 + $0x300] sm:$0xff] %vm6928, %v9625
        %9785 = vst.msk [vmem:[%s9687 + $0x308] sm:$0xff] %vm6928, %v9628
        %9786 = vst.msk [vmem:[%s9687 + $0x310] sm:$0xff] %vm6928, %v9633
        %9787 = vst.msk [vmem:[%s9687 + $0x318] sm:$0xff] %vm6928, %v9636
        %9788 = vst.msk [vmem:[%s9687 + $0x320] sm:$0xff] %vm6928, %v9641
        %9789 = vst.msk [vmem:[%s9687 + $0x328] sm:$0xff] %vm6928, %v9644
        %9790 = vst.msk [vmem:[%s9687 + $0x330] sm:$0xff] %vm6928, %v9649
        %9791 = vst.msk [vmem:[%s9687 + $0x338] sm:$0xff] %vm6928, %v9652
        %9792 = vst.msk [vmem:[%s9687 + $0x340] sm:$0xff] %vm6928, %v9657
        %9793 = vst.msk [vmem:[%s9687 + $0x348] sm:$0xff] %vm6928, %v9660
        %9794 = vst.msk [vmem:[%s9687 + $0x350] sm:$0xff] %vm6928, %v9665
        %9795 = vst.msk [vmem:[%s9687 + $0x358] sm:$0xff] %vm6928, %v9668
        %9796 = vst.msk [vmem:[%s9687 + $0x360] sm:$0xff] %vm6928, %v9673
        %9797 = vst.msk [vmem:[%s9687 + $0x368] sm:$0xff] %vm6928, %v9676
        %9798 = vst.msk [vmem:[%s9687 + $0x370] sm:$0xff] %vm6928, %v9681
        %9799 = vst.msk [vmem:[%s9687 + $0x378] sm:$0xff] %vm6928, %v9684
        %s9800 = sand.u32 %s117, 1
        %s9801 = sand.u32 %s117, 1
        %s9802 = smul.addr %s9801, 1792
        %s9803 = scalar_lea.vmem [#allocation4], %s9802
        // Predicated region
        $region37: #{a_call__.1} parent=31 // pred_check
          %p9804 = pneg %p127
        $region38: #{a_call__.1} parent=31 // pred_check_branch
          %9806 = sbr.rel (%p9804) target = $region40
        $region39: #{a_call__.1} parent=31 // pred_region
          %s9807 = smul.u32 2, %s22
          %s9808 = smul.u32 112, %s21
          %s9809 = smul.addr %s9807, 224
          %s9810 = sadd.s32 %s9808, %s9809
          %s9811 = smul.addr %s9810, 8
          %s9812 = scalar_lea.vmem %s3, %s9811
          // Predicated region
          $region41: #{a_call__.1} parent=39 // pred_check
            _
          $region42: #{a_call__.1} parent=39 // pred_check_branch
            %9814 = sbr.rel (0) target = $region44
          $region43: #{a_call__.1} parent=39 // pred_region
            // Predicated region
            $region45: #{a_call__.1} parent=43 // pred_check
              _
            $region46: #{a_call__.1} parent=43 // pred_check_branch
              %9816 = sbr.rel (0) target = $region48
            $region47: #{a_call__.1} parent=43 // pred_region
              // Predicated region
              $region60: #{a_call__.1} parent=47 // pred_check
                _
              $region61: #{a_call__.1} parent=47 // pred_check_branch
                %10278 = sbr.rel (0) target = $region63
              $region62: #{a_call__.1} parent=47 // pred_region
                loop: start=0, step=1, limit=1
                $region64: #{a_call__.1} parent=62 // loop_pre_header
                  _
                $region65: #{a_call__.1} parent=62 // loop_header
                  %s10280 = sphi 0, %s10284
                  %p10281 = scmp.ge.s32.totalorder %s10280, 1
                  %s10285 = sphi %s9803, %s9803
                  %s10286 = sphi %s9812, %s9812
                $region66: #{a_call__.1} parent=62 // loop_header_branch
                  %10283 = sbr.rel (%p10281) target = $region70
                $region67: #{a_call__.1} parent=62 // loop_body
                  %v10287 = vld [vmem:[%s10285] sm:$0xff]
                  %10288 = vst [vmem:[%s10286] sm:$0xff] %v10287
                  %v10289 = vld [vmem:[%s10285 + $0x8] sm:$0xff]
                  %10290 = vst [vmem:[%s10286 + $0x8] sm:$0xff] %v10289
                  %v10291 = vld [vmem:[%s10285 + $0x10] sm:$0xff]
                  %10292 = vst [vmem:[%s10286 + $0x10] sm:$0xff] %v10291
                  %v10293 = vld [vmem:[%s10285 + $0x18] sm:$0xff]
                  %10294 = vst [vmem:[%s10286 + $0x18] sm:$0xff] %v10293
                  %v10295 = vld [vmem:[%s10285 + $0x20] sm:$0xff]
                  %10296 = vst [vmem:[%s10286 + $0x20] sm:$0xff] %v10295
                  %v10297 = vld [vmem:[%s10285 + $0x28] sm:$0xff]
                  %10298 = vst [vmem:[%s10286 + $0x28] sm:$0xff] %v10297
                  %v10299 = vld [vmem:[%s10285 + $0x30] sm:$0xff]
                  %10300 = vst [vmem:[%s10286 + $0x30] sm:$0xff] %v10299
                  %v10301 = vld [vmem:[%s10285 + $0x38] sm:$0xff]
                  %10302 = vst [vmem:[%s10286 + $0x38] sm:$0xff] %v10301
                  %v10303 = vld [vmem:[%s10285 + $0x40] sm:$0xff]
                  %10304 = vst [vmem:[%s10286 + $0x40] sm:$0xff] %v10303
                  %v10305 = vld [vmem:[%s10285 + $0x48] sm:$0xff]
                  %10306 = vst [vmem:[%s10286 + $0x48] sm:$0xff] %v10305
                  %v10307 = vld [vmem:[%s10285 + $0x50] sm:$0xff]
                  %10308 = vst [vmem:[%s10286 + $0x50] sm:$0xff] %v10307
                  %v10309 = vld [vmem:[%s10285 + $0x58] sm:$0xff]
                  %10310 = vst [vmem:[%s10286 + $0x58] sm:$0xff] %v10309
                  %v10311 = vld [vmem:[%s10285 + $0x60] sm:$0xff]
                  %10312 = vst [vmem:[%s10286 + $0x60] sm:$0xff] %v10311
                  %v10313 = vld [vmem:[%s10285 + $0x68] sm:$0xff]
                  %10314 = vst [vmem:[%s10286 + $0x68] sm:$0xff] %v10313
                  %v10315 = vld [vmem:[%s10285 + $0x70] sm:$0xff]
                  %10316 = vst [vmem:[%s10286 + $0x70] sm:$0xff] %v10315
                  %v10317 = vld [vmem:[%s10285 + $0x78] sm:$0xff]
                  %10318 = vst [vmem:[%s10286 + $0x78] sm:$0xff] %v10317
                  %v10319 = vld [vmem:[%s10285 + $0x80] sm:$0xff]
                  %10320 = vst [vmem:[%s10286 + $0x80] sm:$0xff] %v10319
                  %v10321 = vld [vmem:[%s10285 + $0x88] sm:$0xff]
                  %10322 = vst [vmem:[%s10286 + $0x88] sm:$0xff] %v10321
                  %v10323 = vld [vmem:[%s10285 + $0x90] sm:$0xff]
                  %10324 = vst [vmem:[%s10286 + $0x90] sm:$0xff] %v10323
                  %v10325 = vld [vmem:[%s10285 + $0x98] sm:$0xff]
                  %10326 = vst [vmem:[%s10286 + $0x98] sm:$0xff] %v10325
                  %v10327 = vld [vmem:[%s10285 + $0xa0] sm:$0xff]
                  %10328 = vst [vmem:[%s10286 + $0xa0] sm:$0xff] %v10327
                  %v10329 = vld [vmem:[%s10285 + $0xa8] sm:$0xff]
                  %10330 = vst [vmem:[%s10286 + $0xa8] sm:$0xff] %v10329
                  %v10331 = vld [vmem:[%s10285 + $0xb0] sm:$0xff]
                  %10332 = vst [vmem:[%s10286 + $0xb0] sm:$0xff] %v10331
                  %v10333 = vld [vmem:[%s10285 + $0xb8] sm:$0xff]
                  %10334 = vst [vmem:[%s10286 + $0xb8] sm:$0xff] %v10333
                  %v10335 = vld [vmem:[%s10285 + $0xc0] sm:$0xff]
                  %10336 = vst [vmem:[%s10286 + $0xc0] sm:$0xff] %v10335
                  %v10337 = vld [vmem:[%s10285 + $0xc8] sm:$0xff]
                  %10338 = vst [vmem:[%s10286 + $0xc8] sm:$0xff] %v10337
                  %v10339 = vld [vmem:[%s10285 + $0xd0] sm:$0xff]
                  %10340 = vst [vmem:[%s10286 + $0xd0] sm:$0xff] %v10339
                  %v10341 = vld [vmem:[%s10285 + $0xd8] sm:$0xff]
                  %10342 = vst [vmem:[%s10286 + $0xd8] sm:$0xff] %v10341
                  %v10343 = vld [vmem:[%s10285 + $0xe0] sm:$0xff]
                  %10344 = vst [vmem:[%s10286 + $0xe0] sm:$0xff] %v10343
                  %v10345 = vld [vmem:[%s10285 + $0xe8] sm:$0xff]
                  %10346 = vst [vmem:[%s10286 + $0xe8] sm:$0xff] %v10345
                  %v10347 = vld [vmem:[%s10285 + $0xf0] sm:$0xff]
                  %10348 = vst [vmem:[%s10286 + $0xf0] sm:$0xff] %v10347
                  %v10349 = vld [vmem:[%s10285 + $0xf8] sm:$0xff]
                  %10350 = vst [vmem:[%s10286 + $0xf8] sm:$0xff] %v10349
                  %v10351 = vld [vmem:[%s10285 + $0x100] sm:$0xff]
                  %10352 = vst [vmem:[%s10286 + $0x100] sm:$0xff] %v10351
                  %v10353 = vld [vmem:[%s10285 + $0x108] sm:$0xff]
                  %10354 = vst [vmem:[%s10286 + $0x108] sm:$0xff] %v10353
                  %v10355 = vld [vmem:[%s10285 + $0x110] sm:$0xff]
                  %10356 = vst [vmem:[%s10286 + $0x110] sm:$0xff] %v10355
                  %v10357 = vld [vmem:[%s10285 + $0x118] sm:$0xff]
                  %10358 = vst [vmem:[%s10286 + $0x118] sm:$0xff] %v10357
                  %v10359 = vld [vmem:[%s10285 + $0x120] sm:$0xff]
                  %10360 = vst [vmem:[%s10286 + $0x120] sm:$0xff] %v10359
                  %v10361 = vld [vmem:[%s10285 + $0x128] sm:$0xff]
                  %10362 = vst [vmem:[%s10286 + $0x128] sm:$0xff] %v10361
                  %v10363 = vld [vmem:[%s10285 + $0x130] sm:$0xff]
                  %10364 = vst [vmem:[%s10286 + $0x130] sm:$0xff] %v10363
                  %v10365 = vld [vmem:[%s10285 + $0x138] sm:$0xff]
                  %10366 = vst [vmem:[%s10286 + $0x138] sm:$0xff] %v10365
                  %v10367 = vld [vmem:[%s10285 + $0x140] sm:$0xff]
                  %10368 = vst [vmem:[%s10286 + $0x140] sm:$0xff] %v10367
                  %v10369 = vld [vmem:[%s10285 + $0x148] sm:$0xff]
                  %10370 = vst [vmem:[%s10286 + $0x148] sm:$0xff] %v10369
                  %v10371 = vld [vmem:[%s10285 + $0x150] sm:$0xff]
                  %10372 = vst [vmem:[%s10286 + $0x150] sm:$0xff] %v10371
                  %v10373 = vld [vmem:[%s10285 + $0x158] sm:$0xff]
                  %10374 = vst [vmem:[%s10286 + $0x158] sm:$0xff] %v10373
                  %v10375 = vld [vmem:[%s10285 + $0x160] sm:$0xff]
                  %10376 = vst [vmem:[%s10286 + $0x160] sm:$0xff] %v10375
                  %v10377 = vld [vmem:[%s10285 + $0x168] sm:$0xff]
                  %10378 = vst [vmem:[%s10286 + $0x168] sm:$0xff] %v10377
                  %v10379 = vld [vmem:[%s10285 + $0x170] sm:$0xff]
                  %10380 = vst [vmem:[%s10286 + $0x170] sm:$0xff] %v10379
                  %v10381 = vld [vmem:[%s10285 + $0x178] sm:$0xff]
                  %10382 = vst [vmem:[%s10286 + $0x178] sm:$0xff] %v10381
                  %v10383 = vld [vmem:[%s10285 + $0x180] sm:$0xff]
                  %10384 = vst [vmem:[%s10286 + $0x180] sm:$0xff] %v10383
                  %v10385 = vld [vmem:[%s10285 + $0x188] sm:$0xff]
                  %10386 = vst [vmem:[%s10286 + $0x188] sm:$0xff] %v10385
                  %v10387 = vld [vmem:[%s10285 + $0x190] sm:$0xff]
                  %10388 = vst [vmem:[%s10286 + $0x190] sm:$0xff] %v10387
                  %v10389 = vld [vmem:[%s10285 + $0x198] sm:$0xff]
                  %10390 = vst [vmem:[%s10286 + $0x198] sm:$0xff] %v10389
                  %v10391 = vld [vmem:[%s10285 + $0x1a0] sm:$0xff]
                  %10392 = vst [vmem:[%s10286 + $0x1a0] sm:$0xff] %v10391
                  %v10393 = vld [vmem:[%s10285 + $0x1a8] sm:$0xff]
                  %10394 = vst [vmem:[%s10286 + $0x1a8] sm:$0xff] %v10393
                  %v10395 = vld [vmem:[%s10285 + $0x1b0] sm:$0xff]
                  %10396 = vst [vmem:[%s10286 + $0x1b0] sm:$0xff] %v10395
                  %v10397 = vld [vmem:[%s10285 + $0x1b8] sm:$0xff]
                  %10398 = vst [vmem:[%s10286 + $0x1b8] sm:$0xff] %v10397
                  %v10399 = vld [vmem:[%s10285 + $0x1c0] sm:$0xff]
                  %10400 = vst [vmem:[%s10286 + $0x1c0] sm:$0xff] %v10399
                  %v10401 = vld [vmem:[%s10285 + $0x1c8] sm:$0xff]
                  %10402 = vst [vmem:[%s10286 + $0x1c8] sm:$0xff] %v10401
                  %v10403 = vld [vmem:[%s10285 + $0x1d0] sm:$0xff]
                  %10404 = vst [vmem:[%s10286 + $0x1d0] sm:$0xff] %v10403
                  %v10405 = vld [vmem:[%s10285 + $0x1d8] sm:$0xff]
                  %10406 = vst [vmem:[%s10286 + $0x1d8] sm:$0xff] %v10405
                  %v10407 = vld [vmem:[%s10285 + $0x1e0] sm:$0xff]
                  %10408 = vst [vmem:[%s10286 + $0x1e0] sm:$0xff] %v10407
                  %v10409 = vld [vmem:[%s10285 + $0x1e8] sm:$0xff]
                  %10410 = vst [vmem:[%s10286 + $0x1e8] sm:$0xff] %v10409
                  %v10411 = vld [vmem:[%s10285 + $0x1f0] sm:$0xff]
                  %10412 = vst [vmem:[%s10286 + $0x1f0] sm:$0xff] %v10411
                  %v10413 = vld [vmem:[%s10285 + $0x1f8] sm:$0xff]
                  %10414 = vst [vmem:[%s10286 + $0x1f8] sm:$0xff] %v10413
                  %v10415 = vld [vmem:[%s10285 + $0x200] sm:$0xff]
                  %10416 = vst [vmem:[%s10286 + $0x200] sm:$0xff] %v10415
                  %v10417 = vld [vmem:[%s10285 + $0x208] sm:$0xff]
                  %10418 = vst [vmem:[%s10286 + $0x208] sm:$0xff] %v10417
                  %v10419 = vld [vmem:[%s10285 + $0x210] sm:$0xff]
                  %10420 = vst [vmem:[%s10286 + $0x210] sm:$0xff] %v10419
                  %v10421 = vld [vmem:[%s10285 + $0x218] sm:$0xff]
                  %10422 = vst [vmem:[%s10286 + $0x218] sm:$0xff] %v10421
                  %v10423 = vld [vmem:[%s10285 + $0x220] sm:$0xff]
                  %10424 = vst [vmem:[%s10286 + $0x220] sm:$0xff] %v10423
                  %v10425 = vld [vmem:[%s10285 + $0x228] sm:$0xff]
                  %10426 = vst [vmem:[%s10286 + $0x228] sm:$0xff] %v10425
                  %v10427 = vld [vmem:[%s10285 + $0x230] sm:$0xff]
                  %10428 = vst [vmem:[%s10286 + $0x230] sm:$0xff] %v10427
                  %v10429 = vld [vmem:[%s10285 + $0x238] sm:$0xff]
                  %10430 = vst [vmem:[%s10286 + $0x238] sm:$0xff] %v10429
                  %v10431 = vld [vmem:[%s10285 + $0x240] sm:$0xff]
                  %10432 = vst [vmem:[%s10286 + $0x240] sm:$0xff] %v10431
                  %v10433 = vld [vmem:[%s10285 + $0x248] sm:$0xff]
                  %10434 = vst [vmem:[%s10286 + $0x248] sm:$0xff] %v10433
                  %v10435 = vld [vmem:[%s10285 + $0x250] sm:$0xff]
                  %10436 = vst [vmem:[%s10286 + $0x250] sm:$0xff] %v10435
                  %v10437 = vld [vmem:[%s10285 + $0x258] sm:$0xff]
                  %10438 = vst [vmem:[%s10286 + $0x258] sm:$0xff] %v10437
                  %v10439 = vld [vmem:[%s10285 + $0x260] sm:$0xff]
                  %10440 = vst [vmem:[%s10286 + $0x260] sm:$0xff] %v10439
                  %v10441 = vld [vmem:[%s10285 + $0x268] sm:$0xff]
                  %10442 = vst [vmem:[%s10286 + $0x268] sm:$0xff] %v10441
                  %v10443 = vld [vmem:[%s10285 + $0x270] sm:$0xff]
                  %10444 = vst [vmem:[%s10286 + $0x270] sm:$0xff] %v10443
                  %v10445 = vld [vmem:[%s10285 + $0x278] sm:$0xff]
                  %10446 = vst [vmem:[%s10286 + $0x278] sm:$0xff] %v10445
                  %v10447 = vld [vmem:[%s10285 + $0x280] sm:$0xff]
                  %10448 = vst [vmem:[%s10286 + $0x280] sm:$0xff] %v10447
                  %v10449 = vld [vmem:[%s10285 + $0x288] sm:$0xff]
                  %10450 = vst [vmem:[%s10286 + $0x288] sm:$0xff] %v10449
                  %v10451 = vld [vmem:[%s10285 + $0x290] sm:$0xff]
                  %10452 = vst [vmem:[%s10286 + $0x290] sm:$0xff] %v10451
                  %v10453 = vld [vmem:[%s10285 + $0x298] sm:$0xff]
                  %10454 = vst [vmem:[%s10286 + $0x298] sm:$0xff] %v10453
                  %v10455 = vld [vmem:[%s10285 + $0x2a0] sm:$0xff]
                  %10456 = vst [vmem:[%s10286 + $0x2a0] sm:$0xff] %v10455
                  %v10457 = vld [vmem:[%s10285 + $0x2a8] sm:$0xff]
                  %10458 = vst [vmem:[%s10286 + $0x2a8] sm:$0xff] %v10457
                  %v10459 = vld [vmem:[%s10285 + $0x2b0] sm:$0xff]
                  %10460 = vst [vmem:[%s10286 + $0x2b0] sm:$0xff] %v10459
                  %v10461 = vld [vmem:[%s10285 + $0x2b8] sm:$0xff]
                  %10462 = vst [vmem:[%s10286 + $0x2b8] sm:$0xff] %v10461
                  %v10463 = vld [vmem:[%s10285 + $0x2c0] sm:$0xff]
                  %10464 = vst [vmem:[%s10286 + $0x2c0] sm:$0xff] %v10463
                  %v10465 = vld [vmem:[%s10285 + $0x2c8] sm:$0xff]
                  %10466 = vst [vmem:[%s10286 + $0x2c8] sm:$0xff] %v10465
                  %v10467 = vld [vmem:[%s10285 + $0x2d0] sm:$0xff]
                  %10468 = vst [vmem:[%s10286 + $0x2d0] sm:$0xff] %v10467
                  %v10469 = vld [vmem:[%s10285 + $0x2d8] sm:$0xff]
                  %10470 = vst [vmem:[%s10286 + $0x2d8] sm:$0xff] %v10469
                  %v10471 = vld [vmem:[%s10285 + $0x2e0] sm:$0xff]
                  %10472 = vst [vmem:[%s10286 + $0x2e0] sm:$0xff] %v10471
                  %v10473 = vld [vmem:[%s10285 + $0x2e8] sm:$0xff]
                  %10474 = vst [vmem:[%s10286 + $0x2e8] sm:$0xff] %v10473
                  %v10475 = vld [vmem:[%s10285 + $0x2f0] sm:$0xff]
                  %10476 = vst [vmem:[%s10286 + $0x2f0] sm:$0xff] %v10475
                  %v10477 = vld [vmem:[%s10285 + $0x2f8] sm:$0xff]
                  %10478 = vst [vmem:[%s10286 + $0x2f8] sm:$0xff] %v10477
                  %v10479 = vld [vmem:[%s10285 + $0x300] sm:$0xff]
                  %10480 = vst [vmem:[%s10286 + $0x300] sm:$0xff] %v10479
                  %v10481 = vld [vmem:[%s10285 + $0x308] sm:$0xff]
                  %10482 = vst [vmem:[%s10286 + $0x308] sm:$0xff] %v10481
                  %v10483 = vld [vmem:[%s10285 + $0x310] sm:$0xff]
                  %10484 = vst [vmem:[%s10286 + $0x310] sm:$0xff] %v10483
                  %v10485 = vld [vmem:[%s10285 + $0x318] sm:$0xff]
                  %10486 = vst [vmem:[%s10286 + $0x318] sm:$0xff] %v10485
                  %v10487 = vld [vmem:[%s10285 + $0x320] sm:$0xff]
                  %10488 = vst [vmem:[%s10286 + $0x320] sm:$0xff] %v10487
                  %v10489 = vld [vmem:[%s10285 + $0x328] sm:$0xff]
                  %10490 = vst [vmem:[%s10286 + $0x328] sm:$0xff] %v10489
                  %v10491 = vld [vmem:[%s10285 + $0x330] sm:$0xff]
                  %10492 = vst [vmem:[%s10286 + $0x330] sm:$0xff] %v10491
                  %v10493 = vld [vmem:[%s10285 + $0x338] sm:$0xff]
                  %10494 = vst [vmem:[%s10286 + $0x338] sm:$0xff] %v10493
                  %v10495 = vld [vmem:[%s10285 + $0x340] sm:$0xff]
                  %10496 = vst [vmem:[%s10286 + $0x340] sm:$0xff] %v10495
                  %v10497 = vld [vmem:[%s10285 + $0x348] sm:$0xff]
                  %10498 = vst [vmem:[%s10286 + $0x348] sm:$0xff] %v10497
                  %v10499 = vld [vmem:[%s10285 + $0x350] sm:$0xff]
                  %10500 = vst [vmem:[%s10286 + $0x350] sm:$0xff] %v10499
                  %v10501 = vld [vmem:[%s10285 + $0x358] sm:$0xff]
                  %10502 = vst [vmem:[%s10286 + $0x358] sm:$0xff] %v10501
                  %v10503 = vld [vmem:[%s10285 + $0x360] sm:$0xff]
                  %10504 = vst [vmem:[%s10286 + $0x360] sm:$0xff] %v10503
                  %v10505 = vld [vmem:[%s10285 + $0x368] sm:$0xff]
                  %10506 = vst [vmem:[%s10286 + $0x368] sm:$0xff] %v10505
                  %v10507 = vld [vmem:[%s10285 + $0x370] sm:$0xff]
                  %10508 = vst [vmem:[%s10286 + $0x370] sm:$0xff] %v10507
                  %v10509 = vld [vmem:[%s10285 + $0x378] sm:$0xff]
                  %10510 = vst [vmem:[%s10286 + $0x378] sm:$0xff] %v10509
                  %v10511 = vld [vmem:[%s10285 + $0x380] sm:$0xff]
                  %10512 = vst [vmem:[%s10286 + $0x700] sm:$0xff] %v10511
                  %v10513 = vld [vmem:[%s10285 + $0x388] sm:$0xff]
                  %10514 = vst [vmem:[%s10286 + $0x708] sm:$0xff] %v10513
                  %v10515 = vld [vmem:[%s10285 + $0x390] sm:$0xff]
                  %10516 = vst [vmem:[%s10286 + $0x710] sm:$0xff] %v10515
                  %v10517 = vld [vmem:[%s10285 + $0x398] sm:$0xff]
                  %10518 = vst [vmem:[%s10286 + $0x718] sm:$0xff] %v10517
                  %v10519 = vld [vmem:[%s10285 + $0x3a0] sm:$0xff]
                  %10520 = vst [vmem:[%s10286 + $0x720] sm:$0xff] %v10519
                  %v10521 = vld [vmem:[%s10285 + $0x3a8] sm:$0xff]
                  %10522 = vst [vmem:[%s10286 + $0x728] sm:$0xff] %v10521
                  %v10523 = vld [vmem:[%s10285 + $0x3b0] sm:$0xff]
                  %10524 = vst [vmem:[%s10286 + $0x730] sm:$0xff] %v10523
                  %v10525 = vld [vmem:[%s10285 + $0x3b8] sm:$0xff]
                  %10526 = vst [vmem:[%s10286 + $0x738] sm:$0xff] %v10525
                  %v10527 = vld [vmem:[%s10285 + $0x3c0] sm:$0xff]
                  %10528 = vst [vmem:[%s10286 + $0x740] sm:$0xff] %v10527
                  %v10529 = vld [vmem:[%s10285 + $0x3c8] sm:$0xff]
                  %10530 = vst [vmem:[%s10286 + $0x748] sm:$0xff] %v10529
                  %v10531 = vld [vmem:[%s10285 + $0x3d0] sm:$0xff]
                  %10532 = vst [vmem:[%s10286 + $0x750] sm:$0xff] %v10531
                  %v10533 = vld [vmem:[%s10285 + $0x3d8] sm:$0xff]
                  %10534 = vst [vmem:[%s10286 + $0x758] sm:$0xff] %v10533
                  %v10535 = vld [vmem:[%s10285 + $0x3e0] sm:$0xff]
                  %10536 = vst [vmem:[%s10286 + $0x760] sm:$0xff] %v10535
                  %v10537 = vld [vmem:[%s10285 + $0x3e8] sm:$0xff]
                  %10538 = vst [vmem:[%s10286 + $0x768] sm:$0xff] %v10537
                  %v10539 = vld [vmem:[%s10285 + $0x3f0] sm:$0xff]
                  %10540 = vst [vmem:[%s10286 + $0x770] sm:$0xff] %v10539
                  %v10541 = vld [vmem:[%s10285 + $0x3f8] sm:$0xff]
                  %10542 = vst [vmem:[%s10286 + $0x778] sm:$0xff] %v10541
                  %v10543 = vld [vmem:[%s10285 + $0x400] sm:$0xff]
                  %10544 = vst [vmem:[%s10286 + $0x780] sm:$0xff] %v10543
                  %v10545 = vld [vmem:[%s10285 + $0x408] sm:$0xff]
                  %10546 = vst [vmem:[%s10286 + $0x788] sm:$0xff] %v10545
                  %v10547 = vld [vmem:[%s10285 + $0x410] sm:$0xff]
                  %10548 = vst [vmem:[%s10286 + $0x790] sm:$0xff] %v10547
                  %v10549 = vld [vmem:[%s10285 + $0x418] sm:$0xff]
                  %10550 = vst [vmem:[%s10286 + $0x798] sm:$0xff] %v10549
                  %v10551 = vld [vmem:[%s10285 + $0x420] sm:$0xff]
                  %10552 = vst [vmem:[%s10286 + $0x7a0] sm:$0xff] %v10551
                  %v10553 = vld [vmem:[%s10285 + $0x428] sm:$0xff]
                  %10554 = vst [vmem:[%s10286 + $0x7a8] sm:$0xff] %v10553
                  %v10555 = vld [vmem:[%s10285 + $0x430] sm:$0xff]
                  %10556 = vst [vmem:[%s10286 + $0x7b0] sm:$0xff] %v10555
                  %v10557 = vld [vmem:[%s10285 + $0x438] sm:$0xff]
                  %10558 = vst [vmem:[%s10286 + $0x7b8] sm:$0xff] %v10557
                  %v10559 = vld [vmem:[%s10285 + $0x440] sm:$0xff]
                  %10560 = vst [vmem:[%s10286 + $0x7c0] sm:$0xff] %v10559
                  %v10561 = vld [vmem:[%s10285 + $0x448] sm:$0xff]
                  %10562 = vst [vmem:[%s10286 + $0x7c8] sm:$0xff] %v10561
                  %v10563 = vld [vmem:[%s10285 + $0x450] sm:$0xff]
                  %10564 = vst [vmem:[%s10286 + $0x7d0] sm:$0xff] %v10563
                  %v10565 = vld [vmem:[%s10285 + $0x458] sm:$0xff]
                  %10566 = vst [vmem:[%s10286 + $0x7d8] sm:$0xff] %v10565
                  %v10567 = vld [vmem:[%s10285 + $0x460] sm:$0xff]
                  %10568 = vst [vmem:[%s10286 + $0x7e0] sm:$0xff] %v10567
                  %v10569 = vld [vmem:[%s10285 + $0x468] sm:$0xff]
                  %10570 = vst [vmem:[%s10286 + $0x7e8] sm:$0xff] %v10569
                  %v10571 = vld [vmem:[%s10285 + $0x470] sm:$0xff]
                  %10572 = vst [vmem:[%s10286 + $0x7f0] sm:$0xff] %v10571
                  %v10573 = vld [vmem:[%s10285 + $0x478] sm:$0xff]
                  %10574 = vst [vmem:[%s10286 + $0x7f8] sm:$0xff] %v10573
                  %v10575 = vld [vmem:[%s10285 + $0x480] sm:$0xff]
                  %10576 = vst [vmem:[%s10286 + $0x800] sm:$0xff] %v10575
                  %v10577 = vld [vmem:[%s10285 + $0x488] sm:$0xff]
                  %10578 = vst [vmem:[%s10286 + $0x808] sm:$0xff] %v10577
                  %v10579 = vld [vmem:[%s10285 + $0x490] sm:$0xff]
                  %10580 = vst [vmem:[%s10286 + $0x810] sm:$0xff] %v10579
                  %v10581 = vld [vmem:[%s10285 + $0x498] sm:$0xff]
                  %10582 = vst [vmem:[%s10286 + $0x818] sm:$0xff] %v10581
                  %v10583 = vld [vmem:[%s10285 + $0x4a0] sm:$0xff]
                  %10584 = vst [vmem:[%s10286 + $0x820] sm:$0xff] %v10583
                  %v10585 = vld [vmem:[%s10285 + $0x4a8] sm:$0xff]
                  %10586 = vst [vmem:[%s10286 + $0x828] sm:$0xff] %v10585
                  %v10587 = vld [vmem:[%s10285 + $0x4b0] sm:$0xff]
                  %10588 = vst [vmem:[%s10286 + $0x830] sm:$0xff] %v10587
                  %v10589 = vld [vmem:[%s10285 + $0x4b8] sm:$0xff]
                  %10590 = vst [vmem:[%s10286 + $0x838] sm:$0xff] %v10589
                  %v10591 = vld [vmem:[%s10285 + $0x4c0] sm:$0xff]
                  %10592 = vst [vmem:[%s10286 + $0x840] sm:$0xff] %v10591
                  %v10593 = vld [vmem:[%s10285 + $0x4c8] sm:$0xff]
                  %10594 = vst [vmem:[%s10286 + $0x848] sm:$0xff] %v10593
                  %v10595 = vld [vmem:[%s10285 + $0x4d0] sm:$0xff]
                  %10596 = vst [vmem:[%s10286 + $0x850] sm:$0xff] %v10595
                  %v10597 = vld [vmem:[%s10285 + $0x4d8] sm:$0xff]
                  %10598 = vst [vmem:[%s10286 + $0x858] sm:$0xff] %v10597
                  %v10599 = vld [vmem:[%s10285 + $0x4e0] sm:$0xff]
                  %10600 = vst [vmem:[%s10286 + $0x860] sm:$0xff] %v10599
                  %v10601 = vld [vmem:[%s10285 + $0x4e8] sm:$0xff]
                  %10602 = vst [vmem:[%s10286 + $0x868] sm:$0xff] %v10601
                  %v10603 = vld [vmem:[%s10285 + $0x4f0] sm:$0xff]
                  %10604 = vst [vmem:[%s10286 + $0x870] sm:$0xff] %v10603
                  %v10605 = vld [vmem:[%s10285 + $0x4f8] sm:$0xff]
                  %10606 = vst [vmem:[%s10286 + $0x878] sm:$0xff] %v10605
                  %v10607 = vld [vmem:[%s10285 + $0x500] sm:$0xff]
                  %10608 = vst [vmem:[%s10286 + $0x880] sm:$0xff] %v10607
                  %v10609 = vld [vmem:[%s10285 + $0x508] sm:$0xff]
                  %10610 = vst [vmem:[%s10286 + $0x888] sm:$0xff] %v10609
                  %v10611 = vld [vmem:[%s10285 + $0x510] sm:$0xff]
                  %10612 = vst [vmem:[%s10286 + $0x890] sm:$0xff] %v10611
                  %v10613 = vld [vmem:[%s10285 + $0x518] sm:$0xff]
                  %10614 = vst [vmem:[%s10286 + $0x898] sm:$0xff] %v10613
                  %v10615 = vld [vmem:[%s10285 + $0x520] sm:$0xff]
                  %10616 = vst [vmem:[%s10286 + $0x8a0] sm:$0xff] %v10615
                  %v10617 = vld [vmem:[%s10285 + $0x528] sm:$0xff]
                  %10618 = vst [vmem:[%s10286 + $0x8a8] sm:$0xff] %v10617
                  %v10619 = vld [vmem:[%s10285 + $0x530] sm:$0xff]
                  %10620 = vst [vmem:[%s10286 + $0x8b0] sm:$0xff] %v10619
                  %v10621 = vld [vmem:[%s10285 + $0x538] sm:$0xff]
                  %10622 = vst [vmem:[%s10286 + $0x8b8] sm:$0xff] %v10621
                  %v10623 = vld [vmem:[%s10285 + $0x540] sm:$0xff]
                  %10624 = vst [vmem:[%s10286 + $0x8c0] sm:$0xff] %v10623
                  %v10625 = vld [vmem:[%s10285 + $0x548] sm:$0xff]
                  %10626 = vst [vmem:[%s10286 + $0x8c8] sm:$0xff] %v10625
                  %v10627 = vld [vmem:[%s10285 + $0x550] sm:$0xff]
                  %10628 = vst [vmem:[%s10286 + $0x8d0] sm:$0xff] %v10627
                  %v10629 = vld [vmem:[%s10285 + $0x558] sm:$0xff]
                  %10630 = vst [vmem:[%s10286 + $0x8d8] sm:$0xff] %v10629
                  %v10631 = vld [vmem:[%s10285 + $0x560] sm:$0xff]
                  %10632 = vst [vmem:[%s10286 + $0x8e0] sm:$0xff] %v10631
                  %v10633 = vld [vmem:[%s10285 + $0x568] sm:$0xff]
                  %10634 = vst [vmem:[%s10286 + $0x8e8] sm:$0xff] %v10633
                  %v10635 = vld [vmem:[%s10285 + $0x570] sm:$0xff]
                  %10636 = vst [vmem:[%s10286 + $0x8f0] sm:$0xff] %v10635
                  %v10637 = vld [vmem:[%s10285 + $0x578] sm:$0xff]
                  %10638 = vst [vmem:[%s10286 + $0x8f8] sm:$0xff] %v10637
                  %v10639 = vld [vmem:[%s10285 + $0x580] sm:$0xff]
                  %10640 = vst [vmem:[%s10286 + $0x900] sm:$0xff] %v10639
                  %v10641 = vld [vmem:[%s10285 + $0x588] sm:$0xff]
                  %10642 = vst [vmem:[%s10286 + $0x908] sm:$0xff] %v10641
                  %v10643 = vld [vmem:[%s10285 + $0x590] sm:$0xff]
                  %10644 = vst [vmem:[%s10286 + $0x910] sm:$0xff] %v10643
                  %v10645 = vld [vmem:[%s10285 + $0x598] sm:$0xff]
                  %10646 = vst [vmem:[%s10286 + $0x918] sm:$0xff] %v10645
                  %v10647 = vld [vmem:[%s10285 + $0x5a0] sm:$0xff]
                  %10648 = vst [vmem:[%s10286 + $0x920] sm:$0xff] %v10647
                  %v10649 = vld [vmem:[%s10285 + $0x5a8] sm:$0xff]
                  %10650 = vst [vmem:[%s10286 + $0x928] sm:$0xff] %v10649
                  %v10651 = vld [vmem:[%s10285 + $0x5b0] sm:$0xff]
                  %10652 = vst [vmem:[%s10286 + $0x930] sm:$0xff] %v10651
                  %v10653 = vld [vmem:[%s10285 + $0x5b8] sm:$0xff]
                  %10654 = vst [vmem:[%s10286 + $0x938] sm:$0xff] %v10653
                  %v10655 = vld [vmem:[%s10285 + $0x5c0] sm:$0xff]
                  %10656 = vst [vmem:[%s10286 + $0x940] sm:$0xff] %v10655
                  %v10657 = vld [vmem:[%s10285 + $0x5c8] sm:$0xff]
                  %10658 = vst [vmem:[%s10286 + $0x948] sm:$0xff] %v10657
                  %v10659 = vld [vmem:[%s10285 + $0x5d0] sm:$0xff]
                  %10660 = vst [vmem:[%s10286 + $0x950] sm:$0xff] %v10659
                  %v10661 = vld [vmem:[%s10285 + $0x5d8] sm:$0xff]
                  %10662 = vst [vmem:[%s10286 + $0x958] sm:$0xff] %v10661
                  %v10663 = vld [vmem:[%s10285 + $0x5e0] sm:$0xff]
                  %10664 = vst [vmem:[%s10286 + $0x960] sm:$0xff] %v10663
                  %v10665 = vld [vmem:[%s10285 + $0x5e8] sm:$0xff]
                  %10666 = vst [vmem:[%s10286 + $0x968] sm:$0xff] %v10665
                  %v10667 = vld [vmem:[%s10285 + $0x5f0] sm:$0xff]
                  %10668 = vst [vmem:[%s10286 + $0x970] sm:$0xff] %v10667
                  %v10669 = vld [vmem:[%s10285 + $0x5f8] sm:$0xff]
                  %10670 = vst [vmem:[%s10286 + $0x978] sm:$0xff] %v10669
                  %v10671 = vld [vmem:[%s10285 + $0x600] sm:$0xff]
                  %10672 = vst [vmem:[%s10286 + $0x980] sm:$0xff] %v10671
                  %v10673 = vld [vmem:[%s10285 + $0x608] sm:$0xff]
                  %10674 = vst [vmem:[%s10286 + $0x988] sm:$0xff] %v10673
                  %v10675 = vld [vmem:[%s10285 + $0x610] sm:$0xff]
                  %10676 = vst [vmem:[%s10286 + $0x990] sm:$0xff] %v10675
                  %v10677 = vld [vmem:[%s10285 + $0x618] sm:$0xff]
                  %10678 = vst [vmem:[%s10286 + $0x998] sm:$0xff] %v10677
                  %v10679 = vld [vmem:[%s10285 + $0x620] sm:$0xff]
                  %10680 = vst [vmem:[%s10286 + $0x9a0] sm:$0xff] %v10679
                  %v10681 = vld [vmem:[%s10285 + $0x628] sm:$0xff]
                  %10682 = vst [vmem:[%s10286 + $0x9a8] sm:$0xff] %v10681
                  %v10683 = vld [vmem:[%s10285 + $0x630] sm:$0xff]
                  %10684 = vst [vmem:[%s10286 + $0x9b0] sm:$0xff] %v10683
                  %v10685 = vld [vmem:[%s10285 + $0x638] sm:$0xff]
                  %10686 = vst [vmem:[%s10286 + $0x9b8] sm:$0xff] %v10685
                  %v10687 = vld [vmem:[%s10285 + $0x640] sm:$0xff]
                  %10688 = vst [vmem:[%s10286 + $0x9c0] sm:$0xff] %v10687
                  %v10689 = vld [vmem:[%s10285 + $0x648] sm:$0xff]
                  %10690 = vst [vmem:[%s10286 + $0x9c8] sm:$0xff] %v10689
                  %v10691 = vld [vmem:[%s10285 + $0x650] sm:$0xff]
                  %10692 = vst [vmem:[%s10286 + $0x9d0] sm:$0xff] %v10691
                  %v10693 = vld [vmem:[%s10285 + $0x658] sm:$0xff]
                  %10694 = vst [vmem:[%s10286 + $0x9d8] sm:$0xff] %v10693
                  %v10695 = vld [vmem:[%s10285 + $0x660] sm:$0xff]
                  %10696 = vst [vmem:[%s10286 + $0x9e0] sm:$0xff] %v10695
                  %v10697 = vld [vmem:[%s10285 + $0x668] sm:$0xff]
                  %10698 = vst [vmem:[%s10286 + $0x9e8] sm:$0xff] %v10697
                  %v10699 = vld [vmem:[%s10285 + $0x670] sm:$0xff]
                  %10700 = vst [vmem:[%s10286 + $0x9f0] sm:$0xff] %v10699
                  %v10701 = vld [vmem:[%s10285 + $0x678] sm:$0xff]
                  %10702 = vst [vmem:[%s10286 + $0x9f8] sm:$0xff] %v10701
                  %v10703 = vld [vmem:[%s10285 + $0x680] sm:$0xff]
                  %10704 = vst [vmem:[%s10286 + $0xa00] sm:$0xff] %v10703
                  %v10705 = vld [vmem:[%s10285 + $0x688] sm:$0xff]
                  %10706 = vst [vmem:[%s10286 + $0xa08] sm:$0xff] %v10705
                  %v10707 = vld [vmem:[%s10285 + $0x690] sm:$0xff]
                  %10708 = vst [vmem:[%s10286 + $0xa10] sm:$0xff] %v10707
                  %v10709 = vld [vmem:[%s10285 + $0x698] sm:$0xff]
                  %10710 = vst [vmem:[%s10286 + $0xa18] sm:$0xff] %v10709
                  %v10711 = vld [vmem:[%s10285 + $0x6a0] sm:$0xff]
                  %10712 = vst [vmem:[%s10286 + $0xa20] sm:$0xff] %v10711
                  %v10713 = vld [vmem:[%s10285 + $0x6a8] sm:$0xff]
                  %10714 = vst [vmem:[%s10286 + $0xa28] sm:$0xff] %v10713
                  %v10715 = vld [vmem:[%s10285 + $0x6b0] sm:$0xff]
                  %10716 = vst [vmem:[%s10286 + $0xa30] sm:$0xff] %v10715
                  %v10717 = vld [vmem:[%s10285 + $0x6b8] sm:$0xff]
                  %10718 = vst [vmem:[%s10286 + $0xa38] sm:$0xff] %v10717
                  %v10719 = vld [vmem:[%s10285 + $0x6c0] sm:$0xff]
                  %10720 = vst [vmem:[%s10286 + $0xa40] sm:$0xff] %v10719
                  %v10721 = vld [vmem:[%s10285 + $0x6c8] sm:$0xff]
                  %10722 = vst [vmem:[%s10286 + $0xa48] sm:$0xff] %v10721
                  %v10723 = vld [vmem:[%s10285 + $0x6d0] sm:$0xff]
                  %10724 = vst [vmem:[%s10286 + $0xa50] sm:$0xff] %v10723
                  %v10725 = vld [vmem:[%s10285 + $0x6d8] sm:$0xff]
                  %10726 = vst [vmem:[%s10286 + $0xa58] sm:$0xff] %v10725
                  %v10727 = vld [vmem:[%s10285 + $0x6e0] sm:$0xff]
                  %10728 = vst [vmem:[%s10286 + $0xa60] sm:$0xff] %v10727
                  %v10729 = vld [vmem:[%s10285 + $0x6e8] sm:$0xff]
                  %10730 = vst [vmem:[%s10286 + $0xa68] sm:$0xff] %v10729
                  %v10731 = vld [vmem:[%s10285 + $0x6f0] sm:$0xff]
                  %10732 = vst [vmem:[%s10286 + $0xa70] sm:$0xff] %v10731
                  %v10733 = vld [vmem:[%s10285 + $0x6f8] sm:$0xff]
                  %10734 = vst [vmem:[%s10286 + $0xa78] sm:$0xff] %v10733
                $region68: #{a_call__.1} parent=62 // loop_footer
                  %s10284 = sadd.s32 1, %s10280
                $region69: #{a_call__.1} parent=62 // loop_footer_branch
                  %10279 = sbr.rel target = $region65
                $region70: #{a_call__.1} parent=62 // loop_exit
                  _
              $region63: #{a_call__.1} parent=47 // pred_fallthru
                _
              // Predicated region
              $region71: #{a_call__.1} parent=47 // pred_check
                _
              $region72: #{a_call__.1} parent=47 // pred_check_branch
                %10736 = sbr.rel target = $region74
              $region73: #{a_call__.1} parent=47 // pred_region
                _
              $region74: #{a_call__.1} parent=47 // pred_fallthru
                _
            $region48: #{a_call__.1} parent=43 // pred_fallthru
              _
            // Predicated region
            $region49: #{a_call__.1} parent=43 // pred_check
              _
            $region50: #{a_call__.1} parent=43 // pred_check_branch
              %9818 = sbr.rel target = $region52
            $region51: #{a_call__.1} parent=43 // pred_region
              %s9820 = ssub.s32 256, 1
              loop: start=0, step=1, limit=1
              $region53: #{a_call__.1} parent=51 // loop_pre_header
                _
              $region54: #{a_call__.1} parent=51 // loop_header
                %s9822 = sphi 0, %s9826
                %p9823 = scmp.ge.s32.totalorder %s9822, 1
                %s9827 = sphi %s9803, %s9803
                %s9828 = sphi %s9812, %s9812
              $region55: #{a_call__.1} parent=51 // loop_header_branch
                %9825 = sbr.rel (%p9823) target = $region59
              $region56: #{a_call__.1} parent=51 // loop_body
                %v9829 = vld [vmem:[%s9827] sm:%s9820]
                %9830 = vst [vmem:[%s9828] sm:%s9820] %v9829
                %v9831 = vld [vmem:[%s9827 + $0x8] sm:%s9820]
                %9832 = vst [vmem:[%s9828 + $0x8] sm:%s9820] %v9831
                %v9833 = vld [vmem:[%s9827 + $0x10] sm:%s9820]
                %9834 = vst [vmem:[%s9828 + $0x10] sm:%s9820] %v9833
                %v9835 = vld [vmem:[%s9827 + $0x18] sm:%s9820]
                %9836 = vst [vmem:[%s9828 + $0x18] sm:%s9820] %v9835
                %v9837 = vld [vmem:[%s9827 + $0x20] sm:%s9820]
                %9838 = vst [vmem:[%s9828 + $0x20] sm:%s9820] %v9837
                %v9839 = vld [vmem:[%s9827 + $0x28] sm:%s9820]
                %9840 = vst [vmem:[%s9828 + $0x28] sm:%s9820] %v9839
                %v9841 = vld [vmem:[%s9827 + $0x30] sm:%s9820]
                %9842 = vst [vmem:[%s9828 + $0x30] sm:%s9820] %v9841
                %v9843 = vld [vmem:[%s9827 + $0x38] sm:%s9820]
                %9844 = vst [vmem:[%s9828 + $0x38] sm:%s9820] %v9843
                %v9845 = vld [vmem:[%s9827 + $0x40] sm:%s9820]
                %9846 = vst [vmem:[%s9828 + $0x40] sm:%s9820] %v9845
                %v9847 = vld [vmem:[%s9827 + $0x48] sm:%s9820]
                %9848 = vst [vmem:[%s9828 + $0x48] sm:%s9820] %v9847
                %v9849 = vld [vmem:[%s9827 + $0x50] sm:%s9820]
                %9850 = vst [vmem:[%s9828 + $0x50] sm:%s9820] %v9849
                %v9851 = vld [vmem:[%s9827 + $0x58] sm:%s9820]
                %9852 = vst [vmem:[%s9828 + $0x58] sm:%s9820] %v9851
                %v9853 = vld [vmem:[%s9827 + $0x60] sm:%s9820]
                %9854 = vst [vmem:[%s9828 + $0x60] sm:%s9820] %v9853
                %v9855 = vld [vmem:[%s9827 + $0x68] sm:%s9820]
                %9856 = vst [vmem:[%s9828 + $0x68] sm:%s9820] %v9855
                %v9857 = vld [vmem:[%s9827 + $0x70] sm:%s9820]
                %9858 = vst [vmem:[%s9828 + $0x70] sm:%s9820] %v9857
                %v9859 = vld [vmem:[%s9827 + $0x78] sm:%s9820]
                %9860 = vst [vmem:[%s9828 + $0x78] sm:%s9820] %v9859
                %v9861 = vld [vmem:[%s9827 + $0x80] sm:%s9820]
                %9862 = vst [vmem:[%s9828 + $0x80] sm:%s9820] %v9861
                %v9863 = vld [vmem:[%s9827 + $0x88] sm:%s9820]
                %9864 = vst [vmem:[%s9828 + $0x88] sm:%s9820] %v9863
                %v9865 = vld [vmem:[%s9827 + $0x90] sm:%s9820]
                %9866 = vst [vmem:[%s9828 + $0x90] sm:%s9820] %v9865
                %v9867 = vld [vmem:[%s9827 + $0x98] sm:%s9820]
                %9868 = vst [vmem:[%s9828 + $0x98] sm:%s9820] %v9867
                %v9869 = vld [vmem:[%s9827 + $0xa0] sm:%s9820]
                %9870 = vst [vmem:[%s9828 + $0xa0] sm:%s9820] %v9869
                %v9871 = vld [vmem:[%s9827 + $0xa8] sm:%s9820]
                %9872 = vst [vmem:[%s9828 + $0xa8] sm:%s9820] %v9871
                %v9873 = vld [vmem:[%s9827 + $0xb0] sm:%s9820]
                %9874 = vst [vmem:[%s9828 + $0xb0] sm:%s9820] %v9873
                %v9875 = vld [vmem:[%s9827 + $0xb8] sm:%s9820]
                %9876 = vst [vmem:[%s9828 + $0xb8] sm:%s9820] %v9875
                %v9877 = vld [vmem:[%s9827 + $0xc0] sm:%s9820]
                %9878 = vst [vmem:[%s9828 + $0xc0] sm:%s9820] %v9877
                %v9879 = vld [vmem:[%s9827 + $0xc8] sm:%s9820]
                %9880 = vst [vmem:[%s9828 + $0xc8] sm:%s9820] %v9879
                %v9881 = vld [vmem:[%s9827 + $0xd0] sm:%s9820]
                %9882 = vst [vmem:[%s9828 + $0xd0] sm:%s9820] %v9881
                %v9883 = vld [vmem:[%s9827 + $0xd8] sm:%s9820]
                %9884 = vst [vmem:[%s9828 + $0xd8] sm:%s9820] %v9883
                %v9885 = vld [vmem:[%s9827 + $0xe0] sm:%s9820]
                %9886 = vst [vmem:[%s9828 + $0xe0] sm:%s9820] %v9885
                %v9887 = vld [vmem:[%s9827 + $0xe8] sm:%s9820]
                %9888 = vst [vmem:[%s9828 + $0xe8] sm:%s9820] %v9887
                %v9889 = vld [vmem:[%s9827 + $0xf0] sm:%s9820]
                %9890 = vst [vmem:[%s9828 + $0xf0] sm:%s9820] %v9889
                %v9891 = vld [vmem:[%s9827 + $0xf8] sm:%s9820]
                %9892 = vst [vmem:[%s9828 + $0xf8] sm:%s9820] %v9891
                %v9893 = vld [vmem:[%s9827 + $0x100] sm:%s9820]
                %9894 = vst [vmem:[%s9828 + $0x100] sm:%s9820] %v9893
                %v9895 = vld [vmem:[%s9827 + $0x108] sm:%s9820]
                %9896 = vst [vmem:[%s9828 + $0x108] sm:%s9820] %v9895
                %v9897 = vld [vmem:[%s9827 + $0x110] sm:%s9820]
                %9898 = vst [vmem:[%s9828 + $0x110] sm:%s9820] %v9897
                %v9899 = vld [vmem:[%s9827 + $0x118] sm:%s9820]
                %9900 = vst [vmem:[%s9828 + $0x118] sm:%s9820] %v9899
                %v9901 = vld [vmem:[%s9827 + $0x120] sm:%s9820]
                %9902 = vst [vmem:[%s9828 + $0x120] sm:%s9820] %v9901
                %v9903 = vld [vmem:[%s9827 + $0x128] sm:%s9820]
                %9904 = vst [vmem:[%s9828 + $0x128] sm:%s9820] %v9903
                %v9905 = vld [vmem:[%s9827 + $0x130] sm:%s9820]
                %9906 = vst [vmem:[%s9828 + $0x130] sm:%s9820] %v9905
                %v9907 = vld [vmem:[%s9827 + $0x138] sm:%s9820]
                %9908 = vst [vmem:[%s9828 + $0x138] sm:%s9820] %v9907
                %v9909 = vld [vmem:[%s9827 + $0x140] sm:%s9820]
                %9910 = vst [vmem:[%s9828 + $0x140] sm:%s9820] %v9909
                %v9911 = vld [vmem:[%s9827 + $0x148] sm:%s9820]
                %9912 = vst [vmem:[%s9828 + $0x148] sm:%s9820] %v9911
                %v9913 = vld [vmem:[%s9827 + $0x150] sm:%s9820]
                %9914 = vst [vmem:[%s9828 + $0x150] sm:%s9820] %v9913
                %v9915 = vld [vmem:[%s9827 + $0x158] sm:%s9820]
                %9916 = vst [vmem:[%s9828 + $0x158] sm:%s9820] %v9915
                %v9917 = vld [vmem:[%s9827 + $0x160] sm:%s9820]
                %9918 = vst [vmem:[%s9828 + $0x160] sm:%s9820] %v9917
                %v9919 = vld [vmem:[%s9827 + $0x168] sm:%s9820]
                %9920 = vst [vmem:[%s9828 + $0x168] sm:%s9820] %v9919
                %v9921 = vld [vmem:[%s9827 + $0x170] sm:%s9820]
                %9922 = vst [vmem:[%s9828 + $0x170] sm:%s9820] %v9921
                %v9923 = vld [vmem:[%s9827 + $0x178] sm:%s9820]
                %9924 = vst [vmem:[%s9828 + $0x178] sm:%s9820] %v9923
                %v9925 = vld [vmem:[%s9827 + $0x180] sm:%s9820]
                %9926 = vst [vmem:[%s9828 + $0x180] sm:%s9820] %v9925
                %v9927 = vld [vmem:[%s9827 + $0x188] sm:%s9820]
                %9928 = vst [vmem:[%s9828 + $0x188] sm:%s9820] %v9927
                %v9929 = vld [vmem:[%s9827 + $0x190] sm:%s9820]
                %9930 = vst [vmem:[%s9828 + $0x190] sm:%s9820] %v9929
                %v9931 = vld [vmem:[%s9827 + $0x198] sm:%s9820]
                %9932 = vst [vmem:[%s9828 + $0x198] sm:%s9820] %v9931
                %v9933 = vld [vmem:[%s9827 + $0x1a0] sm:%s9820]
                %9934 = vst [vmem:[%s9828 + $0x1a0] sm:%s9820] %v9933
                %v9935 = vld [vmem:[%s9827 + $0x1a8] sm:%s9820]
                %9936 = vst [vmem:[%s9828 + $0x1a8] sm:%s9820] %v9935
                %v9937 = vld [vmem:[%s9827 + $0x1b0] sm:%s9820]
                %9938 = vst [vmem:[%s9828 + $0x1b0] sm:%s9820] %v9937
                %v9939 = vld [vmem:[%s9827 + $0x1b8] sm:%s9820]
                %9940 = vst [vmem:[%s9828 + $0x1b8] sm:%s9820] %v9939
                %v9941 = vld [vmem:[%s9827 + $0x1c0] sm:%s9820]
                %9942 = vst [vmem:[%s9828 + $0x1c0] sm:%s9820] %v9941
                %v9943 = vld [vmem:[%s9827 + $0x1c8] sm:%s9820]
                %9944 = vst [vmem:[%s9828 + $0x1c8] sm:%s9820] %v9943
                %v9945 = vld [vmem:[%s9827 + $0x1d0] sm:%s9820]
                %9946 = vst [vmem:[%s9828 + $0x1d0] sm:%s9820] %v9945
                %v9947 = vld [vmem:[%s9827 + $0x1d8] sm:%s9820]
                %9948 = vst [vmem:[%s9828 + $0x1d8] sm:%s9820] %v9947
                %v9949 = vld [vmem:[%s9827 + $0x1e0] sm:%s9820]
                %9950 = vst [vmem:[%s9828 + $0x1e0] sm:%s9820] %v9949
                %v9951 = vld [vmem:[%s9827 + $0x1e8] sm:%s9820]
                %9952 = vst [vmem:[%s9828 + $0x1e8] sm:%s9820] %v9951
                %v9953 = vld [vmem:[%s9827 + $0x1f0] sm:%s9820]
                %9954 = vst [vmem:[%s9828 + $0x1f0] sm:%s9820] %v9953
                %v9955 = vld [vmem:[%s9827 + $0x1f8] sm:%s9820]
                %9956 = vst [vmem:[%s9828 + $0x1f8] sm:%s9820] %v9955
                %v9957 = vld [vmem:[%s9827 + $0x200] sm:%s9820]
                %9958 = vst [vmem:[%s9828 + $0x200] sm:%s9820] %v9957
                %v9959 = vld [vmem:[%s9827 + $0x208] sm:%s9820]
                %9960 = vst [vmem:[%s9828 + $0x208] sm:%s9820] %v9959
                %v9961 = vld [vmem:[%s9827 + $0x210] sm:%s9820]
                %9962 = vst [vmem:[%s9828 + $0x210] sm:%s9820] %v9961
                %v9963 = vld [vmem:[%s9827 + $0x218] sm:%s9820]
                %9964 = vst [vmem:[%s9828 + $0x218] sm:%s9820] %v9963
                %v9965 = vld [vmem:[%s9827 + $0x220] sm:%s9820]
                %9966 = vst [vmem:[%s9828 + $0x220] sm:%s9820] %v9965
                %v9967 = vld [vmem:[%s9827 + $0x228] sm:%s9820]
                %9968 = vst [vmem:[%s9828 + $0x228] sm:%s9820] %v9967
                %v9969 = vld [vmem:[%s9827 + $0x230] sm:%s9820]
                %9970 = vst [vmem:[%s9828 + $0x230] sm:%s9820] %v9969
                %v9971 = vld [vmem:[%s9827 + $0x238] sm:%s9820]
                %9972 = vst [vmem:[%s9828 + $0x238] sm:%s9820] %v9971
                %v9973 = vld [vmem:[%s9827 + $0x240] sm:%s9820]
                %9974 = vst [vmem:[%s9828 + $0x240] sm:%s9820] %v9973
                %v9975 = vld [vmem:[%s9827 + $0x248] sm:%s9820]
                %9976 = vst [vmem:[%s9828 + $0x248] sm:%s9820] %v9975
                %v9977 = vld [vmem:[%s9827 + $0x250] sm:%s9820]
                %9978 = vst [vmem:[%s9828 + $0x250] sm:%s9820] %v9977
                %v9979 = vld [vmem:[%s9827 + $0x258] sm:%s9820]
                %9980 = vst [vmem:[%s9828 + $0x258] sm:%s9820] %v9979
                %v9981 = vld [vmem:[%s9827 + $0x260] sm:%s9820]
                %9982 = vst [vmem:[%s9828 + $0x260] sm:%s9820] %v9981
                %v9983 = vld [vmem:[%s9827 + $0x268] sm:%s9820]
                %9984 = vst [vmem:[%s9828 + $0x268] sm:%s9820] %v9983
                %v9985 = vld [vmem:[%s9827 + $0x270] sm:%s9820]
                %9986 = vst [vmem:[%s9828 + $0x270] sm:%s9820] %v9985
                %v9987 = vld [vmem:[%s9827 + $0x278] sm:%s9820]
                %9988 = vst [vmem:[%s9828 + $0x278] sm:%s9820] %v9987
                %v9989 = vld [vmem:[%s9827 + $0x280] sm:%s9820]
                %9990 = vst [vmem:[%s9828 + $0x280] sm:%s9820] %v9989
                %v9991 = vld [vmem:[%s9827 + $0x288] sm:%s9820]
                %9992 = vst [vmem:[%s9828 + $0x288] sm:%s9820] %v9991
                %v9993 = vld [vmem:[%s9827 + $0x290] sm:%s9820]
                %9994 = vst [vmem:[%s9828 + $0x290] sm:%s9820] %v9993
                %v9995 = vld [vmem:[%s9827 + $0x298] sm:%s9820]
                %9996 = vst [vmem:[%s9828 + $0x298] sm:%s9820] %v9995
                %v9997 = vld [vmem:[%s9827 + $0x2a0] sm:%s9820]
                %9998 = vst [vmem:[%s9828 + $0x2a0] sm:%s9820] %v9997
                %v9999 = vld [vmem:[%s9827 + $0x2a8] sm:%s9820]
                %10000 = vst [vmem:[%s9828 + $0x2a8] sm:%s9820] %v9999
                %v10001 = vld [vmem:[%s9827 + $0x2b0] sm:%s9820]
                %10002 = vst [vmem:[%s9828 + $0x2b0] sm:%s9820] %v10001
                %v10003 = vld [vmem:[%s9827 + $0x2b8] sm:%s9820]
                %10004 = vst [vmem:[%s9828 + $0x2b8] sm:%s9820] %v10003
                %v10005 = vld [vmem:[%s9827 + $0x2c0] sm:%s9820]
                %10006 = vst [vmem:[%s9828 + $0x2c0] sm:%s9820] %v10005
                %v10007 = vld [vmem:[%s9827 + $0x2c8] sm:%s9820]
                %10008 = vst [vmem:[%s9828 + $0x2c8] sm:%s9820] %v10007
                %v10009 = vld [vmem:[%s9827 + $0x2d0] sm:%s9820]
                %10010 = vst [vmem:[%s9828 + $0x2d0] sm:%s9820] %v10009
                %v10011 = vld [vmem:[%s9827 + $0x2d8] sm:%s9820]
                %10012 = vst [vmem:[%s9828 + $0x2d8] sm:%s9820] %v10011
                %v10013 = vld [vmem:[%s9827 + $0x2e0] sm:%s9820]
                %10014 = vst [vmem:[%s9828 + $0x2e0] sm:%s9820] %v10013
                %v10015 = vld [vmem:[%s9827 + $0x2e8] sm:%s9820]
                %10016 = vst [vmem:[%s9828 + $0x2e8] sm:%s9820] %v10015
                %v10017 = vld [vmem:[%s9827 + $0x2f0] sm:%s9820]
                %10018 = vst [vmem:[%s9828 + $0x2f0] sm:%s9820] %v10017
                %v10019 = vld [vmem:[%s9827 + $0x2f8] sm:%s9820]
                %10020 = vst [vmem:[%s9828 + $0x2f8] sm:%s9820] %v10019
                %v10021 = vld [vmem:[%s9827 + $0x300] sm:%s9820]
                %10022 = vst [vmem:[%s9828 + $0x300] sm:%s9820] %v10021
                %v10023 = vld [vmem:[%s9827 + $0x308] sm:%s9820]
                %10024 = vst [vmem:[%s9828 + $0x308] sm:%s9820] %v10023
                %v10025 = vld [vmem:[%s9827 + $0x310] sm:%s9820]
                %10026 = vst [vmem:[%s9828 + $0x310] sm:%s9820] %v10025
                %v10027 = vld [vmem:[%s9827 + $0x318] sm:%s9820]
                %10028 = vst [vmem:[%s9828 + $0x318] sm:%s9820] %v10027
                %v10029 = vld [vmem:[%s9827 + $0x320] sm:%s9820]
                %10030 = vst [vmem:[%s9828 + $0x320] sm:%s9820] %v10029
                %v10031 = vld [vmem:[%s9827 + $0x328] sm:%s9820]
                %10032 = vst [vmem:[%s9828 + $0x328] sm:%s9820] %v10031
                %v10033 = vld [vmem:[%s9827 + $0x330] sm:%s9820]
                %10034 = vst [vmem:[%s9828 + $0x330] sm:%s9820] %v10033
                %v10035 = vld [vmem:[%s9827 + $0x338] sm:%s9820]
                %10036 = vst [vmem:[%s9828 + $0x338] sm:%s9820] %v10035
                %v10037 = vld [vmem:[%s9827 + $0x340] sm:%s9820]
                %10038 = vst [vmem:[%s9828 + $0x340] sm:%s9820] %v10037
                %v10039 = vld [vmem:[%s9827 + $0x348] sm:%s9820]
                %10040 = vst [vmem:[%s9828 + $0x348] sm:%s9820] %v10039
                %v10041 = vld [vmem:[%s9827 + $0x350] sm:%s9820]
                %10042 = vst [vmem:[%s9828 + $0x350] sm:%s9820] %v10041
                %v10043 = vld [vmem:[%s9827 + $0x358] sm:%s9820]
                %10044 = vst [vmem:[%s9828 + $0x358] sm:%s9820] %v10043
                %v10045 = vld [vmem:[%s9827 + $0x360] sm:%s9820]
                %10046 = vst [vmem:[%s9828 + $0x360] sm:%s9820] %v10045
                %v10047 = vld [vmem:[%s9827 + $0x368] sm:%s9820]
                %10048 = vst [vmem:[%s9828 + $0x368] sm:%s9820] %v10047
                %v10049 = vld [vmem:[%s9827 + $0x370] sm:%s9820]
                %10050 = vst [vmem:[%s9828 + $0x370] sm:%s9820] %v10049
                %v10051 = vld [vmem:[%s9827 + $0x378] sm:%s9820]
                %10052 = vst [vmem:[%s9828 + $0x378] sm:%s9820] %v10051
                %v10053 = vld [vmem:[%s9827 + $0x380] sm:%s9820]
                %10054 = vst [vmem:[%s9828 + $0x700] sm:%s9820] %v10053
                %v10055 = vld [vmem:[%s9827 + $0x388] sm:%s9820]
                %10056 = vst [vmem:[%s9828 + $0x708] sm:%s9820] %v10055
                %v10057 = vld [vmem:[%s9827 + $0x390] sm:%s9820]
                %10058 = vst [vmem:[%s9828 + $0x710] sm:%s9820] %v10057
                %v10059 = vld [vmem:[%s9827 + $0x398] sm:%s9820]
                %10060 = vst [vmem:[%s9828 + $0x718] sm:%s9820] %v10059
                %v10061 = vld [vmem:[%s9827 + $0x3a0] sm:%s9820]
                %10062 = vst [vmem:[%s9828 + $0x720] sm:%s9820] %v10061
                %v10063 = vld [vmem:[%s9827 + $0x3a8] sm:%s9820]
                %10064 = vst [vmem:[%s9828 + $0x728] sm:%s9820] %v10063
                %v10065 = vld [vmem:[%s9827 + $0x3b0] sm:%s9820]
                %10066 = vst [vmem:[%s9828 + $0x730] sm:%s9820] %v10065
                %v10067 = vld [vmem:[%s9827 + $0x3b8] sm:%s9820]
                %10068 = vst [vmem:[%s9828 + $0x738] sm:%s9820] %v10067
                %v10069 = vld [vmem:[%s9827 + $0x3c0] sm:%s9820]
                %10070 = vst [vmem:[%s9828 + $0x740] sm:%s9820] %v10069
                %v10071 = vld [vmem:[%s9827 + $0x3c8] sm:%s9820]
                %10072 = vst [vmem:[%s9828 + $0x748] sm:%s9820] %v10071
                %v10073 = vld [vmem:[%s9827 + $0x3d0] sm:%s9820]
                %10074 = vst [vmem:[%s9828 + $0x750] sm:%s9820] %v10073
                %v10075 = vld [vmem:[%s9827 + $0x3d8] sm:%s9820]
                %10076 = vst [vmem:[%s9828 + $0x758] sm:%s9820] %v10075
                %v10077 = vld [vmem:[%s9827 + $0x3e0] sm:%s9820]
                %10078 = vst [vmem:[%s9828 + $0x760] sm:%s9820] %v10077
                %v10079 = vld [vmem:[%s9827 + $0x3e8] sm:%s9820]
                %10080 = vst [vmem:[%s9828 + $0x768] sm:%s9820] %v10079
                %v10081 = vld [vmem:[%s9827 + $0x3f0] sm:%s9820]
                %10082 = vst [vmem:[%s9828 + $0x770] sm:%s9820] %v10081
                %v10083 = vld [vmem:[%s9827 + $0x3f8] sm:%s9820]
                %10084 = vst [vmem:[%s9828 + $0x778] sm:%s9820] %v10083
                %v10085 = vld [vmem:[%s9827 + $0x400] sm:%s9820]
                %10086 = vst [vmem:[%s9828 + $0x780] sm:%s9820] %v10085
                %v10087 = vld [vmem:[%s9827 + $0x408] sm:%s9820]
                %10088 = vst [vmem:[%s9828 + $0x788] sm:%s9820] %v10087
                %v10089 = vld [vmem:[%s9827 + $0x410] sm:%s9820]
                %10090 = vst [vmem:[%s9828 + $0x790] sm:%s9820] %v10089
                %v10091 = vld [vmem:[%s9827 + $0x418] sm:%s9820]
                %10092 = vst [vmem:[%s9828 + $0x798] sm:%s9820] %v10091
                %v10093 = vld [vmem:[%s9827 + $0x420] sm:%s9820]
                %10094 = vst [vmem:[%s9828 + $0x7a0] sm:%s9820] %v10093
                %v10095 = vld [vmem:[%s9827 + $0x428] sm:%s9820]
                %10096 = vst [vmem:[%s9828 + $0x7a8] sm:%s9820] %v10095
                %v10097 = vld [vmem:[%s9827 + $0x430] sm:%s9820]
                %10098 = vst [vmem:[%s9828 + $0x7b0] sm:%s9820] %v10097
                %v10099 = vld [vmem:[%s9827 + $0x438] sm:%s9820]
                %10100 = vst [vmem:[%s9828 + $0x7b8] sm:%s9820] %v10099
                %v10101 = vld [vmem:[%s9827 + $0x440] sm:%s9820]
                %10102 = vst [vmem:[%s9828 + $0x7c0] sm:%s9820] %v10101
                %v10103 = vld [vmem:[%s9827 + $0x448] sm:%s9820]
                %10104 = vst [vmem:[%s9828 + $0x7c8] sm:%s9820] %v10103
                %v10105 = vld [vmem:[%s9827 + $0x450] sm:%s9820]
                %10106 = vst [vmem:[%s9828 + $0x7d0] sm:%s9820] %v10105
                %v10107 = vld [vmem:[%s9827 + $0x458] sm:%s9820]
                %10108 = vst [vmem:[%s9828 + $0x7d8] sm:%s9820] %v10107
                %v10109 = vld [vmem:[%s9827 + $0x460] sm:%s9820]
                %10110 = vst [vmem:[%s9828 + $0x7e0] sm:%s9820] %v10109
                %v10111 = vld [vmem:[%s9827 + $0x468] sm:%s9820]
                %10112 = vst [vmem:[%s9828 + $0x7e8] sm:%s9820] %v10111
                %v10113 = vld [vmem:[%s9827 + $0x470] sm:%s9820]
                %10114 = vst [vmem:[%s9828 + $0x7f0] sm:%s9820] %v10113
                %v10115 = vld [vmem:[%s9827 + $0x478] sm:%s9820]
                %10116 = vst [vmem:[%s9828 + $0x7f8] sm:%s9820] %v10115
                %v10117 = vld [vmem:[%s9827 + $0x480] sm:%s9820]
                %10118 = vst [vmem:[%s9828 + $0x800] sm:%s9820] %v10117
                %v10119 = vld [vmem:[%s9827 + $0x488] sm:%s9820]
                %10120 = vst [vmem:[%s9828 + $0x808] sm:%s9820] %v10119
                %v10121 = vld [vmem:[%s9827 + $0x490] sm:%s9820]
                %10122 = vst [vmem:[%s9828 + $0x810] sm:%s9820] %v10121
                %v10123 = vld [vmem:[%s9827 + $0x498] sm:%s9820]
                %10124 = vst [vmem:[%s9828 + $0x818] sm:%s9820] %v10123
                %v10125 = vld [vmem:[%s9827 + $0x4a0] sm:%s9820]
                %10126 = vst [vmem:[%s9828 + $0x820] sm:%s9820] %v10125
                %v10127 = vld [vmem:[%s9827 + $0x4a8] sm:%s9820]
                %10128 = vst [vmem:[%s9828 + $0x828] sm:%s9820] %v10127
                %v10129 = vld [vmem:[%s9827 + $0x4b0] sm:%s9820]
                %10130 = vst [vmem:[%s9828 + $0x830] sm:%s9820] %v10129
                %v10131 = vld [vmem:[%s9827 + $0x4b8] sm:%s9820]
                %10132 = vst [vmem:[%s9828 + $0x838] sm:%s9820] %v10131
                %v10133 = vld [vmem:[%s9827 + $0x4c0] sm:%s9820]
                %10134 = vst [vmem:[%s9828 + $0x840] sm:%s9820] %v10133
                %v10135 = vld [vmem:[%s9827 + $0x4c8] sm:%s9820]
                %10136 = vst [vmem:[%s9828 + $0x848] sm:%s9820] %v10135
                %v10137 = vld [vmem:[%s9827 + $0x4d0] sm:%s9820]
                %10138 = vst [vmem:[%s9828 + $0x850] sm:%s9820] %v10137
                %v10139 = vld [vmem:[%s9827 + $0x4d8] sm:%s9820]
                %10140 = vst [vmem:[%s9828 + $0x858] sm:%s9820] %v10139
                %v10141 = vld [vmem:[%s9827 + $0x4e0] sm:%s9820]
                %10142 = vst [vmem:[%s9828 + $0x860] sm:%s9820] %v10141
                %v10143 = vld [vmem:[%s9827 + $0x4e8] sm:%s9820]
                %10144 = vst [vmem:[%s9828 + $0x868] sm:%s9820] %v10143
                %v10145 = vld [vmem:[%s9827 + $0x4f0] sm:%s9820]
                %10146 = vst [vmem:[%s9828 + $0x870] sm:%s9820] %v10145
                %v10147 = vld [vmem:[%s9827 + $0x4f8] sm:%s9820]
                %10148 = vst [vmem:[%s9828 + $0x878] sm:%s9820] %v10147
                %v10149 = vld [vmem:[%s9827 + $0x500] sm:%s9820]
                %10150 = vst [vmem:[%s9828 + $0x880] sm:%s9820] %v10149
                %v10151 = vld [vmem:[%s9827 + $0x508] sm:%s9820]
                %10152 = vst [vmem:[%s9828 + $0x888] sm:%s9820] %v10151
                %v10153 = vld [vmem:[%s9827 + $0x510] sm:%s9820]
                %10154 = vst [vmem:[%s9828 + $0x890] sm:%s9820] %v10153
                %v10155 = vld [vmem:[%s9827 + $0x518] sm:%s9820]
                %10156 = vst [vmem:[%s9828 + $0x898] sm:%s9820] %v10155
                %v10157 = vld [vmem:[%s9827 + $0x520] sm:%s9820]
                %10158 = vst [vmem:[%s9828 + $0x8a0] sm:%s9820] %v10157
                %v10159 = vld [vmem:[%s9827 + $0x528] sm:%s9820]
                %10160 = vst [vmem:[%s9828 + $0x8a8] sm:%s9820] %v10159
                %v10161 = vld [vmem:[%s9827 + $0x530] sm:%s9820]
                %10162 = vst [vmem:[%s9828 + $0x8b0] sm:%s9820] %v10161
                %v10163 = vld [vmem:[%s9827 + $0x538] sm:%s9820]
                %10164 = vst [vmem:[%s9828 + $0x8b8] sm:%s9820] %v10163
                %v10165 = vld [vmem:[%s9827 + $0x540] sm:%s9820]
                %10166 = vst [vmem:[%s9828 + $0x8c0] sm:%s9820] %v10165
                %v10167 = vld [vmem:[%s9827 + $0x548] sm:%s9820]
                %10168 = vst [vmem:[%s9828 + $0x8c8] sm:%s9820] %v10167
                %v10169 = vld [vmem:[%s9827 + $0x550] sm:%s9820]
                %10170 = vst [vmem:[%s9828 + $0x8d0] sm:%s9820] %v10169
                %v10171 = vld [vmem:[%s9827 + $0x558] sm:%s9820]
                %10172 = vst [vmem:[%s9828 + $0x8d8] sm:%s9820] %v10171
                %v10173 = vld [vmem:[%s9827 + $0x560] sm:%s9820]
                %10174 = vst [vmem:[%s9828 + $0x8e0] sm:%s9820] %v10173
                %v10175 = vld [vmem:[%s9827 + $0x568] sm:%s9820]
                %10176 = vst [vmem:[%s9828 + $0x8e8] sm:%s9820] %v10175
                %v10177 = vld [vmem:[%s9827 + $0x570] sm:%s9820]
                %10178 = vst [vmem:[%s9828 + $0x8f0] sm:%s9820] %v10177
                %v10179 = vld [vmem:[%s9827 + $0x578] sm:%s9820]
                %10180 = vst [vmem:[%s9828 + $0x8f8] sm:%s9820] %v10179
                %v10181 = vld [vmem:[%s9827 + $0x580] sm:%s9820]
                %10182 = vst [vmem:[%s9828 + $0x900] sm:%s9820] %v10181
                %v10183 = vld [vmem:[%s9827 + $0x588] sm:%s9820]
                %10184 = vst [vmem:[%s9828 + $0x908] sm:%s9820] %v10183
                %v10185 = vld [vmem:[%s9827 + $0x590] sm:%s9820]
                %10186 = vst [vmem:[%s9828 + $0x910] sm:%s9820] %v10185
                %v10187 = vld [vmem:[%s9827 + $0x598] sm:%s9820]
                %10188 = vst [vmem:[%s9828 + $0x918] sm:%s9820] %v10187
                %v10189 = vld [vmem:[%s9827 + $0x5a0] sm:%s9820]
                %10190 = vst [vmem:[%s9828 + $0x920] sm:%s9820] %v10189
                %v10191 = vld [vmem:[%s9827 + $0x5a8] sm:%s9820]
                %10192 = vst [vmem:[%s9828 + $0x928] sm:%s9820] %v10191
                %v10193 = vld [vmem:[%s9827 + $0x5b0] sm:%s9820]
                %10194 = vst [vmem:[%s9828 + $0x930] sm:%s9820] %v10193
                %v10195 = vld [vmem:[%s9827 + $0x5b8] sm:%s9820]
                %10196 = vst [vmem:[%s9828 + $0x938] sm:%s9820] %v10195
                %v10197 = vld [vmem:[%s9827 + $0x5c0] sm:%s9820]
                %10198 = vst [vmem:[%s9828 + $0x940] sm:%s9820] %v10197
                %v10199 = vld [vmem:[%s9827 + $0x5c8] sm:%s9820]
                %10200 = vst [vmem:[%s9828 + $0x948] sm:%s9820] %v10199
                %v10201 = vld [vmem:[%s9827 + $0x5d0] sm:%s9820]
                %10202 = vst [vmem:[%s9828 + $0x950] sm:%s9820] %v10201
                %v10203 = vld [vmem:[%s9827 + $0x5d8] sm:%s9820]
                %10204 = vst [vmem:[%s9828 + $0x958] sm:%s9820] %v10203
                %v10205 = vld [vmem:[%s9827 + $0x5e0] sm:%s9820]
                %10206 = vst [vmem:[%s9828 + $0x960] sm:%s9820] %v10205
                %v10207 = vld [vmem:[%s9827 + $0x5e8] sm:%s9820]
                %10208 = vst [vmem:[%s9828 + $0x968] sm:%s9820] %v10207
                %v10209 = vld [vmem:[%s9827 + $0x5f0] sm:%s9820]
                %10210 = vst [vmem:[%s9828 + $0x970] sm:%s9820] %v10209
                %v10211 = vld [vmem:[%s9827 + $0x5f8] sm:%s9820]
                %10212 = vst [vmem:[%s9828 + $0x978] sm:%s9820] %v10211
                %v10213 = vld [vmem:[%s9827 + $0x600] sm:%s9820]
                %10214 = vst [vmem:[%s9828 + $0x980] sm:%s9820] %v10213
                %v10215 = vld [vmem:[%s9827 + $0x608] sm:%s9820]
                %10216 = vst [vmem:[%s9828 + $0x988] sm:%s9820] %v10215
                %v10217 = vld [vmem:[%s9827 + $0x610] sm:%s9820]
                %10218 = vst [vmem:[%s9828 + $0x990] sm:%s9820] %v10217
                %v10219 = vld [vmem:[%s9827 + $0x618] sm:%s9820]
                %10220 = vst [vmem:[%s9828 + $0x998] sm:%s9820] %v10219
                %v10221 = vld [vmem:[%s9827 + $0x620] sm:%s9820]
                %10222 = vst [vmem:[%s9828 + $0x9a0] sm:%s9820] %v10221
                %v10223 = vld [vmem:[%s9827 + $0x628] sm:%s9820]
                %10224 = vst [vmem:[%s9828 + $0x9a8] sm:%s9820] %v10223
                %v10225 = vld [vmem:[%s9827 + $0x630] sm:%s9820]
                %10226 = vst [vmem:[%s9828 + $0x9b0] sm:%s9820] %v10225
                %v10227 = vld [vmem:[%s9827 + $0x638] sm:%s9820]
                %10228 = vst [vmem:[%s9828 + $0x9b8] sm:%s9820] %v10227
                %v10229 = vld [vmem:[%s9827 + $0x640] sm:%s9820]
                %10230 = vst [vmem:[%s9828 + $0x9c0] sm:%s9820] %v10229
                %v10231 = vld [vmem:[%s9827 + $0x648] sm:%s9820]
                %10232 = vst [vmem:[%s9828 + $0x9c8] sm:%s9820] %v10231
                %v10233 = vld [vmem:[%s9827 + $0x650] sm:%s9820]
                %10234 = vst [vmem:[%s9828 + $0x9d0] sm:%s9820] %v10233
                %v10235 = vld [vmem:[%s9827 + $0x658] sm:%s9820]
                %10236 = vst [vmem:[%s9828 + $0x9d8] sm:%s9820] %v10235
                %v10237 = vld [vmem:[%s9827 + $0x660] sm:%s9820]
                %10238 = vst [vmem:[%s9828 + $0x9e0] sm:%s9820] %v10237
                %v10239 = vld [vmem:[%s9827 + $0x668] sm:%s9820]
                %10240 = vst [vmem:[%s9828 + $0x9e8] sm:%s9820] %v10239
                %v10241 = vld [vmem:[%s9827 + $0x670] sm:%s9820]
                %10242 = vst [vmem:[%s9828 + $0x9f0] sm:%s9820] %v10241
                %v10243 = vld [vmem:[%s9827 + $0x678] sm:%s9820]
                %10244 = vst [vmem:[%s9828 + $0x9f8] sm:%s9820] %v10243
                %v10245 = vld [vmem:[%s9827 + $0x680] sm:%s9820]
                %10246 = vst [vmem:[%s9828 + $0xa00] sm:%s9820] %v10245
                %v10247 = vld [vmem:[%s9827 + $0x688] sm:%s9820]
                %10248 = vst [vmem:[%s9828 + $0xa08] sm:%s9820] %v10247
                %v10249 = vld [vmem:[%s9827 + $0x690] sm:%s9820]
                %10250 = vst [vmem:[%s9828 + $0xa10] sm:%s9820] %v10249
                %v10251 = vld [vmem:[%s9827 + $0x698] sm:%s9820]
                %10252 = vst [vmem:[%s9828 + $0xa18] sm:%s9820] %v10251
                %v10253 = vld [vmem:[%s9827 + $0x6a0] sm:%s9820]
                %10254 = vst [vmem:[%s9828 + $0xa20] sm:%s9820] %v10253
                %v10255 = vld [vmem:[%s9827 + $0x6a8] sm:%s9820]
                %10256 = vst [vmem:[%s9828 + $0xa28] sm:%s9820] %v10255
                %v10257 = vld [vmem:[%s9827 + $0x6b0] sm:%s9820]
                %10258 = vst [vmem:[%s9828 + $0xa30] sm:%s9820] %v10257
                %v10259 = vld [vmem:[%s9827 + $0x6b8] sm:%s9820]
                %10260 = vst [vmem:[%s9828 + $0xa38] sm:%s9820] %v10259
                %v10261 = vld [vmem:[%s9827 + $0x6c0] sm:%s9820]
                %10262 = vst [vmem:[%s9828 + $0xa40] sm:%s9820] %v10261
                %v10263 = vld [vmem:[%s9827 + $0x6c8] sm:%s9820]
                %10264 = vst [vmem:[%s9828 + $0xa48] sm:%s9820] %v10263
                %v10265 = vld [vmem:[%s9827 + $0x6d0] sm:%s9820]
                %10266 = vst [vmem:[%s9828 + $0xa50] sm:%s9820] %v10265
                %v10267 = vld [vmem:[%s9827 + $0x6d8] sm:%s9820]
                %10268 = vst [vmem:[%s9828 + $0xa58] sm:%s9820] %v10267
                %v10269 = vld [vmem:[%s9827 + $0x6e0] sm:%s9820]
                %10270 = vst [vmem:[%s9828 + $0xa60] sm:%s9820] %v10269
                %v10271 = vld [vmem:[%s9827 + $0x6e8] sm:%s9820]
                %10272 = vst [vmem:[%s9828 + $0xa68] sm:%s9820] %v10271
                %v10273 = vld [vmem:[%s9827 + $0x6f0] sm:%s9820]
                %10274 = vst [vmem:[%s9828 + $0xa70] sm:%s9820] %v10273
                %v10275 = vld [vmem:[%s9827 + $0x6f8] sm:%s9820]
                %10276 = vst [vmem:[%s9828 + $0xa78] sm:%s9820] %v10275
              $region57: #{a_call__.1} parent=51 // loop_footer
                %s9826 = sadd.s32 1, %s9822
              $region58: #{a_call__.1} parent=51 // loop_footer_branch
                %9821 = sbr.rel target = $region54
              $region59: #{a_call__.1} parent=51 // loop_exit
                _
            $region52: #{a_call__.1} parent=43 // pred_fallthru
              _
          $region44: #{a_call__.1} parent=39 // pred_fallthru
            _
          %10737 = vnop
        $region40: #{a_call__.1} parent=31 // pred_fallthru
          _
      $region32: #{a_call__.1} parent=5 // pred_fallthru
        _
      %p10738 = scmp.le.s32.totalorder 2, %s12
      // Predicated region
      $region75: #{a_call__.1} parent=5 // pred_check
        %p10739 = pneg %p10738
      $region76: #{a_call__.1} parent=5 // pred_check_branch
        %10741 = sbr.rel (%p10739) target = $region78
      $region77: #{a_call__.1} parent=5 // pred_region
        %s10742 = ssub.s32 %s12, 2
        // Predicated region
        $region79: #{a_call__.1} parent=77 // pred_check
          %p10743 = pneg %p133
        $region80: #{a_call__.1} parent=77 // pred_check_branch
          %10745 = sbr.rel (%p10743) target = $region82
        $region81: #{a_call__.1} parent=77 // pred_region
          %s10746 = sand.u32 %s118, 1
          %s10747 = sand.u32 %s118, 1
          %s10748 = smul.addr %s10747, 1792
          %s10749 = scalar_lea.vmem [#allocation4], %s10748
        $region82: #{a_call__.1} parent=77 // pred_fallthru
          _
      $region78: #{a_call__.1} parent=5 // pred_fallthru
        _
    $region6: #{a_call__.1} parent=1 // loop_footer
      %s16 = sadd.s32 1, %s12
    $region7: #{a_call__.1} parent=1 // loop_footer_branch
      %11 = sbr.rel target = $region3
    $region8: #{a_call__.1} parent=1 // loop_exit
      _
    %10750 = vsyncpa [#allocation3], 1
    %s10751 = scalar_lea.sflag [#allocation3], 1
    %10752 = vsyncpa %s10751, 1

</llo_original>
